<compile_context>
chip_gen: v7x
topology: tpu7x:2x2x1
jax: 0.10.0
libtpu: 0.0.40
codegen_flags: <defaults>
</compile_context>

<pallas_src>
import jax
import jax.numpy as jnp
from jax import lax
from jax.experimental import pallas as pl
from jax.experimental.pallas import tpu as pltpu

N_QUBITS = 5
N_QLAYERS = 3


# ----------------------- fused conv-stage Pallas kernel ---------------------

def _conv_stage_kernel(p_ref, w_ref, cb_ref, g_ref, b_ref, o_ref):
    """5x5 conv (matmul over im2col columns) + bias + BatchNorm (batch stats)
    + ReLU + 2x2 max-pool, fused, channel-major / lane-dense.

    p_ref : (K, 4*Mq) bf16   im2col columns, 4 pool phases concat'd on lanes
    w_ref : (CB, K)   bf16   block of output channels
    cb_ref/g_ref/b_ref : (CB, 1) f32
    o_ref : (CB, Mq)  bf16   pooled output block
    """
    y = jnp.dot(w_ref[...], p_ref[...], preferred_element_type=jnp.float32)
    y = y + cb_ref[...]                                  # conv bias
    n = y.shape[1]                                       # B*H*W pre-pool pixels
    inv_n = 1.0 / n
    mean = jnp.sum(y, axis=1, keepdims=True) * inv_n
    var = jnp.sum(jnp.square(y - mean), axis=1, keepdims=True) * inv_n  # biased
    scale = g_ref[...] * lax.rsqrt(var + 1e-5)
    shift = b_ref[...] - mean * scale
    z = jnp.maximum(y * scale + shift, 0.0)              # BN + ReLU
    mq = o_ref.shape[1]
    pooled = z[:, 0:mq]
    for k in range(1, n // mq):                          # 2x2 max-pool
        pooled = jnp.maximum(pooled, z[:, k * mq:(k + 1) * mq])
    o_ref[...] = pooled.astype(o_ref.dtype)


def conv_bn_relu_pool(x_cbhw, w_ok, conv_b, gamma, beta, *, cblk=16):
    """One conv stage.  x_cbhw: (Cin, B, H, W) bf16 channel-major;
    w_ok: (Cout, Cin*25) bf16.  Returns (Cout, B*(H//2)*(W//2)) bf16."""
    Cin, B, H, W = x_cbhw.shape
    Cout, K = w_ok.shape
    assert K == Cin * 25
    Ho, Wo = H // 2, W // 2
    Mq = B * Ho * Wo

    # TODO(synk): im2col columns are still built by XLA glue (in bf16); a fully
    # in-kernel im2col would need in-kernel strided relayouts of the padded
    # input, which Mosaic handles poorly for these tiny tensors.
    xp = jnp.pad(x_cbhw, ((0, 0), (0, 0), (2, 2), (2, 2)))
    taps = [xp[:, :, dy:dy + H, dx:dx + W] for dy in range(5) for dx in range(5)]
    taps = jnp.stack(taps, axis=1)                          # (Cin, 25, B, H, W)
    groups = [taps[:, :, :, py::2, px::2].reshape(K, Mq)    # one per pool phase
              for py in (0, 1) for px in (0, 1)]
    patches = jnp.concatenate(groups, axis=1)               # (K, 4*Mq) bf16

    cb = cblk if (Cout % cblk == 0) else Cout               # channel block
    grid = (Cout // cb,)
    return pl.pallas_call(
        _conv_stage_kernel,
        out_shape=jax.ShapeDtypeStruct((Cout, Mq), jnp.bfloat16),
        grid_spec=pltpu.PrefetchScalarGridSpec(
            num_scalar_prefetch=0,
            grid=grid,
            in_specs=[pl.BlockSpec((K, 4 * Mq), lambda j: (0, 0)),
                      pl.BlockSpec((cb, K), lambda j: (j, 0)),
                      pl.BlockSpec((cb, 1), lambda j: (j, 0)),
                      pl.BlockSpec((cb, 1), lambda j: (j, 0)),
                      pl.BlockSpec((cb, 1), lambda j: (j, 0))],
            out_specs=pl.BlockSpec((cb, Mq), lambda j: (j, 0))),
        compiler_params=pltpu.CompilerParams(
            dimension_semantics=("parallel",)),
    )(patches, w_ok,
      conv_b.reshape(Cout, 1).astype(jnp.float32),
      gamma.reshape(Cout, 1).astype(jnp.float32),
      beta.reshape(Cout, 1).astype(jnp.float32))


# --------------------------- fused MLP head kernel --------------------------

def _mlp_head_kernel(x_ref, w1_ref, b1_ref, w2_ref, b2_ref, o_ref):
    h = jnp.dot(x_ref[...], w1_ref[...], preferred_element_type=jnp.float32)
    h = jnp.maximum(h + b1_ref[...], 0.0)
    h = jnp.dot(h, w2_ref[...], preferred_element_type=jnp.float32)
    o_ref[...] = jnp.maximum(h + b2_ref[...], 0.0)


def mlp_head_pallas(x, w1, b1, w2, b2):
    """relu(relu(x @ w1 + b1) @ w2 + b2) in a single pallas_call."""
    B, K1 = x.shape
    N1 = w1.shape[1]
    N2 = w2.shape[1]
    return pl.pallas_call(
        _mlp_head_kernel,
        out_shape=jax.ShapeDtypeStruct((B, N2), jnp.float32),
        grid_spec=pltpu.PrefetchScalarGridSpec(
            num_scalar_prefetch=0,
            grid=(1,),
            in_specs=[pl.BlockSpec((B, K1), lambda i: (0, 0)),
                      pl.BlockSpec((K1, N1), lambda i: (0, 0)),
                      pl.BlockSpec((1, N1), lambda i: (0, 0)),
                      pl.BlockSpec((N1, N2), lambda i: (0, 0)),
                      pl.BlockSpec((1, N2), lambda i: (0, 0))],
            out_specs=pl.BlockSpec((B, N2), lambda i: (0, 0))),
    )(x, w1, b1.reshape(1, N1).astype(jnp.float32),
      w2.astype(jnp.float32), b2.reshape(1, N2).astype(jnp.float32))


# ------------------------------ plain linear kernel -------------------------

def _linear_kernel(x_ref, w_ref, b_ref, o_ref):
    o_ref[...] = (jnp.dot(x_ref[...], w_ref[...],
                          preferred_element_type=jnp.float32) + b_ref[...])


def linear_pallas(x, w, b):
    """y = x @ w + b.  x: (M, K) f32, w: (K, N) f32, b: (N,)."""
    M, K = x.shape
    N = w.shape[1]
    return pl.pallas_call(
        _linear_kernel,
        out_shape=jax.ShapeDtypeStruct((M, N), jnp.float32),
        grid_spec=pltpu.PrefetchScalarGridSpec(
            num_scalar_prefetch=0,
            grid=(1,),
            in_specs=[pl.BlockSpec((M, K), lambda i: (0, 0)),
                      pl.BlockSpec((K, N), lambda i: (0, 0)),
                      pl.BlockSpec((1, N), lambda i: (0, 0))],
            out_specs=pl.BlockSpec((M, N), lambda i: (0, 0))),
    )(x.astype(jnp.float32), w.astype(jnp.float32),
      b.reshape(1, N).astype(jnp.float32))


# -------------------- quantum circuit simulation (JAX) ----------------------
# TODO(synk): no complex dtype in Pallas TPU; exact statevector sim in JAX.

def _rx(theta):
    c = jnp.cos(theta / 2).astype(jnp.complex64)
    js = (1j * jnp.sin(theta / 2)).astype(jnp.complex64)
    return jnp.stack([jnp.stack([c, -js]), jnp.stack([-js, c])])


def _rot(phi, theta, omega):
    c = jnp.cos(theta / 2)
    s = jnp.sin(theta / 2)
    e_m = jnp.exp(-0.5j * (phi + omega))
    e_p = jnp.exp(0.5j * (phi + omega))
    e_pm = jnp.exp(0.5j * (phi - omega))
    e_mp = jnp.exp(-0.5j * (phi - omega))
    return jnp.stack([jnp.stack([e_m * c, -e_pm * s]),
                      jnp.stack([e_mp * s, e_p * c])]).astype(jnp.complex64)


def _apply_1q(state, U, wire):
    st = jnp.moveaxis(state, wire, 0)
    st = jnp.tensordot(U, st, axes=((1,), (0,)))
    return jnp.moveaxis(st, 0, wire)


def _apply_cnot(state, control, target):
    st = jnp.moveaxis(state, (control, target), (0, 1))
    st = jnp.stack([st[0], st[1][::-1]], axis=0)
    return jnp.moveaxis(st, (0, 1), (control, target))


def qnode_sim(inputs, weights):
    """inputs: (5,), weights: (3,5,3) -> (5,) PauliZ expectation values."""
    n = N_QUBITS
    state = jnp.zeros((2,) * n, jnp.complex64).at[(0,) * n].set(1.0)
    for i in range(n):                      # AngleEmbedding (RX rotations)
        state = _apply_1q(state, _rx(inputs[i]), i)
    ranges = [(l % (n - 1)) + 1 for l in range(N_QLAYERS)]
    for l in range(N_QLAYERS):              # StronglyEntanglingLayers
        for i in range(n):
            state = _apply_1q(
                state, _rot(weights[l, i, 0], weights[l, i, 1], weights[l, i, 2]), i)
        for i in range(n):
            state = _apply_cnot(state, i, (i + ranges[l]) % n)
    probs = jnp.abs(state) ** 2
    outs = []
    for i in range(n):
        marg = jnp.sum(probs, axis=tuple(j for j in range(n) if j != i))
        outs.append(marg[0] - marg[1])
    return jnp.stack(outs).astype(jnp.float32)


# ------------------------------- the network --------------------------------

def init_params(key):
    ks = jax.random.split(key, 11)
    p = {}
    # conv weights stored pre-flattened as (Cout, Cin*25) bf16 (MXU input dtype)
    p["conv1_w"] = (0.1 * jax.random.normal(ks[0], (16, 3, 5, 5), jnp.float32)
                    ).reshape(16, 75).astype(jnp.bfloat16)
    p["conv1_b"] = 0.1 * jax.random.normal(ks[1], (16,), jnp.float32)
    p["bn1_g"] = jnp.ones((16,), jnp.float32)
    p["bn1_b"] = jnp.zeros((16,), jnp.float32)
    p["conv2_w"] = (0.05 * jax.random.normal(ks[2], (32, 16, 5, 5), jnp.float32)
                    ).reshape(32, 400).astype(jnp.bfloat16)
    p["conv2_b"] = 0.05 * jax.random.normal(ks[3], (32,), jnp.float32)
    p["bn2_g"] = jnp.ones((32,), jnp.float32)
    p["bn2_b"] = jnp.zeros((32,), jnp.float32)
    # FC weights stored pre-transposed as (K, N): no per-call .T HBM copies.
    p["fc1_w"] = (0.02 * jax.random.normal(ks[4], (32 * 16 * 16, 120),
                                           jnp.float32)).astype(jnp.bfloat16)
    p["fc1_b"] = 0.02 * jax.random.normal(ks[5], (120,), jnp.float32)
    p["fc2_w"] = 0.1 * jax.random.normal(ks[6], (120, 20), jnp.float32)
    p["fc2_b"] = 0.1 * jax.random.normal(ks[7], (20,), jnp.float32)
    p["fc3_w"] = 0.1 * jax.random.normal(ks[8], (20, 11), jnp.float32)
    p["fc3_b"] = 0.1 * jax.random.normal(ks[9], (11,), jnp.float32)
    # 4 quantum layers' weights stacked: TorchLayer default init U(0, 2*pi)
    p["q_w"] = jax.random.uniform(ks[10], (4, N_QLAYERS, N_QUBITS, 3),
                                  jnp.float32, 0.0, 2.0 * jnp.pi)
    return p


@jax.jit
def net_forward(params, x_nchw):
    B = x_nchw.shape[0]
    # channel-major (C, B, H, W), bf16 for the DMA-bound conv path
    x = jnp.transpose(x_nchw, (1, 0, 2, 3)).astype(jnp.bfloat16)

    # conv1 -> bn1 -> relu -> pool  (one fused pallas_call)
    y = conv_bn_relu_pool(x, params["conv1_w"], params["conv1_b"],
                          params["bn1_g"], params["bn1_b"])     # (16, B*32*32)
    y = y.reshape(16, B, 32, 32)

    # conv2 -> bn2 -> relu -> pool  (one fused pallas_call, 2-way channel grid)
    y = conv_bn_relu_pool(y, params["conv2_w"], params["conv2_b"],
                          params["bn2_g"], params["bn2_b"])     # (32, B*16*16)

    # flatten in NCHW order to match torch's x.view(-1, 32*16*16)
    feat = y.reshape(32, B, 16 * 16).transpose(1, 0, 2).reshape(B, 32 * 16 * 16)

    # fc1 + relu + fc2 + relu  (one fused pallas_call)
    h = mlp_head_pallas(feat, params["fc1_w"], params["fc1_b"],
                        params["fc2_w"], params["fc2_b"])       # (B, 20) f32

    # TODO(synk): the original forward's `torch.split(x, 2, dim=1)` + 2-way
    # unpack is shape-inconsistent (10 chunks; cat of two 5-dim qnode outputs
    # would not match fc3's 20 inputs).  Implemented the self-consistent
    # variant: split the 20 features into 4 chunks of 5, one per qlayer.
    hc = h.reshape(B, 4, N_QUBITS).transpose(1, 0, 2)           # (4, B, 5)
    q = jax.vmap(jax.vmap(qnode_sim, in_axes=(0, None)),
                 in_axes=(0, 0))(hc, params["q_w"])             # (4, B, 5)
    q = q.transpose(1, 0, 2).reshape(B, 4 * N_QUBITS)           # (B, 20)

    return linear_pallas(q, params["fc3_w"], params["fc3_b"])   # (B, 11)


if __name__ == "__main__":
    key = jax.random.PRNGKey(0)
    pkey, xkey = jax.random.split(key)
    params = init_params(pkey)
    # spatial size 64 is forced by x.view(-1, 32*16*16) after two 2x2 pools
    x = jax.random.normal(xkey, (2, 3, 64, 64), jnp.float32)
    out = net_forward(params, x)
    out = jax.block_until_ready(out)
    assert out.shape == (2, 11) and out.dtype == jnp.float32
    print("KERNEL_OK")
</pallas_src>

<mosaic_0001>
module attributes {stable_mosaic.version = 11 : i64} {
  func.func @_conv_stage_kernel(%arg0: i32, %arg1: memref<75x8192xbf16, #tpu.memory_space<vmem>>, %arg2: memref<16x75xbf16, #tpu.memory_space<vmem>>, %arg3: memref<16x1xf32, #tpu.memory_space<vmem>>, %arg4: memref<16x1xf32, #tpu.memory_space<vmem>>, %arg5: memref<16x1xf32, #tpu.memory_space<vmem>>, %arg6: memref<16x2048xbf16, #tpu.memory_space<vmem>>) attributes {dimension_semantics = [#tpu.dimension_semantics<parallel>], iteration_bounds = array<i64: 1>, scalar_prefetch = 0 : i64, scratch_operands = 0 : i64, tpu.core_type = #tpu.core_type<tc>, window_params = [{pipeline_mode = #tpu.pipeline_mode<synchronous>, transform_indices = @transform_0, window_bounds = array<i64: 75, 8192>}, {transform_indices = @transform_1, window_bounds = array<i64: 16, 75>}, {transform_indices = @transform_2, window_bounds = array<i64: 16, 1>}, {transform_indices = @transform_3, window_bounds = array<i64: 16, 1>}, {transform_indices = @transform_4, window_bounds = array<i64: 16, 1>}, {transform_indices = @transform_5, window_bounds = array<i64: 16, 2048>}]} {
    %c0 = arith.constant 0 : index
    %c0_0 = arith.constant 0 : index
    %0 = vector.load %arg2[%c0, %c0_0] : memref<16x75xbf16, #tpu.memory_space<vmem>>, vector<16x75xbf16>
    %c0_1 = arith.constant 0 : index
    %c0_2 = arith.constant 0 : index
    %1 = vector.load %arg1[%c0_1, %c0_2] : memref<75x8192xbf16, #tpu.memory_space<vmem>>, vector<75x8192xbf16>
    %cst = arith.constant dense<0.000000e+00> : vector<16x8192xf32>
    %2 = tpu.matmul %0, %1, %cst {dimension_numbers = #tpu.dot_dimension_numbers<[1], [0], [0], [1], [0, 0, 1, 1], [], []>} : vector<16x75xbf16>, vector<75x8192xbf16>, vector<16x8192xf32> -> vector<16x8192xf32>
    %c0_3 = arith.constant 0 : index
    %c0_4 = arith.constant 0 : index
    %3 = vector.load %arg3[%c0_3, %c0_4] : memref<16x1xf32, #tpu.memory_space<vmem>>, vector<16x1xf32>
    %4 = vector.broadcast %3 : vector<16x1xf32> to vector<16x8192xf32>
    %5 = arith.addf %2, %4 : vector<16x8192xf32>
    %cst_5 = arith.constant dense<0.000000e+00> : vector<16xf32>
    %6 = vector.multi_reduction <add>, %5, %cst_5 [1] : vector<16x8192xf32> to vector<16xf32>
    %7 = vector.shape_cast %6 : vector<16xf32> to vector<16x1xf32>
    %cst_6 = arith.constant 1.22070313E-4 : f32
    %8 = vector.broadcast %cst_6 : f32 to vector<16x1xf32>
    %9 = arith.mulf %7, %8 : vector<16x1xf32>
    %10 = vector.broadcast %9 : vector<16x1xf32> to vector<16x8192xf32>
    %11 = arith.subf %5, %10 : vector<16x8192xf32>
    %12 = arith.mulf %11, %11 : vector<16x8192xf32>
    %cst_7 = arith.constant dense<0.000000e+00> : vector<16xf32>
    %13 = vector.multi_reduction <add>, %12, %cst_7 [1] : vector<16x8192xf32> to vector<16xf32>
    %14 = vector.shape_cast %13 : vector<16xf32> to vector<16x1xf32>
    %cst_8 = arith.constant 1.22070313E-4 : f32
    %15 = vector.broadcast %cst_8 : f32 to vector<16x1xf32>
    %16 = arith.mulf %14, %15 : vector<16x1xf32>
    %c0_9 = arith.constant 0 : index
    %c0_10 = arith.constant 0 : index
    %17 = vector.load %arg4[%c0_9, %c0_10] : memref<16x1xf32, #tpu.memory_space<vmem>>, vector<16x1xf32>
    %cst_11 = arith.constant 9.99999974E-6 : f32
    %18 = vector.broadcast %cst_11 : f32 to vector<16x1xf32>
    %19 = arith.addf %16, %18 : vector<16x1xf32>
    %20 = math.rsqrt %19 : vector<16x1xf32>
    %21 = arith.mulf %17, %20 : vector<16x1xf32>
    %c0_12 = arith.constant 0 : index
    %c0_13 = arith.constant 0 : index
    %22 = vector.load %arg5[%c0_12, %c0_13] : memref<16x1xf32, #tpu.memory_space<vmem>>, vector<16x1xf32>
    %23 = arith.mulf %9, %21 : vector<16x1xf32>
    %24 = arith.subf %22, %23 : vector<16x1xf32>
    %25 = vector.broadcast %21 : vector<16x1xf32> to vector<16x8192xf32>
    %26 = arith.mulf %5, %25 : vector<16x8192xf32>
    %27 = vector.broadcast %24 : vector<16x1xf32> to vector<16x8192xf32>
    %28 = arith.addf %26, %27 : vector<16x8192xf32>
    %cst_14 = arith.constant 0.000000e+00 : f32
    %29 = vector.broadcast %cst_14 : f32 to vector<16x8192xf32>
    %30 = arith.maximumf %28, %29 : vector<16x8192xf32>
    %31 = vector.extract_strided_slice %30 {offsets = [0, 0], sizes = [16, 2048], strides = [1, 1]} : vector<16x8192xf32> to vector<16x2048xf32>
    %32 = vector.extract_strided_slice %30 {offsets = [0, 2048], sizes = [16, 2048], strides = [1, 1]} : vector<16x8192xf32> to vector<16x2048xf32>
    %33 = arith.maximumf %31, %32 : vector<16x2048xf32>
    %34 = vector.extract_strided_slice %30 {offsets = [0, 4096], sizes = [16, 2048], strides = [1, 1]} : vector<16x8192xf32> to vector<16x2048xf32>
    %35 = arith.maximumf %33, %34 : vector<16x2048xf32>
    %36 = vector.extract_strided_slice %30 {offsets = [0, 6144], sizes = [16, 2048], strides = [1, 1]} : vector<16x8192xf32> to vector<16x2048xf32>
    %37 = arith.maximumf %35, %36 : vector<16x2048xf32>
    %38 = arith.truncf %37 : vector<16x2048xf32> to vector<16x2048xbf16>
    %c0_15 = arith.constant 0 : index
    %c0_16 = arith.constant 0 : index
    %39 = vector.load %arg6[%c0_15, %c0_16] : memref<16x2048xbf16, #tpu.memory_space<vmem>>, vector<16x2048xbf16>
    tpu.vector_store %arg6[%c0_15, %c0_16], %38 {strides = array<i32>} : memref<16x2048xbf16, #tpu.memory_space<vmem>>, vector<16x2048xbf16>,
    return
  }
  func.func @transform_0(%arg0: i32) -> (i32, i32) {
    %c0_i32 = arith.constant 0 : i32
    %c0_i32_0 = arith.constant 0 : i32
    %c0_i32_1 = arith.constant 0 : i32
    return %c0_i32, %c0_i32_0 : i32, i32
  }
  func.func @transform_1(%arg0: i32) -> (i32, i32) {
    %c0_i32 = arith.constant 0 : i32
    %c0_i32_0 = arith.constant 0 : i32
    return %arg0, %c0_i32 : i32, i32
  }
  func.func @transform_2(%arg0: i32) -> (i32, i32) {
    %c0_i32 = arith.constant 0 : i32
    %c0_i32_0 = arith.constant 0 : i32
    return %arg0, %c0_i32 : i32, i32
  }
  func.func @transform_3(%arg0: i32) -> (i32, i32) {
    %c0_i32 = arith.constant 0 : i32
    %c0_i32_0 = arith.constant 0 : i32
    return %arg0, %c0_i32 : i32, i32
  }
  func.func @transform_4(%arg0: i32) -> (i32, i32) {
    %c0_i32 = arith.constant 0 : i32
    %c0_i32_0 = arith.constant 0 : i32
    return %arg0, %c0_i32 : i32, i32
  }
  func.func @transform_5(%arg0: i32) -> (i32, i32) {
    %c0_i32 = arith.constant 0 : i32
    %c0_i32_0 = arith.constant 0 : i32
    return %arg0, %c0_i32 : i32, i32
  }
}

module attributes {stable_mosaic.version = 11 : i64} {
  func.func @_conv_stage_kernel(%arg0: i32, %arg1: memref<400x2048xbf16, #tpu.memory_space<vmem>>, %arg2: memref<16x400xbf16, #tpu.memory_space<vmem>>, %arg3: memref<16x1xf32, #tpu.memory_space<vmem>>, %arg4: memref<16x1xf32, #tpu.memory_space<vmem>>, %arg5: memref<16x1xf32, #tpu.memory_space<vmem>>, %arg6: memref<16x512xbf16, #tpu.memory_space<vmem>>) attributes {dimension_semantics = [#tpu.dimension_semantics<parallel>], iteration_bounds = array<i64: 2>, scalar_prefetch = 0 : i64, scratch_operands = 0 : i64, tpu.core_type = #tpu.core_type<tc>, window_params = [{pipeline_mode = #tpu.pipeline_mode<synchronous>, transform_indices = @transform_0, window_bounds = array<i64: 400, 2048>}, {transform_indices = @transform_1, window_bounds = array<i64: 16, 400>}, {transform_indices = @transform_2, window_bounds = array<i64: 16, 1>}, {transform_indices = @transform_3, window_bounds = array<i64: 16, 1>}, {transform_indices = @transform_4, window_bounds = array<i64: 16, 1>}, {transform_indices = @transform_5, window_bounds = array<i64: 16, 512>}]} {
    %c0 = arith.constant 0 : index
    %c0_0 = arith.constant 0 : index
    %0 = vector.load %arg2[%c0, %c0_0] : memref<16x400xbf16, #tpu.memory_space<vmem>>, vector<16x400xbf16>
    %c0_1 = arith.constant 0 : index
    %c0_2 = arith.constant 0 : index
    %1 = vector.load %arg1[%c0_1, %c0_2] : memref<400x2048xbf16, #tpu.memory_space<vmem>>, vector<400x2048xbf16>
    %cst = arith.constant dense<0.000000e+00> : vector<16x2048xf32>
    %2 = tpu.matmul %0, %1, %cst {dimension_numbers = #tpu.dot_dimension_numbers<[1], [0], [0], [1], [0, 0, 1, 1], [], []>} : vector<16x400xbf16>, vector<400x2048xbf16>, vector<16x2048xf32> -> vector<16x2048xf32>
    %c0_3 = arith.constant 0 : index
    %c0_4 = arith.constant 0 : index
    %3 = vector.load %arg3[%c0_3, %c0_4] : memref<16x1xf32, #tpu.memory_space<vmem>>, vector<16x1xf32>
    %4 = vector.broadcast %3 : vector<16x1xf32> to vector<16x2048xf32>
    %5 = arith.addf %2, %4 : vector<16x2048xf32>
    %cst_5 = arith.constant dense<0.000000e+00> : vector<16xf32>
    %6 = vector.multi_reduction <add>, %5, %cst_5 [1] : vector<16x2048xf32> to vector<16xf32>
    %7 = vector.shape_cast %6 : vector<16xf32> to vector<16x1xf32>
    %cst_6 = arith.constant 4.8828125E-4 : f32
    %8 = vector.broadcast %cst_6 : f32 to vector<16x1xf32>
    %9 = arith.mulf %7, %8 : vector<16x1xf32>
    %10 = vector.broadcast %9 : vector<16x1xf32> to vector<16x2048xf32>
    %11 = arith.subf %5, %10 : vector<16x2048xf32>
    %12 = arith.mulf %11, %11 : vector<16x2048xf32>
    %cst_7 = arith.constant dense<0.000000e+00> : vector<16xf32>
    %13 = vector.multi_reduction <add>, %12, %cst_7 [1] : vector<16x2048xf32> to vector<16xf32>
    %14 = vector.shape_cast %13 : vector<16xf32> to vector<16x1xf32>
    %cst_8 = arith.constant 4.8828125E-4 : f32
    %15 = vector.broadcast %cst_8 : f32 to vector<16x1xf32>
    %16 = arith.mulf %14, %15 : vector<16x1xf32>
    %c0_9 = arith.constant 0 : index
    %c0_10 = arith.constant 0 : index
    %17 = vector.load %arg4[%c0_9, %c0_10] : memref<16x1xf32, #tpu.memory_space<vmem>>, vector<16x1xf32>
    %cst_11 = arith.constant 9.99999974E-6 : f32
    %18 = vector.broadcast %cst_11 : f32 to vector<16x1xf32>
    %19 = arith.addf %16, %18 : vector<16x1xf32>
    %20 = math.rsqrt %19 : vector<16x1xf32>
    %21 = arith.mulf %17, %20 : vector<16x1xf32>
    %c0_12 = arith.constant 0 : index
    %c0_13 = arith.constant 0 : index
    %22 = vector.load %arg5[%c0_12, %c0_13] : memref<16x1xf32, #tpu.memory_space<vmem>>, vector<16x1xf32>
    %23 = arith.mulf %9, %21 : vector<16x1xf32>
    %24 = arith.subf %22, %23 : vector<16x1xf32>
    %25 = vector.broadcast %21 : vector<16x1xf32> to vector<16x2048xf32>
    %26 = arith.mulf %5, %25 : vector<16x2048xf32>
    %27 = vector.broadcast %24 : vector<16x1xf32> to vector<16x2048xf32>
    %28 = arith.addf %26, %27 : vector<16x2048xf32>
    %cst_14 = arith.constant 0.000000e+00 : f32
    %29 = vector.broadcast %cst_14 : f32 to vector<16x2048xf32>
    %30 = arith.maximumf %28, %29 : vector<16x2048xf32>
    %31 = vector.extract_strided_slice %30 {offsets = [0, 0], sizes = [16, 512], strides = [1, 1]} : vector<16x2048xf32> to vector<16x512xf32>
    %32 = vector.extract_strided_slice %30 {offsets = [0, 512], sizes = [16, 512], strides = [1, 1]} : vector<16x2048xf32> to vector<16x512xf32>
    %33 = arith.maximumf %31, %32 : vector<16x512xf32>
    %34 = vector.extract_strided_slice %30 {offsets = [0, 1024], sizes = [16, 512], strides = [1, 1]} : vector<16x2048xf32> to vector<16x512xf32>
    %35 = arith.maximumf %33, %34 : vector<16x512xf32>
    %36 = vector.extract_strided_slice %30 {offsets = [0, 1536], sizes = [16, 512], strides = [1, 1]} : vector<16x2048xf32> to vector<16x512xf32>
    %37 = arith.maximumf %35, %36 : vector<16x512xf32>
    %38 = arith.truncf %37 : vector<16x512xf32> to vector<16x512xbf16>
    %c0_15 = arith.constant 0 : index
    %c0_16 = arith.constant 0 : index
    %39 = vector.load %arg6[%c0_15, %c0_16] : memref<16x512xbf16, #tpu.memory_space<vmem>>, vector<16x512xbf16>
    tpu.vector_store %arg6[%c0_15, %c0_16], %38 {strides = array<i32>} : memref<16x512xbf16, #tpu.memory_space<vmem>>, vector<16x512xbf16>,
    return
  }
  func.func @transform_0(%arg0: i32) -> (i32, i32) {
    %c0_i32 = arith.constant 0 : i32
    %c0_i32_0 = arith.constant 0 : i32
    %c0_i32_1 = arith.constant 0 : i32
    return %c0_i32, %c0_i32_0 : i32, i32
  }
  func.func @transform_1(%arg0: i32) -> (i32, i32) {
    %c0_i32 = arith.constant 0 : i32
    %c0_i32_0 = arith.constant 0 : i32
    return %arg0, %c0_i32 : i32, i32
  }
  func.func @transform_2(%arg0: i32) -> (i32, i32) {
    %c0_i32 = arith.constant 0 : i32
    %c0_i32_0 = arith.constant 0 : i32
    return %arg0, %c0_i32 : i32, i32
  }
  func.func @transform_3(%arg0: i32) -> (i32, i32) {
    %c0_i32 = arith.constant 0 : i32
    %c0_i32_0 = arith.constant 0 : i32
    return %arg0, %c0_i32 : i32, i32
  }
  func.func @transform_4(%arg0: i32) -> (i32, i32) {
    %c0_i32 = arith.constant 0 : i32
    %c0_i32_0 = arith.constant 0 : i32
    return %arg0, %c0_i32 : i32, i32
  }
  func.func @transform_5(%arg0: i32) -> (i32, i32) {
    %c0_i32 = arith.constant 0 : i32
    %c0_i32_0 = arith.constant 0 : i32
    return %arg0, %c0_i32 : i32, i32
  }
}

module attributes {stable_mosaic.version = 11 : i64} {
  func.func @_mlp_head_kernel(%arg0: i32, %arg1: memref<2x8192xbf16, #tpu.memory_space<vmem>>, %arg2: memref<8192x120xbf16, #tpu.memory_space<vmem>>, %arg3: memref<1x120xf32, #tpu.memory_space<vmem>>, %arg4: memref<120x20xf32, #tpu.memory_space<vmem>>, %arg5: memref<1x20xf32, #tpu.memory_space<vmem>>, %arg6: memref<2x20xf32, #tpu.memory_space<vmem>>) attributes {dimension_semantics = [#tpu.dimension_semantics<arbitrary>], iteration_bounds = array<i64: 1>, scalar_prefetch = 0 : i64, scratch_operands = 0 : i64, tpu.core_type = #tpu.core_type<tc>, window_params = [{pipeline_mode = #tpu.pipeline_mode<synchronous>, transform_indices = @transform_0, window_bounds = array<i64: 2, 8192>}, {pipeline_mode = #tpu.pipeline_mode<synchronous>, transform_indices = @transform_1, window_bounds = array<i64: 8192, 120>}, {pipeline_mode = #tpu.pipeline_mode<synchronous>, transform_indices = @transform_2, window_bounds = array<i64: 1, 120>}, {pipeline_mode = #tpu.pipeline_mode<synchronous>, transform_indices = @transform_3, window_bounds = array<i64: 120, 20>}, {pipeline_mode = #tpu.pipeline_mode<synchronous>, transform_indices = @transform_4, window_bounds = array<i64: 1, 20>}, {pipeline_mode = #tpu.pipeline_mode<synchronous>, transform_indices = @transform_5, window_bounds = array<i64: 2, 20>}]} {
    %c0 = arith.constant 0 : index
    %c0_0 = arith.constant 0 : index
    %0 = vector.load %arg1[%c0, %c0_0] : memref<2x8192xbf16, #tpu.memory_space<vmem>>, vector<2x8192xbf16>
    %c0_1 = arith.constant 0 : index
    %c0_2 = arith.constant 0 : index
    %1 = vector.load %arg2[%c0_1, %c0_2] : memref<8192x120xbf16, #tpu.memory_space<vmem>>, vector<8192x120xbf16>
    %cst = arith.constant dense<0.000000e+00> : vector<2x120xf32>
    %2 = tpu.matmul %0, %1, %cst {dimension_numbers = #tpu.dot_dimension_numbers<[1], [0], [0], [1], [0, 0, 1, 1], [], []>} : vector<2x8192xbf16>, vector<8192x120xbf16>, vector<2x120xf32> -> vector<2x120xf32>
    %c0_3 = arith.constant 0 : index
    %c0_4 = arith.constant 0 : index
    %3 = vector.load %arg3[%c0_3, %c0_4] : memref<1x120xf32, #tpu.memory_space<vmem>>, vector<1x120xf32>
    %4 = vector.broadcast %3 : vector<1x120xf32> to vector<2x120xf32>
    %5 = arith.addf %2, %4 : vector<2x120xf32>
    %cst_5 = arith.constant 0.000000e+00 : f32
    %6 = vector.broadcast %cst_5 : f32 to vector<2x120xf32>
    %7 = arith.maximumf %5, %6 : vector<2x120xf32>
    %c0_6 = arith.constant 0 : index
    %c0_7 = arith.constant 0 : index
    %8 = vector.load %arg4[%c0_6, %c0_7] : memref<120x20xf32, #tpu.memory_space<vmem>>, vector<120x20xf32>
    %cst_8 = arith.constant dense<0.000000e+00> : vector<2x20xf32>
    %9 = tpu.matmul %7, %8, %cst_8 {dimension_numbers = #tpu.dot_dimension_numbers<[1], [0], [0], [1], [0, 0, 1, 1], [], []>} : vector<2x120xf32>, vector<120x20xf32>, vector<2x20xf32> -> vector<2x20xf32>
    %c0_9 = arith.constant 0 : index
    %c0_10 = arith.constant 0 : index
    %10 = vector.load %arg5[%c0_9, %c0_10] : memref<1x20xf32, #tpu.memory_space<vmem>>, vector<1x20xf32>
    %11 = vector.broadcast %10 : vector<1x20xf32> to vector<2x20xf32>
    %12 = arith.addf %9, %11 : vector<2x20xf32>
    %cst_11 = arith.constant 0.000000e+00 : f32
    %13 = vector.broadcast %cst_11 : f32 to vector<2x20xf32>
    %14 = arith.maximumf %12, %13 : vector<2x20xf32>
    %c0_12 = arith.constant 0 : index
    %c0_13 = arith.constant 0 : index
    %15 = vector.load %arg6[%c0_12, %c0_13] : memref<2x20xf32, #tpu.memory_space<vmem>>, vector<2x20xf32>
    tpu.vector_store %arg6[%c0_12, %c0_13], %14 {strides = array<i32>} : memref<2x20xf32, #tpu.memory_space<vmem>>, vector<2x20xf32>,
    return
  }
  func.func @transform_0(%arg0: i32) -> (i32, i32) {
    %c0_i32 = arith.constant 0 : i32
    %c0_i32_0 = arith.constant 0 : i32
    %c0_i32_1 = arith.constant 0 : i32
    return %c0_i32, %c0_i32_0 : i32, i32
  }
  func.func @transform_1(%arg0: i32) -> (i32, i32) {
    %c0_i32 = arith.constant 0 : i32
    %c0_i32_0 = arith.constant 0 : i32
    %c0_i32_1 = arith.constant 0 : i32
    return %c0_i32, %c0_i32_0 : i32, i32
  }
  func.func @transform_2(%arg0: i32) -> (i32, i32) {
    %c0_i32 = arith.constant 0 : i32
    %c0_i32_0 = arith.constant 0 : i32
    %c0_i32_1 = arith.constant 0 : i32
    return %c0_i32, %c0_i32_0 : i32, i32
  }
  func.func @transform_3(%arg0: i32) -> (i32, i32) {
    %c0_i32 = arith.constant 0 : i32
    %c0_i32_0 = arith.constant 0 : i32
    %c0_i32_1 = arith.constant 0 : i32
    return %c0_i32, %c0_i32_0 : i32, i32
  }
  func.func @transform_4(%arg0: i32) -> (i32, i32) {
    %c0_i32 = arith.constant 0 : i32
    %c0_i32_0 = arith.constant 0 : i32
    %c0_i32_1 = arith.constant 0 : i32
    return %c0_i32, %c0_i32_0 : i32, i32
  }
  func.func @transform_5(%arg0: i32) -> (i32, i32) {
    %c0_i32 = arith.constant 0 : i32
    %c0_i32_0 = arith.constant 0 : i32
    %c0_i32_1 = arith.constant 0 : i32
    return %c0_i32, %c0_i32_0 : i32, i32
  }
}

module attributes {stable_mosaic.version = 11 : i64} {
  func.func @_linear_kernel(%arg0: i32, %arg1: memref<2x20xf32, #tpu.memory_space<vmem>>, %arg2: memref<20x11xf32, #tpu.memory_space<vmem>>, %arg3: memref<1x11xf32, #tpu.memory_space<vmem>>, %arg4: memref<2x11xf32, #tpu.memory_space<vmem>>) attributes {dimension_semantics = [#tpu.dimension_semantics<arbitrary>], iteration_bounds = array<i64: 1>, scalar_prefetch = 0 : i64, scratch_operands = 0 : i64, tpu.core_type = #tpu.core_type<tc>, window_params = [{pipeline_mode = #tpu.pipeline_mode<synchronous>, transform_indices = @transform_0, window_bounds = array<i64: 2, 20>}, {pipeline_mode = #tpu.pipeline_mode<synchronous>, transform_indices = @transform_1, window_bounds = array<i64: 20, 11>}, {pipeline_mode = #tpu.pipeline_mode<synchronous>, transform_indices = @transform_2, window_bounds = array<i64: 1, 11>}, {pipeline_mode = #tpu.pipeline_mode<synchronous>, transform_indices = @transform_3, window_bounds = array<i64: 2, 11>}]} {
    %c0 = arith.constant 0 : index
    %c0_0 = arith.constant 0 : index
    %0 = vector.load %arg1[%c0, %c0_0] : memref<2x20xf32, #tpu.memory_space<vmem>>, vector<2x20xf32>
    %c0_1 = arith.constant 0 : index
    %c0_2 = arith.constant 0 : index
    %1 = vector.load %arg2[%c0_1, %c0_2] : memref<20x11xf32, #tpu.memory_space<vmem>>, vector<20x11xf32>
    %cst = arith.constant dense<0.000000e+00> : vector<2x11xf32>
    %2 = tpu.matmul %0, %1, %cst {dimension_numbers = #tpu.dot_dimension_numbers<[1], [0], [0], [1], [0, 0, 1, 1], [], []>} : vector<2x20xf32>, vector<20x11xf32>, vector<2x11xf32> -> vector<2x11xf32>
    %c0_3 = arith.constant 0 : index
    %c0_4 = arith.constant 0 : index
    %3 = vector.load %arg3[%c0_3, %c0_4] : memref<1x11xf32, #tpu.memory_space<vmem>>, vector<1x11xf32>
    %4 = vector.broadcast %3 : vector<1x11xf32> to vector<2x11xf32>
    %5 = arith.addf %2, %4 : vector<2x11xf32>
    %c0_5 = arith.constant 0 : index
    %c0_6 = arith.constant 0 : index
    %6 = vector.load %arg4[%c0_5, %c0_6] : memref<2x11xf32, #tpu.memory_space<vmem>>, vector<2x11xf32>
    tpu.vector_store %arg4[%c0_5, %c0_6], %5 {strides = array<i32>} : memref<2x11xf32, #tpu.memory_space<vmem>>, vector<2x11xf32>,
    return
  }
  func.func @transform_0(%arg0: i32) -> (i32, i32) {
    %c0_i32 = arith.constant 0 : i32
    %c0_i32_0 = arith.constant 0 : i32
    %c0_i32_1 = arith.constant 0 : i32
    return %c0_i32, %c0_i32_0 : i32, i32
  }
  func.func @transform_1(%arg0: i32) -> (i32, i32) {
    %c0_i32 = arith.constant 0 : i32
    %c0_i32_0 = arith.constant 0 : i32
    %c0_i32_1 = arith.constant 0 : i32
    return %c0_i32, %c0_i32_0 : i32, i32
  }
  func.func @transform_2(%arg0: i32) -> (i32, i32) {
    %c0_i32 = arith.constant 0 : i32
    %c0_i32_0 = arith.constant 0 : i32
    %c0_i32_1 = arith.constant 0 : i32
    return %c0_i32, %c0_i32_0 : i32, i32
  }
  func.func @transform_3(%arg0: i32) -> (i32, i32) {
    %c0_i32 = arith.constant 0 : i32
    %c0_i32_0 = arith.constant 0 : i32
    %c0_i32_1 = arith.constant 0 : i32
    return %c0_i32, %c0_i32_0 : i32, i32
  }
}

</mosaic_0001>

<llo_original>
// kernel: net_forward.4
$region0: #{net_forward.4}
  #allocation0 [shape = 'u32[]', space=smem, size = 0x4, offset = 0x4, fixed_abs, tag = 'smem constant byte address 0x4 - core index']
  #allocation1 [shape = 'u32[144,128]{1,0:T(1,128)}', space=vmem, size = 0x12000, scoped, tag = 'internal scratch']
  %s0 = inlined_call_operand.vmem [shape: bf16[75,8192], index: 0, kind: input, shape index: {}]
  %s1 = inlined_call_operand.vmem [shape: bf16[16,75], index: 1, kind: input, shape index: {}]
  %s2 = inlined_call_operand.vmem [shape: f32[16,1], index: 2, kind: input, shape index: {}]
  %s3 = inlined_call_operand.vmem [shape: f32[16,1], index: 3, kind: input, shape index: {}]
  %s4 = inlined_call_operand.vmem [shape: f32[16,1], index: 4, kind: input, shape index: {}]
  %s5 = inlined_call_operand.vmem [shape: bf16[16,2048], index: 5, kind: output, shape index: {}]
  %s6 = sld [smem:[#allocation0]]
  $region30: #{net_forward.4} parent=0
    _
  %s8 = ssub.s32 1, %s6
  %s9 = scalar_select 0, %s8, %s6
  // Predicated region
  $region2: #{net_forward.4} parent=0 // pred_check
    _
  $region3: #{net_forward.4} parent=0 // pred_check_branch
    %11 = sbr.rel (0) target = $region5
  $region4: #{net_forward.4} parent=0 // pred_region
    _
  $region5: #{net_forward.4} parent=0 // pred_fallthru
    _
  // Predicated region
  $region6: #{net_forward.4} parent=0 // pred_check
    _
  $region7: #{net_forward.4} parent=0 // pred_check_branch
    %13 = sbr.rel (0) target = $region9
  $region8: #{net_forward.4} parent=0 // pred_region
    _
  $region9: #{net_forward.4} parent=0 // pred_fallthru
    _
  // Predicated region
  $region10: #{net_forward.4} parent=0 // pred_check
    _
  $region11: #{net_forward.4} parent=0 // pred_check_branch
    %15 = sbr.rel (0) target = $region13
  $region12: #{net_forward.4} parent=0 // pred_region
    _
  $region13: #{net_forward.4} parent=0 // pred_fallthru
    _
  // Predicated region
  $region14: #{net_forward.4} parent=0 // pred_check
    _
  $region15: #{net_forward.4} parent=0 // pred_check_branch
    %17 = sbr.rel (0) target = $region17
  $region16: #{net_forward.4} parent=0 // pred_region
    _
  $region17: #{net_forward.4} parent=0 // pred_fallthru
    _
  // Predicated region
  $region18: #{net_forward.4} parent=0 // pred_check
    _
  $region19: #{net_forward.4} parent=0 // pred_check_branch
    %19 = sbr.rel (0) target = $region21
  $region20: #{net_forward.4} parent=0 // pred_region
    _
  $region21: #{net_forward.4} parent=0 // pred_fallthru
    _
  %v21 = vld [vmem:[%s1] sm:$0xf]
  %v22 = vld [vmem:[%s1 + $0x4] sm:$0xf]
  %v23 = vld [vmem:[%s0] sm:$0xff]
  %v24 = vld [vmem:[%s0 + $0x8] sm:$0xff]
  %v25 = vld [vmem:[%s0 + $0x10] sm:$0xff]
  %v26 = vld [vmem:[%s0 + $0x18] sm:$0xff]
  %v27 = vld [vmem:[%s0 + $0x20] sm:$0xff]
  %v28 = vld [vmem:[%s0 + $0x28] sm:$0xff]
  %v29 = vld [vmem:[%s0 + $0x30] sm:$0xff]
  %v30 = vld [vmem:[%s0 + $0x38] sm:$0xff]
  %v31 = vld [vmem:[%s0 + $0x40] sm:$0xff]
  %v32 = vld [vmem:[%s0 + $0x48] sm:$0xff]
  %v33 = vld [vmem:[%s0 + $0x50] sm:$0xff]
  %v34 = vld [vmem:[%s0 + $0x58] sm:$0xff]
  %v35 = vld [vmem:[%s0 + $0x60] sm:$0xff]
  %v36 = vld [vmem:[%s0 + $0x68] sm:$0xff]
  %v37 = vld [vmem:[%s0 + $0x70] sm:$0xff]
  %v38 = vld [vmem:[%s0 + $0x78] sm:$0xff]
  %v39 = vld [vmem:[%s0 + $0x80] sm:$0xff]
  %v40 = vld [vmem:[%s0 + $0x88] sm:$0xff]
  %v41 = vld [vmem:[%s0 + $0x90] sm:$0xff]
  %v42 = vld [vmem:[%s0 + $0x98] sm:$0xff]
  %v43 = vld [vmem:[%s0 + $0xa0] sm:$0xff]
  %v44 = vld [vmem:[%s0 + $0xa8] sm:$0xff]
  %v45 = vld [vmem:[%s0 + $0xb0] sm:$0xff]
  %v46 = vld [vmem:[%s0 + $0xb8] sm:$0xff]
  %v47 = vld [vmem:[%s0 + $0xc0] sm:$0xff]
  %v48 = vld [vmem:[%s0 + $0xc8] sm:$0xff]
  %v49 = vld [vmem:[%s0 + $0xd0] sm:$0xff]
  %v50 = vld [vmem:[%s0 + $0xd8] sm:$0xff]
  %v51 = vld [vmem:[%s0 + $0xe0] sm:$0xff]
  %v52 = vld [vmem:[%s0 + $0xe8] sm:$0xff]
  %v53 = vld [vmem:[%s0 + $0xf0] sm:$0xff]
  %v54 = vld [vmem:[%s0 + $0xf8] sm:$0xff]
  %v55 = vld [vmem:[%s0 + $0x100] sm:$0xff]
  %v56 = vld [vmem:[%s0 + $0x108] sm:$0xff]
  %v57 = vld [vmem:[%s0 + $0x110] sm:$0xff]
  %v58 = vld [vmem:[%s0 + $0x118] sm:$0xff]
  %v59 = vld [vmem:[%s0 + $0x120] sm:$0xff]
  %v60 = vld [vmem:[%s0 + $0x128] sm:$0xff]
  %v61 = vld [vmem:[%s0 + $0x130] sm:$0xff]
  %v62 = vld [vmem:[%s0 + $0x138] sm:$0xff]
  %v63 = vld [vmem:[%s0 + $0x140] sm:$0xff]
  %v64 = vld [vmem:[%s0 + $0x148] sm:$0xff]
  %v65 = vld [vmem:[%s0 + $0x150] sm:$0xff]
  %v66 = vld [vmem:[%s0 + $0x158] sm:$0xff]
  %v67 = vld [vmem:[%s0 + $0x160] sm:$0xff]
  %v68 = vld [vmem:[%s0 + $0x168] sm:$0xff]
  %v69 = vld [vmem:[%s0 + $0x170] sm:$0xff]
  %v70 = vld [vmem:[%s0 + $0x178] sm:$0xff]
  %v71 = vld [vmem:[%s0 + $0x180] sm:$0xff]
  %v72 = vld [vmem:[%s0 + $0x188] sm:$0xff]
  %v73 = vld [vmem:[%s0 + $0x190] sm:$0xff]
  %v74 = vld [vmem:[%s0 + $0x198] sm:$0xff]
  %v75 = vld [vmem:[%s0 + $0x1a0] sm:$0xff]
  %v76 = vld [vmem:[%s0 + $0x1a8] sm:$0xff]
  %v77 = vld [vmem:[%s0 + $0x1b0] sm:$0xff]
  %v78 = vld [vmem:[%s0 + $0x1b8] sm:$0xff]
  %v79 = vld [vmem:[%s0 + $0x1c0] sm:$0xff]
  %v80 = vld [vmem:[%s0 + $0x1c8] sm:$0xff]
  %v81 = vld [vmem:[%s0 + $0x1d0] sm:$0xff]
  %v82 = vld [vmem:[%s0 + $0x1d8] sm:$0xff]
  %v83 = vld [vmem:[%s0 + $0x1e0] sm:$0xff]
  %v84 = vld [vmem:[%s0 + $0x1e8] sm:$0xff]
  %v85 = vld [vmem:[%s0 + $0x1f0] sm:$0xff]
  %v86 = vld [vmem:[%s0 + $0x1f8] sm:$0xff]
  %v87 = vld [vmem:[%s0 + $0x200] sm:$0xff]
  %v88 = vld [vmem:[%s0 + $0x208] sm:$0xff]
  %v89 = vld [vmem:[%s0 + $0x210] sm:$0xff]
  %v90 = vld [vmem:[%s0 + $0x218] sm:$0xff]
  %v91 = vld [vmem:[%s0 + $0x220] sm:$0xff]
  %v92 = vld [vmem:[%s0 + $0x228] sm:$0xff]
  %v93 = vld [vmem:[%s0 + $0x230] sm:$0xff]
  %v94 = vld [vmem:[%s0 + $0x238] sm:$0xff]
  %v95 = vld [vmem:[%s0 + $0x240] sm:$0xff]
  %v96 = vld [vmem:[%s0 + $0x248] sm:$0xff]
  %v97 = vld [vmem:[%s0 + $0x250] sm:$0xff]
  %v98 = vld [vmem:[%s0 + $0x258] sm:$0xff]
  %v99 = vld [vmem:[%s0 + $0x260] sm:$0xff]
  %v100 = vld [vmem:[%s0 + $0x268] sm:$0xff]
  %v101 = vld [vmem:[%s0 + $0x270] sm:$0xff]
  %v102 = vld [vmem:[%s0 + $0x278] sm:$0xff]
  %v103 = vld [vmem:[%s0 + $0x280] sm:$0xff]
  %v104 = vld [vmem:[%s0 + $0x288] sm:$0xff]
  %v105 = vld [vmem:[%s0 + $0x290] sm:$0xff]
  %v106 = vld [vmem:[%s0 + $0x298] sm:$0xff]
  %v107 = vld [vmem:[%s0 + $0x2a0] sm:$0xff]
  %v108 = vld [vmem:[%s0 + $0x2a8] sm:$0xff]
  %v109 = vld [vmem:[%s0 + $0x2b0] sm:$0xff]
  %v110 = vld [vmem:[%s0 + $0x2b8] sm:$0xff]
  %v111 = vld [vmem:[%s0 + $0x2c0] sm:$0xff]
  %v112 = vld [vmem:[%s0 + $0x2c8] sm:$0xff]
  %v113 = vld [vmem:[%s0 + $0x2d0] sm:$0xff]
  %v114 = vld [vmem:[%s0 + $0x2d8] sm:$0xff]
  %v115 = vld [vmem:[%s0 + $0x2e0] sm:$0xff]
  %v116 = vld [vmem:[%s0 + $0x2e8] sm:$0xff]
  %v117 = vld [vmem:[%s0 + $0x2f0] sm:$0xff]
  %v118 = vld [vmem:[%s0 + $0x2f8] sm:$0xff]
  %v119 = vld [vmem:[%s0 + $0x300] sm:$0xff]
  %v120 = vld [vmem:[%s0 + $0x308] sm:$0xff]
  %v121 = vld [vmem:[%s0 + $0x310] sm:$0xff]
  %v122 = vld [vmem:[%s0 + $0x318] sm:$0xff]
  %v123 = vld [vmem:[%s0 + $0x320] sm:$0xff]
  %v124 = vld [vmem:[%s0 + $0x328] sm:$0xff]
  %v125 = vld [vmem:[%s0 + $0x330] sm:$0xff]
  %v126 = vld [vmem:[%s0 + $0x338] sm:$0xff]
  %v127 = vld [vmem:[%s0 + $0x340] sm:$0xff]
  %v128 = vld [vmem:[%s0 + $0x348] sm:$0xff]
  %v129 = vld [vmem:[%s0 + $0x350] sm:$0xff]
  %v130 = vld [vmem:[%s0 + $0x358] sm:$0xff]
  %v131 = vld [vmem:[%s0 + $0x360] sm:$0xff]
  %v132 = vld [vmem:[%s0 + $0x368] sm:$0xff]
  %v133 = vld [vmem:[%s0 + $0x370] sm:$0xff]
  %v134 = vld [vmem:[%s0 + $0x378] sm:$0xff]
  %v135 = vld [vmem:[%s0 + $0x380] sm:$0xff]
  %v136 = vld [vmem:[%s0 + $0x388] sm:$0xff]
  %v137 = vld [vmem:[%s0 + $0x390] sm:$0xff]
  %v138 = vld [vmem:[%s0 + $0x398] sm:$0xff]
  %v139 = vld [vmem:[%s0 + $0x3a0] sm:$0xff]
  %v140 = vld [vmem:[%s0 + $0x3a8] sm:$0xff]
  %v141 = vld [vmem:[%s0 + $0x3b0] sm:$0xff]
  %v142 = vld [vmem:[%s0 + $0x3b8] sm:$0xff]
  %v143 = vld [vmem:[%s0 + $0x3c0] sm:$0xff]
  %v144 = vld [vmem:[%s0 + $0x3c8] sm:$0xff]
  %v145 = vld [vmem:[%s0 + $0x3d0] sm:$0xff]
  %v146 = vld [vmem:[%s0 + $0x3d8] sm:$0xff]
  %v147 = vld [vmem:[%s0 + $0x3e0] sm:$0xff]
  %v148 = vld [vmem:[%s0 + $0x3e8] sm:$0xff]
  %v149 = vld [vmem:[%s0 + $0x3f0] sm:$0xff]
  %v150 = vld [vmem:[%s0 + $0x3f8] sm:$0xff]
  %v151 = vld [vmem:[%s0 + $0x400] sm:$0xff]
  %v152 = vld [vmem:[%s0 + $0x408] sm:$0xff]
  %v153 = vld [vmem:[%s0 + $0x410] sm:$0xff]
  %v154 = vld [vmem:[%s0 + $0x418] sm:$0xff]
  %v155 = vld [vmem:[%s0 + $0x420] sm:$0xff]
  %v156 = vld [vmem:[%s0 + $0x428] sm:$0xff]
  %v157 = vld [vmem:[%s0 + $0x430] sm:$0xff]
  %v158 = vld [vmem:[%s0 + $0x438] sm:$0xff]
  %v159 = vld [vmem:[%s0 + $0x440] sm:$0xff]
  %v160 = vld [vmem:[%s0 + $0x448] sm:$0xff]
  %v161 = vld [vmem:[%s0 + $0x450] sm:$0xff]
  %v162 = vld [vmem:[%s0 + $0x458] sm:$0xff]
  %v163 = vld [vmem:[%s0 + $0x460] sm:$0xff]
  %v164 = vld [vmem:[%s0 + $0x468] sm:$0xff]
  %v165 = vld [vmem:[%s0 + $0x470] sm:$0xff]
  %v166 = vld [vmem:[%s0 + $0x478] sm:$0xff]
  %v167 = vld [vmem:[%s0 + $0x480] sm:$0xff]
  %v168 = vld [vmem:[%s0 + $0x488] sm:$0xff]
  %v169 = vld [vmem:[%s0 + $0x490] sm:$0xff]
  %v170 = vld [vmem:[%s0 + $0x498] sm:$0xff]
  %v171 = vld [vmem:[%s0 + $0x4a0] sm:$0xff]
  %v172 = vld [vmem:[%s0 + $0x4a8] sm:$0xff]
  %v173 = vld [vmem:[%s0 + $0x4b0] sm:$0xff]
  %v174 = vld [vmem:[%s0 + $0x4b8] sm:$0xff]
  %v175 = vld [vmem:[%s0 + $0x4c0] sm:$0xff]
  %v176 = vld [vmem:[%s0 + $0x4c8] sm:$0xff]
  %v177 = vld [vmem:[%s0 + $0x4d0] sm:$0xff]
  %v178 = vld [vmem:[%s0 + $0x4d8] sm:$0xff]
  %v179 = vld [vmem:[%s0 + $0x4e0] sm:$0xff]
  %v180 = vld [vmem:[%s0 + $0x4e8] sm:$0xff]
  %v181 = vld [vmem:[%s0 + $0x4f0] sm:$0xff]
  %v182 = vld [vmem:[%s0 + $0x4f8] sm:$0xff]
  %v183 = vld [vmem:[%s0 + $0x500] sm:$0xff]
  %v184 = vld [vmem:[%s0 + $0x508] sm:$0xff]
  %v185 = vld [vmem:[%s0 + $0x510] sm:$0xff]
  %v186 = vld [vmem:[%s0 + $0x518] sm:$0xff]
  %v187 = vld [vmem:[%s0 + $0x520] sm:$0xff]
  %v188 = vld [vmem:[%s0 + $0x528] sm:$0xff]
  %v189 = vld [vmem:[%s0 + $0x530] sm:$0xff]
  %v190 = vld [vmem:[%s0 + $0x538] sm:$0xff]
  %v191 = vld [vmem:[%s0 + $0x540] sm:$0xff]
  %v192 = vld [vmem:[%s0 + $0x548] sm:$0xff]
  %v193 = vld [vmem:[%s0 + $0x550] sm:$0xff]
  %v194 = vld [vmem:[%s0 + $0x558] sm:$0xff]
  %v195 = vld [vmem:[%s0 + $0x560] sm:$0xff]
  %v196 = vld [vmem:[%s0 + $0x568] sm:$0xff]
  %v197 = vld [vmem:[%s0 + $0x570] sm:$0xff]
  %v198 = vld [vmem:[%s0 + $0x578] sm:$0xff]
  %v199 = vld [vmem:[%s0 + $0x580] sm:$0xff]
  %v200 = vld [vmem:[%s0 + $0x588] sm:$0xff]
  %v201 = vld [vmem:[%s0 + $0x590] sm:$0xff]
  %v202 = vld [vmem:[%s0 + $0x598] sm:$0xff]
  %v203 = vld [vmem:[%s0 + $0x5a0] sm:$0xff]
  %v204 = vld [vmem:[%s0 + $0x5a8] sm:$0xff]
  %v205 = vld [vmem:[%s0 + $0x5b0] sm:$0xff]
  %v206 = vld [vmem:[%s0 + $0x5b8] sm:$0xff]
  %v207 = vld [vmem:[%s0 + $0x5c0] sm:$0xff]
  %v208 = vld [vmem:[%s0 + $0x5c8] sm:$0xff]
  %v209 = vld [vmem:[%s0 + $0x5d0] sm:$0xff]
  %v210 = vld [vmem:[%s0 + $0x5d8] sm:$0xff]
  %v211 = vld [vmem:[%s0 + $0x5e0] sm:$0xff]
  %v212 = vld [vmem:[%s0 + $0x5e8] sm:$0xff]
  %v213 = vld [vmem:[%s0 + $0x5f0] sm:$0xff]
  %v214 = vld [vmem:[%s0 + $0x5f8] sm:$0xff]
  %v215 = vld [vmem:[%s0 + $0x600] sm:$0xff]
  %v216 = vld [vmem:[%s0 + $0x608] sm:$0xff]
  %v217 = vld [vmem:[%s0 + $0x610] sm:$0xff]
  %v218 = vld [vmem:[%s0 + $0x618] sm:$0xff]
  %v219 = vld [vmem:[%s0 + $0x620] sm:$0xff]
  %v220 = vld [vmem:[%s0 + $0x628] sm:$0xff]
  %v221 = vld [vmem:[%s0 + $0x630] sm:$0xff]
  %v222 = vld [vmem:[%s0 + $0x638] sm:$0xff]
  %v223 = vld [vmem:[%s0 + $0x640] sm:$0xff]
  %v224 = vld [vmem:[%s0 + $0x648] sm:$0xff]
  %v225 = vld [vmem:[%s0 + $0x650] sm:$0xff]
  %v226 = vld [vmem:[%s0 + $0x658] sm:$0xff]
  %v227 = vld [vmem:[%s0 + $0x660] sm:$0xff]
  %v228 = vld [vmem:[%s0 + $0x668] sm:$0xff]
  %v229 = vld [vmem:[%s0 + $0x670] sm:$0xff]
  %v230 = vld [vmem:[%s0 + $0x678] sm:$0xff]
  %v231 = vld [vmem:[%s0 + $0x680] sm:$0xff]
  %v232 = vld [vmem:[%s0 + $0x688] sm:$0xff]
  %v233 = vld [vmem:[%s0 + $0x690] sm:$0xff]
  %v234 = vld [vmem:[%s0 + $0x698] sm:$0xff]
  %v235 = vld [vmem:[%s0 + $0x6a0] sm:$0xff]
  %v236 = vld [vmem:[%s0 + $0x6a8] sm:$0xff]
  %v237 = vld [vmem:[%s0 + $0x6b0] sm:$0xff]
  %v238 = vld [vmem:[%s0 + $0x6b8] sm:$0xff]
  %v239 = vld [vmem:[%s0 + $0x6c0] sm:$0xff]
  %v240 = vld [vmem:[%s0 + $0x6c8] sm:$0xff]
  %v241 = vld [vmem:[%s0 + $0x6d0] sm:$0xff]
  %v242 = vld [vmem:[%s0 + $0x6d8] sm:$0xff]
  %v243 = vld [vmem:[%s0 + $0x6e0] sm:$0xff]
  %v244 = vld [vmem:[%s0 + $0x6e8] sm:$0xff]
  %v245 = vld [vmem:[%s0 + $0x6f0] sm:$0xff]
  %v246 = vld [vmem:[%s0 + $0x6f8] sm:$0xff]
  %v247 = vld [vmem:[%s0 + $0x700] sm:$0xff]
  %v248 = vld [vmem:[%s0 + $0x708] sm:$0xff]
  %v249 = vld [vmem:[%s0 + $0x710] sm:$0xff]
  %v250 = vld [vmem:[%s0 + $0x718] sm:$0xff]
  %v251 = vld [vmem:[%s0 + $0x720] sm:$0xff]
  %v252 = vld [vmem:[%s0 + $0x728] sm:$0xff]
  %v253 = vld [vmem:[%s0 + $0x730] sm:$0xff]
  %v254 = vld [vmem:[%s0 + $0x738] sm:$0xff]
  %v255 = vld [vmem:[%s0 + $0x740] sm:$0xff]
  %v256 = vld [vmem:[%s0 + $0x748] sm:$0xff]
  %v257 = vld [vmem:[%s0 + $0x750] sm:$0xff]
  %v258 = vld [vmem:[%s0 + $0x758] sm:$0xff]
  %v259 = vld [vmem:[%s0 + $0x760] sm:$0xff]
  %v260 = vld [vmem:[%s0 + $0x768] sm:$0xff]
  %v261 = vld [vmem:[%s0 + $0x770] sm:$0xff]
  %v262 = vld [vmem:[%s0 + $0x778] sm:$0xff]
  %v263 = vld [vmem:[%s0 + $0x780] sm:$0xff]
  %v264 = vld [vmem:[%s0 + $0x788] sm:$0xff]
  %v265 = vld [vmem:[%s0 + $0x790] sm:$0xff]
  %v266 = vld [vmem:[%s0 + $0x798] sm:$0xff]
  %v267 = vld [vmem:[%s0 + $0x7a0] sm:$0xff]
  %v268 = vld [vmem:[%s0 + $0x7a8] sm:$0xff]
  %v269 = vld [vmem:[%s0 + $0x7b0] sm:$0xff]
  %v270 = vld [vmem:[%s0 + $0x7b8] sm:$0xff]
  %v271 = vld [vmem:[%s0 + $0x7c0] sm:$0xff]
  %v272 = vld [vmem:[%s0 + $0x7c8] sm:$0xff]
  %v273 = vld [vmem:[%s0 + $0x7d0] sm:$0xff]
  %v274 = vld [vmem:[%s0 + $0x7d8] sm:$0xff]
  %v275 = vld [vmem:[%s0 + $0x7e0] sm:$0xff]
  %v276 = vld [vmem:[%s0 + $0x7e8] sm:$0xff]
  %v277 = vld [vmem:[%s0 + $0x7f0] sm:$0xff]
  %v278 = vld [vmem:[%s0 + $0x7f8] sm:$0xff]
  %v279 = vld [vmem:[%s0 + $0x800] sm:$0xff]
  %v280 = vld [vmem:[%s0 + $0x808] sm:$0xff]
  %v281 = vld [vmem:[%s0 + $0x810] sm:$0xff]
  %v282 = vld [vmem:[%s0 + $0x818] sm:$0xff]
  %v283 = vld [vmem:[%s0 + $0x820] sm:$0xff]
  %v284 = vld [vmem:[%s0 + $0x828] sm:$0xff]
  %v285 = vld [vmem:[%s0 + $0x830] sm:$0xff]
  %v286 = vld [vmem:[%s0 + $0x838] sm:$0xff]
  %v287 = vld [vmem:[%s0 + $0x840] sm:$0xff]
  %v288 = vld [vmem:[%s0 + $0x848] sm:$0xff]
  %v289 = vld [vmem:[%s0 + $0x850] sm:$0xff]
  %v290 = vld [vmem:[%s0 + $0x858] sm:$0xff]
  %v291 = vld [vmem:[%s0 + $0x860] sm:$0xff]
  %v292 = vld [vmem:[%s0 + $0x868] sm:$0xff]
  %v293 = vld [vmem:[%s0 + $0x870] sm:$0xff]
  %v294 = vld [vmem:[%s0 + $0x878] sm:$0xff]
  %v295 = vld [vmem:[%s0 + $0x880] sm:$0xff]
  %v296 = vld [vmem:[%s0 + $0x888] sm:$0xff]
  %v297 = vld [vmem:[%s0 + $0x890] sm:$0xff]
  %v298 = vld [vmem:[%s0 + $0x898] sm:$0xff]
  %v299 = vld [vmem:[%s0 + $0x8a0] sm:$0xff]
  %v300 = vld [vmem:[%s0 + $0x8a8] sm:$0xff]
  %v301 = vld [vmem:[%s0 + $0x8b0] sm:$0xff]
  %v302 = vld [vmem:[%s0 + $0x8b8] sm:$0xff]
  %v303 = vld [vmem:[%s0 + $0x8c0] sm:$0xff]
  %v304 = vld [vmem:[%s0 + $0x8c8] sm:$0xff]
  %v305 = vld [vmem:[%s0 + $0x8d0] sm:$0xff]
  %v306 = vld [vmem:[%s0 + $0x8d8] sm:$0xff]
  %v307 = vld [vmem:[%s0 + $0x8e0] sm:$0xff]
  %v308 = vld [vmem:[%s0 + $0x8e8] sm:$0xff]
  %v309 = vld [vmem:[%s0 + $0x8f0] sm:$0xff]
  %v310 = vld [vmem:[%s0 + $0x8f8] sm:$0xff]
  %v311 = vld [vmem:[%s0 + $0x900] sm:$0x33]
  %v312 = vld [vmem:[%s0 + $0x908] sm:$0x33]
  %v313 = vld [vmem:[%s0 + $0x910] sm:$0x33]
  %v314 = vld [vmem:[%s0 + $0x918] sm:$0x33]
  %v315 = vld [vmem:[%s0 + $0x920] sm:$0x33]
  %v316 = vld [vmem:[%s0 + $0x928] sm:$0x33]
  %v317 = vld [vmem:[%s0 + $0x930] sm:$0x33]
  %v318 = vld [vmem:[%s0 + $0x938] sm:$0x33]
  %v319 = vld [vmem:[%s0 + $0x940] sm:$0x33]
  %v320 = vld [vmem:[%s0 + $0x948] sm:$0x33]
  %v321 = vld [vmem:[%s0 + $0x950] sm:$0x33]
  %v322 = vld [vmem:[%s0 + $0x958] sm:$0x33]
  %v323 = vld [vmem:[%s0 + $0x960] sm:$0x33]
  %v324 = vld [vmem:[%s0 + $0x968] sm:$0x33]
  %v325 = vld [vmem:[%s0 + $0x970] sm:$0x33]
  %v326 = vld [vmem:[%s0 + $0x978] sm:$0x33]
  %v327 = vld [vmem:[%s0 + $0x980] sm:$0x33]
  %v328 = vld [vmem:[%s0 + $0x988] sm:$0x33]
  %v329 = vld [vmem:[%s0 + $0x990] sm:$0x33]
  %v330 = vld [vmem:[%s0 + $0x998] sm:$0x33]
  %v331 = vld [vmem:[%s0 + $0x9a0] sm:$0x33]
  %v332 = vld [vmem:[%s0 + $0x9a8] sm:$0x33]
  %v333 = vld [vmem:[%s0 + $0x9b0] sm:$0x33]
  %v334 = vld [vmem:[%s0 + $0x9b8] sm:$0x33]
  %v335 = vld [vmem:[%s0 + $0x9c0] sm:$0x33]
  %v336 = vld [vmem:[%s0 + $0x9c8] sm:$0x33]
  %v337 = vld [vmem:[%s0 + $0x9d0] sm:$0x33]
  %v338 = vld [vmem:[%s0 + $0x9d8] sm:$0x33]
  %v339 = vld [vmem:[%s0 + $0x9e0] sm:$0x33]
  %v340 = vld [vmem:[%s0 + $0x9e8] sm:$0x33]
  %v341 = vld [vmem:[%s0 + $0x9f0] sm:$0x33]
  %v342 = vld [vmem:[%s0 + $0x9f8] sm:$0x33]
  %v343 = vld [vmem:[%s2] sm:$0xff]
  %v344 = vld [vmem:[%s2 + $0x8] sm:$0xff]
  %346 = vset.pattern.permute.xlu0 0
  %347 = vperm.xlu0 %346, %v343
  %v348 = vpop.permute.xlu0 %347
  %351 = vset.pattern.permute.xlu0 0
  %352 = vperm.xlu0 %351, %v344
  %v353 = vpop.permute.xlu0 %352
  %v357 = vunpack.c.l.b16 %v21
  %v358 = vunpack.c.l.b16 %v22
  %v359 = vpack.c.b16 %v358, %v357
  %v680 = vunpack.c.l.b16 %v23
  %v681 = vunpack.c.h.b16 %v23
  %v682 = vunpack.c.l.b16 %v24
  %v683 = vunpack.c.h.b16 %v24
  %v684 = vunpack.c.l.b16 %v25
  %v685 = vunpack.c.h.b16 %v25
  %v686 = vunpack.c.l.b16 %v26
  %v687 = vunpack.c.h.b16 %v26
  %v688 = vunpack.c.l.b16 %v27
  %v689 = vunpack.c.h.b16 %v27
  %v690 = vunpack.c.l.b16 %v28
  %v691 = vunpack.c.h.b16 %v28
  %v692 = vunpack.c.l.b16 %v29
  %v693 = vunpack.c.h.b16 %v29
  %v694 = vunpack.c.l.b16 %v30
  %v695 = vunpack.c.h.b16 %v30
  %v696 = vunpack.c.l.b16 %v31
  %v697 = vunpack.c.h.b16 %v31
  %v698 = vunpack.c.l.b16 %v32
  %v699 = vunpack.c.h.b16 %v32
  %v700 = vunpack.c.l.b16 %v33
  %v701 = vunpack.c.h.b16 %v33
  %v702 = vunpack.c.l.b16 %v34
  %v703 = vunpack.c.h.b16 %v34
  %v704 = vunpack.c.l.b16 %v35
  %v705 = vunpack.c.h.b16 %v35
  %v706 = vunpack.c.l.b16 %v36
  %v707 = vunpack.c.h.b16 %v36
  %v708 = vunpack.c.l.b16 %v37
  %v709 = vunpack.c.h.b16 %v37
  %v710 = vunpack.c.l.b16 %v38
  %v711 = vunpack.c.h.b16 %v38
  %v712 = vunpack.c.l.b16 %v39
  %v713 = vunpack.c.h.b16 %v39
  %v714 = vunpack.c.l.b16 %v40
  %v715 = vunpack.c.h.b16 %v40
  %v716 = vunpack.c.l.b16 %v41
  %v717 = vunpack.c.h.b16 %v41
  %v718 = vunpack.c.l.b16 %v42
  %v719 = vunpack.c.h.b16 %v42
  %v720 = vunpack.c.l.b16 %v43
  %v721 = vunpack.c.h.b16 %v43
  %v722 = vunpack.c.l.b16 %v44
  %v723 = vunpack.c.h.b16 %v44
  %v724 = vunpack.c.l.b16 %v45
  %v725 = vunpack.c.h.b16 %v45
  %v726 = vunpack.c.l.b16 %v46
  %v727 = vunpack.c.h.b16 %v46
  %v728 = vunpack.c.l.b16 %v47
  %v729 = vunpack.c.h.b16 %v47
  %v730 = vunpack.c.l.b16 %v48
  %v731 = vunpack.c.h.b16 %v48
  %v732 = vunpack.c.l.b16 %v49
  %v733 = vunpack.c.h.b16 %v49
  %v734 = vunpack.c.l.b16 %v50
  %v735 = vunpack.c.h.b16 %v50
  %v736 = vunpack.c.l.b16 %v51
  %v737 = vunpack.c.h.b16 %v51
  %v738 = vunpack.c.l.b16 %v52
  %v739 = vunpack.c.h.b16 %v52
  %v740 = vunpack.c.l.b16 %v53
  %v741 = vunpack.c.h.b16 %v53
  %v742 = vunpack.c.l.b16 %v54
  %v743 = vunpack.c.h.b16 %v54
  %v744 = vunpack.c.l.b16 %v55
  %v745 = vunpack.c.h.b16 %v55
  %v746 = vunpack.c.l.b16 %v56
  %v747 = vunpack.c.h.b16 %v56
  %v748 = vunpack.c.l.b16 %v57
  %v749 = vunpack.c.h.b16 %v57
  %v750 = vunpack.c.l.b16 %v58
  %v751 = vunpack.c.h.b16 %v58
  %v752 = vunpack.c.l.b16 %v59
  %v753 = vunpack.c.h.b16 %v59
  %v754 = vunpack.c.l.b16 %v60
  %v755 = vunpack.c.h.b16 %v60
  %v756 = vunpack.c.l.b16 %v61
  %v757 = vunpack.c.h.b16 %v61
  %v758 = vunpack.c.l.b16 %v62
  %v759 = vunpack.c.h.b16 %v62
  %v760 = vunpack.c.l.b16 %v63
  %v761 = vunpack.c.h.b16 %v63
  %v762 = vunpack.c.l.b16 %v64
  %v763 = vunpack.c.h.b16 %v64
  %v764 = vunpack.c.l.b16 %v65
  %v765 = vunpack.c.h.b16 %v65
  %v766 = vunpack.c.l.b16 %v66
  %v767 = vunpack.c.h.b16 %v66
  %v768 = vunpack.c.l.b16 %v67
  %v769 = vunpack.c.h.b16 %v67
  %v770 = vunpack.c.l.b16 %v68
  %v771 = vunpack.c.h.b16 %v68
  %v772 = vunpack.c.l.b16 %v69
  %v773 = vunpack.c.h.b16 %v69
  %v774 = vunpack.c.l.b16 %v70
  %v775 = vunpack.c.h.b16 %v70
  %v776 = vunpack.c.l.b16 %v71
  %v777 = vunpack.c.h.b16 %v71
  %v778 = vunpack.c.l.b16 %v72
  %v779 = vunpack.c.h.b16 %v72
  %v780 = vunpack.c.l.b16 %v73
  %v781 = vunpack.c.h.b16 %v73
  %v782 = vunpack.c.l.b16 %v74
  %v783 = vunpack.c.h.b16 %v74
  %v784 = vunpack.c.l.b16 %v75
  %v785 = vunpack.c.h.b16 %v75
  %v786 = vunpack.c.l.b16 %v76
  %v787 = vunpack.c.h.b16 %v76
  %v788 = vunpack.c.l.b16 %v77
  %v789 = vunpack.c.h.b16 %v77
  %v790 = vunpack.c.l.b16 %v78
  %v791 = vunpack.c.h.b16 %v78
  %v792 = vunpack.c.l.b16 %v79
  %v793 = vunpack.c.h.b16 %v79
  %v794 = vunpack.c.l.b16 %v80
  %v795 = vunpack.c.h.b16 %v80
  %v796 = vunpack.c.l.b16 %v81
  %v797 = vunpack.c.h.b16 %v81
  %v798 = vunpack.c.l.b16 %v82
  %v799 = vunpack.c.h.b16 %v82
  %v800 = vunpack.c.l.b16 %v83
  %v801 = vunpack.c.h.b16 %v83
  %v802 = vunpack.c.l.b16 %v84
  %v803 = vunpack.c.h.b16 %v84
  %v804 = vunpack.c.l.b16 %v85
  %v805 = vunpack.c.h.b16 %v85
  %v806 = vunpack.c.l.b16 %v86
  %v807 = vunpack.c.h.b16 %v86
  %v808 = vunpack.c.l.b16 %v87
  %v809 = vunpack.c.h.b16 %v87
  %v810 = vunpack.c.l.b16 %v88
  %v811 = vunpack.c.h.b16 %v88
  %v812 = vunpack.c.l.b16 %v89
  %v813 = vunpack.c.h.b16 %v89
  %v814 = vunpack.c.l.b16 %v90
  %v815 = vunpack.c.h.b16 %v90
  %v816 = vunpack.c.l.b16 %v91
  %v817 = vunpack.c.h.b16 %v91
  %v818 = vunpack.c.l.b16 %v92
  %v819 = vunpack.c.h.b16 %v92
  %v820 = vunpack.c.l.b16 %v93
  %v821 = vunpack.c.h.b16 %v93
  %v822 = vunpack.c.l.b16 %v94
  %v823 = vunpack.c.h.b16 %v94
  %v824 = vunpack.c.l.b16 %v95
  %v825 = vunpack.c.h.b16 %v95
  %v826 = vunpack.c.l.b16 %v96
  %v827 = vunpack.c.h.b16 %v96
  %v828 = vunpack.c.l.b16 %v97
  %v829 = vunpack.c.h.b16 %v97
  %v830 = vunpack.c.l.b16 %v98
  %v831 = vunpack.c.h.b16 %v98
  %v832 = vunpack.c.l.b16 %v99
  %v833 = vunpack.c.h.b16 %v99
  %v834 = vunpack.c.l.b16 %v100
  %v835 = vunpack.c.h.b16 %v100
  %v836 = vunpack.c.l.b16 %v101
  %v837 = vunpack.c.h.b16 %v101
  %v838 = vunpack.c.l.b16 %v102
  %v839 = vunpack.c.h.b16 %v102
  %v840 = vunpack.c.l.b16 %v103
  %v841 = vunpack.c.h.b16 %v103
  %v842 = vunpack.c.l.b16 %v104
  %v843 = vunpack.c.h.b16 %v104
  %v844 = vunpack.c.l.b16 %v105
  %v845 = vunpack.c.h.b16 %v105
  %v846 = vunpack.c.l.b16 %v106
  %v847 = vunpack.c.h.b16 %v106
  %v848 = vunpack.c.l.b16 %v107
  %v849 = vunpack.c.h.b16 %v107
  %v850 = vunpack.c.l.b16 %v108
  %v851 = vunpack.c.h.b16 %v108
  %v852 = vunpack.c.l.b16 %v109
  %v853 = vunpack.c.h.b16 %v109
  %v854 = vunpack.c.l.b16 %v110
  %v855 = vunpack.c.h.b16 %v110
  %v856 = vunpack.c.l.b16 %v111
  %v857 = vunpack.c.h.b16 %v111
  %v858 = vunpack.c.l.b16 %v112
  %v859 = vunpack.c.h.b16 %v112
  %v860 = vunpack.c.l.b16 %v113
  %v861 = vunpack.c.h.b16 %v113
  %v862 = vunpack.c.l.b16 %v114
  %v863 = vunpack.c.h.b16 %v114
  %v864 = vunpack.c.l.b16 %v115
  %v865 = vunpack.c.h.b16 %v115
  %v866 = vunpack.c.l.b16 %v116
  %v867 = vunpack.c.h.b16 %v116
  %v868 = vunpack.c.l.b16 %v117
  %v869 = vunpack.c.h.b16 %v117
  %v870 = vunpack.c.l.b16 %v118
  %v871 = vunpack.c.h.b16 %v118
  %v872 = vunpack.c.l.b16 %v119
  %v873 = vunpack.c.h.b16 %v119
  %v874 = vunpack.c.l.b16 %v120
  %v875 = vunpack.c.h.b16 %v120
  %v876 = vunpack.c.l.b16 %v121
  %v877 = vunpack.c.h.b16 %v121
  %v878 = vunpack.c.l.b16 %v122
  %v879 = vunpack.c.h.b16 %v122
  %v880 = vunpack.c.l.b16 %v123
  %v881 = vunpack.c.h.b16 %v123
  %v882 = vunpack.c.l.b16 %v124
  %v883 = vunpack.c.h.b16 %v124
  %v884 = vunpack.c.l.b16 %v125
  %v885 = vunpack.c.h.b16 %v125
  %v886 = vunpack.c.l.b16 %v126
  %v887 = vunpack.c.h.b16 %v126
  %v888 = vunpack.c.l.b16 %v127
  %v889 = vunpack.c.h.b16 %v127
  %v890 = vunpack.c.l.b16 %v128
  %v891 = vunpack.c.h.b16 %v128
  %v892 = vunpack.c.l.b16 %v129
  %v893 = vunpack.c.h.b16 %v129
  %v894 = vunpack.c.l.b16 %v130
  %v895 = vunpack.c.h.b16 %v130
  %v896 = vunpack.c.l.b16 %v131
  %v897 = vunpack.c.h.b16 %v131
  %v898 = vunpack.c.l.b16 %v132
  %v899 = vunpack.c.h.b16 %v132
  %v900 = vunpack.c.l.b16 %v133
  %v901 = vunpack.c.h.b16 %v133
  %v902 = vunpack.c.l.b16 %v134
  %v903 = vunpack.c.h.b16 %v134
  %v904 = vunpack.c.l.b16 %v135
  %v905 = vunpack.c.h.b16 %v135
  %v906 = vunpack.c.l.b16 %v136
  %v907 = vunpack.c.h.b16 %v136
  %v908 = vunpack.c.l.b16 %v137
  %v909 = vunpack.c.h.b16 %v137
  %v910 = vunpack.c.l.b16 %v138
  %v911 = vunpack.c.h.b16 %v138
  %v912 = vunpack.c.l.b16 %v139
  %v913 = vunpack.c.h.b16 %v139
  %v914 = vunpack.c.l.b16 %v140
  %v915 = vunpack.c.h.b16 %v140
  %v916 = vunpack.c.l.b16 %v141
  %v917 = vunpack.c.h.b16 %v141
  %v918 = vunpack.c.l.b16 %v142
  %v919 = vunpack.c.h.b16 %v142
  %v920 = vunpack.c.l.b16 %v143
  %v921 = vunpack.c.h.b16 %v143
  %v922 = vunpack.c.l.b16 %v144
  %v923 = vunpack.c.h.b16 %v144
  %v924 = vunpack.c.l.b16 %v145
  %v925 = vunpack.c.h.b16 %v145
  %v926 = vunpack.c.l.b16 %v146
  %v927 = vunpack.c.h.b16 %v146
  %v928 = vunpack.c.l.b16 %v147
  %v929 = vunpack.c.h.b16 %v147
  %v930 = vunpack.c.l.b16 %v148
  %v931 = vunpack.c.h.b16 %v148
  %v932 = vunpack.c.l.b16 %v149
  %v933 = vunpack.c.h.b16 %v149
  %v934 = vunpack.c.l.b16 %v150
  %v935 = vunpack.c.h.b16 %v150
  %v936 = vunpack.c.l.b16 %v151
  %v937 = vunpack.c.h.b16 %v151
  %v938 = vunpack.c.l.b16 %v152
  %v939 = vunpack.c.h.b16 %v152
  %v940 = vunpack.c.l.b16 %v153
  %v941 = vunpack.c.h.b16 %v153
  %v942 = vunpack.c.l.b16 %v154
  %v943 = vunpack.c.h.b16 %v154
  %v944 = vunpack.c.l.b16 %v155
  %v945 = vunpack.c.h.b16 %v155
  %v946 = vunpack.c.l.b16 %v156
  %v947 = vunpack.c.h.b16 %v156
  %v948 = vunpack.c.l.b16 %v157
  %v949 = vunpack.c.h.b16 %v157
  %v950 = vunpack.c.l.b16 %v158
  %v951 = vunpack.c.h.b16 %v158
  %v952 = vunpack.c.l.b16 %v159
  %v953 = vunpack.c.h.b16 %v159
  %v954 = vunpack.c.l.b16 %v160
  %v955 = vunpack.c.h.b16 %v160
  %v956 = vunpack.c.l.b16 %v161
  %v957 = vunpack.c.h.b16 %v161
  %v958 = vunpack.c.l.b16 %v162
  %v959 = vunpack.c.h.b16 %v162
  %v960 = vunpack.c.l.b16 %v163
  %v961 = vunpack.c.h.b16 %v163
  %v962 = vunpack.c.l.b16 %v164
  %v963 = vunpack.c.h.b16 %v164
  %v964 = vunpack.c.l.b16 %v165
  %v965 = vunpack.c.h.b16 %v165
  %v966 = vunpack.c.l.b16 %v166
  %v967 = vunpack.c.h.b16 %v166
  %v968 = vunpack.c.l.b16 %v167
  %v969 = vunpack.c.h.b16 %v167
  %v970 = vunpack.c.l.b16 %v168
  %v971 = vunpack.c.h.b16 %v168
  %v972 = vunpack.c.l.b16 %v169
  %v973 = vunpack.c.h.b16 %v169
  %v974 = vunpack.c.l.b16 %v170
  %v975 = vunpack.c.h.b16 %v170
  %v976 = vunpack.c.l.b16 %v171
  %v977 = vunpack.c.h.b16 %v171
  %v978 = vunpack.c.l.b16 %v172
  %v979 = vunpack.c.h.b16 %v172
  %v980 = vunpack.c.l.b16 %v173
  %v981 = vunpack.c.h.b16 %v173
  %v982 = vunpack.c.l.b16 %v174
  %v983 = vunpack.c.h.b16 %v174
  %v984 = vunpack.c.l.b16 %v175
  %v985 = vunpack.c.h.b16 %v175
  %v986 = vunpack.c.l.b16 %v176
  %v987 = vunpack.c.h.b16 %v176
  %v988 = vunpack.c.l.b16 %v177
  %v989 = vunpack.c.h.b16 %v177
  %v990 = vunpack.c.l.b16 %v178
  %v991 = vunpack.c.h.b16 %v178
  %v992 = vunpack.c.l.b16 %v179
  %v993 = vunpack.c.h.b16 %v179
  %v994 = vunpack.c.l.b16 %v180
  %v995 = vunpack.c.h.b16 %v180
  %v996 = vunpack.c.l.b16 %v181
  %v997 = vunpack.c.h.b16 %v181
  %v998 = vunpack.c.l.b16 %v182
  %v999 = vunpack.c.h.b16 %v182
  %v1000 = vunpack.c.l.b16 %v183
  %v1001 = vunpack.c.h.b16 %v183
  %v1002 = vunpack.c.l.b16 %v184
  %v1003 = vunpack.c.h.b16 %v184
  %v1004 = vunpack.c.l.b16 %v185
  %v1005 = vunpack.c.h.b16 %v185
  %v1006 = vunpack.c.l.b16 %v186
  %v1007 = vunpack.c.h.b16 %v186
  %v1008 = vunpack.c.l.b16 %v187
  %v1009 = vunpack.c.h.b16 %v187
  %v1010 = vunpack.c.l.b16 %v188
  %v1011 = vunpack.c.h.b16 %v188
  %v1012 = vunpack.c.l.b16 %v189
  %v1013 = vunpack.c.h.b16 %v189
  %v1014 = vunpack.c.l.b16 %v190
  %v1015 = vunpack.c.h.b16 %v190
  %v1016 = vunpack.c.l.b16 %v191
  %v1017 = vunpack.c.h.b16 %v191
  %v1018 = vunpack.c.l.b16 %v192
  %v1019 = vunpack.c.h.b16 %v192
  %v1020 = vunpack.c.l.b16 %v193
  %v1021 = vunpack.c.h.b16 %v193
  %v1022 = vunpack.c.l.b16 %v194
  %v1023 = vunpack.c.h.b16 %v194
  %v1024 = vunpack.c.l.b16 %v195
  %v1025 = vunpack.c.h.b16 %v195
  %v1026 = vunpack.c.l.b16 %v196
  %v1027 = vunpack.c.h.b16 %v196
  %v1028 = vunpack.c.l.b16 %v197
  %v1029 = vunpack.c.h.b16 %v197
  %v1030 = vunpack.c.l.b16 %v198
  %v1031 = vunpack.c.h.b16 %v198
  %v1032 = vunpack.c.l.b16 %v199
  %v1033 = vunpack.c.h.b16 %v199
  %v1034 = vunpack.c.l.b16 %v200
  %v1035 = vunpack.c.h.b16 %v200
  %v1036 = vunpack.c.l.b16 %v201
  %v1037 = vunpack.c.h.b16 %v201
  %v1038 = vunpack.c.l.b16 %v202
  %v1039 = vunpack.c.h.b16 %v202
  %v1040 = vunpack.c.l.b16 %v203
  %v1041 = vunpack.c.h.b16 %v203
  %v1042 = vunpack.c.l.b16 %v204
  %v1043 = vunpack.c.h.b16 %v204
  %v1044 = vunpack.c.l.b16 %v205
  %v1045 = vunpack.c.h.b16 %v205
  %v1046 = vunpack.c.l.b16 %v206
  %v1047 = vunpack.c.h.b16 %v206
  %v1048 = vunpack.c.l.b16 %v207
  %v1049 = vunpack.c.h.b16 %v207
  %v1050 = vunpack.c.l.b16 %v208
  %v1051 = vunpack.c.h.b16 %v208
  %v1052 = vunpack.c.l.b16 %v209
  %v1053 = vunpack.c.h.b16 %v209
  %v1054 = vunpack.c.l.b16 %v210
  %v1055 = vunpack.c.h.b16 %v210
  %v1056 = vunpack.c.l.b16 %v211
  %v1057 = vunpack.c.h.b16 %v211
  %v1058 = vunpack.c.l.b16 %v212
  %v1059 = vunpack.c.h.b16 %v212
  %v1060 = vunpack.c.l.b16 %v213
  %v1061 = vunpack.c.h.b16 %v213
  %v1062 = vunpack.c.l.b16 %v214
  %v1063 = vunpack.c.h.b16 %v214
  %v1064 = vunpack.c.l.b16 %v215
  %v1065 = vunpack.c.h.b16 %v215
  %v1066 = vunpack.c.l.b16 %v216
  %v1067 = vunpack.c.h.b16 %v216
  %v1068 = vunpack.c.l.b16 %v217
  %v1069 = vunpack.c.h.b16 %v217
  %v1070 = vunpack.c.l.b16 %v218
  %v1071 = vunpack.c.h.b16 %v218
  %v1072 = vunpack.c.l.b16 %v219
  %v1073 = vunpack.c.h.b16 %v219
  %v1074 = vunpack.c.l.b16 %v220
  %v1075 = vunpack.c.h.b16 %v220
  %v1076 = vunpack.c.l.b16 %v221
  %v1077 = vunpack.c.h.b16 %v221
  %v1078 = vunpack.c.l.b16 %v222
  %v1079 = vunpack.c.h.b16 %v222
  %v1080 = vunpack.c.l.b16 %v223
  %v1081 = vunpack.c.h.b16 %v223
  %v1082 = vunpack.c.l.b16 %v224
  %v1083 = vunpack.c.h.b16 %v224
  %v1084 = vunpack.c.l.b16 %v225
  %v1085 = vunpack.c.h.b16 %v225
  %v1086 = vunpack.c.l.b16 %v226
  %v1087 = vunpack.c.h.b16 %v226
  %v1088 = vunpack.c.l.b16 %v227
  %v1089 = vunpack.c.h.b16 %v227
  %v1090 = vunpack.c.l.b16 %v228
  %v1091 = vunpack.c.h.b16 %v228
  %v1092 = vunpack.c.l.b16 %v229
  %v1093 = vunpack.c.h.b16 %v229
  %v1094 = vunpack.c.l.b16 %v230
  %v1095 = vunpack.c.h.b16 %v230
  %v1096 = vunpack.c.l.b16 %v231
  %v1097 = vunpack.c.h.b16 %v231
  %v1098 = vunpack.c.l.b16 %v232
  %v1099 = vunpack.c.h.b16 %v232
  %v1100 = vunpack.c.l.b16 %v233
  %v1101 = vunpack.c.h.b16 %v233
  %v1102 = vunpack.c.l.b16 %v234
  %v1103 = vunpack.c.h.b16 %v234
  %v1104 = vunpack.c.l.b16 %v235
  %v1105 = vunpack.c.h.b16 %v235
  %v1106 = vunpack.c.l.b16 %v236
  %v1107 = vunpack.c.h.b16 %v236
  %v1108 = vunpack.c.l.b16 %v237
  %v1109 = vunpack.c.h.b16 %v237
  %v1110 = vunpack.c.l.b16 %v238
  %v1111 = vunpack.c.h.b16 %v238
  %v1112 = vunpack.c.l.b16 %v239
  %v1113 = vunpack.c.h.b16 %v239
  %v1114 = vunpack.c.l.b16 %v240
  %v1115 = vunpack.c.h.b16 %v240
  %v1116 = vunpack.c.l.b16 %v241
  %v1117 = vunpack.c.h.b16 %v241
  %v1118 = vunpack.c.l.b16 %v242
  %v1119 = vunpack.c.h.b16 %v242
  %v1120 = vunpack.c.l.b16 %v243
  %v1121 = vunpack.c.h.b16 %v243
  %v1122 = vunpack.c.l.b16 %v244
  %v1123 = vunpack.c.h.b16 %v244
  %v1124 = vunpack.c.l.b16 %v245
  %v1125 = vunpack.c.h.b16 %v245
  %v1126 = vunpack.c.l.b16 %v246
  %v1127 = vunpack.c.h.b16 %v246
  %v1128 = vunpack.c.l.b16 %v247
  %v1129 = vunpack.c.h.b16 %v247
  %v1130 = vunpack.c.l.b16 %v248
  %v1131 = vunpack.c.h.b16 %v248
  %v1132 = vunpack.c.l.b16 %v249
  %v1133 = vunpack.c.h.b16 %v249
  %v1134 = vunpack.c.l.b16 %v250
  %v1135 = vunpack.c.h.b16 %v250
  %v1136 = vunpack.c.l.b16 %v251
  %v1137 = vunpack.c.h.b16 %v251
  %v1138 = vunpack.c.l.b16 %v252
  %v1139 = vunpack.c.h.b16 %v252
  %v1140 = vunpack.c.l.b16 %v253
  %v1141 = vunpack.c.h.b16 %v253
  %v1142 = vunpack.c.l.b16 %v254
  %v1143 = vunpack.c.h.b16 %v254
  %v1144 = vunpack.c.l.b16 %v255
  %v1145 = vunpack.c.h.b16 %v255
  %v1146 = vunpack.c.l.b16 %v256
  %v1147 = vunpack.c.h.b16 %v256
  %v1148 = vunpack.c.l.b16 %v257
  %v1149 = vunpack.c.h.b16 %v257
  %v1150 = vunpack.c.l.b16 %v258
  %v1151 = vunpack.c.h.b16 %v258
  %v1152 = vunpack.c.l.b16 %v259
  %v1153 = vunpack.c.h.b16 %v259
  %v1154 = vunpack.c.l.b16 %v260
  %v1155 = vunpack.c.h.b16 %v260
  %v1156 = vunpack.c.l.b16 %v261
  %v1157 = vunpack.c.h.b16 %v261
  %v1158 = vunpack.c.l.b16 %v262
  %v1159 = vunpack.c.h.b16 %v262
  %v1160 = vunpack.c.l.b16 %v263
  %v1161 = vunpack.c.h.b16 %v263
  %v1162 = vunpack.c.l.b16 %v264
  %v1163 = vunpack.c.h.b16 %v264
  %v1164 = vunpack.c.l.b16 %v265
  %v1165 = vunpack.c.h.b16 %v265
  %v1166 = vunpack.c.l.b16 %v266
  %v1167 = vunpack.c.h.b16 %v266
  %v1168 = vunpack.c.l.b16 %v267
  %v1169 = vunpack.c.h.b16 %v267
  %v1170 = vunpack.c.l.b16 %v268
  %v1171 = vunpack.c.h.b16 %v268
  %v1172 = vunpack.c.l.b16 %v269
  %v1173 = vunpack.c.h.b16 %v269
  %v1174 = vunpack.c.l.b16 %v270
  %v1175 = vunpack.c.h.b16 %v270
  %v1176 = vunpack.c.l.b16 %v271
  %v1177 = vunpack.c.h.b16 %v271
  %v1178 = vunpack.c.l.b16 %v272
  %v1179 = vunpack.c.h.b16 %v272
  %v1180 = vunpack.c.l.b16 %v273
  %v1181 = vunpack.c.h.b16 %v273
  %v1182 = vunpack.c.l.b16 %v274
  %v1183 = vunpack.c.h.b16 %v274
  %v1184 = vunpack.c.l.b16 %v275
  %v1185 = vunpack.c.h.b16 %v275
  %v1186 = vunpack.c.l.b16 %v276
  %v1187 = vunpack.c.h.b16 %v276
  %v1188 = vunpack.c.l.b16 %v277
  %v1189 = vunpack.c.h.b16 %v277
  %v1190 = vunpack.c.l.b16 %v278
  %v1191 = vunpack.c.h.b16 %v278
  %v1192 = vunpack.c.l.b16 %v279
  %v1193 = vunpack.c.h.b16 %v279
  %v1194 = vunpack.c.l.b16 %v280
  %v1195 = vunpack.c.h.b16 %v280
  %v1196 = vunpack.c.l.b16 %v281
  %v1197 = vunpack.c.h.b16 %v281
  %v1198 = vunpack.c.l.b16 %v282
  %v1199 = vunpack.c.h.b16 %v282
  %v1200 = vunpack.c.l.b16 %v283
  %v1201 = vunpack.c.h.b16 %v283
  %v1202 = vunpack.c.l.b16 %v284
  %v1203 = vunpack.c.h.b16 %v284
  %v1204 = vunpack.c.l.b16 %v285
  %v1205 = vunpack.c.h.b16 %v285
  %v1206 = vunpack.c.l.b16 %v286
  %v1207 = vunpack.c.h.b16 %v286
  %v1208 = vunpack.c.l.b16 %v287
  %v1209 = vunpack.c.h.b16 %v287
  %v1210 = vunpack.c.l.b16 %v288
  %v1211 = vunpack.c.h.b16 %v288
  %v1212 = vunpack.c.l.b16 %v289
  %v1213 = vunpack.c.h.b16 %v289
  %v1214 = vunpack.c.l.b16 %v290
  %v1215 = vunpack.c.h.b16 %v290
  %v1216 = vunpack.c.l.b16 %v291
  %v1217 = vunpack.c.h.b16 %v291
  %v1218 = vunpack.c.l.b16 %v292
  %v1219 = vunpack.c.h.b16 %v292
  %v1220 = vunpack.c.l.b16 %v293
  %v1221 = vunpack.c.h.b16 %v293
  %v1222 = vunpack.c.l.b16 %v294
  %v1223 = vunpack.c.h.b16 %v294
  %v1224 = vunpack.c.l.b16 %v295
  %v1225 = vunpack.c.h.b16 %v295
  %v1226 = vunpack.c.l.b16 %v296
  %v1227 = vunpack.c.h.b16 %v296
  %v1228 = vunpack.c.l.b16 %v297
  %v1229 = vunpack.c.h.b16 %v297
  %v1230 = vunpack.c.l.b16 %v298
  %v1231 = vunpack.c.h.b16 %v298
  %v1232 = vunpack.c.l.b16 %v299
  %v1233 = vunpack.c.h.b16 %v299
  %v1234 = vunpack.c.l.b16 %v300
  %v1235 = vunpack.c.h.b16 %v300
  %v1236 = vunpack.c.l.b16 %v301
  %v1237 = vunpack.c.h.b16 %v301
  %v1238 = vunpack.c.l.b16 %v302
  %v1239 = vunpack.c.h.b16 %v302
  %v1240 = vunpack.c.l.b16 %v303
  %v1241 = vunpack.c.h.b16 %v303
  %v1242 = vunpack.c.l.b16 %v304
  %v1243 = vunpack.c.h.b16 %v304
  %v1244 = vunpack.c.l.b16 %v305
  %v1245 = vunpack.c.h.b16 %v305
  %v1246 = vunpack.c.l.b16 %v306
  %v1247 = vunpack.c.h.b16 %v306
  %v1248 = vunpack.c.l.b16 %v307
  %v1249 = vunpack.c.h.b16 %v307
  %v1250 = vunpack.c.l.b16 %v308
  %v1251 = vunpack.c.h.b16 %v308
  %v1252 = vunpack.c.l.b16 %v309
  %v1253 = vunpack.c.h.b16 %v309
  %v1254 = vunpack.c.l.b16 %v310
  %v1255 = vunpack.c.h.b16 %v310
  %v1256 = vunpack.c.l.b16 %v311
  %v1257 = vunpack.c.h.b16 %v311
  %v1258 = vunpack.c.l.b16 %v312
  %v1259 = vunpack.c.h.b16 %v312
  %v1260 = vunpack.c.l.b16 %v313
  %v1261 = vunpack.c.h.b16 %v313
  %v1262 = vunpack.c.l.b16 %v314
  %v1263 = vunpack.c.h.b16 %v314
  %v1264 = vunpack.c.l.b16 %v315
  %v1265 = vunpack.c.h.b16 %v315
  %v1266 = vunpack.c.l.b16 %v316
  %v1267 = vunpack.c.h.b16 %v316
  %v1268 = vunpack.c.l.b16 %v317
  %v1269 = vunpack.c.h.b16 %v317
  %v1270 = vunpack.c.l.b16 %v318
  %v1271 = vunpack.c.h.b16 %v318
  %v1272 = vunpack.c.l.b16 %v319
  %v1273 = vunpack.c.h.b16 %v319
  %v1274 = vunpack.c.l.b16 %v320
  %v1275 = vunpack.c.h.b16 %v320
  %v1276 = vunpack.c.l.b16 %v321
  %v1277 = vunpack.c.h.b16 %v321
  %v1278 = vunpack.c.l.b16 %v322
  %v1279 = vunpack.c.h.b16 %v322
  %v1280 = vunpack.c.l.b16 %v323
  %v1281 = vunpack.c.h.b16 %v323
  %v1282 = vunpack.c.l.b16 %v324
  %v1283 = vunpack.c.h.b16 %v324
  %v1284 = vunpack.c.l.b16 %v325
  %v1285 = vunpack.c.h.b16 %v325
  %v1286 = vunpack.c.l.b16 %v326
  %v1287 = vunpack.c.h.b16 %v326
  %v1288 = vunpack.c.l.b16 %v327
  %v1289 = vunpack.c.h.b16 %v327
  %v1290 = vunpack.c.l.b16 %v328
  %v1291 = vunpack.c.h.b16 %v328
  %v1292 = vunpack.c.l.b16 %v329
  %v1293 = vunpack.c.h.b16 %v329
  %v1294 = vunpack.c.l.b16 %v330
  %v1295 = vunpack.c.h.b16 %v330
  %v1296 = vunpack.c.l.b16 %v331
  %v1297 = vunpack.c.h.b16 %v331
  %v1298 = vunpack.c.l.b16 %v332
  %v1299 = vunpack.c.h.b16 %v332
  %v1300 = vunpack.c.l.b16 %v333
  %v1301 = vunpack.c.h.b16 %v333
  %v1302 = vunpack.c.l.b16 %v334
  %v1303 = vunpack.c.h.b16 %v334
  %v1304 = vunpack.c.l.b16 %v335
  %v1305 = vunpack.c.h.b16 %v335
  %v1306 = vunpack.c.l.b16 %v336
  %v1307 = vunpack.c.h.b16 %v336
  %v1308 = vunpack.c.l.b16 %v337
  %v1309 = vunpack.c.h.b16 %v337
  %v1310 = vunpack.c.l.b16 %v338
  %v1311 = vunpack.c.h.b16 %v338
  %v1312 = vunpack.c.l.b16 %v339
  %v1313 = vunpack.c.h.b16 %v339
  %v1314 = vunpack.c.l.b16 %v340
  %v1315 = vunpack.c.h.b16 %v340
  %v1316 = vunpack.c.l.b16 %v341
  %v1317 = vunpack.c.h.b16 %v341
  %v1318 = vunpack.c.l.b16 %v342
  %v1319 = vunpack.c.h.b16 %v342
  %v1320 = vpack.c.b16 %v744, %v680
  %v1321 = vpack.c.b16 %v745, %v681
  %v1322 = vpack.c.b16 %v746, %v682
  %v1323 = vpack.c.b16 %v747, %v683
  %v1324 = vpack.c.b16 %v748, %v684
  %v1325 = vpack.c.b16 %v749, %v685
  %v1326 = vpack.c.b16 %v750, %v686
  %v1327 = vpack.c.b16 %v751, %v687
  %v1328 = vpack.c.b16 %v752, %v688
  %v1329 = vpack.c.b16 %v753, %v689
  %v1330 = vpack.c.b16 %v754, %v690
  %v1331 = vpack.c.b16 %v755, %v691
  %v1332 = vpack.c.b16 %v756, %v692
  %v1333 = vpack.c.b16 %v757, %v693
  %v1334 = vpack.c.b16 %v758, %v694
  %v1335 = vpack.c.b16 %v759, %v695
  %v1336 = vpack.c.b16 %v760, %v696
  %v1337 = vpack.c.b16 %v761, %v697
  %v1338 = vpack.c.b16 %v762, %v698
  %v1339 = vpack.c.b16 %v763, %v699
  %v1340 = vpack.c.b16 %v764, %v700
  %v1341 = vpack.c.b16 %v765, %v701
  %v1342 = vpack.c.b16 %v766, %v702
  %v1343 = vpack.c.b16 %v767, %v703
  %v1344 = vpack.c.b16 %v768, %v704
  %v1345 = vpack.c.b16 %v769, %v705
  %v1346 = vpack.c.b16 %v770, %v706
  %v1347 = vpack.c.b16 %v771, %v707
  %v1348 = vpack.c.b16 %v772, %v708
  %v1349 = vpack.c.b16 %v773, %v709
  %v1350 = vpack.c.b16 %v774, %v710
  %v1351 = vpack.c.b16 %v775, %v711
  %v1352 = vpack.c.b16 %v776, %v712
  %v1353 = vpack.c.b16 %v777, %v713
  %v1354 = vpack.c.b16 %v778, %v714
  %v1355 = vpack.c.b16 %v779, %v715
  %v1356 = vpack.c.b16 %v780, %v716
  %v1357 = vpack.c.b16 %v781, %v717
  %v1358 = vpack.c.b16 %v782, %v718
  %v1359 = vpack.c.b16 %v783, %v719
  %v1360 = vpack.c.b16 %v784, %v720
  %v1361 = vpack.c.b16 %v785, %v721
  %v1362 = vpack.c.b16 %v786, %v722
  %v1363 = vpack.c.b16 %v787, %v723
  %v1364 = vpack.c.b16 %v788, %v724
  %v1365 = vpack.c.b16 %v789, %v725
  %v1366 = vpack.c.b16 %v790, %v726
  %v1367 = vpack.c.b16 %v791, %v727
  %v1368 = vpack.c.b16 %v792, %v728
  %v1369 = vpack.c.b16 %v793, %v729
  %v1370 = vpack.c.b16 %v794, %v730
  %v1371 = vpack.c.b16 %v795, %v731
  %v1372 = vpack.c.b16 %v796, %v732
  %v1373 = vpack.c.b16 %v797, %v733
  %v1374 = vpack.c.b16 %v798, %v734
  %v1375 = vpack.c.b16 %v799, %v735
  %v1376 = vpack.c.b16 %v800, %v736
  %v1377 = vpack.c.b16 %v801, %v737
  %v1378 = vpack.c.b16 %v802, %v738
  %v1379 = vpack.c.b16 %v803, %v739
  %v1380 = vpack.c.b16 %v804, %v740
  %v1381 = vpack.c.b16 %v805, %v741
  %v1382 = vpack.c.b16 %v806, %v742
  %v1383 = vpack.c.b16 %v807, %v743
  %v1384 = vpack.c.b16 %v872, %v808
  %v1385 = vpack.c.b16 %v873, %v809
  %v1386 = vpack.c.b16 %v874, %v810
  %v1387 = vpack.c.b16 %v875, %v811
  %v1388 = vpack.c.b16 %v876, %v812
  %v1389 = vpack.c.b16 %v877, %v813
  %v1390 = vpack.c.b16 %v878, %v814
  %v1391 = vpack.c.b16 %v879, %v815
  %v1392 = vpack.c.b16 %v880, %v816
  %v1393 = vpack.c.b16 %v881, %v817
  %v1394 = vpack.c.b16 %v882, %v818
  %v1395 = vpack.c.b16 %v883, %v819
  %v1396 = vpack.c.b16 %v884, %v820
  %v1397 = vpack.c.b16 %v885, %v821
  %v1398 = vpack.c.b16 %v886, %v822
  %v1399 = vpack.c.b16 %v887, %v823
  %v1400 = vpack.c.b16 %v888, %v824
  %v1401 = vpack.c.b16 %v889, %v825
  %v1402 = vpack.c.b16 %v890, %v826
  %v1403 = vpack.c.b16 %v891, %v827
  %v1404 = vpack.c.b16 %v892, %v828
  %v1405 = vpack.c.b16 %v893, %v829
  %v1406 = vpack.c.b16 %v894, %v830
  %v1407 = vpack.c.b16 %v895, %v831
  %v1408 = vpack.c.b16 %v896, %v832
  %v1409 = vpack.c.b16 %v897, %v833
  %v1410 = vpack.c.b16 %v898, %v834
  %v1411 = vpack.c.b16 %v899, %v835
  %v1412 = vpack.c.b16 %v900, %v836
  %v1413 = vpack.c.b16 %v901, %v837
  %v1414 = vpack.c.b16 %v902, %v838
  %v1415 = vpack.c.b16 %v903, %v839
  %v1416 = vpack.c.b16 %v904, %v840
  %v1417 = vpack.c.b16 %v905, %v841
  %v1418 = vpack.c.b16 %v906, %v842
  %v1419 = vpack.c.b16 %v907, %v843
  %v1420 = vpack.c.b16 %v908, %v844
  %v1421 = vpack.c.b16 %v909, %v845
  %v1422 = vpack.c.b16 %v910, %v846
  %v1423 = vpack.c.b16 %v911, %v847
  %v1424 = vpack.c.b16 %v912, %v848
  %v1425 = vpack.c.b16 %v913, %v849
  %v1426 = vpack.c.b16 %v914, %v850
  %v1427 = vpack.c.b16 %v915, %v851
  %v1428 = vpack.c.b16 %v916, %v852
  %v1429 = vpack.c.b16 %v917, %v853
  %v1430 = vpack.c.b16 %v918, %v854
  %v1431 = vpack.c.b16 %v919, %v855
  %v1432 = vpack.c.b16 %v920, %v856
  %v1433 = vpack.c.b16 %v921, %v857
  %v1434 = vpack.c.b16 %v922, %v858
  %v1435 = vpack.c.b16 %v923, %v859
  %v1436 = vpack.c.b16 %v924, %v860
  %v1437 = vpack.c.b16 %v925, %v861
  %v1438 = vpack.c.b16 %v926, %v862
  %v1439 = vpack.c.b16 %v927, %v863
  %v1440 = vpack.c.b16 %v928, %v864
  %v1441 = vpack.c.b16 %v929, %v865
  %v1442 = vpack.c.b16 %v930, %v866
  %v1443 = vpack.c.b16 %v931, %v867
  %v1444 = vpack.c.b16 %v932, %v868
  %v1445 = vpack.c.b16 %v933, %v869
  %v1446 = vpack.c.b16 %v934, %v870
  %v1447 = vpack.c.b16 %v935, %v871
  %v1448 = vpack.c.b16 %v1000, %v936
  %v1449 = vpack.c.b16 %v1001, %v937
  %v1450 = vpack.c.b16 %v1002, %v938
  %v1451 = vpack.c.b16 %v1003, %v939
  %v1452 = vpack.c.b16 %v1004, %v940
  %v1453 = vpack.c.b16 %v1005, %v941
  %v1454 = vpack.c.b16 %v1006, %v942
  %v1455 = vpack.c.b16 %v1007, %v943
  %v1456 = vpack.c.b16 %v1008, %v944
  %v1457 = vpack.c.b16 %v1009, %v945
  %v1458 = vpack.c.b16 %v1010, %v946
  %v1459 = vpack.c.b16 %v1011, %v947
  %v1460 = vpack.c.b16 %v1012, %v948
  %v1461 = vpack.c.b16 %v1013, %v949
  %v1462 = vpack.c.b16 %v1014, %v950
  %v1463 = vpack.c.b16 %v1015, %v951
  %v1464 = vpack.c.b16 %v1016, %v952
  %v1465 = vpack.c.b16 %v1017, %v953
  %v1466 = vpack.c.b16 %v1018, %v954
  %v1467 = vpack.c.b16 %v1019, %v955
  %v1468 = vpack.c.b16 %v1020, %v956
  %v1469 = vpack.c.b16 %v1021, %v957
  %v1470 = vpack.c.b16 %v1022, %v958
  %v1471 = vpack.c.b16 %v1023, %v959
  %v1472 = vpack.c.b16 %v1024, %v960
  %v1473 = vpack.c.b16 %v1025, %v961
  %v1474 = vpack.c.b16 %v1026, %v962
  %v1475 = vpack.c.b16 %v1027, %v963
  %v1476 = vpack.c.b16 %v1028, %v964
  %v1477 = vpack.c.b16 %v1029, %v965
  %v1478 = vpack.c.b16 %v1030, %v966
  %v1479 = vpack.c.b16 %v1031, %v967
  %v1480 = vpack.c.b16 %v1032, %v968
  %v1481 = vpack.c.b16 %v1033, %v969
  %v1482 = vpack.c.b16 %v1034, %v970
  %v1483 = vpack.c.b16 %v1035, %v971
  %v1484 = vpack.c.b16 %v1036, %v972
  %v1485 = vpack.c.b16 %v1037, %v973
  %v1486 = vpack.c.b16 %v1038, %v974
  %v1487 = vpack.c.b16 %v1039, %v975
  %v1488 = vpack.c.b16 %v1040, %v976
  %v1489 = vpack.c.b16 %v1041, %v977
  %v1490 = vpack.c.b16 %v1042, %v978
  %v1491 = vpack.c.b16 %v1043, %v979
  %v1492 = vpack.c.b16 %v1044, %v980
  %v1493 = vpack.c.b16 %v1045, %v981
  %v1494 = vpack.c.b16 %v1046, %v982
  %v1495 = vpack.c.b16 %v1047, %v983
  %v1496 = vpack.c.b16 %v1048, %v984
  %v1497 = vpack.c.b16 %v1049, %v985
  %v1498 = vpack.c.b16 %v1050, %v986
  %v1499 = vpack.c.b16 %v1051, %v987
  %v1500 = vpack.c.b16 %v1052, %v988
  %v1501 = vpack.c.b16 %v1053, %v989
  %v1502 = vpack.c.b16 %v1054, %v990
  %v1503 = vpack.c.b16 %v1055, %v991
  %v1504 = vpack.c.b16 %v1056, %v992
  %v1505 = vpack.c.b16 %v1057, %v993
  %v1506 = vpack.c.b16 %v1058, %v994
  %v1507 = vpack.c.b16 %v1059, %v995
  %v1508 = vpack.c.b16 %v1060, %v996
  %v1509 = vpack.c.b16 %v1061, %v997
  %v1510 = vpack.c.b16 %v1062, %v998
  %v1511 = vpack.c.b16 %v1063, %v999
  %v1512 = vpack.c.b16 %v1128, %v1064
  %v1513 = vpack.c.b16 %v1129, %v1065
  %v1514 = vpack.c.b16 %v1130, %v1066
  %v1515 = vpack.c.b16 %v1131, %v1067
  %v1516 = vpack.c.b16 %v1132, %v1068
  %v1517 = vpack.c.b16 %v1133, %v1069
  %v1518 = vpack.c.b16 %v1134, %v1070
  %v1519 = vpack.c.b16 %v1135, %v1071
  %v1520 = vpack.c.b16 %v1136, %v1072
  %v1521 = vpack.c.b16 %v1137, %v1073
  %v1522 = vpack.c.b16 %v1138, %v1074
  %v1523 = vpack.c.b16 %v1139, %v1075
  %v1524 = vpack.c.b16 %v1140, %v1076
  %v1525 = vpack.c.b16 %v1141, %v1077
  %v1526 = vpack.c.b16 %v1142, %v1078
  %v1527 = vpack.c.b16 %v1143, %v1079
  %v1528 = vpack.c.b16 %v1144, %v1080
  %v1529 = vpack.c.b16 %v1145, %v1081
  %v1530 = vpack.c.b16 %v1146, %v1082
  %v1531 = vpack.c.b16 %v1147, %v1083
  %v1532 = vpack.c.b16 %v1148, %v1084
  %v1533 = vpack.c.b16 %v1149, %v1085
  %v1534 = vpack.c.b16 %v1150, %v1086
  %v1535 = vpack.c.b16 %v1151, %v1087
  %v1536 = vpack.c.b16 %v1152, %v1088
  %v1537 = vpack.c.b16 %v1153, %v1089
  %v1538 = vpack.c.b16 %v1154, %v1090
  %v1539 = vpack.c.b16 %v1155, %v1091
  %v1540 = vpack.c.b16 %v1156, %v1092
  %v1541 = vpack.c.b16 %v1157, %v1093
  %v1542 = vpack.c.b16 %v1158, %v1094
  %v1543 = vpack.c.b16 %v1159, %v1095
  %v1544 = vpack.c.b16 %v1160, %v1096
  %v1545 = vpack.c.b16 %v1161, %v1097
  %v1546 = vpack.c.b16 %v1162, %v1098
  %v1547 = vpack.c.b16 %v1163, %v1099
  %v1548 = vpack.c.b16 %v1164, %v1100
  %v1549 = vpack.c.b16 %v1165, %v1101
  %v1550 = vpack.c.b16 %v1166, %v1102
  %v1551 = vpack.c.b16 %v1167, %v1103
  %v1552 = vpack.c.b16 %v1168, %v1104
  %v1553 = vpack.c.b16 %v1169, %v1105
  %v1554 = vpack.c.b16 %v1170, %v1106
  %v1555 = vpack.c.b16 %v1171, %v1107
  %v1556 = vpack.c.b16 %v1172, %v1108
  %v1557 = vpack.c.b16 %v1173, %v1109
  %v1558 = vpack.c.b16 %v1174, %v1110
  %v1559 = vpack.c.b16 %v1175, %v1111
  %v1560 = vpack.c.b16 %v1176, %v1112
  %v1561 = vpack.c.b16 %v1177, %v1113
  %v1562 = vpack.c.b16 %v1178, %v1114
  %v1563 = vpack.c.b16 %v1179, %v1115
  %v1564 = vpack.c.b16 %v1180, %v1116
  %v1565 = vpack.c.b16 %v1181, %v1117
  %v1566 = vpack.c.b16 %v1182, %v1118
  %v1567 = vpack.c.b16 %v1183, %v1119
  %v1568 = vpack.c.b16 %v1184, %v1120
  %v1569 = vpack.c.b16 %v1185, %v1121
  %v1570 = vpack.c.b16 %v1186, %v1122
  %v1571 = vpack.c.b16 %v1187, %v1123
  %v1572 = vpack.c.b16 %v1188, %v1124
  %v1573 = vpack.c.b16 %v1189, %v1125
  %v1574 = vpack.c.b16 %v1190, %v1126
  %v1575 = vpack.c.b16 %v1191, %v1127
  %v1576 = vpack.c.b16 %v1256, %v1192
  %v1577 = vpack.c.b16 %v1257, %v1193
  %v1578 = vpack.c.b16 %v1258, %v1194
  %v1579 = vpack.c.b16 %v1259, %v1195
  %v1580 = vpack.c.b16 %v1260, %v1196
  %v1581 = vpack.c.b16 %v1261, %v1197
  %v1582 = vpack.c.b16 %v1262, %v1198
  %v1583 = vpack.c.b16 %v1263, %v1199
  %v1584 = vpack.c.b16 %v1264, %v1200
  %v1585 = vpack.c.b16 %v1265, %v1201
  %v1586 = vpack.c.b16 %v1266, %v1202
  %v1587 = vpack.c.b16 %v1267, %v1203
  %v1588 = vpack.c.b16 %v1268, %v1204
  %v1589 = vpack.c.b16 %v1269, %v1205
  %v1590 = vpack.c.b16 %v1270, %v1206
  %v1591 = vpack.c.b16 %v1271, %v1207
  %v1592 = vpack.c.b16 %v1272, %v1208
  %v1593 = vpack.c.b16 %v1273, %v1209
  %v1594 = vpack.c.b16 %v1274, %v1210
  %v1595 = vpack.c.b16 %v1275, %v1211
  %v1596 = vpack.c.b16 %v1276, %v1212
  %v1597 = vpack.c.b16 %v1277, %v1213
  %v1598 = vpack.c.b16 %v1278, %v1214
  %v1599 = vpack.c.b16 %v1279, %v1215
  %v1600 = vpack.c.b16 %v1280, %v1216
  %v1601 = vpack.c.b16 %v1281, %v1217
  %v1602 = vpack.c.b16 %v1282, %v1218
  %v1603 = vpack.c.b16 %v1283, %v1219
  %v1604 = vpack.c.b16 %v1284, %v1220
  %v1605 = vpack.c.b16 %v1285, %v1221
  %v1606 = vpack.c.b16 %v1286, %v1222
  %v1607 = vpack.c.b16 %v1287, %v1223
  %v1608 = vpack.c.b16 %v1288, %v1224
  %v1609 = vpack.c.b16 %v1289, %v1225
  %v1610 = vpack.c.b16 %v1290, %v1226
  %v1611 = vpack.c.b16 %v1291, %v1227
  %v1612 = vpack.c.b16 %v1292, %v1228
  %v1613 = vpack.c.b16 %v1293, %v1229
  %v1614 = vpack.c.b16 %v1294, %v1230
  %v1615 = vpack.c.b16 %v1295, %v1231
  %v1616 = vpack.c.b16 %v1296, %v1232
  %v1617 = vpack.c.b16 %v1297, %v1233
  %v1618 = vpack.c.b16 %v1298, %v1234
  %v1619 = vpack.c.b16 %v1299, %v1235
  %v1620 = vpack.c.b16 %v1300, %v1236
  %v1621 = vpack.c.b16 %v1301, %v1237
  %v1622 = vpack.c.b16 %v1302, %v1238
  %v1623 = vpack.c.b16 %v1303, %v1239
  %v1624 = vpack.c.b16 %v1304, %v1240
  %v1625 = vpack.c.b16 %v1305, %v1241
  %v1626 = vpack.c.b16 %v1306, %v1242
  %v1627 = vpack.c.b16 %v1307, %v1243
  %v1628 = vpack.c.b16 %v1308, %v1244
  %v1629 = vpack.c.b16 %v1309, %v1245
  %v1630 = vpack.c.b16 %v1310, %v1246
  %v1631 = vpack.c.b16 %v1311, %v1247
  %v1632 = vpack.c.b16 %v1312, %v1248
  %v1633 = vpack.c.b16 %v1313, %v1249
  %v1634 = vpack.c.b16 %v1314, %v1250
  %v1635 = vpack.c.b16 %v1315, %v1251
  %v1636 = vpack.c.b16 %v1316, %v1252
  %v1637 = vpack.c.b16 %v1317, %v1253
  %v1638 = vpack.c.b16 %v1318, %v1254
  %v1639 = vpack.c.b16 %v1319, %v1255
  %vm1896 = vcmask 613376
  %v1898 = vsel %vm1896, %v359, 0
  %vm1900 = vcmask 1044480
  %vm1901 = vcmask 1045504
  %v1902 = vsel %vm1900, 4294967295, 65535
  %v1903 = vsel %vm1901, %v1902, 0
  %v1905 = vand.u32 %v1576, %v1903
  %v1908 = vand.u32 %v1577, %v1903
  %v1911 = vand.u32 %v1578, %v1903
  %v1914 = vand.u32 %v1579, %v1903
  %v1917 = vand.u32 %v1580, %v1903
  %v1920 = vand.u32 %v1581, %v1903
  %v1923 = vand.u32 %v1582, %v1903
  %v1926 = vand.u32 %v1583, %v1903
  %v1929 = vand.u32 %v1584, %v1903
  %v1932 = vand.u32 %v1585, %v1903
  %v1935 = vand.u32 %v1586, %v1903
  %v1938 = vand.u32 %v1587, %v1903
  %v1941 = vand.u32 %v1588, %v1903
  %v1944 = vand.u32 %v1589, %v1903
  %v1947 = vand.u32 %v1590, %v1903
  %v1950 = vand.u32 %v1591, %v1903
  %v1953 = vand.u32 %v1592, %v1903
  %v1956 = vand.u32 %v1593, %v1903
  %v1959 = vand.u32 %v1594, %v1903
  %v1962 = vand.u32 %v1595, %v1903
  %v1965 = vand.u32 %v1596, %v1903
  %v1968 = vand.u32 %v1597, %v1903
  %v1971 = vand.u32 %v1598, %v1903
  %v1974 = vand.u32 %v1599, %v1903
  %v1977 = vand.u32 %v1600, %v1903
  %v1980 = vand.u32 %v1601, %v1903
  %v1983 = vand.u32 %v1602, %v1903
  %v1986 = vand.u32 %v1603, %v1903
  %v1989 = vand.u32 %v1604, %v1903
  %v1992 = vand.u32 %v1605, %v1903
  %v1995 = vand.u32 %v1606, %v1903
  %v1998 = vand.u32 %v1607, %v1903
  %v2001 = vand.u32 %v1608, %v1903
  %v2004 = vand.u32 %v1609, %v1903
  %v2007 = vand.u32 %v1610, %v1903
  %v2010 = vand.u32 %v1611, %v1903
  %v2013 = vand.u32 %v1612, %v1903
  %v2016 = vand.u32 %v1613, %v1903
  %v2019 = vand.u32 %v1614, %v1903
  %v2022 = vand.u32 %v1615, %v1903
  %v2025 = vand.u32 %v1616, %v1903
  %v2028 = vand.u32 %v1617, %v1903
  %v2031 = vand.u32 %v1618, %v1903
  %v2034 = vand.u32 %v1619, %v1903
  %v2037 = vand.u32 %v1620, %v1903
  %v2040 = vand.u32 %v1621, %v1903
  %v2043 = vand.u32 %v1622, %v1903
  %v2046 = vand.u32 %v1623, %v1903
  %v2049 = vand.u32 %v1624, %v1903
  %v2052 = vand.u32 %v1625, %v1903
  %v2055 = vand.u32 %v1626, %v1903
  %v2058 = vand.u32 %v1627, %v1903
  %v2061 = vand.u32 %v1628, %v1903
  %v2064 = vand.u32 %v1629, %v1903
  %v2067 = vand.u32 %v1630, %v1903
  %v2070 = vand.u32 %v1631, %v1903
  %v2073 = vand.u32 %v1632, %v1903
  %v2076 = vand.u32 %v1633, %v1903
  %v2079 = vand.u32 %v1634, %v1903
  %v2082 = vand.u32 %v1635, %v1903
  %v2085 = vand.u32 %v1636, %v1903
  %v2088 = vand.u32 %v1637, %v1903
  %v2091 = vand.u32 %v1638, %v1903
  %v2094 = vand.u32 %v1639, %v1903
  %2096 = vmatprep.subr.bf16.mxu0 %v1321
  %2097 = vmatpush1.bf16.msra.mxu0 %v1320
  %2098 = vmatprep.subr.bf16.mxu0 %v1385
  %2099 = vmatpush1.bf16.msra.mxu0 %v1384
  %2100 = vmatprep.subr.bf16.mxu0 %v1449
  %2101 = vmatpush1.bf16.msra.mxu0 %v1448
  %2102 = vmatprep.subr.bf16.mxu0 %v1513
  %2103 = vmatpush1.bf16.msra.mxu0 %v1512
  %2104 = vmatprep.subr.bf16.mxu0 %v1908
  %2105 = vmatpush1.bf16.msra.mxu0 %v1905
  %2106 = vmatprep.subr.bf16.mxu0 0
  %2107 = vmatpush1.bf16.msra.mxu0 0
  %2108 = vmatprep.subr.bf16.mxu0 0
  %2109 = vmatpush1.bf16.msra.mxu0 0
  %2110 = vmatprep.subr.bf16.mxu0 0
  %2111 = vmatpush1.bf16.msra.mxu0 0
  %2112 = vmatprep.subr.bf16.mxu0 0
  %2113 = vmatpush1.bf16.msra.mxu0 0
  %2114 = vmatprep.subr.bf16.mxu0 0
  %2115 = vmatpush1.bf16.msra.mxu0 0
  %2116 = vmatprep.subr.bf16.mxu0 0
  %2117 = vmatpush1.bf16.msra.mxu0 0
  %2118 = vmatprep.subr.bf16.mxu0 0
  %2119 = vmatpush1.bf16.msra.mxu0 0
  %2120 = vmatprep.subr.bf16.mxu0 0
  %2121 = vmatpush1.bf16.msra.mxu0 0
  %2122 = vmatprep.subr.bf16.mxu0 0
  %2123 = vmatpush1.bf16.msra.mxu0 0
  %2124 = vmatprep.subr.bf16.mxu0 0
  %2125 = vmatpush1.bf16.msra.mxu0 0
  %2126 = vmatprep.subr.bf16.mxu0 0
  %2127 = vmatpush1.bf16.msra.mxu0 0
  %2128 = vmatprep.mubr.bf16.mxu0 0
  %2129 = vmatmul.mubr.bf16.gmra.mrb[0].mxu0 %v1898
  %v2130 = vpop.f32.mrb[0].mxu0
  %v2131 = vadd.f32 %v348, %v2130
  %v2132 = vpop.f32.mrb[0].mxu0
  %v2133 = vadd.f32 %v348, %v2132
  %v2134 = vpop.f32.mrb[0].mxu0
  %v2135 = vadd.f32 %v353, %v2134
  %v2136 = vpop.f32.mrb[0].mxu0
  %v2137 = vadd.f32 %v353, %v2136
  %2138 = vdwg.mxu0
  %2139 = vmatprep.subr.bf16.mxu0 %v1323
  %2140 = vmatpush1.bf16.msra.mxu0 %v1322
  %2141 = vmatprep.subr.bf16.mxu0 %v1387
  %2142 = vmatpush1.bf16.msra.mxu0 %v1386
  %2143 = vmatprep.subr.bf16.mxu0 %v1451
  %2144 = vmatpush1.bf16.msra.mxu0 %v1450
  %2145 = vmatprep.subr.bf16.mxu0 %v1515
  %2146 = vmatpush1.bf16.msra.mxu0 %v1514
  %2147 = vmatprep.subr.bf16.mxu0 %v1914
  %2148 = vmatpush1.bf16.msra.mxu0 %v1911
  %2149 = vmatprep.subr.bf16.mxu0 0
  %2150 = vmatpush1.bf16.msra.mxu0 0
  %2151 = vmatprep.subr.bf16.mxu0 0
  %2152 = vmatpush1.bf16.msra.mxu0 0
  %2153 = vmatprep.subr.bf16.mxu0 0
  %2154 = vmatpush1.bf16.msra.mxu0 0
  %2155 = vmatprep.subr.bf16.mxu0 0
  %2156 = vmatpush1.bf16.msra.mxu0 0
  %2157 = vmatprep.subr.bf16.mxu0 0
  %2158 = vmatpush1.bf16.msra.mxu0 0
  %2159 = vmatprep.subr.bf16.mxu0 0
  %2160 = vmatpush1.bf16.msra.mxu0 0
  %2161 = vmatprep.subr.bf16.mxu0 0
  %2162 = vmatpush1.bf16.msra.mxu0 0
  %2163 = vmatprep.subr.bf16.mxu0 0
  %2164 = vmatpush1.bf16.msra.mxu0 0
  %2165 = vmatprep.subr.bf16.mxu0 0
  %2166 = vmatpush1.bf16.msra.mxu0 0
  %2167 = vmatprep.subr.bf16.mxu0 0
  %2168 = vmatpush1.bf16.msra.mxu0 0
  %2169 = vmatprep.subr.bf16.mxu0 0
  %2170 = vmatpush1.bf16.msra.mxu0 0
  %2171 = vmatprep.mubr.bf16.mxu0 0
  %2172 = vmatmul.mubr.bf16.gmra.mrb[0].mxu0 %v1898
  %v2173 = vpop.f32.mrb[0].mxu0
  %v2174 = vadd.f32 %v348, %v2173
  %v2175 = vpop.f32.mrb[0].mxu0
  %v2176 = vadd.f32 %v348, %v2175
  %v2177 = vpop.f32.mrb[0].mxu0
  %v2178 = vadd.f32 %v353, %v2177
  %v2179 = vpop.f32.mrb[0].mxu0
  %v2180 = vadd.f32 %v353, %v2179
  %2181 = vdwg.mxu0
  %2182 = vmatprep.subr.bf16.mxu0 %v1325
  %2183 = vmatpush1.bf16.msra.mxu0 %v1324
  %2184 = vmatprep.subr.bf16.mxu0 %v1389
  %2185 = vmatpush1.bf16.msra.mxu0 %v1388
  %2186 = vmatprep.subr.bf16.mxu0 %v1453
  %2187 = vmatpush1.bf16.msra.mxu0 %v1452
  %2188 = vmatprep.subr.bf16.mxu0 %v1517
  %2189 = vmatpush1.bf16.msra.mxu0 %v1516
  %2190 = vmatprep.subr.bf16.mxu0 %v1920
  %2191 = vmatpush1.bf16.msra.mxu0 %v1917
  %2192 = vmatprep.subr.bf16.mxu0 0
  %2193 = vmatpush1.bf16.msra.mxu0 0
  %2194 = vmatprep.subr.bf16.mxu0 0
  %2195 = vmatpush1.bf16.msra.mxu0 0
  %2196 = vmatprep.subr.bf16.mxu0 0
  %2197 = vmatpush1.bf16.msra.mxu0 0
  %2198 = vmatprep.subr.bf16.mxu0 0
  %2199 = vmatpush1.bf16.msra.mxu0 0
  %2200 = vmatprep.subr.bf16.mxu0 0
  %2201 = vmatpush1.bf16.msra.mxu0 0
  %2202 = vmatprep.subr.bf16.mxu0 0
  %2203 = vmatpush1.bf16.msra.mxu0 0
  %2204 = vmatprep.subr.bf16.mxu0 0
  %2205 = vmatpush1.bf16.msra.mxu0 0
  %2206 = vmatprep.subr.bf16.mxu0 0
  %2207 = vmatpush1.bf16.msra.mxu0 0
  %2208 = vmatprep.subr.bf16.mxu0 0
  %2209 = vmatpush1.bf16.msra.mxu0 0
  %2210 = vmatprep.subr.bf16.mxu0 0
  %2211 = vmatpush1.bf16.msra.mxu0 0
  %2212 = vmatprep.subr.bf16.mxu0 0
  %2213 = vmatpush1.bf16.msra.mxu0 0
  %2214 = vmatprep.mubr.bf16.mxu0 0
  %2215 = vmatmul.mubr.bf16.gmra.mrb[0].mxu0 %v1898
  %v2216 = vpop.f32.mrb[0].mxu0
  %v2217 = vadd.f32 %v348, %v2216
  %v2218 = vpop.f32.mrb[0].mxu0
  %v2219 = vadd.f32 %v348, %v2218
  %v2220 = vpop.f32.mrb[0].mxu0
  %v2221 = vadd.f32 %v353, %v2220
  %v2222 = vpop.f32.mrb[0].mxu0
  %v2223 = vadd.f32 %v353, %v2222
  %2224 = vdwg.mxu0
  %2225 = vmatprep.subr.bf16.mxu0 %v1327
  %2226 = vmatpush1.bf16.msra.mxu0 %v1326
  %2227 = vmatprep.subr.bf16.mxu0 %v1391
  %2228 = vmatpush1.bf16.msra.mxu0 %v1390
  %2229 = vmatprep.subr.bf16.mxu0 %v1455
  %2230 = vmatpush1.bf16.msra.mxu0 %v1454
  %2231 = vmatprep.subr.bf16.mxu0 %v1519
  %2232 = vmatpush1.bf16.msra.mxu0 %v1518
  %2233 = vmatprep.subr.bf16.mxu0 %v1926
  %2234 = vmatpush1.bf16.msra.mxu0 %v1923
  %2235 = vmatprep.subr.bf16.mxu0 0
  %2236 = vmatpush1.bf16.msra.mxu0 0
  %2237 = vmatprep.subr.bf16.mxu0 0
  %2238 = vmatpush1.bf16.msra.mxu0 0
  %2239 = vmatprep.subr.bf16.mxu0 0
  %2240 = vmatpush1.bf16.msra.mxu0 0
  %2241 = vmatprep.subr.bf16.mxu0 0
  %2242 = vmatpush1.bf16.msra.mxu0 0
  %2243 = vmatprep.subr.bf16.mxu0 0
  %2244 = vmatpush1.bf16.msra.mxu0 0
  %2245 = vmatprep.subr.bf16.mxu0 0
  %2246 = vmatpush1.bf16.msra.mxu0 0
  %2247 = vmatprep.subr.bf16.mxu0 0
  %2248 = vmatpush1.bf16.msra.mxu0 0
  %2249 = vmatprep.subr.bf16.mxu0 0
  %2250 = vmatpush1.bf16.msra.mxu0 0
  %2251 = vmatprep.subr.bf16.mxu0 0
  %2252 = vmatpush1.bf16.msra.mxu0 0
  %2253 = vmatprep.subr.bf16.mxu0 0
  %2254 = vmatpush1.bf16.msra.mxu0 0
  %2255 = vmatprep.subr.bf16.mxu0 0
  %2256 = vmatpush1.bf16.msra.mxu0 0
  %2257 = vmatprep.mubr.bf16.mxu0 0
  %2258 = vmatmul.mubr.bf16.gmra.mrb[0].mxu0 %v1898
  %v2259 = vpop.f32.mrb[0].mxu0
  %v2260 = vadd.f32 %v348, %v2259
  %v2261 = vpop.f32.mrb[0].mxu0
  %v2262 = vadd.f32 %v348, %v2261
  %v2263 = vpop.f32.mrb[0].mxu0
  %v2264 = vadd.f32 %v353, %v2263
  %v2265 = vpop.f32.mrb[0].mxu0
  %v2266 = vadd.f32 %v353, %v2265
  %2267 = vdwg.mxu0
  %2268 = vmatprep.subr.bf16.mxu0 %v1329
  %2269 = vmatpush1.bf16.msra.mxu0 %v1328
  %2270 = vmatprep.subr.bf16.mxu0 %v1393
  %2271 = vmatpush1.bf16.msra.mxu0 %v1392
  %2272 = vmatprep.subr.bf16.mxu0 %v1457
  %2273 = vmatpush1.bf16.msra.mxu0 %v1456
  %2274 = vmatprep.subr.bf16.mxu0 %v1521
  %2275 = vmatpush1.bf16.msra.mxu0 %v1520
  %2276 = vmatprep.subr.bf16.mxu0 %v1932
  %2277 = vmatpush1.bf16.msra.mxu0 %v1929
  %2278 = vmatprep.subr.bf16.mxu0 0
  %2279 = vmatpush1.bf16.msra.mxu0 0
  %2280 = vmatprep.subr.bf16.mxu0 0
  %2281 = vmatpush1.bf16.msra.mxu0 0
  %2282 = vmatprep.subr.bf16.mxu0 0
  %2283 = vmatpush1.bf16.msra.mxu0 0
  %2284 = vmatprep.subr.bf16.mxu0 0
  %2285 = vmatpush1.bf16.msra.mxu0 0
  %2286 = vmatprep.subr.bf16.mxu0 0
  %2287 = vmatpush1.bf16.msra.mxu0 0
  %2288 = vmatprep.subr.bf16.mxu0 0
  %2289 = vmatpush1.bf16.msra.mxu0 0
  %2290 = vmatprep.subr.bf16.mxu0 0
  %2291 = vmatpush1.bf16.msra.mxu0 0
  %2292 = vmatprep.subr.bf16.mxu0 0
  %2293 = vmatpush1.bf16.msra.mxu0 0
  %2294 = vmatprep.subr.bf16.mxu0 0
  %2295 = vmatpush1.bf16.msra.mxu0 0
  %2296 = vmatprep.subr.bf16.mxu0 0
  %2297 = vmatpush1.bf16.msra.mxu0 0
  %2298 = vmatprep.subr.bf16.mxu0 0
  %2299 = vmatpush1.bf16.msra.mxu0 0
  %2300 = vmatprep.mubr.bf16.mxu0 0
  %2301 = vmatmul.mubr.bf16.gmra.mrb[0].mxu0 %v1898
  %v2302 = vpop.f32.mrb[0].mxu0
  %v2303 = vadd.f32 %v348, %v2302
  %v2304 = vpop.f32.mrb[0].mxu0
  %v2305 = vadd.f32 %v348, %v2304
  %v2306 = vpop.f32.mrb[0].mxu0
  %v2307 = vadd.f32 %v353, %v2306
  %v2308 = vpop.f32.mrb[0].mxu0
  %v2309 = vadd.f32 %v353, %v2308
  %2310 = vdwg.mxu0
  %2311 = vmatprep.subr.bf16.mxu0 %v1331
  %2312 = vmatpush1.bf16.msra.mxu0 %v1330
  %2313 = vmatprep.subr.bf16.mxu0 %v1395
  %2314 = vmatpush1.bf16.msra.mxu0 %v1394
  %2315 = vmatprep.subr.bf16.mxu0 %v1459
  %2316 = vmatpush1.bf16.msra.mxu0 %v1458
  %2317 = vmatprep.subr.bf16.mxu0 %v1523
  %2318 = vmatpush1.bf16.msra.mxu0 %v1522
  %2319 = vmatprep.subr.bf16.mxu0 %v1938
  %2320 = vmatpush1.bf16.msra.mxu0 %v1935
  %2321 = vmatprep.subr.bf16.mxu0 0
  %2322 = vmatpush1.bf16.msra.mxu0 0
  %2323 = vmatprep.subr.bf16.mxu0 0
  %2324 = vmatpush1.bf16.msra.mxu0 0
  %2325 = vmatprep.subr.bf16.mxu0 0
  %2326 = vmatpush1.bf16.msra.mxu0 0
  %2327 = vmatprep.subr.bf16.mxu0 0
  %2328 = vmatpush1.bf16.msra.mxu0 0
  %2329 = vmatprep.subr.bf16.mxu0 0
  %2330 = vmatpush1.bf16.msra.mxu0 0
  %2331 = vmatprep.subr.bf16.mxu0 0
  %2332 = vmatpush1.bf16.msra.mxu0 0
  %2333 = vmatprep.subr.bf16.mxu0 0
  %2334 = vmatpush1.bf16.msra.mxu0 0
  %2335 = vmatprep.subr.bf16.mxu0 0
  %2336 = vmatpush1.bf16.msra.mxu0 0
  %2337 = vmatprep.subr.bf16.mxu0 0
  %2338 = vmatpush1.bf16.msra.mxu0 0
  %2339 = vmatprep.subr.bf16.mxu0 0
  %2340 = vmatpush1.bf16.msra.mxu0 0
  %2341 = vmatprep.subr.bf16.mxu0 0
  %2342 = vmatpush1.bf16.msra.mxu0 0
  %2343 = vmatprep.mubr.bf16.mxu0 0
  %2344 = vmatmul.mubr.bf16.gmra.mrb[0].mxu0 %v1898
  %v2345 = vpop.f32.mrb[0].mxu0
  %v2346 = vadd.f32 %v348, %v2345
  %v2347 = vpop.f32.mrb[0].mxu0
  %v2348 = vadd.f32 %v348, %v2347
  %v2349 = vpop.f32.mrb[0].mxu0
  %v2350 = vadd.f32 %v353, %v2349
  %v2351 = vpop.f32.mrb[0].mxu0
  %v2352 = vadd.f32 %v353, %v2351
  %2353 = vdwg.mxu0
  %2354 = vmatprep.subr.bf16.mxu0 %v1333
  %2355 = vmatpush1.bf16.msra.mxu0 %v1332
  %2356 = vmatprep.subr.bf16.mxu0 %v1397
  %2357 = vmatpush1.bf16.msra.mxu0 %v1396
  %2358 = vmatprep.subr.bf16.mxu0 %v1461
  %2359 = vmatpush1.bf16.msra.mxu0 %v1460
  %2360 = vmatprep.subr.bf16.mxu0 %v1525
  %2361 = vmatpush1.bf16.msra.mxu0 %v1524
  %2362 = vmatprep.subr.bf16.mxu0 %v1944
  %2363 = vmatpush1.bf16.msra.mxu0 %v1941
  %2364 = vmatprep.subr.bf16.mxu0 0
  %2365 = vmatpush1.bf16.msra.mxu0 0
  %2366 = vmatprep.subr.bf16.mxu0 0
  %2367 = vmatpush1.bf16.msra.mxu0 0
  %2368 = vmatprep.subr.bf16.mxu0 0
  %2369 = vmatpush1.bf16.msra.mxu0 0
  %2370 = vmatprep.subr.bf16.mxu0 0
  %2371 = vmatpush1.bf16.msra.mxu0 0
  %2372 = vmatprep.subr.bf16.mxu0 0
  %2373 = vmatpush1.bf16.msra.mxu0 0
  %2374 = vmatprep.subr.bf16.mxu0 0
  %2375 = vmatpush1.bf16.msra.mxu0 0
  %2376 = vmatprep.subr.bf16.mxu0 0
  %2377 = vmatpush1.bf16.msra.mxu0 0
  %2378 = vmatprep.subr.bf16.mxu0 0
  %2379 = vmatpush1.bf16.msra.mxu0 0
  %2380 = vmatprep.subr.bf16.mxu0 0
  %2381 = vmatpush1.bf16.msra.mxu0 0
  %2382 = vmatprep.subr.bf16.mxu0 0
  %2383 = vmatpush1.bf16.msra.mxu0 0
  %2384 = vmatprep.subr.bf16.mxu0 0
  %2385 = vmatpush1.bf16.msra.mxu0 0
  %2386 = vmatprep.mubr.bf16.mxu0 0
  %2387 = vmatmul.mubr.bf16.gmra.mrb[0].mxu0 %v1898
  %v2388 = vpop.f32.mrb[0].mxu0
  %v2389 = vadd.f32 %v348, %v2388
  %v2390 = vpop.f32.mrb[0].mxu0
  %v2391 = vadd.f32 %v348, %v2390
  %v2392 = vpop.f32.mrb[0].mxu0
  %v2393 = vadd.f32 %v353, %v2392
  %v2394 = vpop.f32.mrb[0].mxu0
  %v2395 = vadd.f32 %v353, %v2394
  %2396 = vdwg.mxu0
  %2397 = vmatprep.subr.bf16.mxu0 %v1335
  %2398 = vmatpush1.bf16.msra.mxu0 %v1334
  %2399 = vmatprep.subr.bf16.mxu0 %v1399
  %2400 = vmatpush1.bf16.msra.mxu0 %v1398
  %2401 = vmatprep.subr.bf16.mxu0 %v1463
  %2402 = vmatpush1.bf16.msra.mxu0 %v1462
  %2403 = vmatprep.subr.bf16.mxu0 %v1527
  %2404 = vmatpush1.bf16.msra.mxu0 %v1526
  %2405 = vmatprep.subr.bf16.mxu0 %v1950
  %2406 = vmatpush1.bf16.msra.mxu0 %v1947
  %2407 = vmatprep.subr.bf16.mxu0 0
  %2408 = vmatpush1.bf16.msra.mxu0 0
  %2409 = vmatprep.subr.bf16.mxu0 0
  %2410 = vmatpush1.bf16.msra.mxu0 0
  %2411 = vmatprep.subr.bf16.mxu0 0
  %2412 = vmatpush1.bf16.msra.mxu0 0
  %2413 = vmatprep.subr.bf16.mxu0 0
  %2414 = vmatpush1.bf16.msra.mxu0 0
  %2415 = vmatprep.subr.bf16.mxu0 0
  %2416 = vmatpush1.bf16.msra.mxu0 0
  %2417 = vmatprep.subr.bf16.mxu0 0
  %2418 = vmatpush1.bf16.msra.mxu0 0
  %2419 = vmatprep.subr.bf16.mxu0 0
  %2420 = vmatpush1.bf16.msra.mxu0 0
  %2421 = vmatprep.subr.bf16.mxu0 0
  %2422 = vmatpush1.bf16.msra.mxu0 0
  %2423 = vmatprep.subr.bf16.mxu0 0
  %2424 = vmatpush1.bf16.msra.mxu0 0
  %2425 = vmatprep.subr.bf16.mxu0 0
  %2426 = vmatpush1.bf16.msra.mxu0 0
  %2427 = vmatprep.subr.bf16.mxu0 0
  %2428 = vmatpush1.bf16.msra.mxu0 0
  %2429 = vmatprep.mubr.bf16.mxu0 0
  %2430 = vmatmul.mubr.bf16.gmra.mrb[0].mxu0 %v1898
  %v2431 = vpop.f32.mrb[0].mxu0
  %v2432 = vadd.f32 %v348, %v2431
  %v2433 = vpop.f32.mrb[0].mxu0
  %v2434 = vadd.f32 %v348, %v2433
  %v2435 = vpop.f32.mrb[0].mxu0
  %v2436 = vadd.f32 %v353, %v2435
  %v2437 = vpop.f32.mrb[0].mxu0
  %v2438 = vadd.f32 %v353, %v2437
  %2439 = vdwg.mxu0
  %2440 = vmatprep.subr.bf16.mxu0 %v1337
  %2441 = vmatpush1.bf16.msra.mxu0 %v1336
  %2442 = vmatprep.subr.bf16.mxu0 %v1401
  %2443 = vmatpush1.bf16.msra.mxu0 %v1400
  %2444 = vmatprep.subr.bf16.mxu0 %v1465
  %2445 = vmatpush1.bf16.msra.mxu0 %v1464
  %2446 = vmatprep.subr.bf16.mxu0 %v1529
  %2447 = vmatpush1.bf16.msra.mxu0 %v1528
  %2448 = vmatprep.subr.bf16.mxu0 %v1956
  %2449 = vmatpush1.bf16.msra.mxu0 %v1953
  %2450 = vmatprep.subr.bf16.mxu0 0
  %2451 = vmatpush1.bf16.msra.mxu0 0
  %2452 = vmatprep.subr.bf16.mxu0 0
  %2453 = vmatpush1.bf16.msra.mxu0 0
  %2454 = vmatprep.subr.bf16.mxu0 0
  %2455 = vmatpush1.bf16.msra.mxu0 0
  %2456 = vmatprep.subr.bf16.mxu0 0
  %2457 = vmatpush1.bf16.msra.mxu0 0
  %2458 = vmatprep.subr.bf16.mxu0 0
  %2459 = vmatpush1.bf16.msra.mxu0 0
  %2460 = vmatprep.subr.bf16.mxu0 0
  %2461 = vmatpush1.bf16.msra.mxu0 0
  %2462 = vmatprep.subr.bf16.mxu0 0
  %2463 = vmatpush1.bf16.msra.mxu0 0
  %2464 = vmatprep.subr.bf16.mxu0 0
  %2465 = vmatpush1.bf16.msra.mxu0 0
  %2466 = vmatprep.subr.bf16.mxu0 0
  %2467 = vmatpush1.bf16.msra.mxu0 0
  %2468 = vmatprep.subr.bf16.mxu0 0
  %2469 = vmatpush1.bf16.msra.mxu0 0
  %2470 = vmatprep.subr.bf16.mxu0 0
  %2471 = vmatpush1.bf16.msra.mxu0 0
  %2472 = vmatprep.mubr.bf16.mxu0 0
  %2473 = vmatmul.mubr.bf16.gmra.mrb[0].mxu0 %v1898
  %v2474 = vpop.f32.mrb[0].mxu0
  %v2475 = vadd.f32 %v348, %v2474
  %v2476 = vpop.f32.mrb[0].mxu0
  %v2477 = vadd.f32 %v348, %v2476
  %v2478 = vpop.f32.mrb[0].mxu0
  %v2479 = vadd.f32 %v353, %v2478
  %v2480 = vpop.f32.mrb[0].mxu0
  %v2481 = vadd.f32 %v353, %v2480
  %2482 = vdwg.mxu0
  %2483 = vmatprep.subr.bf16.mxu0 %v1339
  %2484 = vmatpush1.bf16.msra.mxu0 %v1338
  %2485 = vmatprep.subr.bf16.mxu0 %v1403
  %2486 = vmatpush1.bf16.msra.mxu0 %v1402
  %2487 = vmatprep.subr.bf16.mxu0 %v1467
  %2488 = vmatpush1.bf16.msra.mxu0 %v1466
  %2489 = vmatprep.subr.bf16.mxu0 %v1531
  %2490 = vmatpush1.bf16.msra.mxu0 %v1530
  %2491 = vmatprep.subr.bf16.mxu0 %v1962
  %2492 = vmatpush1.bf16.msra.mxu0 %v1959
  %2493 = vmatprep.subr.bf16.mxu0 0
  %2494 = vmatpush1.bf16.msra.mxu0 0
  %2495 = vmatprep.subr.bf16.mxu0 0
  %2496 = vmatpush1.bf16.msra.mxu0 0
  %2497 = vmatprep.subr.bf16.mxu0 0
  %2498 = vmatpush1.bf16.msra.mxu0 0
  %2499 = vmatprep.subr.bf16.mxu0 0
  %2500 = vmatpush1.bf16.msra.mxu0 0
  %2501 = vmatprep.subr.bf16.mxu0 0
  %2502 = vmatpush1.bf16.msra.mxu0 0
  %2503 = vmatprep.subr.bf16.mxu0 0
  %2504 = vmatpush1.bf16.msra.mxu0 0
  %2505 = vmatprep.subr.bf16.mxu0 0
  %2506 = vmatpush1.bf16.msra.mxu0 0
  %2507 = vmatprep.subr.bf16.mxu0 0
  %2508 = vmatpush1.bf16.msra.mxu0 0
  %2509 = vmatprep.subr.bf16.mxu0 0
  %2510 = vmatpush1.bf16.msra.mxu0 0
  %2511 = vmatprep.subr.bf16.mxu0 0
  %2512 = vmatpush1.bf16.msra.mxu0 0
  %2513 = vmatprep.subr.bf16.mxu0 0
  %2514 = vmatpush1.bf16.msra.mxu0 0
  %2515 = vmatprep.mubr.bf16.mxu0 0
  %2516 = vmatmul.mubr.bf16.gmra.mrb[0].mxu0 %v1898
  %v2517 = vpop.f32.mrb[0].mxu0
  %v2518 = vadd.f32 %v348, %v2517
  %v2519 = vpop.f32.mrb[0].mxu0
  %v2520 = vadd.f32 %v348, %v2519
  %v2521 = vpop.f32.mrb[0].mxu0
  %v2522 = vadd.f32 %v353, %v2521
  %v2523 = vpop.f32.mrb[0].mxu0
  %v2524 = vadd.f32 %v353, %v2523
  %2525 = vdwg.mxu0
  %2526 = vmatprep.subr.bf16.mxu0 %v1341
  %2527 = vmatpush1.bf16.msra.mxu0 %v1340
  %2528 = vmatprep.subr.bf16.mxu0 %v1405
  %2529 = vmatpush1.bf16.msra.mxu0 %v1404
  %2530 = vmatprep.subr.bf16.mxu0 %v1469
  %2531 = vmatpush1.bf16.msra.mxu0 %v1468
  %2532 = vmatprep.subr.bf16.mxu0 %v1533
  %2533 = vmatpush1.bf16.msra.mxu0 %v1532
  %2534 = vmatprep.subr.bf16.mxu0 %v1968
  %2535 = vmatpush1.bf16.msra.mxu0 %v1965
  %2536 = vmatprep.subr.bf16.mxu0 0
  %2537 = vmatpush1.bf16.msra.mxu0 0
  %2538 = vmatprep.subr.bf16.mxu0 0
  %2539 = vmatpush1.bf16.msra.mxu0 0
  %2540 = vmatprep.subr.bf16.mxu0 0
  %2541 = vmatpush1.bf16.msra.mxu0 0
  %2542 = vmatprep.subr.bf16.mxu0 0
  %2543 = vmatpush1.bf16.msra.mxu0 0
  %2544 = vmatprep.subr.bf16.mxu0 0
  %2545 = vmatpush1.bf16.msra.mxu0 0
  %2546 = vmatprep.subr.bf16.mxu0 0
  %2547 = vmatpush1.bf16.msra.mxu0 0
  %2548 = vmatprep.subr.bf16.mxu0 0
  %2549 = vmatpush1.bf16.msra.mxu0 0
  %2550 = vmatprep.subr.bf16.mxu0 0
  %2551 = vmatpush1.bf16.msra.mxu0 0
  %2552 = vmatprep.subr.bf16.mxu0 0
  %2553 = vmatpush1.bf16.msra.mxu0 0
  %2554 = vmatprep.subr.bf16.mxu0 0
  %2555 = vmatpush1.bf16.msra.mxu0 0
  %2556 = vmatprep.subr.bf16.mxu0 0
  %2557 = vmatpush1.bf16.msra.mxu0 0
  %2558 = vmatprep.mubr.bf16.mxu0 0
  %2559 = vmatmul.mubr.bf16.gmra.mrb[0].mxu0 %v1898
  %v2560 = vpop.f32.mrb[0].mxu0
  %v2561 = vadd.f32 %v348, %v2560
  %v2562 = vpop.f32.mrb[0].mxu0
  %v2563 = vadd.f32 %v348, %v2562
  %v2564 = vpop.f32.mrb[0].mxu0
  %v2565 = vadd.f32 %v353, %v2564
  %v2566 = vpop.f32.mrb[0].mxu0
  %v2567 = vadd.f32 %v353, %v2566
  %2568 = vdwg.mxu0
  %2569 = vmatprep.subr.bf16.mxu0 %v1343
  %2570 = vmatpush1.bf16.msra.mxu0 %v1342
  %2571 = vmatprep.subr.bf16.mxu0 %v1407
  %2572 = vmatpush1.bf16.msra.mxu0 %v1406
  %2573 = vmatprep.subr.bf16.mxu0 %v1471
  %2574 = vmatpush1.bf16.msra.mxu0 %v1470
  %2575 = vmatprep.subr.bf16.mxu0 %v1535
  %2576 = vmatpush1.bf16.msra.mxu0 %v1534
  %2577 = vmatprep.subr.bf16.mxu0 %v1974
  %2578 = vmatpush1.bf16.msra.mxu0 %v1971
  %2579 = vmatprep.subr.bf16.mxu0 0
  %2580 = vmatpush1.bf16.msra.mxu0 0
  %2581 = vmatprep.subr.bf16.mxu0 0
  %2582 = vmatpush1.bf16.msra.mxu0 0
  %2583 = vmatprep.subr.bf16.mxu0 0
  %2584 = vmatpush1.bf16.msra.mxu0 0
  %2585 = vmatprep.subr.bf16.mxu0 0
  %2586 = vmatpush1.bf16.msra.mxu0 0
  %2587 = vmatprep.subr.bf16.mxu0 0
  %2588 = vmatpush1.bf16.msra.mxu0 0
  %2589 = vmatprep.subr.bf16.mxu0 0
  %2590 = vmatpush1.bf16.msra.mxu0 0
  %2591 = vmatprep.subr.bf16.mxu0 0
  %2592 = vmatpush1.bf16.msra.mxu0 0
  %2593 = vmatprep.subr.bf16.mxu0 0
  %2594 = vmatpush1.bf16.msra.mxu0 0
  %2595 = vmatprep.subr.bf16.mxu0 0
  %2596 = vmatpush1.bf16.msra.mxu0 0
  %2597 = vmatprep.subr.bf16.mxu0 0
  %2598 = vmatpush1.bf16.msra.mxu0 0
  %2599 = vmatprep.subr.bf16.mxu0 0
  %2600 = vmatpush1.bf16.msra.mxu0 0
  %2601 = vmatprep.mubr.bf16.mxu0 0
  %2602 = vmatmul.mubr.bf16.gmra.mrb[0].mxu0 %v1898
  %v2603 = vpop.f32.mrb[0].mxu0
  %v2604 = vadd.f32 %v348, %v2603
  %v2605 = vpop.f32.mrb[0].mxu0
  %v2606 = vadd.f32 %v348, %v2605
  %v2607 = vpop.f32.mrb[0].mxu0
  %v2608 = vadd.f32 %v353, %v2607
  %v2609 = vpop.f32.mrb[0].mxu0
  %v2610 = vadd.f32 %v353, %v2609
  %2611 = vdwg.mxu0
  %2612 = vmatprep.subr.bf16.mxu0 %v1345
  %2613 = vmatpush1.bf16.msra.mxu0 %v1344
  %2614 = vmatprep.subr.bf16.mxu0 %v1409
  %2615 = vmatpush1.bf16.msra.mxu0 %v1408
  %2616 = vmatprep.subr.bf16.mxu0 %v1473
  %2617 = vmatpush1.bf16.msra.mxu0 %v1472
  %2618 = vmatprep.subr.bf16.mxu0 %v1537
  %2619 = vmatpush1.bf16.msra.mxu0 %v1536
  %2620 = vmatprep.subr.bf16.mxu0 %v1980
  %2621 = vmatpush1.bf16.msra.mxu0 %v1977
  %2622 = vmatprep.subr.bf16.mxu0 0
  %2623 = vmatpush1.bf16.msra.mxu0 0
  %2624 = vmatprep.subr.bf16.mxu0 0
  %2625 = vmatpush1.bf16.msra.mxu0 0
  %2626 = vmatprep.subr.bf16.mxu0 0
  %2627 = vmatpush1.bf16.msra.mxu0 0
  %2628 = vmatprep.subr.bf16.mxu0 0
  %2629 = vmatpush1.bf16.msra.mxu0 0
  %2630 = vmatprep.subr.bf16.mxu0 0
  %2631 = vmatpush1.bf16.msra.mxu0 0
  %2632 = vmatprep.subr.bf16.mxu0 0
  %2633 = vmatpush1.bf16.msra.mxu0 0
  %2634 = vmatprep.subr.bf16.mxu0 0
  %2635 = vmatpush1.bf16.msra.mxu0 0
  %2636 = vmatprep.subr.bf16.mxu0 0
  %2637 = vmatpush1.bf16.msra.mxu0 0
  %2638 = vmatprep.subr.bf16.mxu0 0
  %2639 = vmatpush1.bf16.msra.mxu0 0
  %2640 = vmatprep.subr.bf16.mxu0 0
  %2641 = vmatpush1.bf16.msra.mxu0 0
  %2642 = vmatprep.subr.bf16.mxu0 0
  %2643 = vmatpush1.bf16.msra.mxu0 0
  %2644 = vmatprep.mubr.bf16.mxu0 0
  %2645 = vmatmul.mubr.bf16.gmra.mrb[0].mxu0 %v1898
  %v2646 = vpop.f32.mrb[0].mxu0
  %v2647 = vadd.f32 %v348, %v2646
  %v2648 = vpop.f32.mrb[0].mxu0
  %v2649 = vadd.f32 %v348, %v2648
  %v2650 = vpop.f32.mrb[0].mxu0
  %v2651 = vadd.f32 %v353, %v2650
  %v2652 = vpop.f32.mrb[0].mxu0
  %v2653 = vadd.f32 %v353, %v2652
  %2654 = vdwg.mxu0
  %2655 = vmatprep.subr.bf16.mxu0 %v1347
  %2656 = vmatpush1.bf16.msra.mxu0 %v1346
  %2657 = vmatprep.subr.bf16.mxu0 %v1411
  %2658 = vmatpush1.bf16.msra.mxu0 %v1410
  %2659 = vmatprep.subr.bf16.mxu0 %v1475
  %2660 = vmatpush1.bf16.msra.mxu0 %v1474
  %2661 = vmatprep.subr.bf16.mxu0 %v1539
  %2662 = vmatpush1.bf16.msra.mxu0 %v1538
  %2663 = vmatprep.subr.bf16.mxu0 %v1986
  %2664 = vmatpush1.bf16.msra.mxu0 %v1983
  %2665 = vmatprep.subr.bf16.mxu0 0
  %2666 = vmatpush1.bf16.msra.mxu0 0
  %2667 = vmatprep.subr.bf16.mxu0 0
  %2668 = vmatpush1.bf16.msra.mxu0 0
  %2669 = vmatprep.subr.bf16.mxu0 0
  %2670 = vmatpush1.bf16.msra.mxu0 0
  %2671 = vmatprep.subr.bf16.mxu0 0
  %2672 = vmatpush1.bf16.msra.mxu0 0
  %2673 = vmatprep.subr.bf16.mxu0 0
  %2674 = vmatpush1.bf16.msra.mxu0 0
  %2675 = vmatprep.subr.bf16.mxu0 0
  %2676 = vmatpush1.bf16.msra.mxu0 0
  %2677 = vmatprep.subr.bf16.mxu0 0
  %2678 = vmatpush1.bf16.msra.mxu0 0
  %2679 = vmatprep.subr.bf16.mxu0 0
  %2680 = vmatpush1.bf16.msra.mxu0 0
  %2681 = vmatprep.subr.bf16.mxu0 0
  %2682 = vmatpush1.bf16.msra.mxu0 0
  %2683 = vmatprep.subr.bf16.mxu0 0
  %2684 = vmatpush1.bf16.msra.mxu0 0
  %2685 = vmatprep.subr.bf16.mxu0 0
  %2686 = vmatpush1.bf16.msra.mxu0 0
  %2687 = vmatprep.mubr.bf16.mxu0 0
  %2688 = vmatmul.mubr.bf16.gmra.mrb[0].mxu0 %v1898
  %v2689 = vpop.f32.mrb[0].mxu0
  %v2690 = vadd.f32 %v348, %v2689
  %v2691 = vpop.f32.mrb[0].mxu0
  %v2692 = vadd.f32 %v348, %v2691
  %v2693 = vpop.f32.mrb[0].mxu0
  %v2694 = vadd.f32 %v353, %v2693
  %v2695 = vpop.f32.mrb[0].mxu0
  %v2696 = vadd.f32 %v353, %v2695
  %2697 = vdwg.mxu0
  %2698 = vmatprep.subr.bf16.mxu0 %v1349
  %2699 = vmatpush1.bf16.msra.mxu0 %v1348
  %2700 = vmatprep.subr.bf16.mxu0 %v1413
  %2701 = vmatpush1.bf16.msra.mxu0 %v1412
  %2702 = vmatprep.subr.bf16.mxu0 %v1477
  %2703 = vmatpush1.bf16.msra.mxu0 %v1476
  %2704 = vmatprep.subr.bf16.mxu0 %v1541
  %2705 = vmatpush1.bf16.msra.mxu0 %v1540
  %2706 = vmatprep.subr.bf16.mxu0 %v1992
  %2707 = vmatpush1.bf16.msra.mxu0 %v1989
  %2708 = vmatprep.subr.bf16.mxu0 0
  %2709 = vmatpush1.bf16.msra.mxu0 0
  %2710 = vmatprep.subr.bf16.mxu0 0
  %2711 = vmatpush1.bf16.msra.mxu0 0
  %2712 = vmatprep.subr.bf16.mxu0 0
  %2713 = vmatpush1.bf16.msra.mxu0 0
  %2714 = vmatprep.subr.bf16.mxu0 0
  %2715 = vmatpush1.bf16.msra.mxu0 0
  %2716 = vmatprep.subr.bf16.mxu0 0
  %2717 = vmatpush1.bf16.msra.mxu0 0
  %2718 = vmatprep.subr.bf16.mxu0 0
  %2719 = vmatpush1.bf16.msra.mxu0 0
  %2720 = vmatprep.subr.bf16.mxu0 0
  %2721 = vmatpush1.bf16.msra.mxu0 0
  %2722 = vmatprep.subr.bf16.mxu0 0
  %2723 = vmatpush1.bf16.msra.mxu0 0
  %2724 = vmatprep.subr.bf16.mxu0 0
  %2725 = vmatpush1.bf16.msra.mxu0 0
  %2726 = vmatprep.subr.bf16.mxu0 0
  %2727 = vmatpush1.bf16.msra.mxu0 0
  %2728 = vmatprep.subr.bf16.mxu0 0
  %2729 = vmatpush1.bf16.msra.mxu0 0
  %2730 = vmatprep.mubr.bf16.mxu0 0
  %2731 = vmatmul.mubr.bf16.gmra.mrb[0].mxu0 %v1898
  %v2732 = vpop.f32.mrb[0].mxu0
  %v2733 = vadd.f32 %v348, %v2732
  %v2734 = vpop.f32.mrb[0].mxu0
  %v2735 = vadd.f32 %v348, %v2734
  %v2736 = vpop.f32.mrb[0].mxu0
  %v2737 = vadd.f32 %v353, %v2736
  %v2738 = vpop.f32.mrb[0].mxu0
  %v2739 = vadd.f32 %v353, %v2738
  %2740 = vdwg.mxu0
  %2741 = vmatprep.subr.bf16.mxu0 %v1351
  %2742 = vmatpush1.bf16.msra.mxu0 %v1350
  %2743 = vmatprep.subr.bf16.mxu0 %v1415
  %2744 = vmatpush1.bf16.msra.mxu0 %v1414
  %2745 = vmatprep.subr.bf16.mxu0 %v1479
  %2746 = vmatpush1.bf16.msra.mxu0 %v1478
  %2747 = vmatprep.subr.bf16.mxu0 %v1543
  %2748 = vmatpush1.bf16.msra.mxu0 %v1542
  %2749 = vmatprep.subr.bf16.mxu0 %v1998
  %2750 = vmatpush1.bf16.msra.mxu0 %v1995
  %2751 = vmatprep.subr.bf16.mxu0 0
  %2752 = vmatpush1.bf16.msra.mxu0 0
  %2753 = vmatprep.subr.bf16.mxu0 0
  %2754 = vmatpush1.bf16.msra.mxu0 0
  %2755 = vmatprep.subr.bf16.mxu0 0
  %2756 = vmatpush1.bf16.msra.mxu0 0
  %2757 = vmatprep.subr.bf16.mxu0 0
  %2758 = vmatpush1.bf16.msra.mxu0 0
  %2759 = vmatprep.subr.bf16.mxu0 0
  %2760 = vmatpush1.bf16.msra.mxu0 0
  %2761 = vmatprep.subr.bf16.mxu0 0
  %2762 = vmatpush1.bf16.msra.mxu0 0
  %2763 = vmatprep.subr.bf16.mxu0 0
  %2764 = vmatpush1.bf16.msra.mxu0 0
  %2765 = vmatprep.subr.bf16.mxu0 0
  %2766 = vmatpush1.bf16.msra.mxu0 0
  %2767 = vmatprep.subr.bf16.mxu0 0
  %2768 = vmatpush1.bf16.msra.mxu0 0
  %2769 = vmatprep.subr.bf16.mxu0 0
  %2770 = vmatpush1.bf16.msra.mxu0 0
  %2771 = vmatprep.subr.bf16.mxu0 0
  %2772 = vmatpush1.bf16.msra.mxu0 0
  %2773 = vmatprep.mubr.bf16.mxu0 0
  %2774 = vmatmul.mubr.bf16.gmra.mrb[0].mxu0 %v1898
  %v2775 = vpop.f32.mrb[0].mxu0
  %v2776 = vadd.f32 %v348, %v2775
  %v2777 = vpop.f32.mrb[0].mxu0
  %v2778 = vadd.f32 %v348, %v2777
  %v2779 = vpop.f32.mrb[0].mxu0
  %v2780 = vadd.f32 %v353, %v2779
  %v2781 = vpop.f32.mrb[0].mxu0
  %v2782 = vadd.f32 %v353, %v2781
  %2783 = vdwg.mxu0
  %2784 = vmatprep.subr.bf16.mxu0 %v1353
  %2785 = vmatpush1.bf16.msra.mxu0 %v1352
  %2786 = vmatprep.subr.bf16.mxu0 %v1417
  %2787 = vmatpush1.bf16.msra.mxu0 %v1416
  %2788 = vmatprep.subr.bf16.mxu0 %v1481
  %2789 = vmatpush1.bf16.msra.mxu0 %v1480
  %2790 = vmatprep.subr.bf16.mxu0 %v1545
  %2791 = vmatpush1.bf16.msra.mxu0 %v1544
  %2792 = vmatprep.subr.bf16.mxu0 %v2004
  %2793 = vmatpush1.bf16.msra.mxu0 %v2001
  %2794 = vmatprep.subr.bf16.mxu0 0
  %2795 = vmatpush1.bf16.msra.mxu0 0
  %2796 = vmatprep.subr.bf16.mxu0 0
  %2797 = vmatpush1.bf16.msra.mxu0 0
  %2798 = vmatprep.subr.bf16.mxu0 0
  %2799 = vmatpush1.bf16.msra.mxu0 0
  %2800 = vmatprep.subr.bf16.mxu0 0
  %2801 = vmatpush1.bf16.msra.mxu0 0
  %2802 = vmatprep.subr.bf16.mxu0 0
  %2803 = vmatpush1.bf16.msra.mxu0 0
  %2804 = vmatprep.subr.bf16.mxu0 0
  %2805 = vmatpush1.bf16.msra.mxu0 0
  %2806 = vmatprep.subr.bf16.mxu0 0
  %2807 = vmatpush1.bf16.msra.mxu0 0
  %2808 = vmatprep.subr.bf16.mxu0 0
  %2809 = vmatpush1.bf16.msra.mxu0 0
  %2810 = vmatprep.subr.bf16.mxu0 0
  %2811 = vmatpush1.bf16.msra.mxu0 0
  %2812 = vmatprep.subr.bf16.mxu0 0
  %2813 = vmatpush1.bf16.msra.mxu0 0
  %2814 = vmatprep.subr.bf16.mxu0 0
  %2815 = vmatpush1.bf16.msra.mxu0 0
  %2816 = vmatprep.mubr.bf16.mxu0 0
  %2817 = vmatmul.mubr.bf16.gmra.mrb[0].mxu0 %v1898
  %v2818 = vpop.f32.mrb[0].mxu0
  %v2819 = vadd.f32 %v348, %v2818
  %v2820 = vpop.f32.mrb[0].mxu0
  %v2821 = vadd.f32 %v348, %v2820
  %v2822 = vpop.f32.mrb[0].mxu0
  %v2823 = vadd.f32 %v353, %v2822
  %v2824 = vpop.f32.mrb[0].mxu0
  %v2825 = vadd.f32 %v353, %v2824
  %2826 = vdwg.mxu0
  %2827 = vmatprep.subr.bf16.mxu0 %v1355
  %2828 = vmatpush1.bf16.msra.mxu0 %v1354
  %2829 = vmatprep.subr.bf16.mxu0 %v1419
  %2830 = vmatpush1.bf16.msra.mxu0 %v1418
  %2831 = vmatprep.subr.bf16.mxu0 %v1483
  %2832 = vmatpush1.bf16.msra.mxu0 %v1482
  %2833 = vmatprep.subr.bf16.mxu0 %v1547
  %2834 = vmatpush1.bf16.msra.mxu0 %v1546
  %2835 = vmatprep.subr.bf16.mxu0 %v2010
  %2836 = vmatpush1.bf16.msra.mxu0 %v2007
  %2837 = vmatprep.subr.bf16.mxu0 0
  %2838 = vmatpush1.bf16.msra.mxu0 0
  %2839 = vmatprep.subr.bf16.mxu0 0
  %2840 = vmatpush1.bf16.msra.mxu0 0
  %2841 = vmatprep.subr.bf16.mxu0 0
  %2842 = vmatpush1.bf16.msra.mxu0 0
  %2843 = vmatprep.subr.bf16.mxu0 0
  %2844 = vmatpush1.bf16.msra.mxu0 0
  %2845 = vmatprep.subr.bf16.mxu0 0
  %2846 = vmatpush1.bf16.msra.mxu0 0
  %2847 = vmatprep.subr.bf16.mxu0 0
  %2848 = vmatpush1.bf16.msra.mxu0 0
  %2849 = vmatprep.subr.bf16.mxu0 0
  %2850 = vmatpush1.bf16.msra.mxu0 0
  %2851 = vmatprep.subr.bf16.mxu0 0
  %2852 = vmatpush1.bf16.msra.mxu0 0
  %2853 = vmatprep.subr.bf16.mxu0 0
  %2854 = vmatpush1.bf16.msra.mxu0 0
  %2855 = vmatprep.subr.bf16.mxu0 0
  %2856 = vmatpush1.bf16.msra.mxu0 0
  %2857 = vmatprep.subr.bf16.mxu0 0
  %2858 = vmatpush1.bf16.msra.mxu0 0
  %2859 = vmatprep.mubr.bf16.mxu0 0
  %2860 = vmatmul.mubr.bf16.gmra.mrb[0].mxu0 %v1898
  %v2861 = vpop.f32.mrb[0].mxu0
  %v2862 = vadd.f32 %v348, %v2861
  %v2863 = vpop.f32.mrb[0].mxu0
  %v2864 = vadd.f32 %v348, %v2863
  %v2865 = vpop.f32.mrb[0].mxu0
  %v2866 = vadd.f32 %v353, %v2865
  %v2867 = vpop.f32.mrb[0].mxu0
  %v2868 = vadd.f32 %v353, %v2867
  %2869 = vdwg.mxu0
  %2870 = vmatprep.subr.bf16.mxu0 %v1357
  %2871 = vmatpush1.bf16.msra.mxu0 %v1356
  %2872 = vmatprep.subr.bf16.mxu0 %v1421
  %2873 = vmatpush1.bf16.msra.mxu0 %v1420
  %2874 = vmatprep.subr.bf16.mxu0 %v1485
  %2875 = vmatpush1.bf16.msra.mxu0 %v1484
  %2876 = vmatprep.subr.bf16.mxu0 %v1549
  %2877 = vmatpush1.bf16.msra.mxu0 %v1548
  %2878 = vmatprep.subr.bf16.mxu0 %v2016
  %2879 = vmatpush1.bf16.msra.mxu0 %v2013
  %2880 = vmatprep.subr.bf16.mxu0 0
  %2881 = vmatpush1.bf16.msra.mxu0 0
  %2882 = vmatprep.subr.bf16.mxu0 0
  %2883 = vmatpush1.bf16.msra.mxu0 0
  %2884 = vmatprep.subr.bf16.mxu0 0
  %2885 = vmatpush1.bf16.msra.mxu0 0
  %2886 = vmatprep.subr.bf16.mxu0 0
  %2887 = vmatpush1.bf16.msra.mxu0 0
  %2888 = vmatprep.subr.bf16.mxu0 0
  %2889 = vmatpush1.bf16.msra.mxu0 0
  %2890 = vmatprep.subr.bf16.mxu0 0
  %2891 = vmatpush1.bf16.msra.mxu0 0
  %2892 = vmatprep.subr.bf16.mxu0 0
  %2893 = vmatpush1.bf16.msra.mxu0 0
  %2894 = vmatprep.subr.bf16.mxu0 0
  %2895 = vmatpush1.bf16.msra.mxu0 0
  %2896 = vmatprep.subr.bf16.mxu0 0
  %2897 = vmatpush1.bf16.msra.mxu0 0
  %2898 = vmatprep.subr.bf16.mxu0 0
  %2899 = vmatpush1.bf16.msra.mxu0 0
  %2900 = vmatprep.subr.bf16.mxu0 0
  %2901 = vmatpush1.bf16.msra.mxu0 0
  %2902 = vmatprep.mubr.bf16.mxu0 0
  %2903 = vmatmul.mubr.bf16.gmra.mrb[0].mxu0 %v1898
  %v2904 = vpop.f32.mrb[0].mxu0
  %v2905 = vadd.f32 %v348, %v2904
  %v2906 = vpop.f32.mrb[0].mxu0
  %v2907 = vadd.f32 %v348, %v2906
  %v2908 = vpop.f32.mrb[0].mxu0
  %v2909 = vadd.f32 %v353, %v2908
  %v2910 = vpop.f32.mrb[0].mxu0
  %v2911 = vadd.f32 %v353, %v2910
  %2912 = vdwg.mxu0
  %2913 = vmatprep.subr.bf16.mxu0 %v1359
  %2914 = vmatpush1.bf16.msra.mxu0 %v1358
  %2915 = vmatprep.subr.bf16.mxu0 %v1423
  %2916 = vmatpush1.bf16.msra.mxu0 %v1422
  %2917 = vmatprep.subr.bf16.mxu0 %v1487
  %2918 = vmatpush1.bf16.msra.mxu0 %v1486
  %2919 = vmatprep.subr.bf16.mxu0 %v1551
  %2920 = vmatpush1.bf16.msra.mxu0 %v1550
  %2921 = vmatprep.subr.bf16.mxu0 %v2022
  %2922 = vmatpush1.bf16.msra.mxu0 %v2019
  %2923 = vmatprep.subr.bf16.mxu0 0
  %2924 = vmatpush1.bf16.msra.mxu0 0
  %2925 = vmatprep.subr.bf16.mxu0 0
  %2926 = vmatpush1.bf16.msra.mxu0 0
  %2927 = vmatprep.subr.bf16.mxu0 0
  %2928 = vmatpush1.bf16.msra.mxu0 0
  %2929 = vmatprep.subr.bf16.mxu0 0
  %2930 = vmatpush1.bf16.msra.mxu0 0
  %2931 = vmatprep.subr.bf16.mxu0 0
  %2932 = vmatpush1.bf16.msra.mxu0 0
  %2933 = vmatprep.subr.bf16.mxu0 0
  %2934 = vmatpush1.bf16.msra.mxu0 0
  %2935 = vmatprep.subr.bf16.mxu0 0
  %2936 = vmatpush1.bf16.msra.mxu0 0
  %2937 = vmatprep.subr.bf16.mxu0 0
  %2938 = vmatpush1.bf16.msra.mxu0 0
  %2939 = vmatprep.subr.bf16.mxu0 0
  %2940 = vmatpush1.bf16.msra.mxu0 0
  %2941 = vmatprep.subr.bf16.mxu0 0
  %2942 = vmatpush1.bf16.msra.mxu0 0
  %2943 = vmatprep.subr.bf16.mxu0 0
  %2944 = vmatpush1.bf16.msra.mxu0 0
  %2945 = vmatprep.mubr.bf16.mxu0 0
  %2946 = vmatmul.mubr.bf16.gmra.mrb[0].mxu0 %v1898
  %v2947 = vpop.f32.mrb[0].mxu0
  %v2948 = vadd.f32 %v348, %v2947
  %v2949 = vpop.f32.mrb[0].mxu0
  %v2950 = vadd.f32 %v348, %v2949
  %v2951 = vpop.f32.mrb[0].mxu0
  %v2952 = vadd.f32 %v353, %v2951
  %v2953 = vpop.f32.mrb[0].mxu0
  %v2954 = vadd.f32 %v353, %v2953
  %2955 = vdwg.mxu0
  %2956 = vmatprep.subr.bf16.mxu0 %v1361
  %2957 = vmatpush1.bf16.msra.mxu0 %v1360
  %2958 = vmatprep.subr.bf16.mxu0 %v1425
  %2959 = vmatpush1.bf16.msra.mxu0 %v1424
  %2960 = vmatprep.subr.bf16.mxu0 %v1489
  %2961 = vmatpush1.bf16.msra.mxu0 %v1488
  %2962 = vmatprep.subr.bf16.mxu0 %v1553
  %2963 = vmatpush1.bf16.msra.mxu0 %v1552
  %2964 = vmatprep.subr.bf16.mxu0 %v2028
  %2965 = vmatpush1.bf16.msra.mxu0 %v2025
  %2966 = vmatprep.subr.bf16.mxu0 0
  %2967 = vmatpush1.bf16.msra.mxu0 0
  %2968 = vmatprep.subr.bf16.mxu0 0
  %2969 = vmatpush1.bf16.msra.mxu0 0
  %2970 = vmatprep.subr.bf16.mxu0 0
  %2971 = vmatpush1.bf16.msra.mxu0 0
  %2972 = vmatprep.subr.bf16.mxu0 0
  %2973 = vmatpush1.bf16.msra.mxu0 0
  %2974 = vmatprep.subr.bf16.mxu0 0
  %2975 = vmatpush1.bf16.msra.mxu0 0
  %2976 = vmatprep.subr.bf16.mxu0 0
  %2977 = vmatpush1.bf16.msra.mxu0 0
  %2978 = vmatprep.subr.bf16.mxu0 0
  %2979 = vmatpush1.bf16.msra.mxu0 0
  %2980 = vmatprep.subr.bf16.mxu0 0
  %2981 = vmatpush1.bf16.msra.mxu0 0
  %2982 = vmatprep.subr.bf16.mxu0 0
  %2983 = vmatpush1.bf16.msra.mxu0 0
  %2984 = vmatprep.subr.bf16.mxu0 0
  %2985 = vmatpush1.bf16.msra.mxu0 0
  %2986 = vmatprep.subr.bf16.mxu0 0
  %2987 = vmatpush1.bf16.msra.mxu0 0
  %2988 = vmatprep.mubr.bf16.mxu0 0
  %2989 = vmatmul.mubr.bf16.gmra.mrb[0].mxu0 %v1898
  %v2990 = vpop.f32.mrb[0].mxu0
  %v2991 = vadd.f32 %v348, %v2990
  %v2992 = vpop.f32.mrb[0].mxu0
  %v2993 = vadd.f32 %v348, %v2992
  %v2994 = vpop.f32.mrb[0].mxu0
  %v2995 = vadd.f32 %v353, %v2994
  %v2996 = vpop.f32.mrb[0].mxu0
  %v2997 = vadd.f32 %v353, %v2996
  %2998 = vdwg.mxu0
  %2999 = vmatprep.subr.bf16.mxu0 %v1363
  %3000 = vmatpush1.bf16.msra.mxu0 %v1362
  %3001 = vmatprep.subr.bf16.mxu0 %v1427
  %3002 = vmatpush1.bf16.msra.mxu0 %v1426
  %3003 = vmatprep.subr.bf16.mxu0 %v1491
  %3004 = vmatpush1.bf16.msra.mxu0 %v1490
  %3005 = vmatprep.subr.bf16.mxu0 %v1555
  %3006 = vmatpush1.bf16.msra.mxu0 %v1554
  %3007 = vmatprep.subr.bf16.mxu0 %v2034
  %3008 = vmatpush1.bf16.msra.mxu0 %v2031
  %3009 = vmatprep.subr.bf16.mxu0 0
  %3010 = vmatpush1.bf16.msra.mxu0 0
  %3011 = vmatprep.subr.bf16.mxu0 0
  %3012 = vmatpush1.bf16.msra.mxu0 0
  %3013 = vmatprep.subr.bf16.mxu0 0
  %3014 = vmatpush1.bf16.msra.mxu0 0
  %3015 = vmatprep.subr.bf16.mxu0 0
  %3016 = vmatpush1.bf16.msra.mxu0 0
  %3017 = vmatprep.subr.bf16.mxu0 0
  %3018 = vmatpush1.bf16.msra.mxu0 0
  %3019 = vmatprep.subr.bf16.mxu0 0
  %3020 = vmatpush1.bf16.msra.mxu0 0
  %3021 = vmatprep.subr.bf16.mxu0 0
  %3022 = vmatpush1.bf16.msra.mxu0 0
  %3023 = vmatprep.subr.bf16.mxu0 0
  %3024 = vmatpush1.bf16.msra.mxu0 0
  %3025 = vmatprep.subr.bf16.mxu0 0
  %3026 = vmatpush1.bf16.msra.mxu0 0
  %3027 = vmatprep.subr.bf16.mxu0 0
  %3028 = vmatpush1.bf16.msra.mxu0 0
  %3029 = vmatprep.subr.bf16.mxu0 0
  %3030 = vmatpush1.bf16.msra.mxu0 0
  %3031 = vmatprep.mubr.bf16.mxu0 0
  %3032 = vmatmul.mubr.bf16.gmra.mrb[0].mxu0 %v1898
  %v3033 = vpop.f32.mrb[0].mxu0
  %v3034 = vadd.f32 %v348, %v3033
  %v3035 = vpop.f32.mrb[0].mxu0
  %v3036 = vadd.f32 %v348, %v3035
  %v3037 = vpop.f32.mrb[0].mxu0
  %v3038 = vadd.f32 %v353, %v3037
  %v3039 = vpop.f32.mrb[0].mxu0
  %v3040 = vadd.f32 %v353, %v3039
  %3041 = vdwg.mxu0
  %3042 = vmatprep.subr.bf16.mxu0 %v1365
  %3043 = vmatpush1.bf16.msra.mxu0 %v1364
  %3044 = vmatprep.subr.bf16.mxu0 %v1429
  %3045 = vmatpush1.bf16.msra.mxu0 %v1428
  %3046 = vmatprep.subr.bf16.mxu0 %v1493
  %3047 = vmatpush1.bf16.msra.mxu0 %v1492
  %3048 = vmatprep.subr.bf16.mxu0 %v1557
  %3049 = vmatpush1.bf16.msra.mxu0 %v1556
  %3050 = vmatprep.subr.bf16.mxu0 %v2040
  %3051 = vmatpush1.bf16.msra.mxu0 %v2037
  %3052 = vmatprep.subr.bf16.mxu0 0
  %3053 = vmatpush1.bf16.msra.mxu0 0
  %3054 = vmatprep.subr.bf16.mxu0 0
  %3055 = vmatpush1.bf16.msra.mxu0 0
  %3056 = vmatprep.subr.bf16.mxu0 0
  %3057 = vmatpush1.bf16.msra.mxu0 0
  %3058 = vmatprep.subr.bf16.mxu0 0
  %3059 = vmatpush1.bf16.msra.mxu0 0
  %3060 = vmatprep.subr.bf16.mxu0 0
  %3061 = vmatpush1.bf16.msra.mxu0 0
  %3062 = vmatprep.subr.bf16.mxu0 0
  %3063 = vmatpush1.bf16.msra.mxu0 0
  %3064 = vmatprep.subr.bf16.mxu0 0
  %3065 = vmatpush1.bf16.msra.mxu0 0
  %3066 = vmatprep.subr.bf16.mxu0 0
  %3067 = vmatpush1.bf16.msra.mxu0 0
  %3068 = vmatprep.subr.bf16.mxu0 0
  %3069 = vmatpush1.bf16.msra.mxu0 0
  %3070 = vmatprep.subr.bf16.mxu0 0
  %3071 = vmatpush1.bf16.msra.mxu0 0
  %3072 = vmatprep.subr.bf16.mxu0 0
  %3073 = vmatpush1.bf16.msra.mxu0 0
  %3074 = vmatprep.mubr.bf16.mxu0 0
  %3075 = vmatmul.mubr.bf16.gmra.mrb[0].mxu0 %v1898
  %v3076 = vpop.f32.mrb[0].mxu0
  %v3077 = vadd.f32 %v348, %v3076
  %v3078 = vpop.f32.mrb[0].mxu0
  %v3079 = vadd.f32 %v348, %v3078
  %v3080 = vpop.f32.mrb[0].mxu0
  %v3081 = vadd.f32 %v353, %v3080
  %v3082 = vpop.f32.mrb[0].mxu0
  %v3083 = vadd.f32 %v353, %v3082
  %3084 = vdwg.mxu0
  %3085 = vmatprep.subr.bf16.mxu0 %v1367
  %3086 = vmatpush1.bf16.msra.mxu0 %v1366
  %3087 = vmatprep.subr.bf16.mxu0 %v1431
  %3088 = vmatpush1.bf16.msra.mxu0 %v1430
  %3089 = vmatprep.subr.bf16.mxu0 %v1495
  %3090 = vmatpush1.bf16.msra.mxu0 %v1494
  %3091 = vmatprep.subr.bf16.mxu0 %v1559
  %3092 = vmatpush1.bf16.msra.mxu0 %v1558
  %3093 = vmatprep.subr.bf16.mxu0 %v2046
  %3094 = vmatpush1.bf16.msra.mxu0 %v2043
  %3095 = vmatprep.subr.bf16.mxu0 0
  %3096 = vmatpush1.bf16.msra.mxu0 0
  %3097 = vmatprep.subr.bf16.mxu0 0
  %3098 = vmatpush1.bf16.msra.mxu0 0
  %3099 = vmatprep.subr.bf16.mxu0 0
  %3100 = vmatpush1.bf16.msra.mxu0 0
  %3101 = vmatprep.subr.bf16.mxu0 0
  %3102 = vmatpush1.bf16.msra.mxu0 0
  %3103 = vmatprep.subr.bf16.mxu0 0
  %3104 = vmatpush1.bf16.msra.mxu0 0
  %3105 = vmatprep.subr.bf16.mxu0 0
  %3106 = vmatpush1.bf16.msra.mxu0 0
  %3107 = vmatprep.subr.bf16.mxu0 0
  %3108 = vmatpush1.bf16.msra.mxu0 0
  %3109 = vmatprep.subr.bf16.mxu0 0
  %3110 = vmatpush1.bf16.msra.mxu0 0
  %3111 = vmatprep.subr.bf16.mxu0 0
  %3112 = vmatpush1.bf16.msra.mxu0 0
  %3113 = vmatprep.subr.bf16.mxu0 0
  %3114 = vmatpush1.bf16.msra.mxu0 0
  %3115 = vmatprep.subr.bf16.mxu0 0
  %3116 = vmatpush1.bf16.msra.mxu0 0
  %3117 = vmatprep.mubr.bf16.mxu0 0
  %3118 = vmatmul.mubr.bf16.gmra.mrb[0].mxu0 %v1898
  %v3119 = vpop.f32.mrb[0].mxu0
  %v3120 = vadd.f32 %v348, %v3119
  %v3121 = vpop.f32.mrb[0].mxu0
  %v3122 = vadd.f32 %v348, %v3121
  %v3123 = vpop.f32.mrb[0].mxu0
  %v3124 = vadd.f32 %v353, %v3123
  %v3125 = vpop.f32.mrb[0].mxu0
  %v3126 = vadd.f32 %v353, %v3125
  %3127 = vdwg.mxu0
  %3128 = vmatprep.subr.bf16.mxu0 %v1369
  %3129 = vmatpush1.bf16.msra.mxu0 %v1368
  %3130 = vmatprep.subr.bf16.mxu0 %v1433
  %3131 = vmatpush1.bf16.msra.mxu0 %v1432
  %3132 = vmatprep.subr.bf16.mxu0 %v1497
  %3133 = vmatpush1.bf16.msra.mxu0 %v1496
  %3134 = vmatprep.subr.bf16.mxu0 %v1561
  %3135 = vmatpush1.bf16.msra.mxu0 %v1560
  %3136 = vmatprep.subr.bf16.mxu0 %v2052
  %3137 = vmatpush1.bf16.msra.mxu0 %v2049
  %3138 = vmatprep.subr.bf16.mxu0 0
  %3139 = vmatpush1.bf16.msra.mxu0 0
  %3140 = vmatprep.subr.bf16.mxu0 0
  %3141 = vmatpush1.bf16.msra.mxu0 0
  %3142 = vmatprep.subr.bf16.mxu0 0
  %3143 = vmatpush1.bf16.msra.mxu0 0
  %3144 = vmatprep.subr.bf16.mxu0 0
  %3145 = vmatpush1.bf16.msra.mxu0 0
  %3146 = vmatprep.subr.bf16.mxu0 0
  %3147 = vmatpush1.bf16.msra.mxu0 0
  %3148 = vmatprep.subr.bf16.mxu0 0
  %3149 = vmatpush1.bf16.msra.mxu0 0
  %3150 = vmatprep.subr.bf16.mxu0 0
  %3151 = vmatpush1.bf16.msra.mxu0 0
  %3152 = vmatprep.subr.bf16.mxu0 0
  %3153 = vmatpush1.bf16.msra.mxu0 0
  %3154 = vmatprep.subr.bf16.mxu0 0
  %3155 = vmatpush1.bf16.msra.mxu0 0
  %3156 = vmatprep.subr.bf16.mxu0 0
  %3157 = vmatpush1.bf16.msra.mxu0 0
  %3158 = vmatprep.subr.bf16.mxu0 0
  %3159 = vmatpush1.bf16.msra.mxu0 0
  %3160 = vmatprep.mubr.bf16.mxu0 0
  %3161 = vmatmul.mubr.bf16.gmra.mrb[0].mxu0 %v1898
  %v3162 = vpop.f32.mrb[0].mxu0
  %v3163 = vadd.f32 %v348, %v3162
  %v3164 = vpop.f32.mrb[0].mxu0
  %v3165 = vadd.f32 %v348, %v3164
  %v3166 = vpop.f32.mrb[0].mxu0
  %v3167 = vadd.f32 %v353, %v3166
  %v3168 = vpop.f32.mrb[0].mxu0
  %v3169 = vadd.f32 %v353, %v3168
  %3170 = vdwg.mxu0
  %3171 = vmatprep.subr.bf16.mxu0 %v1371
  %3172 = vmatpush1.bf16.msra.mxu0 %v1370
  %3173 = vmatprep.subr.bf16.mxu0 %v1435
  %3174 = vmatpush1.bf16.msra.mxu0 %v1434
  %3175 = vmatprep.subr.bf16.mxu0 %v1499
  %3176 = vmatpush1.bf16.msra.mxu0 %v1498
  %3177 = vmatprep.subr.bf16.mxu0 %v1563
  %3178 = vmatpush1.bf16.msra.mxu0 %v1562
  %3179 = vmatprep.subr.bf16.mxu0 %v2058
  %3180 = vmatpush1.bf16.msra.mxu0 %v2055
  %3181 = vmatprep.subr.bf16.mxu0 0
  %3182 = vmatpush1.bf16.msra.mxu0 0
  %3183 = vmatprep.subr.bf16.mxu0 0
  %3184 = vmatpush1.bf16.msra.mxu0 0
  %3185 = vmatprep.subr.bf16.mxu0 0
  %3186 = vmatpush1.bf16.msra.mxu0 0
  %3187 = vmatprep.subr.bf16.mxu0 0
  %3188 = vmatpush1.bf16.msra.mxu0 0
  %3189 = vmatprep.subr.bf16.mxu0 0
  %3190 = vmatpush1.bf16.msra.mxu0 0
  %3191 = vmatprep.subr.bf16.mxu0 0
  %3192 = vmatpush1.bf16.msra.mxu0 0
  %3193 = vmatprep.subr.bf16.mxu0 0
  %3194 = vmatpush1.bf16.msra.mxu0 0
  %3195 = vmatprep.subr.bf16.mxu0 0
  %3196 = vmatpush1.bf16.msra.mxu0 0
  %3197 = vmatprep.subr.bf16.mxu0 0
  %3198 = vmatpush1.bf16.msra.mxu0 0
  %3199 = vmatprep.subr.bf16.mxu0 0
  %3200 = vmatpush1.bf16.msra.mxu0 0
  %3201 = vmatprep.subr.bf16.mxu0 0
  %3202 = vmatpush1.bf16.msra.mxu0 0
  %3203 = vmatprep.mubr.bf16.mxu0 0
  %3204 = vmatmul.mubr.bf16.gmra.mrb[0].mxu0 %v1898
  %v3205 = vpop.f32.mrb[0].mxu0
  %v3206 = vadd.f32 %v348, %v3205
  %v3207 = vpop.f32.mrb[0].mxu0
  %v3208 = vadd.f32 %v348, %v3207
  %v3209 = vpop.f32.mrb[0].mxu0
  %v3210 = vadd.f32 %v353, %v3209
  %v3211 = vpop.f32.mrb[0].mxu0
  %v3212 = vadd.f32 %v353, %v3211
  %3213 = vdwg.mxu0
  %3214 = vmatprep.subr.bf16.mxu0 %v1373
  %3215 = vmatpush1.bf16.msra.mxu0 %v1372
  %3216 = vmatprep.subr.bf16.mxu0 %v1437
  %3217 = vmatpush1.bf16.msra.mxu0 %v1436
  %3218 = vmatprep.subr.bf16.mxu0 %v1501
  %3219 = vmatpush1.bf16.msra.mxu0 %v1500
  %3220 = vmatprep.subr.bf16.mxu0 %v1565
  %3221 = vmatpush1.bf16.msra.mxu0 %v1564
  %3222 = vmatprep.subr.bf16.mxu0 %v2064
  %3223 = vmatpush1.bf16.msra.mxu0 %v2061
  %3224 = vmatprep.subr.bf16.mxu0 0
  %3225 = vmatpush1.bf16.msra.mxu0 0
  %3226 = vmatprep.subr.bf16.mxu0 0
  %3227 = vmatpush1.bf16.msra.mxu0 0
  %3228 = vmatprep.subr.bf16.mxu0 0
  %3229 = vmatpush1.bf16.msra.mxu0 0
  %3230 = vmatprep.subr.bf16.mxu0 0
  %3231 = vmatpush1.bf16.msra.mxu0 0
  %3232 = vmatprep.subr.bf16.mxu0 0
  %3233 = vmatpush1.bf16.msra.mxu0 0
  %3234 = vmatprep.subr.bf16.mxu0 0
  %3235 = vmatpush1.bf16.msra.mxu0 0
  %3236 = vmatprep.subr.bf16.mxu0 0
  %3237 = vmatpush1.bf16.msra.mxu0 0
  %3238 = vmatprep.subr.bf16.mxu0 0
  %3239 = vmatpush1.bf16.msra.mxu0 0
  %3240 = vmatprep.subr.bf16.mxu0 0
  %3241 = vmatpush1.bf16.msra.mxu0 0
  %3242 = vmatprep.subr.bf16.mxu0 0
  %3243 = vmatpush1.bf16.msra.mxu0 0
  %3244 = vmatprep.subr.bf16.mxu0 0
  %3245 = vmatpush1.bf16.msra.mxu0 0
  %3246 = vmatprep.mubr.bf16.mxu0 0
  %3247 = vmatmul.mubr.bf16.gmra.mrb[0].mxu0 %v1898
  %v3248 = vpop.f32.mrb[0].mxu0
  %v3249 = vadd.f32 %v348, %v3248
  %v3250 = vpop.f32.mrb[0].mxu0
  %v3251 = vadd.f32 %v348, %v3250
  %v3252 = vpop.f32.mrb[0].mxu0
  %v3253 = vadd.f32 %v353, %v3252
  %v3254 = vpop.f32.mrb[0].mxu0
  %v3255 = vadd.f32 %v353, %v3254
  %3256 = vdwg.mxu0
  %3257 = vmatprep.subr.bf16.mxu0 %v1375
  %3258 = vmatpush1.bf16.msra.mxu0 %v1374
  %3259 = vmatprep.subr.bf16.mxu0 %v1439
  %3260 = vmatpush1.bf16.msra.mxu0 %v1438
  %3261 = vmatprep.subr.bf16.mxu0 %v1503
  %3262 = vmatpush1.bf16.msra.mxu0 %v1502
  %3263 = vmatprep.subr.bf16.mxu0 %v1567
  %3264 = vmatpush1.bf16.msra.mxu0 %v1566
  %3265 = vmatprep.subr.bf16.mxu0 %v2070
  %3266 = vmatpush1.bf16.msra.mxu0 %v2067
  %3267 = vmatprep.subr.bf16.mxu0 0
  %3268 = vmatpush1.bf16.msra.mxu0 0
  %3269 = vmatprep.subr.bf16.mxu0 0
  %3270 = vmatpush1.bf16.msra.mxu0 0
  %3271 = vmatprep.subr.bf16.mxu0 0
  %3272 = vmatpush1.bf16.msra.mxu0 0
  %3273 = vmatprep.subr.bf16.mxu0 0
  %3274 = vmatpush1.bf16.msra.mxu0 0
  %3275 = vmatprep.subr.bf16.mxu0 0
  %3276 = vmatpush1.bf16.msra.mxu0 0
  %3277 = vmatprep.subr.bf16.mxu0 0
  %3278 = vmatpush1.bf16.msra.mxu0 0
  %3279 = vmatprep.subr.bf16.mxu0 0
  %3280 = vmatpush1.bf16.msra.mxu0 0
  %3281 = vmatprep.subr.bf16.mxu0 0
  %3282 = vmatpush1.bf16.msra.mxu0 0
  %3283 = vmatprep.subr.bf16.mxu0 0
  %3284 = vmatpush1.bf16.msra.mxu0 0
  %3285 = vmatprep.subr.bf16.mxu0 0
  %3286 = vmatpush1.bf16.msra.mxu0 0
  %3287 = vmatprep.subr.bf16.mxu0 0
  %3288 = vmatpush1.bf16.msra.mxu0 0
  %3289 = vmatprep.mubr.bf16.mxu0 0
  %3290 = vmatmul.mubr.bf16.gmra.mrb[0].mxu0 %v1898
  %v3291 = vpop.f32.mrb[0].mxu0
  %v3292 = vadd.f32 %v348, %v3291
  %v3293 = vpop.f32.mrb[0].mxu0
  %v3294 = vadd.f32 %v348, %v3293
  %v3295 = vpop.f32.mrb[0].mxu0
  %v3296 = vadd.f32 %v353, %v3295
  %v3297 = vpop.f32.mrb[0].mxu0
  %v3298 = vadd.f32 %v353, %v3297
  %3299 = vdwg.mxu0
  %3300 = vmatprep.subr.bf16.mxu0 %v1377
  %3301 = vmatpush1.bf16.msra.mxu0 %v1376
  %3302 = vmatprep.subr.bf16.mxu0 %v1441
  %3303 = vmatpush1.bf16.msra.mxu0 %v1440
  %3304 = vmatprep.subr.bf16.mxu0 %v1505
  %3305 = vmatpush1.bf16.msra.mxu0 %v1504
  %3306 = vmatprep.subr.bf16.mxu0 %v1569
  %3307 = vmatpush1.bf16.msra.mxu0 %v1568
  %3308 = vmatprep.subr.bf16.mxu0 %v2076
  %3309 = vmatpush1.bf16.msra.mxu0 %v2073
  %3310 = vmatprep.subr.bf16.mxu0 0
  %3311 = vmatpush1.bf16.msra.mxu0 0
  %3312 = vmatprep.subr.bf16.mxu0 0
  %3313 = vmatpush1.bf16.msra.mxu0 0
  %3314 = vmatprep.subr.bf16.mxu0 0
  %3315 = vmatpush1.bf16.msra.mxu0 0
  %3316 = vmatprep.subr.bf16.mxu0 0
  %3317 = vmatpush1.bf16.msra.mxu0 0
  %3318 = vmatprep.subr.bf16.mxu0 0
  %3319 = vmatpush1.bf16.msra.mxu0 0
  %3320 = vmatprep.subr.bf16.mxu0 0
  %3321 = vmatpush1.bf16.msra.mxu0 0
  %3322 = vmatprep.subr.bf16.mxu0 0
  %3323 = vmatpush1.bf16.msra.mxu0 0
  %3324 = vmatprep.subr.bf16.mxu0 0
  %3325 = vmatpush1.bf16.msra.mxu0 0
  %3326 = vmatprep.subr.bf16.mxu0 0
  %3327 = vmatpush1.bf16.msra.mxu0 0
  %3328 = vmatprep.subr.bf16.mxu0 0
  %3329 = vmatpush1.bf16.msra.mxu0 0
  %3330 = vmatprep.subr.bf16.mxu0 0
  %3331 = vmatpush1.bf16.msra.mxu0 0
  %3332 = vmatprep.mubr.bf16.mxu0 0
  %3333 = vmatmul.mubr.bf16.gmra.mrb[0].mxu0 %v1898
  %v3334 = vpop.f32.mrb[0].mxu0
  %v3335 = vadd.f32 %v348, %v3334
  %v3336 = vpop.f32.mrb[0].mxu0
  %v3337 = vadd.f32 %v348, %v3336
  %v3338 = vpop.f32.mrb[0].mxu0
  %v3339 = vadd.f32 %v353, %v3338
  %v3340 = vpop.f32.mrb[0].mxu0
  %v3341 = vadd.f32 %v353, %v3340
  %3342 = vdwg.mxu0
  %3343 = vmatprep.subr.bf16.mxu0 %v1379
  %3344 = vmatpush1.bf16.msra.mxu0 %v1378
  %3345 = vmatprep.subr.bf16.mxu0 %v1443
  %3346 = vmatpush1.bf16.msra.mxu0 %v1442
  %3347 = vmatprep.subr.bf16.mxu0 %v1507
  %3348 = vmatpush1.bf16.msra.mxu0 %v1506
  %3349 = vmatprep.subr.bf16.mxu0 %v1571
  %3350 = vmatpush1.bf16.msra.mxu0 %v1570
  %3351 = vmatprep.subr.bf16.mxu0 %v2082
  %3352 = vmatpush1.bf16.msra.mxu0 %v2079
  %3353 = vmatprep.subr.bf16.mxu0 0
  %3354 = vmatpush1.bf16.msra.mxu0 0
  %3355 = vmatprep.subr.bf16.mxu0 0
  %3356 = vmatpush1.bf16.msra.mxu0 0
  %3357 = vmatprep.subr.bf16.mxu0 0
  %3358 = vmatpush1.bf16.msra.mxu0 0
  %3359 = vmatprep.subr.bf16.mxu0 0
  %3360 = vmatpush1.bf16.msra.mxu0 0
  %3361 = vmatprep.subr.bf16.mxu0 0
  %3362 = vmatpush1.bf16.msra.mxu0 0
  %3363 = vmatprep.subr.bf16.mxu0 0
  %3364 = vmatpush1.bf16.msra.mxu0 0
  %3365 = vmatprep.subr.bf16.mxu0 0
  %3366 = vmatpush1.bf16.msra.mxu0 0
  %3367 = vmatprep.subr.bf16.mxu0 0
  %3368 = vmatpush1.bf16.msra.mxu0 0
  %3369 = vmatprep.subr.bf16.mxu0 0
  %3370 = vmatpush1.bf16.msra.mxu0 0
  %3371 = vmatprep.subr.bf16.mxu0 0
  %3372 = vmatpush1.bf16.msra.mxu0 0
  %3373 = vmatprep.subr.bf16.mxu0 0
  %3374 = vmatpush1.bf16.msra.mxu0 0
  %3375 = vmatprep.mubr.bf16.mxu0 0
  %3376 = vmatmul.mubr.bf16.gmra.mrb[0].mxu0 %v1898
  %v3377 = vpop.f32.mrb[0].mxu0
  %v3378 = vadd.f32 %v348, %v3377
  %v3379 = vpop.f32.mrb[0].mxu0
  %v3380 = vadd.f32 %v348, %v3379
  %v3381 = vpop.f32.mrb[0].mxu0
  %v3382 = vadd.f32 %v353, %v3381
  %v3383 = vpop.f32.mrb[0].mxu0
  %v3384 = vadd.f32 %v353, %v3383
  %3385 = vdwg.mxu0
  %3386 = vmatprep.subr.bf16.mxu0 %v1381
  %3387 = vmatpush1.bf16.msra.mxu0 %v1380
  %3388 = vmatprep.subr.bf16.mxu0 %v1445
  %3389 = vmatpush1.bf16.msra.mxu0 %v1444
  %3390 = vmatprep.subr.bf16.mxu0 %v1509
  %3391 = vmatpush1.bf16.msra.mxu0 %v1508
  %3392 = vmatprep.subr.bf16.mxu0 %v1573
  %3393 = vmatpush1.bf16.msra.mxu0 %v1572
  %3394 = vmatprep.subr.bf16.mxu0 %v2088
  %3395 = vmatpush1.bf16.msra.mxu0 %v2085
  %3396 = vmatprep.subr.bf16.mxu0 0
  %3397 = vmatpush1.bf16.msra.mxu0 0
  %3398 = vmatprep.subr.bf16.mxu0 0
  %3399 = vmatpush1.bf16.msra.mxu0 0
  %3400 = vmatprep.subr.bf16.mxu0 0
  %3401 = vmatpush1.bf16.msra.mxu0 0
  %3402 = vmatprep.subr.bf16.mxu0 0
  %3403 = vmatpush1.bf16.msra.mxu0 0
  %3404 = vmatprep.subr.bf16.mxu0 0
  %3405 = vmatpush1.bf16.msra.mxu0 0
  %3406 = vmatprep.subr.bf16.mxu0 0
  %3407 = vmatpush1.bf16.msra.mxu0 0
  %3408 = vmatprep.subr.bf16.mxu0 0
  %3409 = vmatpush1.bf16.msra.mxu0 0
  %3410 = vmatprep.subr.bf16.mxu0 0
  %3411 = vmatpush1.bf16.msra.mxu0 0
  %3412 = vmatprep.subr.bf16.mxu0 0
  %3413 = vmatpush1.bf16.msra.mxu0 0
  %3414 = vmatprep.subr.bf16.mxu0 0
  %3415 = vmatpush1.bf16.msra.mxu0 0
  %3416 = vmatprep.subr.bf16.mxu0 0
  %3417 = vmatpush1.bf16.msra.mxu0 0
  %3418 = vmatprep.mubr.bf16.mxu0 0
  %3419 = vmatmul.mubr.bf16.gmra.mrb[0].mxu0 %v1898
  %v3420 = vpop.f32.mrb[0].mxu0
  %v3421 = vadd.f32 %v348, %v3420
  %v3422 = vpop.f32.mrb[0].mxu0
  %v3423 = vadd.f32 %v348, %v3422
  %v3424 = vpop.f32.mrb[0].mxu0
  %v3425 = vadd.f32 %v353, %v3424
  %v3426 = vpop.f32.mrb[0].mxu0
  %v3427 = vadd.f32 %v353, %v3426
  %3428 = vdwg.mxu0
  %3429 = vmatprep.subr.bf16.mxu0 %v1383
  %3430 = vmatpush1.bf16.msra.mxu0 %v1382
  %3431 = vmatprep.subr.bf16.mxu0 %v1447
  %3432 = vmatpush1.bf16.msra.mxu0 %v1446
  %3433 = vmatprep.subr.bf16.mxu0 %v1511
  %3434 = vmatpush1.bf16.msra.mxu0 %v1510
  %3435 = vmatprep.subr.bf16.mxu0 %v1575
  %3436 = vmatpush1.bf16.msra.mxu0 %v1574
  %3437 = vmatprep.subr.bf16.mxu0 %v2094
  %3438 = vmatpush1.bf16.msra.mxu0 %v2091
  %3439 = vmatprep.subr.bf16.mxu0 0
  %3440 = vmatpush1.bf16.msra.mxu0 0
  %3441 = vmatprep.subr.bf16.mxu0 0
  %3442 = vmatpush1.bf16.msra.mxu0 0
  %3443 = vmatprep.subr.bf16.mxu0 0
  %3444 = vmatpush1.bf16.msra.mxu0 0
  %3445 = vmatprep.subr.bf16.mxu0 0
  %3446 = vmatpush1.bf16.msra.mxu0 0
  %3447 = vmatprep.subr.bf16.mxu0 0
  %3448 = vmatpush1.bf16.msra.mxu0 0
  %3449 = vmatprep.subr.bf16.mxu0 0
  %3450 = vmatpush1.bf16.msra.mxu0 0
  %3451 = vmatprep.subr.bf16.mxu0 0
  %3452 = vmatpush1.bf16.msra.mxu0 0
  %3453 = vmatprep.subr.bf16.mxu0 0
  %3454 = vmatpush1.bf16.msra.mxu0 0
  %3455 = vmatprep.subr.bf16.mxu0 0
  %3456 = vmatpush1.bf16.msra.mxu0 0
  %3457 = vmatprep.subr.bf16.mxu0 0
  %3458 = vmatpush1.bf16.msra.mxu0 0
  %3459 = vmatprep.subr.bf16.mxu0 0
  %3460 = vmatpush1.bf16.msra.mxu0 0
  %3461 = vmatprep.mubr.bf16.mxu0 0
  %3462 = vmatmul.mubr.bf16.gmra.mrb[0].mxu0 %v1898
  %v3463 = vpop.f32.mrb[0].mxu0
  %v3464 = vadd.f32 %v348, %v3463
  %v3465 = vpop.f32.mrb[0].mxu0
  %v3466 = vadd.f32 %v348, %v3465
  %v3467 = vpop.f32.mrb[0].mxu0
  %v3468 = vadd.f32 %v353, %v3467
  %v3469 = vpop.f32.mrb[0].mxu0
  %v3470 = vadd.f32 %v353, %v3469
  %3471 = vdwg.mxu0
  %v3472 = vadd.f32 %v2131, %v2133
  %v3473 = vadd.f32 %v3472, %v2174
  %v3474 = vadd.f32 %v3473, %v2176
  %v3475 = vadd.f32 %v3474, %v2217
  %v3476 = vadd.f32 %v3475, %v2219
  %v3477 = vadd.f32 %v3476, %v2260
  %v3478 = vadd.f32 %v3477, %v2262
  %v3479 = vadd.f32 %v3478, %v2303
  %v3480 = vadd.f32 %v3479, %v2305
  %v3481 = vadd.f32 %v3480, %v2346
  %v3482 = vadd.f32 %v3481, %v2348
  %v3483 = vadd.f32 %v3482, %v2389
  %v3484 = vadd.f32 %v3483, %v2391
  %v3485 = vadd.f32 %v3484, %v2432
  %v3486 = vadd.f32 %v3485, %v2434
  %v3487 = vadd.f32 %v3486, %v2475
  %v3488 = vadd.f32 %v3487, %v2477
  %v3489 = vadd.f32 %v3488, %v2518
  %v3490 = vadd.f32 %v3489, %v2520
  %v3491 = vadd.f32 %v3490, %v2561
  %v3492 = vadd.f32 %v3491, %v2563
  %v3493 = vadd.f32 %v3492, %v2604
  %v3494 = vadd.f32 %v3493, %v2606
  %v3495 = vadd.f32 %v3494, %v2647
  %v3496 = vadd.f32 %v3495, %v2649
  %v3497 = vadd.f32 %v3496, %v2690
  %v3498 = vadd.f32 %v3497, %v2692
  %v3499 = vadd.f32 %v3498, %v2733
  %v3500 = vadd.f32 %v3499, %v2735
  %v3501 = vadd.f32 %v3500, %v2776
  %v3502 = vadd.f32 %v3501, %v2778
  %v3503 = vadd.f32 %v3502, %v2819
  %v3504 = vadd.f32 %v3503, %v2821
  %v3505 = vadd.f32 %v3504, %v2862
  %v3506 = vadd.f32 %v3505, %v2864
  %v3507 = vadd.f32 %v3506, %v2905
  %v3508 = vadd.f32 %v3507, %v2907
  %v3509 = vadd.f32 %v3508, %v2948
  %v3510 = vadd.f32 %v3509, %v2950
  %v3511 = vadd.f32 %v3510, %v2991
  %v3512 = vadd.f32 %v3511, %v2993
  %v3513 = vadd.f32 %v3512, %v3034
  %v3514 = vadd.f32 %v3513, %v3036
  %v3515 = vadd.f32 %v3514, %v3077
  %v3516 = vadd.f32 %v3515, %v3079
  %v3517 = vadd.f32 %v3516, %v3120
  %v3518 = vadd.f32 %v3517, %v3122
  %v3519 = vadd.f32 %v3518, %v3163
  %v3520 = vadd.f32 %v3519, %v3165
  %v3521 = vadd.f32 %v3520, %v3206
  %v3522 = vadd.f32 %v3521, %v3208
  %v3523 = vadd.f32 %v3522, %v3249
  %v3524 = vadd.f32 %v3523, %v3251
  %v3525 = vadd.f32 %v3524, %v3292
  %v3526 = vadd.f32 %v3525, %v3294
  %v3527 = vadd.f32 %v3526, %v3335
  %v3528 = vadd.f32 %v3527, %v3337
  %v3529 = vadd.f32 %v3528, %v3378
  %v3530 = vadd.f32 %v3529, %v3380
  %v3531 = vadd.f32 %v3530, %v3421
  %v3532 = vadd.f32 %v3531, %v3423
  %v3533 = vadd.f32 %v3532, %v3464
  %v3534 = vadd.f32 %v3533, %v3466
  %3535 = vadd.xlane.f32.xlu0 %v3534
  %v3536 = vpop.xlane.xlu0 %3535
  %v3537 = vadd.f32 %v2135, %v2137
  %v3538 = vadd.f32 %v3537, %v2178
  %v3539 = vadd.f32 %v3538, %v2180
  %v3540 = vadd.f32 %v3539, %v2221
  %v3541 = vadd.f32 %v3540, %v2223
  %v3542 = vadd.f32 %v3541, %v2264
  %v3543 = vadd.f32 %v3542, %v2266
  %v3544 = vadd.f32 %v3543, %v2307
  %v3545 = vadd.f32 %v3544, %v2309
  %v3546 = vadd.f32 %v3545, %v2350
  %v3547 = vadd.f32 %v3546, %v2352
  %v3548 = vadd.f32 %v3547, %v2393
  %v3549 = vadd.f32 %v3548, %v2395
  %v3550 = vadd.f32 %v3549, %v2436
  %v3551 = vadd.f32 %v3550, %v2438
  %v3552 = vadd.f32 %v3551, %v2479
  %v3553 = vadd.f32 %v3552, %v2481
  %v3554 = vadd.f32 %v3553, %v2522
  %v3555 = vadd.f32 %v3554, %v2524
  %v3556 = vadd.f32 %v3555, %v2565
  %v3557 = vadd.f32 %v3556, %v2567
  %v3558 = vadd.f32 %v3557, %v2608
  %v3559 = vadd.f32 %v3558, %v2610
  %v3560 = vadd.f32 %v3559, %v2651
  %v3561 = vadd.f32 %v3560, %v2653
  %v3562 = vadd.f32 %v3561, %v2694
  %v3563 = vadd.f32 %v3562, %v2696
  %v3564 = vadd.f32 %v3563, %v2737
  %v3565 = vadd.f32 %v3564, %v2739
  %v3566 = vadd.f32 %v3565, %v2780
  %v3567 = vadd.f32 %v3566, %v2782
  %v3568 = vadd.f32 %v3567, %v2823
  %v3569 = vadd.f32 %v3568, %v2825
  %v3570 = vadd.f32 %v3569, %v2866
  %v3571 = vadd.f32 %v3570, %v2868
  %v3572 = vadd.f32 %v3571, %v2909
  %v3573 = vadd.f32 %v3572, %v2911
  %v3574 = vadd.f32 %v3573, %v2952
  %v3575 = vadd.f32 %v3574, %v2954
  %v3576 = vadd.f32 %v3575, %v2995
  %v3577 = vadd.f32 %v3576, %v2997
  %v3578 = vadd.f32 %v3577, %v3038
  %v3579 = vadd.f32 %v3578, %v3040
  %v3580 = vadd.f32 %v3579, %v3081
  %v3581 = vadd.f32 %v3580, %v3083
  %v3582 = vadd.f32 %v3581, %v3124
  %v3583 = vadd.f32 %v3582, %v3126
  %v3584 = vadd.f32 %v3583, %v3167
  %v3585 = vadd.f32 %v3584, %v3169
  %v3586 = vadd.f32 %v3585, %v3210
  %v3587 = vadd.f32 %v3586, %v3212
  %v3588 = vadd.f32 %v3587, %v3253
  %v3589 = vadd.f32 %v3588, %v3255
  %v3590 = vadd.f32 %v3589, %v3296
  %v3591 = vadd.f32 %v3590, %v3298
  %v3592 = vadd.f32 %v3591, %v3339
  %v3593 = vadd.f32 %v3592, %v3341
  %v3594 = vadd.f32 %v3593, %v3382
  %v3595 = vadd.f32 %v3594, %v3384
  %v3596 = vadd.f32 %v3595, %v3425
  %v3597 = vadd.f32 %v3596, %v3427
  %v3598 = vadd.f32 %v3597, %v3468
  %v3599 = vadd.f32 %v3598, %v3470
  %3600 = vadd.xlane.f32.xlu0 %v3599
  %v3601 = vpop.xlane.xlu0 %3600
  %v3602 = vmul.f32 %v3536, 0.00012207031
  %v3603 = vmul.f32 %v3601, 0.00012207031
  %v3604 = vsub.f32 %v2131, %v3602
  %v3605 = vsub.f32 %v2133, %v3602
  %v3606 = vsub.f32 %v2174, %v3602
  %v3607 = vsub.f32 %v2176, %v3602
  %v3608 = vsub.f32 %v2217, %v3602
  %v3609 = vsub.f32 %v2219, %v3602
  %v3610 = vsub.f32 %v2260, %v3602
  %v3611 = vsub.f32 %v2262, %v3602
  %v3612 = vsub.f32 %v2303, %v3602
  %v3613 = vsub.f32 %v2305, %v3602
  %v3614 = vsub.f32 %v2346, %v3602
  %v3615 = vsub.f32 %v2348, %v3602
  %v3616 = vsub.f32 %v2389, %v3602
  %v3617 = vsub.f32 %v2391, %v3602
  %v3618 = vsub.f32 %v2432, %v3602
  %v3619 = vsub.f32 %v2434, %v3602
  %v3620 = vsub.f32 %v2475, %v3602
  %v3621 = vsub.f32 %v2477, %v3602
  %v3622 = vsub.f32 %v2518, %v3602
  %v3623 = vsub.f32 %v2520, %v3602
  %v3624 = vsub.f32 %v2561, %v3602
  %v3625 = vsub.f32 %v2563, %v3602
  %v3626 = vsub.f32 %v2604, %v3602
  %v3627 = vsub.f32 %v2606, %v3602
  %v3628 = vsub.f32 %v2647, %v3602
  %v3629 = vsub.f32 %v2649, %v3602
  %v3630 = vsub.f32 %v2690, %v3602
  %v3631 = vsub.f32 %v2692, %v3602
  %v3632 = vsub.f32 %v2733, %v3602
  %v3633 = vsub.f32 %v2735, %v3602
  %v3634 = vsub.f32 %v2776, %v3602
  %v3635 = vsub.f32 %v2778, %v3602
  %v3636 = vsub.f32 %v2819, %v3602
  %v3637 = vsub.f32 %v2821, %v3602
  %v3638 = vsub.f32 %v2862, %v3602
  %v3639 = vsub.f32 %v2864, %v3602
  %v3640 = vsub.f32 %v2905, %v3602
  %v3641 = vsub.f32 %v2907, %v3602
  %v3642 = vsub.f32 %v2948, %v3602
  %v3643 = vsub.f32 %v2950, %v3602
  %v3644 = vsub.f32 %v2991, %v3602
  %v3645 = vsub.f32 %v2993, %v3602
  %v3646 = vsub.f32 %v3034, %v3602
  %v3647 = vsub.f32 %v3036, %v3602
  %v3648 = vsub.f32 %v3077, %v3602
  %v3649 = vsub.f32 %v3079, %v3602
  %v3650 = vsub.f32 %v3120, %v3602
  %v3651 = vsub.f32 %v3122, %v3602
  %v3652 = vsub.f32 %v3163, %v3602
  %v3653 = vsub.f32 %v3165, %v3602
  %v3654 = vsub.f32 %v3206, %v3602
  %v3655 = vsub.f32 %v3208, %v3602
  %v3656 = vsub.f32 %v3249, %v3602
  %v3657 = vsub.f32 %v3251, %v3602
  %v3658 = vsub.f32 %v3292, %v3602
  %v3659 = vsub.f32 %v3294, %v3602
  %v3660 = vsub.f32 %v3335, %v3602
  %v3661 = vsub.f32 %v3337, %v3602
  %v3662 = vsub.f32 %v3378, %v3602
  %v3663 = vsub.f32 %v3380, %v3602
  %v3664 = vsub.f32 %v3421, %v3602
  %v3665 = vsub.f32 %v3423, %v3602
  %v3666 = vsub.f32 %v3464, %v3602
  %v3667 = vsub.f32 %v3466, %v3602
  %v3668 = vsub.f32 %v2135, %v3603
  %v3669 = vsub.f32 %v2137, %v3603
  %v3670 = vsub.f32 %v2178, %v3603
  %v3671 = vsub.f32 %v2180, %v3603
  %v3672 = vsub.f32 %v2221, %v3603
  %v3673 = vsub.f32 %v2223, %v3603
  %v3674 = vsub.f32 %v2264, %v3603
  %v3675 = vsub.f32 %v2266, %v3603
  %v3676 = vsub.f32 %v2307, %v3603
  %v3677 = vsub.f32 %v2309, %v3603
  %v3678 = vsub.f32 %v2350, %v3603
  %v3679 = vsub.f32 %v2352, %v3603
  %v3680 = vsub.f32 %v2393, %v3603
  %v3681 = vsub.f32 %v2395, %v3603
  %v3682 = vsub.f32 %v2436, %v3603
  %v3683 = vsub.f32 %v2438, %v3603
  %v3684 = vsub.f32 %v2479, %v3603
  %v3685 = vsub.f32 %v2481, %v3603
  %v3686 = vsub.f32 %v2522, %v3603
  %v3687 = vsub.f32 %v2524, %v3603
  %v3688 = vsub.f32 %v2565, %v3603
  %v3689 = vsub.f32 %v2567, %v3603
  %v3690 = vsub.f32 %v2608, %v3603
  %v3691 = vsub.f32 %v2610, %v3603
  %v3692 = vsub.f32 %v2651, %v3603
  %v3693 = vsub.f32 %v2653, %v3603
  %v3694 = vsub.f32 %v2694, %v3603
  %v3695 = vsub.f32 %v2696, %v3603
  %v3696 = vsub.f32 %v2737, %v3603
  %v3697 = vsub.f32 %v2739, %v3603
  %v3698 = vsub.f32 %v2780, %v3603
  %v3699 = vsub.f32 %v2782, %v3603
  %v3700 = vsub.f32 %v2823, %v3603
  %v3701 = vsub.f32 %v2825, %v3603
  %v3702 = vsub.f32 %v2866, %v3603
  %v3703 = vsub.f32 %v2868, %v3603
  %v3704 = vsub.f32 %v2909, %v3603
  %v3705 = vsub.f32 %v2911, %v3603
  %v3706 = vsub.f32 %v2952, %v3603
  %v3707 = vsub.f32 %v2954, %v3603
  %v3708 = vsub.f32 %v2995, %v3603
  %v3709 = vsub.f32 %v2997, %v3603
  %v3710 = vsub.f32 %v3038, %v3603
  %v3711 = vsub.f32 %v3040, %v3603
  %v3712 = vsub.f32 %v3081, %v3603
  %v3713 = vsub.f32 %v3083, %v3603
  %v3714 = vsub.f32 %v3124, %v3603
  %v3715 = vsub.f32 %v3126, %v3603
  %v3716 = vsub.f32 %v3167, %v3603
  %v3717 = vsub.f32 %v3169, %v3603
  %v3718 = vsub.f32 %v3210, %v3603
  %v3719 = vsub.f32 %v3212, %v3603
  %v3720 = vsub.f32 %v3253, %v3603
  %v3721 = vsub.f32 %v3255, %v3603
  %v3722 = vsub.f32 %v3296, %v3603
  %v3723 = vsub.f32 %v3298, %v3603
  %v3724 = vsub.f32 %v3339, %v3603
  %v3725 = vsub.f32 %v3341, %v3603
  %v3726 = vsub.f32 %v3382, %v3603
  %v3727 = vsub.f32 %v3384, %v3603
  %v3728 = vsub.f32 %v3425, %v3603
  %v3729 = vsub.f32 %v3427, %v3603
  %v3730 = vsub.f32 %v3468, %v3603
  %v3731 = vsub.f32 %v3470, %v3603
  %v3732 = vmul.f32 %v3604, %v3604
  %v3733 = vmul.f32 %v3605, %v3605
  %v3734 = vmul.f32 %v3606, %v3606
  %v3735 = vmul.f32 %v3607, %v3607
  %v3736 = vmul.f32 %v3608, %v3608
  %v3737 = vmul.f32 %v3609, %v3609
  %v3738 = vmul.f32 %v3610, %v3610
  %v3739 = vmul.f32 %v3611, %v3611
  %v3740 = vmul.f32 %v3612, %v3612
  %v3741 = vmul.f32 %v3613, %v3613
  %v3742 = vmul.f32 %v3614, %v3614
  %v3743 = vmul.f32 %v3615, %v3615
  %v3744 = vmul.f32 %v3616, %v3616
  %v3745 = vmul.f32 %v3617, %v3617
  %v3746 = vmul.f32 %v3618, %v3618
  %v3747 = vmul.f32 %v3619, %v3619
  %v3748 = vmul.f32 %v3620, %v3620
  %v3749 = vmul.f32 %v3621, %v3621
  %v3750 = vmul.f32 %v3622, %v3622
  %v3751 = vmul.f32 %v3623, %v3623
  %v3752 = vmul.f32 %v3624, %v3624
  %v3753 = vmul.f32 %v3625, %v3625
  %v3754 = vmul.f32 %v3626, %v3626
  %v3755 = vmul.f32 %v3627, %v3627
  %v3756 = vmul.f32 %v3628, %v3628
  %v3757 = vmul.f32 %v3629, %v3629
  %v3758 = vmul.f32 %v3630, %v3630
  %v3759 = vmul.f32 %v3631, %v3631
  %v3760 = vmul.f32 %v3632, %v3632
  %v3761 = vmul.f32 %v3633, %v3633
  %v3762 = vmul.f32 %v3634, %v3634
  %v3763 = vmul.f32 %v3635, %v3635
  %v3764 = vmul.f32 %v3636, %v3636
  %v3765 = vmul.f32 %v3637, %v3637
  %v3766 = vmul.f32 %v3638, %v3638
  %v3767 = vmul.f32 %v3639, %v3639
  %v3768 = vmul.f32 %v3640, %v3640
  %v3769 = vmul.f32 %v3641, %v3641
  %v3770 = vmul.f32 %v3642, %v3642
  %v3771 = vmul.f32 %v3643, %v3643
  %v3772 = vmul.f32 %v3644, %v3644
  %v3773 = vmul.f32 %v3645, %v3645
  %v3774 = vmul.f32 %v3646, %v3646
  %v3775 = vmul.f32 %v3647, %v3647
  %v3776 = vmul.f32 %v3648, %v3648
  %v3777 = vmul.f32 %v3649, %v3649
  %v3778 = vmul.f32 %v3650, %v3650
  %v3779 = vmul.f32 %v3651, %v3651
  %v3780 = vmul.f32 %v3652, %v3652
  %v3781 = vmul.f32 %v3653, %v3653
  %v3782 = vmul.f32 %v3654, %v3654
  %v3783 = vmul.f32 %v3655, %v3655
  %v3784 = vmul.f32 %v3656, %v3656
  %v3785 = vmul.f32 %v3657, %v3657
  %v3786 = vmul.f32 %v3658, %v3658
  %v3787 = vmul.f32 %v3659, %v3659
  %v3788 = vmul.f32 %v3660, %v3660
  %v3789 = vmul.f32 %v3661, %v3661
  %v3790 = vmul.f32 %v3662, %v3662
  %v3791 = vmul.f32 %v3663, %v3663
  %v3792 = vmul.f32 %v3664, %v3664
  %v3793 = vmul.f32 %v3665, %v3665
  %v3794 = vmul.f32 %v3666, %v3666
  %v3795 = vmul.f32 %v3667, %v3667
  %v3796 = vmul.f32 %v3668, %v3668
  %v3797 = vmul.f32 %v3669, %v3669
  %v3798 = vmul.f32 %v3670, %v3670
  %v3799 = vmul.f32 %v3671, %v3671
  %v3800 = vmul.f32 %v3672, %v3672
  %v3801 = vmul.f32 %v3673, %v3673
  %v3802 = vmul.f32 %v3674, %v3674
  %v3803 = vmul.f32 %v3675, %v3675
  %v3804 = vmul.f32 %v3676, %v3676
  %v3805 = vmul.f32 %v3677, %v3677
  %v3806 = vmul.f32 %v3678, %v3678
  %v3807 = vmul.f32 %v3679, %v3679
  %v3808 = vmul.f32 %v3680, %v3680
  %v3809 = vmul.f32 %v3681, %v3681
  %v3810 = vmul.f32 %v3682, %v3682
  %v3811 = vmul.f32 %v3683, %v3683
  %v3812 = vmul.f32 %v3684, %v3684
  %v3813 = vmul.f32 %v3685, %v3685
  %v3814 = vmul.f32 %v3686, %v3686
  %v3815 = vmul.f32 %v3687, %v3687
  %v3816 = vmul.f32 %v3688, %v3688
  %v3817 = vmul.f32 %v3689, %v3689
  %v3818 = vmul.f32 %v3690, %v3690
  %v3819 = vmul.f32 %v3691, %v3691
  %v3820 = vmul.f32 %v3692, %v3692
  %v3821 = vmul.f32 %v3693, %v3693
  %v3822 = vmul.f32 %v3694, %v3694
  %v3823 = vmul.f32 %v3695, %v3695
  %v3824 = vmul.f32 %v3696, %v3696
  %v3825 = vmul.f32 %v3697, %v3697
  %v3826 = vmul.f32 %v3698, %v3698
  %v3827 = vmul.f32 %v3699, %v3699
  %v3828 = vmul.f32 %v3700, %v3700
  %v3829 = vmul.f32 %v3701, %v3701
  %v3830 = vmul.f32 %v3702, %v3702
  %v3831 = vmul.f32 %v3703, %v3703
  %v3832 = vmul.f32 %v3704, %v3704
  %v3833 = vmul.f32 %v3705, %v3705
  %v3834 = vmul.f32 %v3706, %v3706
  %v3835 = vmul.f32 %v3707, %v3707
  %v3836 = vmul.f32 %v3708, %v3708
  %v3837 = vmul.f32 %v3709, %v3709
  %v3838 = vmul.f32 %v3710, %v3710
  %v3839 = vmul.f32 %v3711, %v3711
  %v3840 = vmul.f32 %v3712, %v3712
  %v3841 = vmul.f32 %v3713, %v3713
  %v3842 = vmul.f32 %v3714, %v3714
  %v3843 = vmul.f32 %v3715, %v3715
  %v3844 = vmul.f32 %v3716, %v3716
  %v3845 = vmul.f32 %v3717, %v3717
  %v3846 = vmul.f32 %v3718, %v3718
  %v3847 = vmul.f32 %v3719, %v3719
  %v3848 = vmul.f32 %v3720, %v3720
  %v3849 = vmul.f32 %v3721, %v3721
  %v3850 = vmul.f32 %v3722, %v3722
  %v3851 = vmul.f32 %v3723, %v3723
  %v3852 = vmul.f32 %v3724, %v3724
  %v3853 = vmul.f32 %v3725, %v3725
  %v3854 = vmul.f32 %v3726, %v3726
  %v3855 = vmul.f32 %v3727, %v3727
  %v3856 = vmul.f32 %v3728, %v3728
  %v3857 = vmul.f32 %v3729, %v3729
  %v3858 = vmul.f32 %v3730, %v3730
  %v3859 = vmul.f32 %v3731, %v3731
  %v3860 = vadd.f32 %v3732, %v3733
  %v3861 = vadd.f32 %v3860, %v3734
  %v3862 = vadd.f32 %v3861, %v3735
  %v3863 = vadd.f32 %v3862, %v3736
  %v3864 = vadd.f32 %v3863, %v3737
  %v3865 = vadd.f32 %v3864, %v3738
  %v3866 = vadd.f32 %v3865, %v3739
  %v3867 = vadd.f32 %v3866, %v3740
  %v3868 = vadd.f32 %v3867, %v3741
  %v3869 = vadd.f32 %v3868, %v3742
  %v3870 = vadd.f32 %v3869, %v3743
  %v3871 = vadd.f32 %v3870, %v3744
  %v3872 = vadd.f32 %v3871, %v3745
  %v3873 = vadd.f32 %v3872, %v3746
  %v3874 = vadd.f32 %v3873, %v3747
  %v3875 = vadd.f32 %v3874, %v3748
  %v3876 = vadd.f32 %v3875, %v3749
  %v3877 = vadd.f32 %v3876, %v3750
  %v3878 = vadd.f32 %v3877, %v3751
  %v3879 = vadd.f32 %v3878, %v3752
  %v3880 = vadd.f32 %v3879, %v3753
  %v3881 = vadd.f32 %v3880, %v3754
  %v3882 = vadd.f32 %v3881, %v3755
  %v3883 = vadd.f32 %v3882, %v3756
  %v3884 = vadd.f32 %v3883, %v3757
  %v3885 = vadd.f32 %v3884, %v3758
  %v3886 = vadd.f32 %v3885, %v3759
  %v3887 = vadd.f32 %v3886, %v3760
  %v3888 = vadd.f32 %v3887, %v3761
  %v3889 = vadd.f32 %v3888, %v3762
  %v3890 = vadd.f32 %v3889, %v3763
  %v3891 = vadd.f32 %v3890, %v3764
  %v3892 = vadd.f32 %v3891, %v3765
  %v3893 = vadd.f32 %v3892, %v3766
  %v3894 = vadd.f32 %v3893, %v3767
  %v3895 = vadd.f32 %v3894, %v3768
  %v3896 = vadd.f32 %v3895, %v3769
  %v3897 = vadd.f32 %v3896, %v3770
  %v3898 = vadd.f32 %v3897, %v3771
  %v3899 = vadd.f32 %v3898, %v3772
  %v3900 = vadd.f32 %v3899, %v3773
  %v3901 = vadd.f32 %v3900, %v3774
  %v3902 = vadd.f32 %v3901, %v3775
  %v3903 = vadd.f32 %v3902, %v3776
  %v3904 = vadd.f32 %v3903, %v3777
  %v3905 = vadd.f32 %v3904, %v3778
  %v3906 = vadd.f32 %v3905, %v3779
  %v3907 = vadd.f32 %v3906, %v3780
  %v3908 = vadd.f32 %v3907, %v3781
  %v3909 = vadd.f32 %v3908, %v3782
  %v3910 = vadd.f32 %v3909, %v3783
  %v3911 = vadd.f32 %v3910, %v3784
  %v3912 = vadd.f32 %v3911, %v3785
  %v3913 = vadd.f32 %v3912, %v3786
  %v3914 = vadd.f32 %v3913, %v3787
  %v3915 = vadd.f32 %v3914, %v3788
  %v3916 = vadd.f32 %v3915, %v3789
  %v3917 = vadd.f32 %v3916, %v3790
  %v3918 = vadd.f32 %v3917, %v3791
  %v3919 = vadd.f32 %v3918, %v3792
  %v3920 = vadd.f32 %v3919, %v3793
  %v3921 = vadd.f32 %v3920, %v3794
  %v3922 = vadd.f32 %v3921, %v3795
  %3923 = vadd.xlane.f32.xlu0 %v3922
  %v3924 = vpop.xlane.xlu0 %3923
  %v3925 = vadd.f32 %v3796, %v3797
  %v3926 = vadd.f32 %v3925, %v3798
  %v3927 = vadd.f32 %v3926, %v3799
  %v3928 = vadd.f32 %v3927, %v3800
  %v3929 = vadd.f32 %v3928, %v3801
  %v3930 = vadd.f32 %v3929, %v3802
  %v3931 = vadd.f32 %v3930, %v3803
  %v3932 = vadd.f32 %v3931, %v3804
  %v3933 = vadd.f32 %v3932, %v3805
  %v3934 = vadd.f32 %v3933, %v3806
  %v3935 = vadd.f32 %v3934, %v3807
  %v3936 = vadd.f32 %v3935, %v3808
  %v3937 = vadd.f32 %v3936, %v3809
  %v3938 = vadd.f32 %v3937, %v3810
  %v3939 = vadd.f32 %v3938, %v3811
  %v3940 = vadd.f32 %v3939, %v3812
  %v3941 = vadd.f32 %v3940, %v3813
  %v3942 = vadd.f32 %v3941, %v3814
  %v3943 = vadd.f32 %v3942, %v3815
  %v3944 = vadd.f32 %v3943, %v3816
  %v3945 = vadd.f32 %v3944, %v3817
  %v3946 = vadd.f32 %v3945, %v3818
  %v3947 = vadd.f32 %v3946, %v3819
  %v3948 = vadd.f32 %v3947, %v3820
  %v3949 = vadd.f32 %v3948, %v3821
  %v3950 = vadd.f32 %v3949, %v3822
  %v3951 = vadd.f32 %v3950, %v3823
  %v3952 = vadd.f32 %v3951, %v3824
  %v3953 = vadd.f32 %v3952, %v3825
  %v3954 = vadd.f32 %v3953, %v3826
  %v3955 = vadd.f32 %v3954, %v3827
  %v3956 = vadd.f32 %v3955, %v3828
  %v3957 = vadd.f32 %v3956, %v3829
  %v3958 = vadd.f32 %v3957, %v3830
  %v3959 = vadd.f32 %v3958, %v3831
  %v3960 = vadd.f32 %v3959, %v3832
  %v3961 = vadd.f32 %v3960, %v3833
  %v3962 = vadd.f32 %v3961, %v3834
  %v3963 = vadd.f32 %v3962, %v3835
  %v3964 = vadd.f32 %v3963, %v3836
  %v3965 = vadd.f32 %v3964, %v3837
  %v3966 = vadd.f32 %v3965, %v3838
  %v3967 = vadd.f32 %v3966, %v3839
  %v3968 = vadd.f32 %v3967, %v3840
  %v3969 = vadd.f32 %v3968, %v3841
  %v3970 = vadd.f32 %v3969, %v3842
  %v3971 = vadd.f32 %v3970, %v3843
  %v3972 = vadd.f32 %v3971, %v3844
  %v3973 = vadd.f32 %v3972, %v3845
  %v3974 = vadd.f32 %v3973, %v3846
  %v3975 = vadd.f32 %v3974, %v3847
  %v3976 = vadd.f32 %v3975, %v3848
  %v3977 = vadd.f32 %v3976, %v3849
  %v3978 = vadd.f32 %v3977, %v3850
  %v3979 = vadd.f32 %v3978, %v3851
  %v3980 = vadd.f32 %v3979, %v3852
  %v3981 = vadd.f32 %v3980, %v3853
  %v3982 = vadd.f32 %v3981, %v3854
  %v3983 = vadd.f32 %v3982, %v3855
  %v3984 = vadd.f32 %v3983, %v3856
  %v3985 = vadd.f32 %v3984, %v3857
  %v3986 = vadd.f32 %v3985, %v3858
  %v3987 = vadd.f32 %v3986, %v3859
  %3988 = vadd.xlane.f32.xlu0 %v3987
  %v3989 = vpop.xlane.xlu0 %3988
  %v3990 = vmul.f32 %v3924, 0.00012207031
  %v3991 = vmul.f32 %v3989, 0.00012207031
  %v3992 = vld [vmem:[%s3] sm:$0xff]
  %v3993 = vld [vmem:[%s3 + $0x8] sm:$0xff]
  %v3994 = vadd.f32 %v3990, 1e-05
  %v3995 = vadd.f32 %v3991, 1e-05
  %v3996 = vrsqrt.pop %v3994
  %v3997 = vrsqrt.pop %v3995
  %v3998 = vmul.f32 %v3992, %v3996
  %v3999 = vmul.f32 %v3993, %v3997
  %v4000 = vld [vmem:[%s4] sm:$0xff]
  %v4001 = vld [vmem:[%s4 + $0x8] sm:$0xff]
  %v4002 = vmul.f32 %v3602, %v3998
  %v4003 = vmul.f32 %v3603, %v3999
  %v4004 = vsub.f32 %v4000, %v4002
  %v4005 = vsub.f32 %v4001, %v4003
  %4007 = vset.pattern.permute.xlu0 0
  %4008 = vperm.xlu0 %4007, %v3998
  %v4009 = vpop.permute.xlu0 %4008
  %4012 = vset.pattern.permute.xlu0 0
  %4013 = vperm.xlu0 %4012, %v3999
  %v4014 = vpop.permute.xlu0 %4013
  %v4016 = vmul.f32 %v2131, %v4009
  %v4017 = vmul.f32 %v2133, %v4009
  %v4018 = vmul.f32 %v2174, %v4009
  %v4019 = vmul.f32 %v2176, %v4009
  %v4020 = vmul.f32 %v2217, %v4009
  %v4021 = vmul.f32 %v2219, %v4009
  %v4022 = vmul.f32 %v2260, %v4009
  %v4023 = vmul.f32 %v2262, %v4009
  %v4024 = vmul.f32 %v2303, %v4009
  %v4025 = vmul.f32 %v2305, %v4009
  %v4026 = vmul.f32 %v2346, %v4009
  %v4027 = vmul.f32 %v2348, %v4009
  %v4028 = vmul.f32 %v2389, %v4009
  %v4029 = vmul.f32 %v2391, %v4009
  %v4030 = vmul.f32 %v2432, %v4009
  %v4031 = vmul.f32 %v2434, %v4009
  %v4032 = vmul.f32 %v2475, %v4009
  %v4033 = vmul.f32 %v2477, %v4009
  %v4034 = vmul.f32 %v2518, %v4009
  %v4035 = vmul.f32 %v2520, %v4009
  %v4036 = vmul.f32 %v2561, %v4009
  %v4037 = vmul.f32 %v2563, %v4009
  %v4038 = vmul.f32 %v2604, %v4009
  %v4039 = vmul.f32 %v2606, %v4009
  %v4040 = vmul.f32 %v2647, %v4009
  %v4041 = vmul.f32 %v2649, %v4009
  %v4042 = vmul.f32 %v2690, %v4009
  %v4043 = vmul.f32 %v2692, %v4009
  %v4044 = vmul.f32 %v2733, %v4009
  %v4045 = vmul.f32 %v2735, %v4009
  %v4046 = vmul.f32 %v2776, %v4009
  %v4047 = vmul.f32 %v2778, %v4009
  %v4048 = vmul.f32 %v2819, %v4009
  %v4049 = vmul.f32 %v2821, %v4009
  %v4050 = vmul.f32 %v2862, %v4009
  %v4051 = vmul.f32 %v2864, %v4009
  %v4052 = vmul.f32 %v2905, %v4009
  %v4053 = vmul.f32 %v2907, %v4009
  %v4054 = vmul.f32 %v2948, %v4009
  %v4055 = vmul.f32 %v2950, %v4009
  %v4056 = vmul.f32 %v2991, %v4009
  %v4057 = vmul.f32 %v2993, %v4009
  %v4058 = vmul.f32 %v3034, %v4009
  %v4059 = vmul.f32 %v3036, %v4009
  %v4060 = vmul.f32 %v3077, %v4009
  %v4061 = vmul.f32 %v3079, %v4009
  %v4062 = vmul.f32 %v3120, %v4009
  %v4063 = vmul.f32 %v3122, %v4009
  %v4064 = vmul.f32 %v3163, %v4009
  %v4065 = vmul.f32 %v3165, %v4009
  %v4066 = vmul.f32 %v3206, %v4009
  %v4067 = vmul.f32 %v3208, %v4009
  %v4068 = vmul.f32 %v3249, %v4009
  %v4069 = vmul.f32 %v3251, %v4009
  %v4070 = vmul.f32 %v3292, %v4009
  %v4071 = vmul.f32 %v3294, %v4009
  %v4072 = vmul.f32 %v3335, %v4009
  %v4073 = vmul.f32 %v3337, %v4009
  %v4074 = vmul.f32 %v3378, %v4009
  %v4075 = vmul.f32 %v3380, %v4009
  %v4076 = vmul.f32 %v3421, %v4009
  %v4077 = vmul.f32 %v3423, %v4009
  %v4078 = vmul.f32 %v3464, %v4009
  %v4079 = vmul.f32 %v3466, %v4009
  %v4080 = vmul.f32 %v2135, %v4014
  %v4081 = vmul.f32 %v2137, %v4014
  %v4082 = vmul.f32 %v2178, %v4014
  %v4083 = vmul.f32 %v2180, %v4014
  %v4084 = vmul.f32 %v2221, %v4014
  %v4085 = vmul.f32 %v2223, %v4014
  %v4086 = vmul.f32 %v2264, %v4014
  %v4087 = vmul.f32 %v2266, %v4014
  %v4088 = vmul.f32 %v2307, %v4014
  %v4089 = vmul.f32 %v2309, %v4014
  %v4090 = vmul.f32 %v2350, %v4014
  %v4091 = vmul.f32 %v2352, %v4014
  %v4092 = vmul.f32 %v2393, %v4014
  %v4093 = vmul.f32 %v2395, %v4014
  %v4094 = vmul.f32 %v2436, %v4014
  %v4095 = vmul.f32 %v2438, %v4014
  %v4096 = vmul.f32 %v2479, %v4014
  %v4097 = vmul.f32 %v2481, %v4014
  %v4098 = vmul.f32 %v2522, %v4014
  %v4099 = vmul.f32 %v2524, %v4014
  %v4100 = vmul.f32 %v2565, %v4014
  %v4101 = vmul.f32 %v2567, %v4014
  %v4102 = vmul.f32 %v2608, %v4014
  %v4103 = vmul.f32 %v2610, %v4014
  %v4104 = vmul.f32 %v2651, %v4014
  %v4105 = vmul.f32 %v2653, %v4014
  %v4106 = vmul.f32 %v2694, %v4014
  %v4107 = vmul.f32 %v2696, %v4014
  %v4108 = vmul.f32 %v2737, %v4014
  %v4109 = vmul.f32 %v2739, %v4014
  %v4110 = vmul.f32 %v2780, %v4014
  %v4111 = vmul.f32 %v2782, %v4014
  %v4112 = vmul.f32 %v2823, %v4014
  %v4113 = vmul.f32 %v2825, %v4014
  %v4114 = vmul.f32 %v2866, %v4014
  %v4115 = vmul.f32 %v2868, %v4014
  %v4116 = vmul.f32 %v2909, %v4014
  %v4117 = vmul.f32 %v2911, %v4014
  %v4118 = vmul.f32 %v2952, %v4014
  %v4119 = vmul.f32 %v2954, %v4014
  %v4120 = vmul.f32 %v2995, %v4014
  %v4121 = vmul.f32 %v2997, %v4014
  %v4122 = vmul.f32 %v3038, %v4014
  %v4123 = vmul.f32 %v3040, %v4014
  %v4124 = vmul.f32 %v3081, %v4014
  %v4125 = vmul.f32 %v3083, %v4014
  %v4126 = vmul.f32 %v3124, %v4014
  %v4127 = vmul.f32 %v3126, %v4014
  %v4128 = vmul.f32 %v3167, %v4014
  %v4129 = vmul.f32 %v3169, %v4014
  %v4130 = vmul.f32 %v3210, %v4014
  %v4131 = vmul.f32 %v3212, %v4014
  %v4132 = vmul.f32 %v3253, %v4014
  %v4133 = vmul.f32 %v3255, %v4014
  %v4134 = vmul.f32 %v3296, %v4014
  %v4135 = vmul.f32 %v3298, %v4014
  %v4136 = vmul.f32 %v3339, %v4014
  %v4137 = vmul.f32 %v3341, %v4014
  %v4138 = vmul.f32 %v3382, %v4014
  %v4139 = vmul.f32 %v3384, %v4014
  %v4140 = vmul.f32 %v3425, %v4014
  %v4141 = vmul.f32 %v3427, %v4014
  %v4142 = vmul.f32 %v3468, %v4014
  %v4143 = vmul.f32 %v3470, %v4014
  %4145 = vset.pattern.permute.xlu0 0
  %4146 = vperm.xlu0 %4145, %v4004
  %v4147 = vpop.permute.xlu0 %4146
  %4150 = vset.pattern.permute.xlu0 0
  %4151 = vperm.xlu0 %4150, %v4005
  %v4152 = vpop.permute.xlu0 %4151
  %v4154 = vadd.f32 %v4016, %v4147
  %v4155 = vadd.f32 %v4017, %v4147
  %v4156 = vadd.f32 %v4018, %v4147
  %v4157 = vadd.f32 %v4019, %v4147
  %v4158 = vadd.f32 %v4020, %v4147
  %v4159 = vadd.f32 %v4021, %v4147
  %v4160 = vadd.f32 %v4022, %v4147
  %v4161 = vadd.f32 %v4023, %v4147
  %v4162 = vadd.f32 %v4024, %v4147
  %v4163 = vadd.f32 %v4025, %v4147
  %v4164 = vadd.f32 %v4026, %v4147
  %v4165 = vadd.f32 %v4027, %v4147
  %v4166 = vadd.f32 %v4028, %v4147
  %v4167 = vadd.f32 %v4029, %v4147
  %v4168 = vadd.f32 %v4030, %v4147
  %v4169 = vadd.f32 %v4031, %v4147
  %v4170 = vadd.f32 %v4032, %v4147
  %v4171 = vadd.f32 %v4033, %v4147
  %v4172 = vadd.f32 %v4034, %v4147
  %v4173 = vadd.f32 %v4035, %v4147
  %v4174 = vadd.f32 %v4036, %v4147
  %v4175 = vadd.f32 %v4037, %v4147
  %v4176 = vadd.f32 %v4038, %v4147
  %v4177 = vadd.f32 %v4039, %v4147
  %v4178 = vadd.f32 %v4040, %v4147
  %v4179 = vadd.f32 %v4041, %v4147
  %v4180 = vadd.f32 %v4042, %v4147
  %v4181 = vadd.f32 %v4043, %v4147
  %v4182 = vadd.f32 %v4044, %v4147
  %v4183 = vadd.f32 %v4045, %v4147
  %v4184 = vadd.f32 %v4046, %v4147
  %v4185 = vadd.f32 %v4047, %v4147
  %v4186 = vadd.f32 %v4048, %v4147
  %v4187 = vadd.f32 %v4049, %v4147
  %v4188 = vadd.f32 %v4050, %v4147
  %v4189 = vadd.f32 %v4051, %v4147
  %v4190 = vadd.f32 %v4052, %v4147
  %v4191 = vadd.f32 %v4053, %v4147
  %v4192 = vadd.f32 %v4054, %v4147
  %v4193 = vadd.f32 %v4055, %v4147
  %v4194 = vadd.f32 %v4056, %v4147
  %v4195 = vadd.f32 %v4057, %v4147
  %v4196 = vadd.f32 %v4058, %v4147
  %v4197 = vadd.f32 %v4059, %v4147
  %v4198 = vadd.f32 %v4060, %v4147
  %v4199 = vadd.f32 %v4061, %v4147
  %v4200 = vadd.f32 %v4062, %v4147
  %v4201 = vadd.f32 %v4063, %v4147
  %v4202 = vadd.f32 %v4064, %v4147
  %v4203 = vadd.f32 %v4065, %v4147
  %v4204 = vadd.f32 %v4066, %v4147
  %v4205 = vadd.f32 %v4067, %v4147
  %v4206 = vadd.f32 %v4068, %v4147
  %v4207 = vadd.f32 %v4069, %v4147
  %v4208 = vadd.f32 %v4070, %v4147
  %v4209 = vadd.f32 %v4071, %v4147
  %v4210 = vadd.f32 %v4072, %v4147
  %v4211 = vadd.f32 %v4073, %v4147
  %v4212 = vadd.f32 %v4074, %v4147
  %v4213 = vadd.f32 %v4075, %v4147
  %v4214 = vadd.f32 %v4076, %v4147
  %v4215 = vadd.f32 %v4077, %v4147
  %v4216 = vadd.f32 %v4078, %v4147
  %v4217 = vadd.f32 %v4079, %v4147
  %v4218 = vadd.f32 %v4080, %v4152
  %v4219 = vadd.f32 %v4081, %v4152
  %v4220 = vadd.f32 %v4082, %v4152
  %v4221 = vadd.f32 %v4083, %v4152
  %v4222 = vadd.f32 %v4084, %v4152
  %v4223 = vadd.f32 %v4085, %v4152
  %v4224 = vadd.f32 %v4086, %v4152
  %v4225 = vadd.f32 %v4087, %v4152
  %v4226 = vadd.f32 %v4088, %v4152
  %v4227 = vadd.f32 %v4089, %v4152
  %v4228 = vadd.f32 %v4090, %v4152
  %v4229 = vadd.f32 %v4091, %v4152
  %v4230 = vadd.f32 %v4092, %v4152
  %v4231 = vadd.f32 %v4093, %v4152
  %v4232 = vadd.f32 %v4094, %v4152
  %v4233 = vadd.f32 %v4095, %v4152
  %v4234 = vadd.f32 %v4096, %v4152
  %v4235 = vadd.f32 %v4097, %v4152
  %v4236 = vadd.f32 %v4098, %v4152
  %v4237 = vadd.f32 %v4099, %v4152
  %v4238 = vadd.f32 %v4100, %v4152
  %v4239 = vadd.f32 %v4101, %v4152
  %v4240 = vadd.f32 %v4102, %v4152
  %v4241 = vadd.f32 %v4103, %v4152
  %v4242 = vadd.f32 %v4104, %v4152
  %v4243 = vadd.f32 %v4105, %v4152
  %v4244 = vadd.f32 %v4106, %v4152
  %v4245 = vadd.f32 %v4107, %v4152
  %v4246 = vadd.f32 %v4108, %v4152
  %v4247 = vadd.f32 %v4109, %v4152
  %v4248 = vadd.f32 %v4110, %v4152
  %v4249 = vadd.f32 %v4111, %v4152
  %v4250 = vadd.f32 %v4112, %v4152
  %v4251 = vadd.f32 %v4113, %v4152
  %v4252 = vadd.f32 %v4114, %v4152
  %v4253 = vadd.f32 %v4115, %v4152
  %v4254 = vadd.f32 %v4116, %v4152
  %v4255 = vadd.f32 %v4117, %v4152
  %v4256 = vadd.f32 %v4118, %v4152
  %v4257 = vadd.f32 %v4119, %v4152
  %v4258 = vadd.f32 %v4120, %v4152
  %v4259 = vadd.f32 %v4121, %v4152
  %v4260 = vadd.f32 %v4122, %v4152
  %v4261 = vadd.f32 %v4123, %v4152
  %v4262 = vadd.f32 %v4124, %v4152
  %v4263 = vadd.f32 %v4125, %v4152
  %v4264 = vadd.f32 %v4126, %v4152
  %v4265 = vadd.f32 %v4127, %v4152
  %v4266 = vadd.f32 %v4128, %v4152
  %v4267 = vadd.f32 %v4129, %v4152
  %v4268 = vadd.f32 %v4130, %v4152
  %v4269 = vadd.f32 %v4131, %v4152
  %v4270 = vadd.f32 %v4132, %v4152
  %v4271 = vadd.f32 %v4133, %v4152
  %v4272 = vadd.f32 %v4134, %v4152
  %v4273 = vadd.f32 %v4135, %v4152
  %v4274 = vadd.f32 %v4136, %v4152
  %v4275 = vadd.f32 %v4137, %v4152
  %v4276 = vadd.f32 %v4138, %v4152
  %v4277 = vadd.f32 %v4139, %v4152
  %v4278 = vadd.f32 %v4140, %v4152
  %v4279 = vadd.f32 %v4141, %v4152
  %v4280 = vadd.f32 %v4142, %v4152
  %v4281 = vadd.f32 %v4143, %v4152
  %v4282 = vmax.f32 %v4154, 0.0
  %v4283 = vmax.f32 %v4155, 0.0
  %v4284 = vmax.f32 %v4156, 0.0
  %v4285 = vmax.f32 %v4157, 0.0
  %v4286 = vmax.f32 %v4158, 0.0
  %v4287 = vmax.f32 %v4159, 0.0
  %v4288 = vmax.f32 %v4160, 0.0
  %v4289 = vmax.f32 %v4161, 0.0
  %v4290 = vmax.f32 %v4162, 0.0
  %v4291 = vmax.f32 %v4163, 0.0
  %v4292 = vmax.f32 %v4164, 0.0
  %v4293 = vmax.f32 %v4165, 0.0
  %v4294 = vmax.f32 %v4166, 0.0
  %v4295 = vmax.f32 %v4167, 0.0
  %v4296 = vmax.f32 %v4168, 0.0
  %v4297 = vmax.f32 %v4169, 0.0
  %v4298 = vmax.f32 %v4170, 0.0
  %v4299 = vmax.f32 %v4171, 0.0
  %v4300 = vmax.f32 %v4172, 0.0
  %v4301 = vmax.f32 %v4173, 0.0
  %v4302 = vmax.f32 %v4174, 0.0
  %v4303 = vmax.f32 %v4175, 0.0
  %v4304 = vmax.f32 %v4176, 0.0
  %v4305 = vmax.f32 %v4177, 0.0
  %v4306 = vmax.f32 %v4178, 0.0
  %v4307 = vmax.f32 %v4179, 0.0
  %v4308 = vmax.f32 %v4180, 0.0
  %v4309 = vmax.f32 %v4181, 0.0
  %v4310 = vmax.f32 %v4182, 0.0
  %v4311 = vmax.f32 %v4183, 0.0
  %v4312 = vmax.f32 %v4184, 0.0
  %v4313 = vmax.f32 %v4185, 0.0
  %v4314 = vmax.f32 %v4186, 0.0
  %v4315 = vmax.f32 %v4187, 0.0
  %v4316 = vmax.f32 %v4188, 0.0
  %v4317 = vmax.f32 %v4189, 0.0
  %v4318 = vmax.f32 %v4190, 0.0
  %v4319 = vmax.f32 %v4191, 0.0
  %v4320 = vmax.f32 %v4192, 0.0
  %v4321 = vmax.f32 %v4193, 0.0
  %v4322 = vmax.f32 %v4194, 0.0
  %v4323 = vmax.f32 %v4195, 0.0
  %v4324 = vmax.f32 %v4196, 0.0
  %v4325 = vmax.f32 %v4197, 0.0
  %v4326 = vmax.f32 %v4198, 0.0
  %v4327 = vmax.f32 %v4199, 0.0
  %v4328 = vmax.f32 %v4200, 0.0
  %v4329 = vmax.f32 %v4201, 0.0
  %v4330 = vmax.f32 %v4202, 0.0
  %v4331 = vmax.f32 %v4203, 0.0
  %v4332 = vmax.f32 %v4204, 0.0
  %v4333 = vmax.f32 %v4205, 0.0
  %v4334 = vmax.f32 %v4206, 0.0
  %v4335 = vmax.f32 %v4207, 0.0
  %v4336 = vmax.f32 %v4208, 0.0
  %v4337 = vmax.f32 %v4209, 0.0
  %v4338 = vmax.f32 %v4210, 0.0
  %v4339 = vmax.f32 %v4211, 0.0
  %v4340 = vmax.f32 %v4212, 0.0
  %v4341 = vmax.f32 %v4213, 0.0
  %v4342 = vmax.f32 %v4214, 0.0
  %v4343 = vmax.f32 %v4215, 0.0
  %v4344 = vmax.f32 %v4216, 0.0
  %v4345 = vmax.f32 %v4217, 0.0
  %v4346 = vmax.f32 %v4218, 0.0
  %v4347 = vmax.f32 %v4219, 0.0
  %v4348 = vmax.f32 %v4220, 0.0
  %v4349 = vmax.f32 %v4221, 0.0
  %v4350 = vmax.f32 %v4222, 0.0
  %v4351 = vmax.f32 %v4223, 0.0
  %v4352 = vmax.f32 %v4224, 0.0
  %v4353 = vmax.f32 %v4225, 0.0
  %v4354 = vmax.f32 %v4226, 0.0
  %v4355 = vmax.f32 %v4227, 0.0
  %v4356 = vmax.f32 %v4228, 0.0
  %v4357 = vmax.f32 %v4229, 0.0
  %v4358 = vmax.f32 %v4230, 0.0
  %v4359 = vmax.f32 %v4231, 0.0
  %v4360 = vmax.f32 %v4232, 0.0
  %v4361 = vmax.f32 %v4233, 0.0
  %v4362 = vmax.f32 %v4234, 0.0
  %v4363 = vmax.f32 %v4235, 0.0
  %v4364 = vmax.f32 %v4236, 0.0
  %v4365 = vmax.f32 %v4237, 0.0
  %v4366 = vmax.f32 %v4238, 0.0
  %v4367 = vmax.f32 %v4239, 0.0
  %v4368 = vmax.f32 %v4240, 0.0
  %v4369 = vmax.f32 %v4241, 0.0
  %v4370 = vmax.f32 %v4242, 0.0
  %v4371 = vmax.f32 %v4243, 0.0
  %v4372 = vmax.f32 %v4244, 0.0
  %v4373 = vmax.f32 %v4245, 0.0
  %v4374 = vmax.f32 %v4246, 0.0
  %v4375 = vmax.f32 %v4247, 0.0
  %v4376 = vmax.f32 %v4248, 0.0
  %v4377 = vmax.f32 %v4249, 0.0
  %v4378 = vmax.f32 %v4250, 0.0
  %v4379 = vmax.f32 %v4251, 0.0
  %v4380 = vmax.f32 %v4252, 0.0
  %v4381 = vmax.f32 %v4253, 0.0
  %v4382 = vmax.f32 %v4254, 0.0
  %v4383 = vmax.f32 %v4255, 0.0
  %v4384 = vmax.f32 %v4256, 0.0
  %v4385 = vmax.f32 %v4257, 0.0
  %v4386 = vmax.f32 %v4258, 0.0
  %v4387 = vmax.f32 %v4259, 0.0
  %v4388 = vmax.f32 %v4260, 0.0
  %v4389 = vmax.f32 %v4261, 0.0
  %v4390 = vmax.f32 %v4262, 0.0
  %v4391 = vmax.f32 %v4263, 0.0
  %v4392 = vmax.f32 %v4264, 0.0
  %v4393 = vmax.f32 %v4265, 0.0
  %v4394 = vmax.f32 %v4266, 0.0
  %v4395 = vmax.f32 %v4267, 0.0
  %v4396 = vmax.f32 %v4268, 0.0
  %v4397 = vmax.f32 %v4269, 0.0
  %v4398 = vmax.f32 %v4270, 0.0
  %v4399 = vmax.f32 %v4271, 0.0
  %v4400 = vmax.f32 %v4272, 0.0
  %v4401 = vmax.f32 %v4273, 0.0
  %v4402 = vmax.f32 %v4274, 0.0
  %v4403 = vmax.f32 %v4275, 0.0
  %v4404 = vmax.f32 %v4276, 0.0
  %v4405 = vmax.f32 %v4277, 0.0
  %v4406 = vmax.f32 %v4278, 0.0
  %v4407 = vmax.f32 %v4279, 0.0
  %v4408 = vmax.f32 %v4280, 0.0
  %v4409 = vmax.f32 %v4281, 0.0
  %v4410 = vmax.f32 %v4282, %v4298
  %v4411 = vmax.f32 %v4283, %v4299
  %v4412 = vmax.f32 %v4284, %v4300
  %v4413 = vmax.f32 %v4285, %v4301
  %v4414 = vmax.f32 %v4286, %v4302
  %v4415 = vmax.f32 %v4287, %v4303
  %v4416 = vmax.f32 %v4288, %v4304
  %v4417 = vmax.f32 %v4289, %v4305
  %v4418 = vmax.f32 %v4290, %v4306
  %v4419 = vmax.f32 %v4291, %v4307
  %v4420 = vmax.f32 %v4292, %v4308
  %v4421 = vmax.f32 %v4293, %v4309
  %v4422 = vmax.f32 %v4294, %v4310
  %v4423 = vmax.f32 %v4295, %v4311
  %v4424 = vmax.f32 %v4296, %v4312
  %v4425 = vmax.f32 %v4297, %v4313
  %v4426 = vmax.f32 %v4346, %v4362
  %v4427 = vmax.f32 %v4347, %v4363
  %v4428 = vmax.f32 %v4348, %v4364
  %v4429 = vmax.f32 %v4349, %v4365
  %v4430 = vmax.f32 %v4350, %v4366
  %v4431 = vmax.f32 %v4351, %v4367
  %v4432 = vmax.f32 %v4352, %v4368
  %v4433 = vmax.f32 %v4353, %v4369
  %v4434 = vmax.f32 %v4354, %v4370
  %v4435 = vmax.f32 %v4355, %v4371
  %v4436 = vmax.f32 %v4356, %v4372
  %v4437 = vmax.f32 %v4357, %v4373
  %v4438 = vmax.f32 %v4358, %v4374
  %v4439 = vmax.f32 %v4359, %v4375
  %v4440 = vmax.f32 %v4360, %v4376
  %v4441 = vmax.f32 %v4361, %v4377
  %v4442 = vmax.f32 %v4410, %v4314
  %v4443 = vmax.f32 %v4411, %v4315
  %v4444 = vmax.f32 %v4412, %v4316
  %v4445 = vmax.f32 %v4413, %v4317
  %v4446 = vmax.f32 %v4414, %v4318
  %v4447 = vmax.f32 %v4415, %v4319
  %v4448 = vmax.f32 %v4416, %v4320
  %v4449 = vmax.f32 %v4417, %v4321
  %v4450 = vmax.f32 %v4418, %v4322
  %v4451 = vmax.f32 %v4419, %v4323
  %v4452 = vmax.f32 %v4420, %v4324
  %v4453 = vmax.f32 %v4421, %v4325
  %v4454 = vmax.f32 %v4422, %v4326
  %v4455 = vmax.f32 %v4423, %v4327
  %v4456 = vmax.f32 %v4424, %v4328
  %v4457 = vmax.f32 %v4425, %v4329
  %v4458 = vmax.f32 %v4426, %v4378
  %v4459 = vmax.f32 %v4427, %v4379
  %v4460 = vmax.f32 %v4428, %v4380
  %v4461 = vmax.f32 %v4429, %v4381
  %v4462 = vmax.f32 %v4430, %v4382
  %v4463 = vmax.f32 %v4431, %v4383
  %v4464 = vmax.f32 %v4432, %v4384
  %v4465 = vmax.f32 %v4433, %v4385
  %v4466 = vmax.f32 %v4434, %v4386
  %v4467 = vmax.f32 %v4435, %v4387
  %v4468 = vmax.f32 %v4436, %v4388
  %v4469 = vmax.f32 %v4437, %v4389
  %v4470 = vmax.f32 %v4438, %v4390
  %v4471 = vmax.f32 %v4439, %v4391
  %v4472 = vmax.f32 %v4440, %v4392
  %v4473 = vmax.f32 %v4441, %v4393
  %v4474 = vmax.f32 %v4442, %v4330
  %v4475 = vmax.f32 %v4443, %v4331
  %v4476 = vmax.f32 %v4444, %v4332
  %v4477 = vmax.f32 %v4445, %v4333
  %v4478 = vmax.f32 %v4446, %v4334
  %v4479 = vmax.f32 %v4447, %v4335
  %v4480 = vmax.f32 %v4448, %v4336
  %v4481 = vmax.f32 %v4449, %v4337
  %v4482 = vmax.f32 %v4450, %v4338
  %v4483 = vmax.f32 %v4451, %v4339
  %v4484 = vmax.f32 %v4452, %v4340
  %v4485 = vmax.f32 %v4453, %v4341
  %v4486 = vmax.f32 %v4454, %v4342
  %v4487 = vmax.f32 %v4455, %v4343
  %v4488 = vmax.f32 %v4456, %v4344
  %v4489 = vmax.f32 %v4457, %v4345
  %v4490 = vmax.f32 %v4458, %v4394
  %v4491 = vmax.f32 %v4459, %v4395
  %v4492 = vmax.f32 %v4460, %v4396
  %v4493 = vmax.f32 %v4461, %v4397
  %v4494 = vmax.f32 %v4462, %v4398
  %v4495 = vmax.f32 %v4463, %v4399
  %v4496 = vmax.f32 %v4464, %v4400
  %v4497 = vmax.f32 %v4465, %v4401
  %v4498 = vmax.f32 %v4466, %v4402
  %v4499 = vmax.f32 %v4467, %v4403
  %v4500 = vmax.f32 %v4468, %v4404
  %v4501 = vmax.f32 %v4469, %v4405
  %v4502 = vmax.f32 %v4470, %v4406
  %v4503 = vmax.f32 %v4471, %v4407
  %v4504 = vmax.f32 %v4472, %v4408
  %v4505 = vmax.f32 %v4473, %v4409
  %v4506 = vpack.c.bf16 %v4490, %v4474
  %v4507 = vpack.c.bf16 %v4491, %v4475
  %v4508 = vpack.c.bf16 %v4492, %v4476
  %v4509 = vpack.c.bf16 %v4493, %v4477
  %v4510 = vpack.c.bf16 %v4494, %v4478
  %v4511 = vpack.c.bf16 %v4495, %v4479
  %v4512 = vpack.c.bf16 %v4496, %v4480
  %v4513 = vpack.c.bf16 %v4497, %v4481
  %v4514 = vpack.c.bf16 %v4498, %v4482
  %v4515 = vpack.c.bf16 %v4499, %v4483
  %v4516 = vpack.c.bf16 %v4500, %v4484
  %v4517 = vpack.c.bf16 %v4501, %v4485
  %v4518 = vpack.c.bf16 %v4502, %v4486
  %v4519 = vpack.c.bf16 %v4503, %v4487
  %v4520 = vpack.c.bf16 %v4504, %v4488
  %v4521 = vpack.c.bf16 %v4505, %v4489
  %v4538 = vunpack.c.l.b16 %v4506
  %v4539 = vunpack.c.l.b16 %v4507
  %v4540 = vunpack.c.l.b16 %v4508
  %v4541 = vunpack.c.l.b16 %v4509
  %v4542 = vunpack.c.l.b16 %v4510
  %v4543 = vunpack.c.l.b16 %v4511
  %v4544 = vunpack.c.l.b16 %v4512
  %v4545 = vunpack.c.l.b16 %v4513
  %v4546 = vunpack.c.l.b16 %v4514
  %v4547 = vunpack.c.l.b16 %v4515
  %v4548 = vunpack.c.l.b16 %v4516
  %v4549 = vunpack.c.l.b16 %v4517
  %v4550 = vunpack.c.l.b16 %v4518
  %v4551 = vunpack.c.l.b16 %v4519
  %v4552 = vunpack.c.l.b16 %v4520
  %v4553 = vunpack.c.l.b16 %v4521
  %v4554 = vunpack.c.h.b16 %v4506
  %v4555 = vunpack.c.h.b16 %v4507
  %v4556 = vunpack.c.h.b16 %v4508
  %v4557 = vunpack.c.h.b16 %v4509
  %v4558 = vunpack.c.h.b16 %v4510
  %v4559 = vunpack.c.h.b16 %v4511
  %v4560 = vunpack.c.h.b16 %v4512
  %v4561 = vunpack.c.h.b16 %v4513
  %v4562 = vunpack.c.h.b16 %v4514
  %v4563 = vunpack.c.h.b16 %v4515
  %v4564 = vunpack.c.h.b16 %v4516
  %v4565 = vunpack.c.h.b16 %v4517
  %v4566 = vunpack.c.h.b16 %v4518
  %v4567 = vunpack.c.h.b16 %v4519
  %v4568 = vunpack.c.h.b16 %v4520
  %v4569 = vunpack.c.h.b16 %v4521
  %v4570 = vpack.c.b16 %v4539, %v4538
  %v4571 = vpack.c.b16 %v4541, %v4540
  %v4572 = vpack.c.b16 %v4543, %v4542
  %v4573 = vpack.c.b16 %v4545, %v4544
  %v4574 = vpack.c.b16 %v4547, %v4546
  %v4575 = vpack.c.b16 %v4549, %v4548
  %v4576 = vpack.c.b16 %v4551, %v4550
  %v4577 = vpack.c.b16 %v4553, %v4552
  %v4578 = vpack.c.b16 %v4555, %v4554
  %v4579 = vpack.c.b16 %v4557, %v4556
  %v4580 = vpack.c.b16 %v4559, %v4558
  %v4581 = vpack.c.b16 %v4561, %v4560
  %v4582 = vpack.c.b16 %v4563, %v4562
  %v4583 = vpack.c.b16 %v4565, %v4564
  %v4584 = vpack.c.b16 %v4567, %v4566
  %v4585 = vpack.c.b16 %v4569, %v4568
  %4602 = vst [vmem:[%s5] sm:$0xff] %v4570
  %4603 = vst [vmem:[%s5 + $0x8] sm:$0xff] %v4571
  %4604 = vst [vmem:[%s5 + $0x10] sm:$0xff] %v4572
  %4605 = vst [vmem:[%s5 + $0x18] sm:$0xff] %v4573
  %4606 = vst [vmem:[%s5 + $0x20] sm:$0xff] %v4574
  %4607 = vst [vmem:[%s5 + $0x28] sm:$0xff] %v4575
  %4608 = vst [vmem:[%s5 + $0x30] sm:$0xff] %v4576
  %4609 = vst [vmem:[%s5 + $0x38] sm:$0xff] %v4577
  %4610 = vst [vmem:[%s5 + $0x40] sm:$0xff] %v4578
  %4611 = vst [vmem:[%s5 + $0x48] sm:$0xff] %v4579
  %4612 = vst [vmem:[%s5 + $0x50] sm:$0xff] %v4580
  %4613 = vst [vmem:[%s5 + $0x58] sm:$0xff] %v4581
  %4614 = vst [vmem:[%s5 + $0x60] sm:$0xff] %v4582
  %4615 = vst [vmem:[%s5 + $0x68] sm:$0xff] %v4583
  %4616 = vst [vmem:[%s5 + $0x70] sm:$0xff] %v4584
  %4617 = vst [vmem:[%s5 + $0x78] sm:$0xff] %v4585
  // Predicated region
  $region22: #{net_forward.4} parent=0 // pred_check
    _
  $region23: #{net_forward.4} parent=0 // pred_check_branch
    %4619 = sbr.rel (0) target = $region25
  $region24: #{net_forward.4} parent=0 // pred_region
    _
  $region25: #{net_forward.4} parent=0 // pred_fallthru
    _
  // Predicated region
  $region26: #{net_forward.4} parent=0 // pred_check
    _
  $region27: #{net_forward.4} parent=0 // pred_check_branch
    %4621 = sbr.rel (0) target = $region29
  $region28: #{net_forward.4} parent=0 // pred_region
    _
  $region29: #{net_forward.4} parent=0 // pred_fallthru
    _

// kernel: net_forward.5
$region0: #{net_forward.5}
  #allocation0 [shape = 'u32[]', space=smem, size = 0x4, offset = 0x4, fixed_abs, tag = 'smem constant byte address 0x4 - core index']
  #allocation1 [shape = 'u32[144,128]{1,0:T(1,128)}', space=vmem, size = 0x12000, scoped, tag = 'internal scratch']
  %s0 = inlined_call_operand.vmem [shape: bf16[400,2048], index: 0, kind: input, shape index: {}]
  %s1 = inlined_call_operand.vmem [shape: bf16[32,400], index: 1, kind: input, shape index: {}]
  %s2 = inlined_call_operand.vmem [shape: f32[32,1], index: 2, kind: input, shape index: {}]
  %s3 = inlined_call_operand.vmem [shape: f32[32,1], index: 3, kind: input, shape index: {}]
  %s4 = inlined_call_operand.vmem [shape: f32[32,1], index: 4, kind: input, shape index: {}]
  %s5 = inlined_call_operand.vmem [shape: bf16[32,512], index: 5, kind: output, shape index: {}]
  %s6 = sld [smem:[#allocation0]]
  $region53: #{net_forward.5} parent=0
    _
  %s8 = ssub.s32 1, %s6
  %s9 = scalar_select 0, %s8, %s6
  loop: start=0, step=1, limit=4
  $region2: #{net_forward.5} parent=0 // loop_pre_header
    _
  $region3: #{net_forward.5} parent=0 // loop_header
    %s11 = sphi 0, %s15
    %p12 = scmp.ge.s32.totalorder %s11, 4
    %s19 = sphi 0, %s19
    %s21 = sphi 0, %s19
    %s22 = sphi 0, %s21
    %s36 = sphi 0, %s22
    %s42 = sphi 0, %s44
    %s45 = sphi 0, %s42
    %s46 = sphi 0, %s45
    %s62 = sphi 0, %s46
    %s68 = sphi 0, %s70
    %s71 = sphi 0, %s68
    %s72 = sphi 0, %s71
    %s88 = sphi 0, %s72
    %s94 = sphi 0, %s96
    %s97 = sphi 0, %s94
    %s98 = sphi 0, %s97
    %s114 = sphi 0, %s98
    %s120 = sphi 0, %s122
    %s123 = sphi 0, %s120
    %s124 = sphi 0, %s123
    %s140 = sphi 0, %s124
    %s146 = sphi 0, %s148
    %s149 = sphi 0, %s146
    %s150 = sphi 0, %s149
    %s166 = sphi 0, %s150
  $region4: #{net_forward.5} parent=0 // loop_header_branch
    %14 = sbr.rel (%p12) target = $region8
  $region5: #{net_forward.5} parent=0 // loop_body
    %s16 = ssub.s32 %s11, 1
    %s17 = ssub.s32 %s11, 2
    %s18 = sadd.s32 %s11, 1
    %s20 = sadd.s32 %s19, 1
    %p23 = scmp.eq.s32.totalorder %s11, 1
    %p24 = scmp.ne.s32.totalorder %s19, %s21
    %p25 = scmp.eq.s32.totalorder %s11, 0
    %p26 = por %p24, %p25
    %p27 = scmp.ne.s32.totalorder %s19, %s21
    %p28 = scmp.eq.s32.totalorder %s16, 1
    %p29 = por %p27, %p28
    %p30 = scmp.ne.s32.totalorder %s21, %s22
    %p31 = scmp.eq.s32.totalorder %s16, 0
    %p32 = por %p30, %p31
    %p33 = scmp.ne.s32.totalorder %s21, %s22
    %p34 = scmp.eq.s32.totalorder %s17, 1
    %p35 = por %p33, %p34
    %p37 = scmp.ne.s32.totalorder %s22, %s36
    %p38 = scmp.eq.s32.totalorder %s17, 0
    %p39 = por %p37, %p38
    %s40 = ssub.s32 %s11, %s18
    %p41 = scmp.eq.s32.totalorder %s40, 0
    %s43 = sadd.s32 %s42, 1
    %s44 = scalar_select %p41, %s42, %s43
    %p47 = pneg %p41
    %p48 = scmp.eq.s32.totalorder %s11, 1
    %p49 = por %p47, %p48
    %p50 = scmp.ne.s32.totalorder %s42, %s45
    %p51 = scmp.eq.s32.totalorder %s11, 0
    %p52 = por %p50, %p51
    %p53 = scmp.ne.s32.totalorder %s42, %s45
    %p54 = scmp.eq.s32.totalorder %s16, 1
    %p55 = por %p53, %p54
    %p56 = scmp.ne.s32.totalorder %s45, %s46
    %p57 = scmp.eq.s32.totalorder %s16, 0
    %p58 = por %p56, %p57
    %p59 = scmp.ne.s32.totalorder %s45, %s46
    %p60 = scmp.eq.s32.totalorder %s17, 1
    %p61 = por %p59, %p60
    %p63 = scmp.ne.s32.totalorder %s46, %s62
    %p64 = scmp.eq.s32.totalorder %s17, 0
    %p65 = por %p63, %p64
    %s66 = ssub.s32 %s11, %s18
    %p67 = scmp.eq.s32.totalorder %s66, 0
    %s69 = sadd.s32 %s68, 1
    %s70 = scalar_select %p67, %s68, %s69
    %p73 = pneg %p67
    %p74 = scmp.eq.s32.totalorder %s11, 1
    %p75 = por %p73, %p74
    %p76 = scmp.ne.s32.totalorder %s68, %s71
    %p77 = scmp.eq.s32.totalorder %s11, 0
    %p78 = por %p76, %p77
    %p79 = scmp.ne.s32.totalorder %s68, %s71
    %p80 = scmp.eq.s32.totalorder %s16, 1
    %p81 = por %p79, %p80
    %p82 = scmp.ne.s32.totalorder %s71, %s72
    %p83 = scmp.eq.s32.totalorder %s16, 0
    %p84 = por %p82, %p83
    %p85 = scmp.ne.s32.totalorder %s71, %s72
    %p86 = scmp.eq.s32.totalorder %s17, 1
    %p87 = por %p85, %p86
    %p89 = scmp.ne.s32.totalorder %s72, %s88
    %p90 = scmp.eq.s32.totalorder %s17, 0
    %p91 = por %p89, %p90
    %s92 = ssub.s32 %s11, %s18
    %p93 = scmp.eq.s32.totalorder %s92, 0
    %s95 = sadd.s32 %s94, 1
    %s96 = scalar_select %p93, %s94, %s95
    %p99 = pneg %p93
    %p100 = scmp.eq.s32.totalorder %s11, 1
    %p101 = por %p99, %p100
    %p102 = scmp.ne.s32.totalorder %s94, %s97
    %p103 = scmp.eq.s32.totalorder %s11, 0
    %p104 = por %p102, %p103
    %p105 = scmp.ne.s32.totalorder %s94, %s97
    %p106 = scmp.eq.s32.totalorder %s16, 1
    %p107 = por %p105, %p106
    %p108 = scmp.ne.s32.totalorder %s97, %s98
    %p109 = scmp.eq.s32.totalorder %s16, 0
    %p110 = por %p108, %p109
    %p111 = scmp.ne.s32.totalorder %s97, %s98
    %p112 = scmp.eq.s32.totalorder %s17, 1
    %p113 = por %p111, %p112
    %p115 = scmp.ne.s32.totalorder %s98, %s114
    %p116 = scmp.eq.s32.totalorder %s17, 0
    %p117 = por %p115, %p116
    %s118 = ssub.s32 %s11, %s18
    %p119 = scmp.eq.s32.totalorder %s118, 0
    %s121 = sadd.s32 %s120, 1
    %s122 = scalar_select %p119, %s120, %s121
    %p125 = pneg %p119
    %p126 = scmp.eq.s32.totalorder %s11, 1
    %p127 = por %p125, %p126
    %p128 = scmp.ne.s32.totalorder %s120, %s123
    %p129 = scmp.eq.s32.totalorder %s11, 0
    %p130 = por %p128, %p129
    %p131 = scmp.ne.s32.totalorder %s120, %s123
    %p132 = scmp.eq.s32.totalorder %s16, 1
    %p133 = por %p131, %p132
    %p134 = scmp.ne.s32.totalorder %s123, %s124
    %p135 = scmp.eq.s32.totalorder %s16, 0
    %p136 = por %p134, %p135
    %p137 = scmp.ne.s32.totalorder %s123, %s124
    %p138 = scmp.eq.s32.totalorder %s17, 1
    %p139 = por %p137, %p138
    %p141 = scmp.ne.s32.totalorder %s124, %s140
    %p142 = scmp.eq.s32.totalorder %s17, 0
    %p143 = por %p141, %p142
    %s144 = ssub.s32 %s11, %s18
    %p145 = scmp.eq.s32.totalorder %s144, 0
    %s147 = sadd.s32 %s146, 1
    %s148 = scalar_select %p145, %s146, %s147
    %p151 = pneg %p145
    %p152 = scmp.eq.s32.totalorder %s11, 1
    %p153 = por %p151, %p152
    %p154 = scmp.ne.s32.totalorder %s146, %s149
    %p155 = scmp.eq.s32.totalorder %s11, 0
    %p156 = por %p154, %p155
    %p157 = scmp.ne.s32.totalorder %s146, %s149
    %p158 = scmp.eq.s32.totalorder %s16, 1
    %p159 = por %p157, %p158
    %p160 = scmp.ne.s32.totalorder %s149, %s150
    %p161 = scmp.eq.s32.totalorder %s16, 0
    %p162 = por %p160, %p161
    %p163 = scmp.ne.s32.totalorder %s149, %s150
    %p164 = scmp.eq.s32.totalorder %s17, 1
    %p165 = por %p163, %p164
    %p167 = scmp.ne.s32.totalorder %s150, %s166
    %p168 = scmp.eq.s32.totalorder %s17, 0
    %p169 = por %p167, %p168
    %p170 = scmp.le.s32.totalorder 1, %s11
    %p171 = scmp.lt.s32.totalorder %s11, 3
    %p172 = pnand %p170, %p171
    %p173 = pneg %p172
    // Predicated region
    $region9: #{net_forward.5} parent=5 // pred_check
      _
    $region10: #{net_forward.5} parent=5 // pred_check_branch
      %175 = sbr.rel (%p172) target = $region12
    $region11: #{net_forward.5} parent=5 // pred_region
      %s176 = ssub.s32 %s11, 1
      // Predicated region
      $region13: #{net_forward.5} parent=11 // pred_check
        %p177 = pneg %p32
      $region14: #{net_forward.5} parent=11 // pred_check_branch
        %179 = sbr.rel (%p177) target = $region16
      $region15: #{net_forward.5} parent=11 // pred_region
        _
      $region16: #{net_forward.5} parent=11 // pred_fallthru
        _
    $region12: #{net_forward.5} parent=5 // pred_fallthru
      _
    %p180 = scmp.lt.s32.totalorder %s11, 2
    // Predicated region
    $region17: #{net_forward.5} parent=5 // pred_check
      %p181 = pneg %p180
    $region18: #{net_forward.5} parent=5 // pred_check_branch
      %183 = sbr.rel (%p181) target = $region20
    $region19: #{net_forward.5} parent=5 // pred_region
      // Predicated region
      $region21: #{net_forward.5} parent=19 // pred_check
        %p184 = pneg %p52
      $region22: #{net_forward.5} parent=19 // pred_check_branch
        %186 = sbr.rel (%p184) target = $region24
      $region23: #{net_forward.5} parent=19 // pred_region
        %s187 = smul.u32 2, %s11
        %p188 = scmp.lt.s32.totalorder %s187, 3
        %s189 = scalar_select %p188, %s187, 3
        %s190 = smul.addr %s189, 4
        %s191 = smul.addr %s190, 4
        %s192 = scalar_lea.vmem %s1, %s191
        %s193 = smul.u32 2, %s11
      $region24: #{net_forward.5} parent=19 // pred_fallthru
        _
      // Predicated region
      $region25: #{net_forward.5} parent=19 // pred_check
        %p194 = pneg %p78
      $region26: #{net_forward.5} parent=19 // pred_check_branch
        %196 = sbr.rel (%p194) target = $region28
      $region27: #{net_forward.5} parent=19 // pred_region
        %s197 = smul.u32 2, %s11
        %p198 = scmp.lt.s32.totalorder %s197, 3
        %s199 = scalar_select %p198, %s197, 3
        %s200 = smul.addr %s199, 8
        %s201 = scalar_lea.vmem %s2, %s200
        %s202 = smul.u32 2, %s11
      $region28: #{net_forward.5} parent=19 // pred_fallthru
        _
      // Predicated region
      $region29: #{net_forward.5} parent=19 // pred_check
        %p203 = pneg %p104
      $region30: #{net_forward.5} parent=19 // pred_check_branch
        %205 = sbr.rel (%p203) target = $region32
      $region31: #{net_forward.5} parent=19 // pred_region
        %s206 = smul.u32 2, %s11
        %p207 = scmp.lt.s32.totalorder %s206, 3
        %s208 = scalar_select %p207, %s206, 3
        %s209 = smul.addr %s208, 8
        %s210 = scalar_lea.vmem %s3, %s209
        %s211 = smul.u32 2, %s11
      $region32: #{net_forward.5} parent=19 // pred_fallthru
        _
      // Predicated region
      $region33: #{net_forward.5} parent=19 // pred_check
        %p212 = pneg %p130
      $region34: #{net_forward.5} parent=19 // pred_check_branch
        %214 = sbr.rel (%p212) target = $region36
      $region35: #{net_forward.5} parent=19 // pred_region
        %s215 = smul.u32 2, %s11
        %p216 = scmp.lt.s32.totalorder %s215, 3
        %s217 = scalar_select %p216, %s215, 3
        %s218 = smul.addr %s217, 8
        %s219 = scalar_lea.vmem %s4, %s218
        %s220 = smul.u32 2, %s11
      $region36: #{net_forward.5} parent=19 // pred_fallthru
        _
    $region20: #{net_forward.5} parent=5 // pred_fallthru
      _
    %p221 = scmp.le.s32.totalorder 1, %s11
    %p222 = scmp.lt.s32.totalorder %s11, 3
    %p223 = pnand %p221, %p222
    %p224 = pneg %p223
    // Predicated region
    $region37: #{net_forward.5} parent=5 // pred_check
      _
    $region38: #{net_forward.5} parent=5 // pred_check_branch
      %226 = sbr.rel (%p223) target = $region40
    $region39: #{net_forward.5} parent=5 // pred_region
      %s227 = ssub.s32 %s11, 1
      %p228 = pneg %p32
      %p229 = pneg %p29
      %s230 = smul.u32 2, %s16
      %p231 = scmp.lt.s32.totalorder %s230, 3
      %s232 = scalar_select %p231, %s230, 3
      %s233 = smul.addr %s232, 4
      %s234 = smul.addr %s233, 4
      %s235 = scalar_lea.vmem %s1, %s234
      %p236 = pneg %p58
      %p237 = pneg %p55
      %s238 = smul.u32 2, %s16
      %p239 = scmp.lt.s32.totalorder %s238, 3
      %s240 = scalar_select %p239, %s238, 3
      %s241 = smul.addr %s240, 8
      %s242 = scalar_lea.vmem %s2, %s241
      %p243 = pneg %p84
      %p244 = pneg %p81
      %s245 = smul.u32 2, %s16
      %p246 = scmp.lt.s32.totalorder %s245, 3
      %s247 = scalar_select %p246, %s245, 3
      %s248 = smul.addr %s247, 8
      %s249 = scalar_lea.vmem %s3, %s248
      %p250 = pneg %p110
      %p251 = pneg %p107
      %s252 = smul.u32 2, %s16
      %p253 = scmp.lt.s32.totalorder %s252, 3
      %s254 = scalar_select %p253, %s252, 3
      %s255 = smul.addr %s254, 8
      %s256 = scalar_lea.vmem %s4, %s255
      %p257 = pneg %p136
      %p258 = pneg %p133
      %p259 = pneg %p162
      %p260 = pneg %p159
      %s261 = smul.u32 2, %s16
      %p262 = scmp.lt.s32.totalorder %s261, 3
      %s263 = scalar_select %p262, %s261, 3
      %s264 = smul.addr %s263, 4
      %s265 = smul.addr %s264, 4
      %s266 = scalar_lea.vmem %s5, %s265
      %s267 = smul.u32 2, %s16
      %p268 = scmp.lt.s32.totalorder %s267, 3
      %s269 = scalar_select %p268, %s267, 3
      %s270 = smul.addr %s269, 4
      %s271 = smul.addr %s270, 4
      %s272 = scalar_lea.vmem %s1, %s271
      %s273 = smul.u32 2, %s16
      %s274 = smul.u32 2, %s16
      %p275 = scmp.lt.s32.totalorder %s274, 3
      %s276 = scalar_select %p275, %s274, 3
      %s277 = smul.addr %s276, 8
      %s278 = scalar_lea.vmem %s2, %s277
      %s279 = smul.u32 2, %s16
      %s280 = smul.u32 2, %s16
      %p281 = scmp.lt.s32.totalorder %s280, 3
      %s282 = scalar_select %p281, %s280, 3
      %s283 = smul.addr %s282, 8
      %s284 = scalar_lea.vmem %s3, %s283
      %s285 = smul.u32 2, %s16
      %s286 = smul.u32 2, %s16
      %p287 = scmp.lt.s32.totalorder %s286, 3
      %s288 = scalar_select %p287, %s286, 3
      %s289 = smul.addr %s288, 8
      %s290 = scalar_lea.vmem %s4, %s289
      %s291 = smul.u32 2, %s16
      %s292 = smul.u32 2, %s16
      %p293 = scmp.lt.s32.totalorder %s292, 3
      %s294 = scalar_select %p293, %s292, 3
      %s295 = smul.addr %s294, 4
      %s296 = smul.addr %s295, 4
      %s297 = scalar_lea.vmem %s5, %s296
      %s298 = smul.u32 2, %s16
      %v300 = vld [vmem:[%s272] sm:$0xff]
      %v301 = vld [vmem:[%s272 + $0x8] sm:$0xff]
      %v302 = vld [vmem:[%s272 + $0x10] sm:$0xff]
      %v303 = vld [vmem:[%s272 + $0x18] sm:$0xff]
      %v304 = vld [vmem:[%s0] sm:$0xff]
      %v305 = vld [vmem:[%s0 + $0x8] sm:$0xff]
      %v306 = vld [vmem:[%s0 + $0x10] sm:$0xff]
      %v307 = vld [vmem:[%s0 + $0x18] sm:$0xff]
      %v308 = vld [vmem:[%s0 + $0x20] sm:$0xff]
      %v309 = vld [vmem:[%s0 + $0x28] sm:$0xff]
      %v310 = vld [vmem:[%s0 + $0x30] sm:$0xff]
      %v311 = vld [vmem:[%s0 + $0x38] sm:$0xff]
      %v312 = vld [vmem:[%s0 + $0x40] sm:$0xff]
      %v313 = vld [vmem:[%s0 + $0x48] sm:$0xff]
      %v314 = vld [vmem:[%s0 + $0x50] sm:$0xff]
      %v315 = vld [vmem:[%s0 + $0x58] sm:$0xff]
      %v316 = vld [vmem:[%s0 + $0x60] sm:$0xff]
      %v317 = vld [vmem:[%s0 + $0x68] sm:$0xff]
      %v318 = vld [vmem:[%s0 + $0x70] sm:$0xff]
      %v319 = vld [vmem:[%s0 + $0x78] sm:$0xff]
      %v320 = vld [vmem:[%s0 + $0x80] sm:$0xff]
      %v321 = vld [vmem:[%s0 + $0x88] sm:$0xff]
      %v322 = vld [vmem:[%s0 + $0x90] sm:$0xff]
      %v323 = vld [vmem:[%s0 + $0x98] sm:$0xff]
      %v324 = vld [vmem:[%s0 + $0xa0] sm:$0xff]
      %v325 = vld [vmem:[%s0 + $0xa8] sm:$0xff]
      %v326 = vld [vmem:[%s0 + $0xb0] sm:$0xff]
      %v327 = vld [vmem:[%s0 + $0xb8] sm:$0xff]
      %v328 = vld [vmem:[%s0 + $0xc0] sm:$0xff]
      %v329 = vld [vmem:[%s0 + $0xc8] sm:$0xff]
      %v330 = vld [vmem:[%s0 + $0xd0] sm:$0xff]
      %v331 = vld [vmem:[%s0 + $0xd8] sm:$0xff]
      %v332 = vld [vmem:[%s0 + $0xe0] sm:$0xff]
      %v333 = vld [vmem:[%s0 + $0xe8] sm:$0xff]
      %v334 = vld [vmem:[%s0 + $0xf0] sm:$0xff]
      %v335 = vld [vmem:[%s0 + $0xf8] sm:$0xff]
      %v336 = vld [vmem:[%s0 + $0x100] sm:$0xff]
      %v337 = vld [vmem:[%s0 + $0x108] sm:$0xff]
      %v338 = vld [vmem:[%s0 + $0x110] sm:$0xff]
      %v339 = vld [vmem:[%s0 + $0x118] sm:$0xff]
      %v340 = vld [vmem:[%s0 + $0x120] sm:$0xff]
      %v341 = vld [vmem:[%s0 + $0x128] sm:$0xff]
      %v342 = vld [vmem:[%s0 + $0x130] sm:$0xff]
      %v343 = vld [vmem:[%s0 + $0x138] sm:$0xff]
      %v344 = vld [vmem:[%s0 + $0x140] sm:$0xff]
      %v345 = vld [vmem:[%s0 + $0x148] sm:$0xff]
      %v346 = vld [vmem:[%s0 + $0x150] sm:$0xff]
      %v347 = vld [vmem:[%s0 + $0x158] sm:$0xff]
      %v348 = vld [vmem:[%s0 + $0x160] sm:$0xff]
      %v349 = vld [vmem:[%s0 + $0x168] sm:$0xff]
      %v350 = vld [vmem:[%s0 + $0x170] sm:$0xff]
      %v351 = vld [vmem:[%s0 + $0x178] sm:$0xff]
      %v352 = vld [vmem:[%s0 + $0x180] sm:$0xff]
      %v353 = vld [vmem:[%s0 + $0x188] sm:$0xff]
      %v354 = vld [vmem:[%s0 + $0x190] sm:$0xff]
      %v355 = vld [vmem:[%s0 + $0x198] sm:$0xff]
      %v356 = vld [vmem:[%s0 + $0x1a0] sm:$0xff]
      %v357 = vld [vmem:[%s0 + $0x1a8] sm:$0xff]
      %v358 = vld [vmem:[%s0 + $0x1b0] sm:$0xff]
      %v359 = vld [vmem:[%s0 + $0x1b8] sm:$0xff]
      %v360 = vld [vmem:[%s0 + $0x1c0] sm:$0xff]
      %v361 = vld [vmem:[%s0 + $0x1c8] sm:$0xff]
      %v362 = vld [vmem:[%s0 + $0x1d0] sm:$0xff]
      %v363 = vld [vmem:[%s0 + $0x1d8] sm:$0xff]
      %v364 = vld [vmem:[%s0 + $0x1e0] sm:$0xff]
      %v365 = vld [vmem:[%s0 + $0x1e8] sm:$0xff]
      %v366 = vld [vmem:[%s0 + $0x1f0] sm:$0xff]
      %v367 = vld [vmem:[%s0 + $0x1f8] sm:$0xff]
      %v368 = vld [vmem:[%s0 + $0x200] sm:$0xff]
      %v369 = vld [vmem:[%s0 + $0x208] sm:$0xff]
      %v370 = vld [vmem:[%s0 + $0x210] sm:$0xff]
      %v371 = vld [vmem:[%s0 + $0x218] sm:$0xff]
      %v372 = vld [vmem:[%s0 + $0x220] sm:$0xff]
      %v373 = vld [vmem:[%s0 + $0x228] sm:$0xff]
      %v374 = vld [vmem:[%s0 + $0x230] sm:$0xff]
      %v375 = vld [vmem:[%s0 + $0x238] sm:$0xff]
      %v376 = vld [vmem:[%s0 + $0x240] sm:$0xff]
      %v377 = vld [vmem:[%s0 + $0x248] sm:$0xff]
      %v378 = vld [vmem:[%s0 + $0x250] sm:$0xff]
      %v379 = vld [vmem:[%s0 + $0x258] sm:$0xff]
      %v380 = vld [vmem:[%s0 + $0x260] sm:$0xff]
      %v381 = vld [vmem:[%s0 + $0x268] sm:$0xff]
      %v382 = vld [vmem:[%s0 + $0x270] sm:$0xff]
      %v383 = vld [vmem:[%s0 + $0x278] sm:$0xff]
      %v384 = vld [vmem:[%s0 + $0x280] sm:$0xff]
      %v385 = vld [vmem:[%s0 + $0x288] sm:$0xff]
      %v386 = vld [vmem:[%s0 + $0x290] sm:$0xff]
      %v387 = vld [vmem:[%s0 + $0x298] sm:$0xff]
      %v388 = vld [vmem:[%s0 + $0x2a0] sm:$0xff]
      %v389 = vld [vmem:[%s0 + $0x2a8] sm:$0xff]
      %v390 = vld [vmem:[%s0 + $0x2b0] sm:$0xff]
      %v391 = vld [vmem:[%s0 + $0x2b8] sm:$0xff]
      %v392 = vld [vmem:[%s0 + $0x2c0] sm:$0xff]
      %v393 = vld [vmem:[%s0 + $0x2c8] sm:$0xff]
      %v394 = vld [vmem:[%s0 + $0x2d0] sm:$0xff]
      %v395 = vld [vmem:[%s0 + $0x2d8] sm:$0xff]
      %v396 = vld [vmem:[%s0 + $0x2e0] sm:$0xff]
      %v397 = vld [vmem:[%s0 + $0x2e8] sm:$0xff]
      %v398 = vld [vmem:[%s0 + $0x2f0] sm:$0xff]
      %v399 = vld [vmem:[%s0 + $0x2f8] sm:$0xff]
      %v400 = vld [vmem:[%s0 + $0x300] sm:$0xff]
      %v401 = vld [vmem:[%s0 + $0x308] sm:$0xff]
      %v402 = vld [vmem:[%s0 + $0x310] sm:$0xff]
      %v403 = vld [vmem:[%s0 + $0x318] sm:$0xff]
      %v404 = vld [vmem:[%s0 + $0x320] sm:$0xff]
      %v405 = vld [vmem:[%s0 + $0x328] sm:$0xff]
      %v406 = vld [vmem:[%s0 + $0x330] sm:$0xff]
      %v407 = vld [vmem:[%s0 + $0x338] sm:$0xff]
      %v408 = vld [vmem:[%s0 + $0x340] sm:$0xff]
      %v409 = vld [vmem:[%s0 + $0x348] sm:$0xff]
      %v410 = vld [vmem:[%s0 + $0x350] sm:$0xff]
      %v411 = vld [vmem:[%s0 + $0x358] sm:$0xff]
      %v412 = vld [vmem:[%s0 + $0x360] sm:$0xff]
      %v413 = vld [vmem:[%s0 + $0x368] sm:$0xff]
      %v414 = vld [vmem:[%s0 + $0x370] sm:$0xff]
      %v415 = vld [vmem:[%s0 + $0x378] sm:$0xff]
      %v416 = vld [vmem:[%s0 + $0x380] sm:$0xff]
      %v417 = vld [vmem:[%s0 + $0x388] sm:$0xff]
      %v418 = vld [vmem:[%s0 + $0x390] sm:$0xff]
      %v419 = vld [vmem:[%s0 + $0x398] sm:$0xff]
      %v420 = vld [vmem:[%s0 + $0x3a0] sm:$0xff]
      %v421 = vld [vmem:[%s0 + $0x3a8] sm:$0xff]
      %v422 = vld [vmem:[%s0 + $0x3b0] sm:$0xff]
      %v423 = vld [vmem:[%s0 + $0x3b8] sm:$0xff]
      %v424 = vld [vmem:[%s0 + $0x3c0] sm:$0xff]
      %v425 = vld [vmem:[%s0 + $0x3c8] sm:$0xff]
      %v426 = vld [vmem:[%s0 + $0x3d0] sm:$0xff]
      %v427 = vld [vmem:[%s0 + $0x3d8] sm:$0xff]
      %v428 = vld [vmem:[%s0 + $0x3e0] sm:$0xff]
      %v429 = vld [vmem:[%s0 + $0x3e8] sm:$0xff]
      %v430 = vld [vmem:[%s0 + $0x3f0] sm:$0xff]
      %v431 = vld [vmem:[%s0 + $0x3f8] sm:$0xff]
      %v432 = vld [vmem:[%s0 + $0x400] sm:$0xff]
      %v433 = vld [vmem:[%s0 + $0x408] sm:$0xff]
      %v434 = vld [vmem:[%s0 + $0x410] sm:$0xff]
      %v435 = vld [vmem:[%s0 + $0x418] sm:$0xff]
      %v436 = vld [vmem:[%s0 + $0x420] sm:$0xff]
      %v437 = vld [vmem:[%s0 + $0x428] sm:$0xff]
      %v438 = vld [vmem:[%s0 + $0x430] sm:$0xff]
      %v439 = vld [vmem:[%s0 + $0x438] sm:$0xff]
      %v440 = vld [vmem:[%s0 + $0x440] sm:$0xff]
      %v441 = vld [vmem:[%s0 + $0x448] sm:$0xff]
      %v442 = vld [vmem:[%s0 + $0x450] sm:$0xff]
      %v443 = vld [vmem:[%s0 + $0x458] sm:$0xff]
      %v444 = vld [vmem:[%s0 + $0x460] sm:$0xff]
      %v445 = vld [vmem:[%s0 + $0x468] sm:$0xff]
      %v446 = vld [vmem:[%s0 + $0x470] sm:$0xff]
      %v447 = vld [vmem:[%s0 + $0x478] sm:$0xff]
      %v448 = vld [vmem:[%s0 + $0x480] sm:$0xff]
      %v449 = vld [vmem:[%s0 + $0x488] sm:$0xff]
      %v450 = vld [vmem:[%s0 + $0x490] sm:$0xff]
      %v451 = vld [vmem:[%s0 + $0x498] sm:$0xff]
      %v452 = vld [vmem:[%s0 + $0x4a0] sm:$0xff]
      %v453 = vld [vmem:[%s0 + $0x4a8] sm:$0xff]
      %v454 = vld [vmem:[%s0 + $0x4b0] sm:$0xff]
      %v455 = vld [vmem:[%s0 + $0x4b8] sm:$0xff]
      %v456 = vld [vmem:[%s0 + $0x4c0] sm:$0xff]
      %v457 = vld [vmem:[%s0 + $0x4c8] sm:$0xff]
      %v458 = vld [vmem:[%s0 + $0x4d0] sm:$0xff]
      %v459 = vld [vmem:[%s0 + $0x4d8] sm:$0xff]
      %v460 = vld [vmem:[%s0 + $0x4e0] sm:$0xff]
      %v461 = vld [vmem:[%s0 + $0x4e8] sm:$0xff]
      %v462 = vld [vmem:[%s0 + $0x4f0] sm:$0xff]
      %v463 = vld [vmem:[%s0 + $0x4f8] sm:$0xff]
      %v464 = vld [vmem:[%s0 + $0x500] sm:$0xff]
      %v465 = vld [vmem:[%s0 + $0x508] sm:$0xff]
      %v466 = vld [vmem:[%s0 + $0x510] sm:$0xff]
      %v467 = vld [vmem:[%s0 + $0x518] sm:$0xff]
      %v468 = vld [vmem:[%s0 + $0x520] sm:$0xff]
      %v469 = vld [vmem:[%s0 + $0x528] sm:$0xff]
      %v470 = vld [vmem:[%s0 + $0x530] sm:$0xff]
      %v471 = vld [vmem:[%s0 + $0x538] sm:$0xff]
      %v472 = vld [vmem:[%s0 + $0x540] sm:$0xff]
      %v473 = vld [vmem:[%s0 + $0x548] sm:$0xff]
      %v474 = vld [vmem:[%s0 + $0x550] sm:$0xff]
      %v475 = vld [vmem:[%s0 + $0x558] sm:$0xff]
      %v476 = vld [vmem:[%s0 + $0x560] sm:$0xff]
      %v477 = vld [vmem:[%s0 + $0x568] sm:$0xff]
      %v478 = vld [vmem:[%s0 + $0x570] sm:$0xff]
      %v479 = vld [vmem:[%s0 + $0x578] sm:$0xff]
      %v480 = vld [vmem:[%s0 + $0x580] sm:$0xff]
      %v481 = vld [vmem:[%s0 + $0x588] sm:$0xff]
      %v482 = vld [vmem:[%s0 + $0x590] sm:$0xff]
      %v483 = vld [vmem:[%s0 + $0x598] sm:$0xff]
      %v484 = vld [vmem:[%s0 + $0x5a0] sm:$0xff]
      %v485 = vld [vmem:[%s0 + $0x5a8] sm:$0xff]
      %v486 = vld [vmem:[%s0 + $0x5b0] sm:$0xff]
      %v487 = vld [vmem:[%s0 + $0x5b8] sm:$0xff]
      %v488 = vld [vmem:[%s0 + $0x5c0] sm:$0xff]
      %v489 = vld [vmem:[%s0 + $0x5c8] sm:$0xff]
      %v490 = vld [vmem:[%s0 + $0x5d0] sm:$0xff]
      %v491 = vld [vmem:[%s0 + $0x5d8] sm:$0xff]
      %v492 = vld [vmem:[%s0 + $0x5e0] sm:$0xff]
      %v493 = vld [vmem:[%s0 + $0x5e8] sm:$0xff]
      %v494 = vld [vmem:[%s0 + $0x5f0] sm:$0xff]
      %v495 = vld [vmem:[%s0 + $0x5f8] sm:$0xff]
      %v496 = vld [vmem:[%s0 + $0x600] sm:$0xff]
      %v497 = vld [vmem:[%s0 + $0x608] sm:$0xff]
      %v498 = vld [vmem:[%s0 + $0x610] sm:$0xff]
      %v499 = vld [vmem:[%s0 + $0x618] sm:$0xff]
      %v500 = vld [vmem:[%s0 + $0x620] sm:$0xff]
      %v501 = vld [vmem:[%s0 + $0x628] sm:$0xff]
      %v502 = vld [vmem:[%s0 + $0x630] sm:$0xff]
      %v503 = vld [vmem:[%s0 + $0x638] sm:$0xff]
      %v504 = vld [vmem:[%s0 + $0x640] sm:$0xff]
      %v505 = vld [vmem:[%s0 + $0x648] sm:$0xff]
      %v506 = vld [vmem:[%s0 + $0x650] sm:$0xff]
      %v507 = vld [vmem:[%s0 + $0x658] sm:$0xff]
      %v508 = vld [vmem:[%s0 + $0x660] sm:$0xff]
      %v509 = vld [vmem:[%s0 + $0x668] sm:$0xff]
      %v510 = vld [vmem:[%s0 + $0x670] sm:$0xff]
      %v511 = vld [vmem:[%s0 + $0x678] sm:$0xff]
      %v512 = vld [vmem:[%s0 + $0x680] sm:$0xff]
      %v513 = vld [vmem:[%s0 + $0x688] sm:$0xff]
      %v514 = vld [vmem:[%s0 + $0x690] sm:$0xff]
      %v515 = vld [vmem:[%s0 + $0x698] sm:$0xff]
      %v516 = vld [vmem:[%s0 + $0x6a0] sm:$0xff]
      %v517 = vld [vmem:[%s0 + $0x6a8] sm:$0xff]
      %v518 = vld [vmem:[%s0 + $0x6b0] sm:$0xff]
      %v519 = vld [vmem:[%s0 + $0x6b8] sm:$0xff]
      %v520 = vld [vmem:[%s0 + $0x6c0] sm:$0xff]
      %v521 = vld [vmem:[%s0 + $0x6c8] sm:$0xff]
      %v522 = vld [vmem:[%s0 + $0x6d0] sm:$0xff]
      %v523 = vld [vmem:[%s0 + $0x6d8] sm:$0xff]
      %v524 = vld [vmem:[%s0 + $0x6e0] sm:$0xff]
      %v525 = vld [vmem:[%s0 + $0x6e8] sm:$0xff]
      %v526 = vld [vmem:[%s0 + $0x6f0] sm:$0xff]
      %v527 = vld [vmem:[%s0 + $0x6f8] sm:$0xff]
      %v528 = vld [vmem:[%s0 + $0x700] sm:$0xff]
      %v529 = vld [vmem:[%s0 + $0x708] sm:$0xff]
      %v530 = vld [vmem:[%s0 + $0x710] sm:$0xff]
      %v531 = vld [vmem:[%s0 + $0x718] sm:$0xff]
      %v532 = vld [vmem:[%s0 + $0x720] sm:$0xff]
      %v533 = vld [vmem:[%s0 + $0x728] sm:$0xff]
      %v534 = vld [vmem:[%s0 + $0x730] sm:$0xff]
      %v535 = vld [vmem:[%s0 + $0x738] sm:$0xff]
      %v536 = vld [vmem:[%s0 + $0x740] sm:$0xff]
      %v537 = vld [vmem:[%s0 + $0x748] sm:$0xff]
      %v538 = vld [vmem:[%s0 + $0x750] sm:$0xff]
      %v539 = vld [vmem:[%s0 + $0x758] sm:$0xff]
      %v540 = vld [vmem:[%s0 + $0x760] sm:$0xff]
      %v541 = vld [vmem:[%s0 + $0x768] sm:$0xff]
      %v542 = vld [vmem:[%s0 + $0x770] sm:$0xff]
      %v543 = vld [vmem:[%s0 + $0x778] sm:$0xff]
      %v544 = vld [vmem:[%s0 + $0x780] sm:$0xff]
      %v545 = vld [vmem:[%s0 + $0x788] sm:$0xff]
      %v546 = vld [vmem:[%s0 + $0x790] sm:$0xff]
      %v547 = vld [vmem:[%s0 + $0x798] sm:$0xff]
      %v548 = vld [vmem:[%s0 + $0x7a0] sm:$0xff]
      %v549 = vld [vmem:[%s0 + $0x7a8] sm:$0xff]
      %v550 = vld [vmem:[%s0 + $0x7b0] sm:$0xff]
      %v551 = vld [vmem:[%s0 + $0x7b8] sm:$0xff]
      %v552 = vld [vmem:[%s0 + $0x7c0] sm:$0xff]
      %v553 = vld [vmem:[%s0 + $0x7c8] sm:$0xff]
      %v554 = vld [vmem:[%s0 + $0x7d0] sm:$0xff]
      %v555 = vld [vmem:[%s0 + $0x7d8] sm:$0xff]
      %v556 = vld [vmem:[%s0 + $0x7e0] sm:$0xff]
      %v557 = vld [vmem:[%s0 + $0x7e8] sm:$0xff]
      %v558 = vld [vmem:[%s0 + $0x7f0] sm:$0xff]
      %v559 = vld [vmem:[%s0 + $0x7f8] sm:$0xff]
      %v560 = vld [vmem:[%s0 + $0x800] sm:$0xff]
      %v561 = vld [vmem:[%s0 + $0x808] sm:$0xff]
      %v562 = vld [vmem:[%s0 + $0x810] sm:$0xff]
      %v563 = vld [vmem:[%s0 + $0x818] sm:$0xff]
      %v564 = vld [vmem:[%s0 + $0x820] sm:$0xff]
      %v565 = vld [vmem:[%s0 + $0x828] sm:$0xff]
      %v566 = vld [vmem:[%s0 + $0x830] sm:$0xff]
      %v567 = vld [vmem:[%s0 + $0x838] sm:$0xff]
      %v568 = vld [vmem:[%s0 + $0x840] sm:$0xff]
      %v569 = vld [vmem:[%s0 + $0x848] sm:$0xff]
      %v570 = vld [vmem:[%s0 + $0x850] sm:$0xff]
      %v571 = vld [vmem:[%s0 + $0x858] sm:$0xff]
      %v572 = vld [vmem:[%s0 + $0x860] sm:$0xff]
      %v573 = vld [vmem:[%s0 + $0x868] sm:$0xff]
      %v574 = vld [vmem:[%s0 + $0x870] sm:$0xff]
      %v575 = vld [vmem:[%s0 + $0x878] sm:$0xff]
      %v576 = vld [vmem:[%s0 + $0x880] sm:$0xff]
      %v577 = vld [vmem:[%s0 + $0x888] sm:$0xff]
      %v578 = vld [vmem:[%s0 + $0x890] sm:$0xff]
      %v579 = vld [vmem:[%s0 + $0x898] sm:$0xff]
      %v580 = vld [vmem:[%s0 + $0x8a0] sm:$0xff]
      %v581 = vld [vmem:[%s0 + $0x8a8] sm:$0xff]
      %v582 = vld [vmem:[%s0 + $0x8b0] sm:$0xff]
      %v583 = vld [vmem:[%s0 + $0x8b8] sm:$0xff]
      %v584 = vld [vmem:[%s0 + $0x8c0] sm:$0xff]
      %v585 = vld [vmem:[%s0 + $0x8c8] sm:$0xff]
      %v586 = vld [vmem:[%s0 + $0x8d0] sm:$0xff]
      %v587 = vld [vmem:[%s0 + $0x8d8] sm:$0xff]
      %v588 = vld [vmem:[%s0 + $0x8e0] sm:$0xff]
      %v589 = vld [vmem:[%s0 + $0x8e8] sm:$0xff]
      %v590 = vld [vmem:[%s0 + $0x8f0] sm:$0xff]
      %v591 = vld [vmem:[%s0 + $0x8f8] sm:$0xff]
      %v592 = vld [vmem:[%s0 + $0x900] sm:$0xff]
      %v593 = vld [vmem:[%s0 + $0x908] sm:$0xff]
      %v594 = vld [vmem:[%s0 + $0x910] sm:$0xff]
      %v595 = vld [vmem:[%s0 + $0x918] sm:$0xff]
      %v596 = vld [vmem:[%s0 + $0x920] sm:$0xff]
      %v597 = vld [vmem:[%s0 + $0x928] sm:$0xff]
      %v598 = vld [vmem:[%s0 + $0x930] sm:$0xff]
      %v599 = vld [vmem:[%s0 + $0x938] sm:$0xff]
      %v600 = vld [vmem:[%s0 + $0x940] sm:$0xff]
      %v601 = vld [vmem:[%s0 + $0x948] sm:$0xff]
      %v602 = vld [vmem:[%s0 + $0x950] sm:$0xff]
      %v603 = vld [vmem:[%s0 + $0x958] sm:$0xff]
      %v604 = vld [vmem:[%s0 + $0x960] sm:$0xff]
      %v605 = vld [vmem:[%s0 + $0x968] sm:$0xff]
      %v606 = vld [vmem:[%s0 + $0x970] sm:$0xff]
      %v607 = vld [vmem:[%s0 + $0x978] sm:$0xff]
      %v608 = vld [vmem:[%s0 + $0x980] sm:$0xff]
      %v609 = vld [vmem:[%s0 + $0x988] sm:$0xff]
      %v610 = vld [vmem:[%s0 + $0x990] sm:$0xff]
      %v611 = vld [vmem:[%s0 + $0x998] sm:$0xff]
      %v612 = vld [vmem:[%s0 + $0x9a0] sm:$0xff]
      %v613 = vld [vmem:[%s0 + $0x9a8] sm:$0xff]
      %v614 = vld [vmem:[%s0 + $0x9b0] sm:$0xff]
      %v615 = vld [vmem:[%s0 + $0x9b8] sm:$0xff]
      %v616 = vld [vmem:[%s0 + $0x9c0] sm:$0xff]
      %v617 = vld [vmem:[%s0 + $0x9c8] sm:$0xff]
      %v618 = vld [vmem:[%s0 + $0x9d0] sm:$0xff]
      %v619 = vld [vmem:[%s0 + $0x9d8] sm:$0xff]
      %v620 = vld [vmem:[%s0 + $0x9e0] sm:$0xff]
      %v621 = vld [vmem:[%s0 + $0x9e8] sm:$0xff]
      %v622 = vld [vmem:[%s0 + $0x9f0] sm:$0xff]
      %v623 = vld [vmem:[%s0 + $0x9f8] sm:$0xff]
      %v624 = vld [vmem:[%s0 + $0xa00] sm:$0xff]
      %v625 = vld [vmem:[%s0 + $0xa08] sm:$0xff]
      %v626 = vld [vmem:[%s0 + $0xa10] sm:$0xff]
      %v627 = vld [vmem:[%s0 + $0xa18] sm:$0xff]
      %v628 = vld [vmem:[%s0 + $0xa20] sm:$0xff]
      %v629 = vld [vmem:[%s0 + $0xa28] sm:$0xff]
      %v630 = vld [vmem:[%s0 + $0xa30] sm:$0xff]
      %v631 = vld [vmem:[%s0 + $0xa38] sm:$0xff]
      %v632 = vld [vmem:[%s0 + $0xa40] sm:$0xff]
      %v633 = vld [vmem:[%s0 + $0xa48] sm:$0xff]
      %v634 = vld [vmem:[%s0 + $0xa50] sm:$0xff]
      %v635 = vld [vmem:[%s0 + $0xa58] sm:$0xff]
      %v636 = vld [vmem:[%s0 + $0xa60] sm:$0xff]
      %v637 = vld [vmem:[%s0 + $0xa68] sm:$0xff]
      %v638 = vld [vmem:[%s0 + $0xa70] sm:$0xff]
      %v639 = vld [vmem:[%s0 + $0xa78] sm:$0xff]
      %v640 = vld [vmem:[%s0 + $0xa80] sm:$0xff]
      %v641 = vld [vmem:[%s0 + $0xa88] sm:$0xff]
      %v642 = vld [vmem:[%s0 + $0xa90] sm:$0xff]
      %v643 = vld [vmem:[%s0 + $0xa98] sm:$0xff]
      %v644 = vld [vmem:[%s0 + $0xaa0] sm:$0xff]
      %v645 = vld [vmem:[%s0 + $0xaa8] sm:$0xff]
      %v646 = vld [vmem:[%s0 + $0xab0] sm:$0xff]
      %v647 = vld [vmem:[%s0 + $0xab8] sm:$0xff]
      %v648 = vld [vmem:[%s0 + $0xac0] sm:$0xff]
      %v649 = vld [vmem:[%s0 + $0xac8] sm:$0xff]
      %v650 = vld [vmem:[%s0 + $0xad0] sm:$0xff]
      %v651 = vld [vmem:[%s0 + $0xad8] sm:$0xff]
      %v652 = vld [vmem:[%s0 + $0xae0] sm:$0xff]
      %v653 = vld [vmem:[%s0 + $0xae8] sm:$0xff]
      %v654 = vld [vmem:[%s0 + $0xaf0] sm:$0xff]
      %v655 = vld [vmem:[%s0 + $0xaf8] sm:$0xff]
      %v656 = vld [vmem:[%s0 + $0xb00] sm:$0xff]
      %v657 = vld [vmem:[%s0 + $0xb08] sm:$0xff]
      %v658 = vld [vmem:[%s0 + $0xb10] sm:$0xff]
      %v659 = vld [vmem:[%s0 + $0xb18] sm:$0xff]
      %v660 = vld [vmem:[%s0 + $0xb20] sm:$0xff]
      %v661 = vld [vmem:[%s0 + $0xb28] sm:$0xff]
      %v662 = vld [vmem:[%s0 + $0xb30] sm:$0xff]
      %v663 = vld [vmem:[%s0 + $0xb38] sm:$0xff]
      %v664 = vld [vmem:[%s0 + $0xb40] sm:$0xff]
      %v665 = vld [vmem:[%s0 + $0xb48] sm:$0xff]
      %v666 = vld [vmem:[%s0 + $0xb50] sm:$0xff]
      %v667 = vld [vmem:[%s0 + $0xb58] sm:$0xff]
      %v668 = vld [vmem:[%s0 + $0xb60] sm:$0xff]
      %v669 = vld [vmem:[%s0 + $0xb68] sm:$0xff]
      %v670 = vld [vmem:[%s0 + $0xb70] sm:$0xff]
      %v671 = vld [vmem:[%s0 + $0xb78] sm:$0xff]
      %v672 = vld [vmem:[%s0 + $0xb80] sm:$0xff]
      %v673 = vld [vmem:[%s0 + $0xb88] sm:$0xff]
      %v674 = vld [vmem:[%s0 + $0xb90] sm:$0xff]
      %v675 = vld [vmem:[%s0 + $0xb98] sm:$0xff]
      %v676 = vld [vmem:[%s0 + $0xba0] sm:$0xff]
      %v677 = vld [vmem:[%s0 + $0xba8] sm:$0xff]
      %v678 = vld [vmem:[%s0 + $0xbb0] sm:$0xff]
      %v679 = vld [vmem:[%s0 + $0xbb8] sm:$0xff]
      %v680 = vld [vmem:[%s0 + $0xbc0] sm:$0xff]
      %v681 = vld [vmem:[%s0 + $0xbc8] sm:$0xff]
      %v682 = vld [vmem:[%s0 + $0xbd0] sm:$0xff]
      %v683 = vld [vmem:[%s0 + $0xbd8] sm:$0xff]
      %v684 = vld [vmem:[%s0 + $0xbe0] sm:$0xff]
      %v685 = vld [vmem:[%s0 + $0xbe8] sm:$0xff]
      %v686 = vld [vmem:[%s0 + $0xbf0] sm:$0xff]
      %v687 = vld [vmem:[%s0 + $0xbf8] sm:$0xff]
      %v688 = vld [vmem:[%s0 + $0xc00] sm:$0xff]
      %v689 = vld [vmem:[%s0 + $0xc08] sm:$0xff]
      %v690 = vld [vmem:[%s0 + $0xc10] sm:$0xff]
      %v691 = vld [vmem:[%s0 + $0xc18] sm:$0xff]
      %v692 = vld [vmem:[%s0 + $0xc20] sm:$0xff]
      %v693 = vld [vmem:[%s0 + $0xc28] sm:$0xff]
      %v694 = vld [vmem:[%s0 + $0xc30] sm:$0xff]
      %v695 = vld [vmem:[%s0 + $0xc38] sm:$0xff]
      %v696 = vld [vmem:[%s0 + $0xc40] sm:$0xff]
      %v697 = vld [vmem:[%s0 + $0xc48] sm:$0xff]
      %v698 = vld [vmem:[%s0 + $0xc50] sm:$0xff]
      %v699 = vld [vmem:[%s0 + $0xc58] sm:$0xff]
      %v700 = vld [vmem:[%s0 + $0xc60] sm:$0xff]
      %v701 = vld [vmem:[%s0 + $0xc68] sm:$0xff]
      %v702 = vld [vmem:[%s0 + $0xc70] sm:$0xff]
      %v703 = vld [vmem:[%s0 + $0xc78] sm:$0xff]
      %v704 = vld [vmem:[%s278] sm:$0xff]
      %v705 = vld [vmem:[%s278 + $0x8] sm:$0xff]
      %707 = vset.pattern.permute.xlu0 0
      %708 = vperm.xlu0 %707, %v704
      %v709 = vpop.permute.xlu0 %708
      %712 = vset.pattern.permute.xlu0 0
      %713 = vperm.xlu0 %712, %v705
      %v714 = vpop.permute.xlu0 %713
      %v720 = vunpack.c.l.b16 %v300
      %v721 = vunpack.c.h.b16 %v300
      %v722 = vunpack.c.l.b16 %v301
      %v723 = vunpack.c.h.b16 %v301
      %v724 = vunpack.c.l.b16 %v302
      %v725 = vunpack.c.h.b16 %v302
      %v726 = vunpack.c.l.b16 %v303
      %v727 = vunpack.c.h.b16 %v303
      %v728 = vpack.c.b16 %v724, %v720
      %v729 = vpack.c.b16 %v725, %v721
      %v730 = vpack.c.b16 %v726, %v722
      %v731 = vpack.c.b16 %v727, %v723
      %v1135 = vunpack.c.l.b16 %v304
      %v1136 = vunpack.c.h.b16 %v304
      %v1137 = vunpack.c.l.b16 %v305
      %v1138 = vunpack.c.h.b16 %v305
      %v1139 = vunpack.c.l.b16 %v306
      %v1140 = vunpack.c.h.b16 %v306
      %v1141 = vunpack.c.l.b16 %v307
      %v1142 = vunpack.c.h.b16 %v307
      %v1143 = vunpack.c.l.b16 %v308
      %v1144 = vunpack.c.h.b16 %v308
      %v1145 = vunpack.c.l.b16 %v309
      %v1146 = vunpack.c.h.b16 %v309
      %v1147 = vunpack.c.l.b16 %v310
      %v1148 = vunpack.c.h.b16 %v310
      %v1149 = vunpack.c.l.b16 %v311
      %v1150 = vunpack.c.h.b16 %v311
      %v1151 = vunpack.c.l.b16 %v312
      %v1152 = vunpack.c.h.b16 %v312
      %v1153 = vunpack.c.l.b16 %v313
      %v1154 = vunpack.c.h.b16 %v313
      %v1155 = vunpack.c.l.b16 %v314
      %v1156 = vunpack.c.h.b16 %v314
      %v1157 = vunpack.c.l.b16 %v315
      %v1158 = vunpack.c.h.b16 %v315
      %v1159 = vunpack.c.l.b16 %v316
      %v1160 = vunpack.c.h.b16 %v316
      %v1161 = vunpack.c.l.b16 %v317
      %v1162 = vunpack.c.h.b16 %v317
      %v1163 = vunpack.c.l.b16 %v318
      %v1164 = vunpack.c.h.b16 %v318
      %v1165 = vunpack.c.l.b16 %v319
      %v1166 = vunpack.c.h.b16 %v319
      %v1167 = vunpack.c.l.b16 %v320
      %v1168 = vunpack.c.h.b16 %v320
      %v1169 = vunpack.c.l.b16 %v321
      %v1170 = vunpack.c.h.b16 %v321
      %v1171 = vunpack.c.l.b16 %v322
      %v1172 = vunpack.c.h.b16 %v322
      %v1173 = vunpack.c.l.b16 %v323
      %v1174 = vunpack.c.h.b16 %v323
      %v1175 = vunpack.c.l.b16 %v324
      %v1176 = vunpack.c.h.b16 %v324
      %v1177 = vunpack.c.l.b16 %v325
      %v1178 = vunpack.c.h.b16 %v325
      %v1179 = vunpack.c.l.b16 %v326
      %v1180 = vunpack.c.h.b16 %v326
      %v1181 = vunpack.c.l.b16 %v327
      %v1182 = vunpack.c.h.b16 %v327
      %v1183 = vunpack.c.l.b16 %v328
      %v1184 = vunpack.c.h.b16 %v328
      %v1185 = vunpack.c.l.b16 %v329
      %v1186 = vunpack.c.h.b16 %v329
      %v1187 = vunpack.c.l.b16 %v330
      %v1188 = vunpack.c.h.b16 %v330
      %v1189 = vunpack.c.l.b16 %v331
      %v1190 = vunpack.c.h.b16 %v331
      %v1191 = vunpack.c.l.b16 %v332
      %v1192 = vunpack.c.h.b16 %v332
      %v1193 = vunpack.c.l.b16 %v333
      %v1194 = vunpack.c.h.b16 %v333
      %v1195 = vunpack.c.l.b16 %v334
      %v1196 = vunpack.c.h.b16 %v334
      %v1197 = vunpack.c.l.b16 %v335
      %v1198 = vunpack.c.h.b16 %v335
      %v1199 = vunpack.c.l.b16 %v336
      %v1200 = vunpack.c.h.b16 %v336
      %v1201 = vunpack.c.l.b16 %v337
      %v1202 = vunpack.c.h.b16 %v337
      %v1203 = vunpack.c.l.b16 %v338
      %v1204 = vunpack.c.h.b16 %v338
      %v1205 = vunpack.c.l.b16 %v339
      %v1206 = vunpack.c.h.b16 %v339
      %v1207 = vunpack.c.l.b16 %v340
      %v1208 = vunpack.c.h.b16 %v340
      %v1209 = vunpack.c.l.b16 %v341
      %v1210 = vunpack.c.h.b16 %v341
      %v1211 = vunpack.c.l.b16 %v342
      %v1212 = vunpack.c.h.b16 %v342
      %v1213 = vunpack.c.l.b16 %v343
      %v1214 = vunpack.c.h.b16 %v343
      %v1215 = vunpack.c.l.b16 %v344
      %v1216 = vunpack.c.h.b16 %v344
      %v1217 = vunpack.c.l.b16 %v345
      %v1218 = vunpack.c.h.b16 %v345
      %v1219 = vunpack.c.l.b16 %v346
      %v1220 = vunpack.c.h.b16 %v346
      %v1221 = vunpack.c.l.b16 %v347
      %v1222 = vunpack.c.h.b16 %v347
      %v1223 = vunpack.c.l.b16 %v348
      %v1224 = vunpack.c.h.b16 %v348
      %v1225 = vunpack.c.l.b16 %v349
      %v1226 = vunpack.c.h.b16 %v349
      %v1227 = vunpack.c.l.b16 %v350
      %v1228 = vunpack.c.h.b16 %v350
      %v1229 = vunpack.c.l.b16 %v351
      %v1230 = vunpack.c.h.b16 %v351
      %v1231 = vunpack.c.l.b16 %v352
      %v1232 = vunpack.c.h.b16 %v352
      %v1233 = vunpack.c.l.b16 %v353
      %v1234 = vunpack.c.h.b16 %v353
      %v1235 = vunpack.c.l.b16 %v354
      %v1236 = vunpack.c.h.b16 %v354
      %v1237 = vunpack.c.l.b16 %v355
      %v1238 = vunpack.c.h.b16 %v355
      %v1239 = vunpack.c.l.b16 %v356
      %v1240 = vunpack.c.h.b16 %v356
      %v1241 = vunpack.c.l.b16 %v357
      %v1242 = vunpack.c.h.b16 %v357
      %v1243 = vunpack.c.l.b16 %v358
      %v1244 = vunpack.c.h.b16 %v358
      %v1245 = vunpack.c.l.b16 %v359
      %v1246 = vunpack.c.h.b16 %v359
      %v1247 = vunpack.c.l.b16 %v360
      %v1248 = vunpack.c.h.b16 %v360
      %v1249 = vunpack.c.l.b16 %v361
      %v1250 = vunpack.c.h.b16 %v361
      %v1251 = vunpack.c.l.b16 %v362
      %v1252 = vunpack.c.h.b16 %v362
      %v1253 = vunpack.c.l.b16 %v363
      %v1254 = vunpack.c.h.b16 %v363
      %v1255 = vunpack.c.l.b16 %v364
      %v1256 = vunpack.c.h.b16 %v364
      %v1257 = vunpack.c.l.b16 %v365
      %v1258 = vunpack.c.h.b16 %v365
      %v1259 = vunpack.c.l.b16 %v366
      %v1260 = vunpack.c.h.b16 %v366
      %v1261 = vunpack.c.l.b16 %v367
      %v1262 = vunpack.c.h.b16 %v367
      %v1263 = vunpack.c.l.b16 %v368
      %v1264 = vunpack.c.h.b16 %v368
      %v1265 = vunpack.c.l.b16 %v369
      %v1266 = vunpack.c.h.b16 %v369
      %v1267 = vunpack.c.l.b16 %v370
      %v1268 = vunpack.c.h.b16 %v370
      %v1269 = vunpack.c.l.b16 %v371
      %v1270 = vunpack.c.h.b16 %v371
      %v1271 = vunpack.c.l.b16 %v372
      %v1272 = vunpack.c.h.b16 %v372
      %v1273 = vunpack.c.l.b16 %v373
      %v1274 = vunpack.c.h.b16 %v373
      %v1275 = vunpack.c.l.b16 %v374
      %v1276 = vunpack.c.h.b16 %v374
      %v1277 = vunpack.c.l.b16 %v375
      %v1278 = vunpack.c.h.b16 %v375
      %v1279 = vunpack.c.l.b16 %v376
      %v1280 = vunpack.c.h.b16 %v376
      %v1281 = vunpack.c.l.b16 %v377
      %v1282 = vunpack.c.h.b16 %v377
      %v1283 = vunpack.c.l.b16 %v378
      %v1284 = vunpack.c.h.b16 %v378
      %v1285 = vunpack.c.l.b16 %v379
      %v1286 = vunpack.c.h.b16 %v379
      %v1287 = vunpack.c.l.b16 %v380
      %v1288 = vunpack.c.h.b16 %v380
      %v1289 = vunpack.c.l.b16 %v381
      %v1290 = vunpack.c.h.b16 %v381
      %v1291 = vunpack.c.l.b16 %v382
      %v1292 = vunpack.c.h.b16 %v382
      %v1293 = vunpack.c.l.b16 %v383
      %v1294 = vunpack.c.h.b16 %v383
      %v1295 = vunpack.c.l.b16 %v384
      %v1296 = vunpack.c.h.b16 %v384
      %v1297 = vunpack.c.l.b16 %v385
      %v1298 = vunpack.c.h.b16 %v385
      %v1299 = vunpack.c.l.b16 %v386
      %v1300 = vunpack.c.h.b16 %v386
      %v1301 = vunpack.c.l.b16 %v387
      %v1302 = vunpack.c.h.b16 %v387
      %v1303 = vunpack.c.l.b16 %v388
      %v1304 = vunpack.c.h.b16 %v388
      %v1305 = vunpack.c.l.b16 %v389
      %v1306 = vunpack.c.h.b16 %v389
      %v1307 = vunpack.c.l.b16 %v390
      %v1308 = vunpack.c.h.b16 %v390
      %v1309 = vunpack.c.l.b16 %v391
      %v1310 = vunpack.c.h.b16 %v391
      %v1311 = vunpack.c.l.b16 %v392
      %v1312 = vunpack.c.h.b16 %v392
      %v1313 = vunpack.c.l.b16 %v393
      %v1314 = vunpack.c.h.b16 %v393
      %v1315 = vunpack.c.l.b16 %v394
      %v1316 = vunpack.c.h.b16 %v394
      %v1317 = vunpack.c.l.b16 %v395
      %v1318 = vunpack.c.h.b16 %v395
      %v1319 = vunpack.c.l.b16 %v396
      %v1320 = vunpack.c.h.b16 %v396
      %v1321 = vunpack.c.l.b16 %v397
      %v1322 = vunpack.c.h.b16 %v397
      %v1323 = vunpack.c.l.b16 %v398
      %v1324 = vunpack.c.h.b16 %v398
      %v1325 = vunpack.c.l.b16 %v399
      %v1326 = vunpack.c.h.b16 %v399
      %v1327 = vunpack.c.l.b16 %v400
      %v1328 = vunpack.c.h.b16 %v400
      %v1329 = vunpack.c.l.b16 %v401
      %v1330 = vunpack.c.h.b16 %v401
      %v1331 = vunpack.c.l.b16 %v402
      %v1332 = vunpack.c.h.b16 %v402
      %v1333 = vunpack.c.l.b16 %v403
      %v1334 = vunpack.c.h.b16 %v403
      %v1335 = vunpack.c.l.b16 %v404
      %v1336 = vunpack.c.h.b16 %v404
      %v1337 = vunpack.c.l.b16 %v405
      %v1338 = vunpack.c.h.b16 %v405
      %v1339 = vunpack.c.l.b16 %v406
      %v1340 = vunpack.c.h.b16 %v406
      %v1341 = vunpack.c.l.b16 %v407
      %v1342 = vunpack.c.h.b16 %v407
      %v1343 = vunpack.c.l.b16 %v408
      %v1344 = vunpack.c.h.b16 %v408
      %v1345 = vunpack.c.l.b16 %v409
      %v1346 = vunpack.c.h.b16 %v409
      %v1347 = vunpack.c.l.b16 %v410
      %v1348 = vunpack.c.h.b16 %v410
      %v1349 = vunpack.c.l.b16 %v411
      %v1350 = vunpack.c.h.b16 %v411
      %v1351 = vunpack.c.l.b16 %v412
      %v1352 = vunpack.c.h.b16 %v412
      %v1353 = vunpack.c.l.b16 %v413
      %v1354 = vunpack.c.h.b16 %v413
      %v1355 = vunpack.c.l.b16 %v414
      %v1356 = vunpack.c.h.b16 %v414
      %v1357 = vunpack.c.l.b16 %v415
      %v1358 = vunpack.c.h.b16 %v415
      %v1359 = vunpack.c.l.b16 %v416
      %v1360 = vunpack.c.h.b16 %v416
      %v1361 = vunpack.c.l.b16 %v417
      %v1362 = vunpack.c.h.b16 %v417
      %v1363 = vunpack.c.l.b16 %v418
      %v1364 = vunpack.c.h.b16 %v418
      %v1365 = vunpack.c.l.b16 %v419
      %v1366 = vunpack.c.h.b16 %v419
      %v1367 = vunpack.c.l.b16 %v420
      %v1368 = vunpack.c.h.b16 %v420
      %v1369 = vunpack.c.l.b16 %v421
      %v1370 = vunpack.c.h.b16 %v421
      %v1371 = vunpack.c.l.b16 %v422
      %v1372 = vunpack.c.h.b16 %v422
      %v1373 = vunpack.c.l.b16 %v423
      %v1374 = vunpack.c.h.b16 %v423
      %v1375 = vunpack.c.l.b16 %v424
      %v1376 = vunpack.c.h.b16 %v424
      %v1377 = vunpack.c.l.b16 %v425
      %v1378 = vunpack.c.h.b16 %v425
      %v1379 = vunpack.c.l.b16 %v426
      %v1380 = vunpack.c.h.b16 %v426
      %v1381 = vunpack.c.l.b16 %v427
      %v1382 = vunpack.c.h.b16 %v427
      %v1383 = vunpack.c.l.b16 %v428
      %v1384 = vunpack.c.h.b16 %v428
      %v1385 = vunpack.c.l.b16 %v429
      %v1386 = vunpack.c.h.b16 %v429
      %v1387 = vunpack.c.l.b16 %v430
      %v1388 = vunpack.c.h.b16 %v430
      %v1389 = vunpack.c.l.b16 %v431
      %v1390 = vunpack.c.h.b16 %v431
      %v1391 = vunpack.c.l.b16 %v432
      %v1392 = vunpack.c.h.b16 %v432
      %v1393 = vunpack.c.l.b16 %v433
      %v1394 = vunpack.c.h.b16 %v433
      %v1395 = vunpack.c.l.b16 %v434
      %v1396 = vunpack.c.h.b16 %v434
      %v1397 = vunpack.c.l.b16 %v435
      %v1398 = vunpack.c.h.b16 %v435
      %v1399 = vunpack.c.l.b16 %v436
      %v1400 = vunpack.c.h.b16 %v436
      %v1401 = vunpack.c.l.b16 %v437
      %v1402 = vunpack.c.h.b16 %v437
      %v1403 = vunpack.c.l.b16 %v438
      %v1404 = vunpack.c.h.b16 %v438
      %v1405 = vunpack.c.l.b16 %v439
      %v1406 = vunpack.c.h.b16 %v439
      %v1407 = vunpack.c.l.b16 %v440
      %v1408 = vunpack.c.h.b16 %v440
      %v1409 = vunpack.c.l.b16 %v441
      %v1410 = vunpack.c.h.b16 %v441
      %v1411 = vunpack.c.l.b16 %v442
      %v1412 = vunpack.c.h.b16 %v442
      %v1413 = vunpack.c.l.b16 %v443
      %v1414 = vunpack.c.h.b16 %v443
      %v1415 = vunpack.c.l.b16 %v444
      %v1416 = vunpack.c.h.b16 %v444
      %v1417 = vunpack.c.l.b16 %v445
      %v1418 = vunpack.c.h.b16 %v445
      %v1419 = vunpack.c.l.b16 %v446
      %v1420 = vunpack.c.h.b16 %v446
      %v1421 = vunpack.c.l.b16 %v447
      %v1422 = vunpack.c.h.b16 %v447
      %v1423 = vunpack.c.l.b16 %v448
      %v1424 = vunpack.c.h.b16 %v448
      %v1425 = vunpack.c.l.b16 %v449
      %v1426 = vunpack.c.h.b16 %v449
      %v1427 = vunpack.c.l.b16 %v450
      %v1428 = vunpack.c.h.b16 %v450
      %v1429 = vunpack.c.l.b16 %v451
      %v1430 = vunpack.c.h.b16 %v451
      %v1431 = vunpack.c.l.b16 %v452
      %v1432 = vunpack.c.h.b16 %v452
      %v1433 = vunpack.c.l.b16 %v453
      %v1434 = vunpack.c.h.b16 %v453
      %v1435 = vunpack.c.l.b16 %v454
      %v1436 = vunpack.c.h.b16 %v454
      %v1437 = vunpack.c.l.b16 %v455
      %v1438 = vunpack.c.h.b16 %v455
      %v1439 = vunpack.c.l.b16 %v456
      %v1440 = vunpack.c.h.b16 %v456
      %v1441 = vunpack.c.l.b16 %v457
      %v1442 = vunpack.c.h.b16 %v457
      %v1443 = vunpack.c.l.b16 %v458
      %v1444 = vunpack.c.h.b16 %v458
      %v1445 = vunpack.c.l.b16 %v459
      %v1446 = vunpack.c.h.b16 %v459
      %v1447 = vunpack.c.l.b16 %v460
      %v1448 = vunpack.c.h.b16 %v460
      %v1449 = vunpack.c.l.b16 %v461
      %v1450 = vunpack.c.h.b16 %v461
      %v1451 = vunpack.c.l.b16 %v462
      %v1452 = vunpack.c.h.b16 %v462
      %v1453 = vunpack.c.l.b16 %v463
      %v1454 = vunpack.c.h.b16 %v463
      %v1455 = vunpack.c.l.b16 %v464
      %v1456 = vunpack.c.h.b16 %v464
      %v1457 = vunpack.c.l.b16 %v465
      %v1458 = vunpack.c.h.b16 %v465
      %v1459 = vunpack.c.l.b16 %v466
      %v1460 = vunpack.c.h.b16 %v466
      %v1461 = vunpack.c.l.b16 %v467
      %v1462 = vunpack.c.h.b16 %v467
      %v1463 = vunpack.c.l.b16 %v468
      %v1464 = vunpack.c.h.b16 %v468
      %v1465 = vunpack.c.l.b16 %v469
      %v1466 = vunpack.c.h.b16 %v469
      %v1467 = vunpack.c.l.b16 %v470
      %v1468 = vunpack.c.h.b16 %v470
      %v1469 = vunpack.c.l.b16 %v471
      %v1470 = vunpack.c.h.b16 %v471
      %v1471 = vunpack.c.l.b16 %v472
      %v1472 = vunpack.c.h.b16 %v472
      %v1473 = vunpack.c.l.b16 %v473
      %v1474 = vunpack.c.h.b16 %v473
      %v1475 = vunpack.c.l.b16 %v474
      %v1476 = vunpack.c.h.b16 %v474
      %v1477 = vunpack.c.l.b16 %v475
      %v1478 = vunpack.c.h.b16 %v475
      %v1479 = vunpack.c.l.b16 %v476
      %v1480 = vunpack.c.h.b16 %v476
      %v1481 = vunpack.c.l.b16 %v477
      %v1482 = vunpack.c.h.b16 %v477
      %v1483 = vunpack.c.l.b16 %v478
      %v1484 = vunpack.c.h.b16 %v478
      %v1485 = vunpack.c.l.b16 %v479
      %v1486 = vunpack.c.h.b16 %v479
      %v1487 = vunpack.c.l.b16 %v480
      %v1488 = vunpack.c.h.b16 %v480
      %v1489 = vunpack.c.l.b16 %v481
      %v1490 = vunpack.c.h.b16 %v481
      %v1491 = vunpack.c.l.b16 %v482
      %v1492 = vunpack.c.h.b16 %v482
      %v1493 = vunpack.c.l.b16 %v483
      %v1494 = vunpack.c.h.b16 %v483
      %v1495 = vunpack.c.l.b16 %v484
      %v1496 = vunpack.c.h.b16 %v484
      %v1497 = vunpack.c.l.b16 %v485
      %v1498 = vunpack.c.h.b16 %v485
      %v1499 = vunpack.c.l.b16 %v486
      %v1500 = vunpack.c.h.b16 %v486
      %v1501 = vunpack.c.l.b16 %v487
      %v1502 = vunpack.c.h.b16 %v487
      %v1503 = vunpack.c.l.b16 %v488
      %v1504 = vunpack.c.h.b16 %v488
      %v1505 = vunpack.c.l.b16 %v489
      %v1506 = vunpack.c.h.b16 %v489
      %v1507 = vunpack.c.l.b16 %v490
      %v1508 = vunpack.c.h.b16 %v490
      %v1509 = vunpack.c.l.b16 %v491
      %v1510 = vunpack.c.h.b16 %v491
      %v1511 = vunpack.c.l.b16 %v492
      %v1512 = vunpack.c.h.b16 %v492
      %v1513 = vunpack.c.l.b16 %v493
      %v1514 = vunpack.c.h.b16 %v493
      %v1515 = vunpack.c.l.b16 %v494
      %v1516 = vunpack.c.h.b16 %v494
      %v1517 = vunpack.c.l.b16 %v495
      %v1518 = vunpack.c.h.b16 %v495
      %v1519 = vunpack.c.l.b16 %v496
      %v1520 = vunpack.c.h.b16 %v496
      %v1521 = vunpack.c.l.b16 %v497
      %v1522 = vunpack.c.h.b16 %v497
      %v1523 = vunpack.c.l.b16 %v498
      %v1524 = vunpack.c.h.b16 %v498
      %v1525 = vunpack.c.l.b16 %v499
      %v1526 = vunpack.c.h.b16 %v499
      %v1527 = vunpack.c.l.b16 %v500
      %v1528 = vunpack.c.h.b16 %v500
      %v1529 = vunpack.c.l.b16 %v501
      %v1530 = vunpack.c.h.b16 %v501
      %v1531 = vunpack.c.l.b16 %v502
      %v1532 = vunpack.c.h.b16 %v502
      %v1533 = vunpack.c.l.b16 %v503
      %v1534 = vunpack.c.h.b16 %v503
      %v1535 = vunpack.c.l.b16 %v504
      %v1536 = vunpack.c.h.b16 %v504
      %v1537 = vunpack.c.l.b16 %v505
      %v1538 = vunpack.c.h.b16 %v505
      %v1539 = vunpack.c.l.b16 %v506
      %v1540 = vunpack.c.h.b16 %v506
      %v1541 = vunpack.c.l.b16 %v507
      %v1542 = vunpack.c.h.b16 %v507
      %v1543 = vunpack.c.l.b16 %v508
      %v1544 = vunpack.c.h.b16 %v508
      %v1545 = vunpack.c.l.b16 %v509
      %v1546 = vunpack.c.h.b16 %v509
      %v1547 = vunpack.c.l.b16 %v510
      %v1548 = vunpack.c.h.b16 %v510
      %v1549 = vunpack.c.l.b16 %v511
      %v1550 = vunpack.c.h.b16 %v511
      %v1551 = vunpack.c.l.b16 %v512
      %v1552 = vunpack.c.h.b16 %v512
      %v1553 = vunpack.c.l.b16 %v513
      %v1554 = vunpack.c.h.b16 %v513
      %v1555 = vunpack.c.l.b16 %v514
      %v1556 = vunpack.c.h.b16 %v514
      %v1557 = vunpack.c.l.b16 %v515
      %v1558 = vunpack.c.h.b16 %v515
      %v1559 = vunpack.c.l.b16 %v516
      %v1560 = vunpack.c.h.b16 %v516
      %v1561 = vunpack.c.l.b16 %v517
      %v1562 = vunpack.c.h.b16 %v517
      %v1563 = vunpack.c.l.b16 %v518
      %v1564 = vunpack.c.h.b16 %v518
      %v1565 = vunpack.c.l.b16 %v519
      %v1566 = vunpack.c.h.b16 %v519
      %v1567 = vunpack.c.l.b16 %v520
      %v1568 = vunpack.c.h.b16 %v520
      %v1569 = vunpack.c.l.b16 %v521
      %v1570 = vunpack.c.h.b16 %v521
      %v1571 = vunpack.c.l.b16 %v522
      %v1572 = vunpack.c.h.b16 %v522
      %v1573 = vunpack.c.l.b16 %v523
      %v1574 = vunpack.c.h.b16 %v523
      %v1575 = vunpack.c.l.b16 %v524
      %v1576 = vunpack.c.h.b16 %v524
      %v1577 = vunpack.c.l.b16 %v525
      %v1578 = vunpack.c.h.b16 %v525
      %v1579 = vunpack.c.l.b16 %v526
      %v1580 = vunpack.c.h.b16 %v526
      %v1581 = vunpack.c.l.b16 %v527
      %v1582 = vunpack.c.h.b16 %v527
      %v1583 = vunpack.c.l.b16 %v528
      %v1584 = vunpack.c.h.b16 %v528
      %v1585 = vunpack.c.l.b16 %v529
      %v1586 = vunpack.c.h.b16 %v529
      %v1587 = vunpack.c.l.b16 %v530
      %v1588 = vunpack.c.h.b16 %v530
      %v1589 = vunpack.c.l.b16 %v531
      %v1590 = vunpack.c.h.b16 %v531
      %v1591 = vunpack.c.l.b16 %v532
      %v1592 = vunpack.c.h.b16 %v532
      %v1593 = vunpack.c.l.b16 %v533
      %v1594 = vunpack.c.h.b16 %v533
      %v1595 = vunpack.c.l.b16 %v534
      %v1596 = vunpack.c.h.b16 %v534
      %v1597 = vunpack.c.l.b16 %v535
      %v1598 = vunpack.c.h.b16 %v535
      %v1599 = vunpack.c.l.b16 %v536
      %v1600 = vunpack.c.h.b16 %v536
      %v1601 = vunpack.c.l.b16 %v537
      %v1602 = vunpack.c.h.b16 %v537
      %v1603 = vunpack.c.l.b16 %v538
      %v1604 = vunpack.c.h.b16 %v538
      %v1605 = vunpack.c.l.b16 %v539
      %v1606 = vunpack.c.h.b16 %v539
      %v1607 = vunpack.c.l.b16 %v540
      %v1608 = vunpack.c.h.b16 %v540
      %v1609 = vunpack.c.l.b16 %v541
      %v1610 = vunpack.c.h.b16 %v541
      %v1611 = vunpack.c.l.b16 %v542
      %v1612 = vunpack.c.h.b16 %v542
      %v1613 = vunpack.c.l.b16 %v543
      %v1614 = vunpack.c.h.b16 %v543
      %v1615 = vunpack.c.l.b16 %v544
      %v1616 = vunpack.c.h.b16 %v544
      %v1617 = vunpack.c.l.b16 %v545
      %v1618 = vunpack.c.h.b16 %v545
      %v1619 = vunpack.c.l.b16 %v546
      %v1620 = vunpack.c.h.b16 %v546
      %v1621 = vunpack.c.l.b16 %v547
      %v1622 = vunpack.c.h.b16 %v547
      %v1623 = vunpack.c.l.b16 %v548
      %v1624 = vunpack.c.h.b16 %v548
      %v1625 = vunpack.c.l.b16 %v549
      %v1626 = vunpack.c.h.b16 %v549
      %v1627 = vunpack.c.l.b16 %v550
      %v1628 = vunpack.c.h.b16 %v550
      %v1629 = vunpack.c.l.b16 %v551
      %v1630 = vunpack.c.h.b16 %v551
      %v1631 = vunpack.c.l.b16 %v552
      %v1632 = vunpack.c.h.b16 %v552
      %v1633 = vunpack.c.l.b16 %v553
      %v1634 = vunpack.c.h.b16 %v553
      %v1635 = vunpack.c.l.b16 %v554
      %v1636 = vunpack.c.h.b16 %v554
      %v1637 = vunpack.c.l.b16 %v555
      %v1638 = vunpack.c.h.b16 %v555
      %v1639 = vunpack.c.l.b16 %v556
      %v1640 = vunpack.c.h.b16 %v556
      %v1641 = vunpack.c.l.b16 %v557
      %v1642 = vunpack.c.h.b16 %v557
      %v1643 = vunpack.c.l.b16 %v558
      %v1644 = vunpack.c.h.b16 %v558
      %v1645 = vunpack.c.l.b16 %v559
      %v1646 = vunpack.c.h.b16 %v559
      %v1647 = vunpack.c.l.b16 %v560
      %v1648 = vunpack.c.h.b16 %v560
      %v1649 = vunpack.c.l.b16 %v561
      %v1650 = vunpack.c.h.b16 %v561
      %v1651 = vunpack.c.l.b16 %v562
      %v1652 = vunpack.c.h.b16 %v562
      %v1653 = vunpack.c.l.b16 %v563
      %v1654 = vunpack.c.h.b16 %v563
      %v1655 = vunpack.c.l.b16 %v564
      %v1656 = vunpack.c.h.b16 %v564
      %v1657 = vunpack.c.l.b16 %v565
      %v1658 = vunpack.c.h.b16 %v565
      %v1659 = vunpack.c.l.b16 %v566
      %v1660 = vunpack.c.h.b16 %v566
      %v1661 = vunpack.c.l.b16 %v567
      %v1662 = vunpack.c.h.b16 %v567
      %v1663 = vunpack.c.l.b16 %v568
      %v1664 = vunpack.c.h.b16 %v568
      %v1665 = vunpack.c.l.b16 %v569
      %v1666 = vunpack.c.h.b16 %v569
      %v1667 = vunpack.c.l.b16 %v570
      %v1668 = vunpack.c.h.b16 %v570
      %v1669 = vunpack.c.l.b16 %v571
      %v1670 = vunpack.c.h.b16 %v571
      %v1671 = vunpack.c.l.b16 %v572
      %v1672 = vunpack.c.h.b16 %v572
      %v1673 = vunpack.c.l.b16 %v573
      %v1674 = vunpack.c.h.b16 %v573
      %v1675 = vunpack.c.l.b16 %v574
      %v1676 = vunpack.c.h.b16 %v574
      %v1677 = vunpack.c.l.b16 %v575
      %v1678 = vunpack.c.h.b16 %v575
      %v1679 = vunpack.c.l.b16 %v576
      %v1680 = vunpack.c.h.b16 %v576
      %v1681 = vunpack.c.l.b16 %v577
      %v1682 = vunpack.c.h.b16 %v577
      %v1683 = vunpack.c.l.b16 %v578
      %v1684 = vunpack.c.h.b16 %v578
      %v1685 = vunpack.c.l.b16 %v579
      %v1686 = vunpack.c.h.b16 %v579
      %v1687 = vunpack.c.l.b16 %v580
      %v1688 = vunpack.c.h.b16 %v580
      %v1689 = vunpack.c.l.b16 %v581
      %v1690 = vunpack.c.h.b16 %v581
      %v1691 = vunpack.c.l.b16 %v582
      %v1692 = vunpack.c.h.b16 %v582
      %v1693 = vunpack.c.l.b16 %v583
      %v1694 = vunpack.c.h.b16 %v583
      %v1695 = vunpack.c.l.b16 %v584
      %v1696 = vunpack.c.h.b16 %v584
      %v1697 = vunpack.c.l.b16 %v585
      %v1698 = vunpack.c.h.b16 %v585
      %v1699 = vunpack.c.l.b16 %v586
      %v1700 = vunpack.c.h.b16 %v586
      %v1701 = vunpack.c.l.b16 %v587
      %v1702 = vunpack.c.h.b16 %v587
      %v1703 = vunpack.c.l.b16 %v588
      %v1704 = vunpack.c.h.b16 %v588
      %v1705 = vunpack.c.l.b16 %v589
      %v1706 = vunpack.c.h.b16 %v589
      %v1707 = vunpack.c.l.b16 %v590
      %v1708 = vunpack.c.h.b16 %v590
      %v1709 = vunpack.c.l.b16 %v591
      %v1710 = vunpack.c.h.b16 %v591
      %v1711 = vunpack.c.l.b16 %v592
      %v1712 = vunpack.c.h.b16 %v592
      %v1713 = vunpack.c.l.b16 %v593
      %v1714 = vunpack.c.h.b16 %v593
      %v1715 = vunpack.c.l.b16 %v594
      %v1716 = vunpack.c.h.b16 %v594
      %v1717 = vunpack.c.l.b16 %v595
      %v1718 = vunpack.c.h.b16 %v595
      %v1719 = vunpack.c.l.b16 %v596
      %v1720 = vunpack.c.h.b16 %v596
      %v1721 = vunpack.c.l.b16 %v597
      %v1722 = vunpack.c.h.b16 %v597
      %v1723 = vunpack.c.l.b16 %v598
      %v1724 = vunpack.c.h.b16 %v598
      %v1725 = vunpack.c.l.b16 %v599
      %v1726 = vunpack.c.h.b16 %v599
      %v1727 = vunpack.c.l.b16 %v600
      %v1728 = vunpack.c.h.b16 %v600
      %v1729 = vunpack.c.l.b16 %v601
      %v1730 = vunpack.c.h.b16 %v601
      %v1731 = vunpack.c.l.b16 %v602
      %v1732 = vunpack.c.h.b16 %v602
      %v1733 = vunpack.c.l.b16 %v603
      %v1734 = vunpack.c.h.b16 %v603
      %v1735 = vunpack.c.l.b16 %v604
      %v1736 = vunpack.c.h.b16 %v604
      %v1737 = vunpack.c.l.b16 %v605
      %v1738 = vunpack.c.h.b16 %v605
      %v1739 = vunpack.c.l.b16 %v606
      %v1740 = vunpack.c.h.b16 %v606
      %v1741 = vunpack.c.l.b16 %v607
      %v1742 = vunpack.c.h.b16 %v607
      %v1743 = vunpack.c.l.b16 %v608
      %v1744 = vunpack.c.h.b16 %v608
      %v1745 = vunpack.c.l.b16 %v609
      %v1746 = vunpack.c.h.b16 %v609
      %v1747 = vunpack.c.l.b16 %v610
      %v1748 = vunpack.c.h.b16 %v610
      %v1749 = vunpack.c.l.b16 %v611
      %v1750 = vunpack.c.h.b16 %v611
      %v1751 = vunpack.c.l.b16 %v612
      %v1752 = vunpack.c.h.b16 %v612
      %v1753 = vunpack.c.l.b16 %v613
      %v1754 = vunpack.c.h.b16 %v613
      %v1755 = vunpack.c.l.b16 %v614
      %v1756 = vunpack.c.h.b16 %v614
      %v1757 = vunpack.c.l.b16 %v615
      %v1758 = vunpack.c.h.b16 %v615
      %v1759 = vunpack.c.l.b16 %v616
      %v1760 = vunpack.c.h.b16 %v616
      %v1761 = vunpack.c.l.b16 %v617
      %v1762 = vunpack.c.h.b16 %v617
      %v1763 = vunpack.c.l.b16 %v618
      %v1764 = vunpack.c.h.b16 %v618
      %v1765 = vunpack.c.l.b16 %v619
      %v1766 = vunpack.c.h.b16 %v619
      %v1767 = vunpack.c.l.b16 %v620
      %v1768 = vunpack.c.h.b16 %v620
      %v1769 = vunpack.c.l.b16 %v621
      %v1770 = vunpack.c.h.b16 %v621
      %v1771 = vunpack.c.l.b16 %v622
      %v1772 = vunpack.c.h.b16 %v622
      %v1773 = vunpack.c.l.b16 %v623
      %v1774 = vunpack.c.h.b16 %v623
      %v1775 = vunpack.c.l.b16 %v624
      %v1776 = vunpack.c.h.b16 %v624
      %v1777 = vunpack.c.l.b16 %v625
      %v1778 = vunpack.c.h.b16 %v625
      %v1779 = vunpack.c.l.b16 %v626
      %v1780 = vunpack.c.h.b16 %v626
      %v1781 = vunpack.c.l.b16 %v627
      %v1782 = vunpack.c.h.b16 %v627
      %v1783 = vunpack.c.l.b16 %v628
      %v1784 = vunpack.c.h.b16 %v628
      %v1785 = vunpack.c.l.b16 %v629
      %v1786 = vunpack.c.h.b16 %v629
      %v1787 = vunpack.c.l.b16 %v630
      %v1788 = vunpack.c.h.b16 %v630
      %v1789 = vunpack.c.l.b16 %v631
      %v1790 = vunpack.c.h.b16 %v631
      %v1791 = vunpack.c.l.b16 %v632
      %v1792 = vunpack.c.h.b16 %v632
      %v1793 = vunpack.c.l.b16 %v633
      %v1794 = vunpack.c.h.b16 %v633
      %v1795 = vunpack.c.l.b16 %v634
      %v1796 = vunpack.c.h.b16 %v634
      %v1797 = vunpack.c.l.b16 %v635
      %v1798 = vunpack.c.h.b16 %v635
      %v1799 = vunpack.c.l.b16 %v636
      %v1800 = vunpack.c.h.b16 %v636
      %v1801 = vunpack.c.l.b16 %v637
      %v1802 = vunpack.c.h.b16 %v637
      %v1803 = vunpack.c.l.b16 %v638
      %v1804 = vunpack.c.h.b16 %v638
      %v1805 = vunpack.c.l.b16 %v639
      %v1806 = vunpack.c.h.b16 %v639
      %v1807 = vunpack.c.l.b16 %v640
      %v1808 = vunpack.c.h.b16 %v640
      %v1809 = vunpack.c.l.b16 %v641
      %v1810 = vunpack.c.h.b16 %v641
      %v1811 = vunpack.c.l.b16 %v642
      %v1812 = vunpack.c.h.b16 %v642
      %v1813 = vunpack.c.l.b16 %v643
      %v1814 = vunpack.c.h.b16 %v643
      %v1815 = vunpack.c.l.b16 %v644
      %v1816 = vunpack.c.h.b16 %v644
      %v1817 = vunpack.c.l.b16 %v645
      %v1818 = vunpack.c.h.b16 %v645
      %v1819 = vunpack.c.l.b16 %v646
      %v1820 = vunpack.c.h.b16 %v646
      %v1821 = vunpack.c.l.b16 %v647
      %v1822 = vunpack.c.h.b16 %v647
      %v1823 = vunpack.c.l.b16 %v648
      %v1824 = vunpack.c.h.b16 %v648
      %v1825 = vunpack.c.l.b16 %v649
      %v1826 = vunpack.c.h.b16 %v649
      %v1827 = vunpack.c.l.b16 %v650
      %v1828 = vunpack.c.h.b16 %v650
      %v1829 = vunpack.c.l.b16 %v651
      %v1830 = vunpack.c.h.b16 %v651
      %v1831 = vunpack.c.l.b16 %v652
      %v1832 = vunpack.c.h.b16 %v652
      %v1833 = vunpack.c.l.b16 %v653
      %v1834 = vunpack.c.h.b16 %v653
      %v1835 = vunpack.c.l.b16 %v654
      %v1836 = vunpack.c.h.b16 %v654
      %v1837 = vunpack.c.l.b16 %v655
      %v1838 = vunpack.c.h.b16 %v655
      %v1839 = vunpack.c.l.b16 %v656
      %v1840 = vunpack.c.h.b16 %v656
      %v1841 = vunpack.c.l.b16 %v657
      %v1842 = vunpack.c.h.b16 %v657
      %v1843 = vunpack.c.l.b16 %v658
      %v1844 = vunpack.c.h.b16 %v658
      %v1845 = vunpack.c.l.b16 %v659
      %v1846 = vunpack.c.h.b16 %v659
      %v1847 = vunpack.c.l.b16 %v660
      %v1848 = vunpack.c.h.b16 %v660
      %v1849 = vunpack.c.l.b16 %v661
      %v1850 = vunpack.c.h.b16 %v661
      %v1851 = vunpack.c.l.b16 %v662
      %v1852 = vunpack.c.h.b16 %v662
      %v1853 = vunpack.c.l.b16 %v663
      %v1854 = vunpack.c.h.b16 %v663
      %v1855 = vunpack.c.l.b16 %v664
      %v1856 = vunpack.c.h.b16 %v664
      %v1857 = vunpack.c.l.b16 %v665
      %v1858 = vunpack.c.h.b16 %v665
      %v1859 = vunpack.c.l.b16 %v666
      %v1860 = vunpack.c.h.b16 %v666
      %v1861 = vunpack.c.l.b16 %v667
      %v1862 = vunpack.c.h.b16 %v667
      %v1863 = vunpack.c.l.b16 %v668
      %v1864 = vunpack.c.h.b16 %v668
      %v1865 = vunpack.c.l.b16 %v669
      %v1866 = vunpack.c.h.b16 %v669
      %v1867 = vunpack.c.l.b16 %v670
      %v1868 = vunpack.c.h.b16 %v670
      %v1869 = vunpack.c.l.b16 %v671
      %v1870 = vunpack.c.h.b16 %v671
      %v1871 = vunpack.c.l.b16 %v672
      %v1872 = vunpack.c.h.b16 %v672
      %v1873 = vunpack.c.l.b16 %v673
      %v1874 = vunpack.c.h.b16 %v673
      %v1875 = vunpack.c.l.b16 %v674
      %v1876 = vunpack.c.h.b16 %v674
      %v1877 = vunpack.c.l.b16 %v675
      %v1878 = vunpack.c.h.b16 %v675
      %v1879 = vunpack.c.l.b16 %v676
      %v1880 = vunpack.c.h.b16 %v676
      %v1881 = vunpack.c.l.b16 %v677
      %v1882 = vunpack.c.h.b16 %v677
      %v1883 = vunpack.c.l.b16 %v678
      %v1884 = vunpack.c.h.b16 %v678
      %v1885 = vunpack.c.l.b16 %v679
      %v1886 = vunpack.c.h.b16 %v679
      %v1887 = vunpack.c.l.b16 %v680
      %v1888 = vunpack.c.h.b16 %v680
      %v1889 = vunpack.c.l.b16 %v681
      %v1890 = vunpack.c.h.b16 %v681
      %v1891 = vunpack.c.l.b16 %v682
      %v1892 = vunpack.c.h.b16 %v682
      %v1893 = vunpack.c.l.b16 %v683
      %v1894 = vunpack.c.h.b16 %v683
      %v1895 = vunpack.c.l.b16 %v684
      %v1896 = vunpack.c.h.b16 %v684
      %v1897 = vunpack.c.l.b16 %v685
      %v1898 = vunpack.c.h.b16 %v685
      %v1899 = vunpack.c.l.b16 %v686
      %v1900 = vunpack.c.h.b16 %v686
      %v1901 = vunpack.c.l.b16 %v687
      %v1902 = vunpack.c.h.b16 %v687
      %v1903 = vunpack.c.l.b16 %v688
      %v1904 = vunpack.c.h.b16 %v688
      %v1905 = vunpack.c.l.b16 %v689
      %v1906 = vunpack.c.h.b16 %v689
      %v1907 = vunpack.c.l.b16 %v690
      %v1908 = vunpack.c.h.b16 %v690
      %v1909 = vunpack.c.l.b16 %v691
      %v1910 = vunpack.c.h.b16 %v691
      %v1911 = vunpack.c.l.b16 %v692
      %v1912 = vunpack.c.h.b16 %v692
      %v1913 = vunpack.c.l.b16 %v693
      %v1914 = vunpack.c.h.b16 %v693
      %v1915 = vunpack.c.l.b16 %v694
      %v1916 = vunpack.c.h.b16 %v694
      %v1917 = vunpack.c.l.b16 %v695
      %v1918 = vunpack.c.h.b16 %v695
      %v1919 = vunpack.c.l.b16 %v696
      %v1920 = vunpack.c.h.b16 %v696
      %v1921 = vunpack.c.l.b16 %v697
      %v1922 = vunpack.c.h.b16 %v697
      %v1923 = vunpack.c.l.b16 %v698
      %v1924 = vunpack.c.h.b16 %v698
      %v1925 = vunpack.c.l.b16 %v699
      %v1926 = vunpack.c.h.b16 %v699
      %v1927 = vunpack.c.l.b16 %v700
      %v1928 = vunpack.c.h.b16 %v700
      %v1929 = vunpack.c.l.b16 %v701
      %v1930 = vunpack.c.h.b16 %v701
      %v1931 = vunpack.c.l.b16 %v702
      %v1932 = vunpack.c.h.b16 %v702
      %v1933 = vunpack.c.l.b16 %v703
      %v1934 = vunpack.c.h.b16 %v703
      %v1935 = vpack.c.b16 %v1151, %v1135
      %v1936 = vpack.c.b16 %v1152, %v1136
      %v1937 = vpack.c.b16 %v1153, %v1137
      %v1938 = vpack.c.b16 %v1154, %v1138
      %v1939 = vpack.c.b16 %v1155, %v1139
      %v1940 = vpack.c.b16 %v1156, %v1140
      %v1941 = vpack.c.b16 %v1157, %v1141
      %v1942 = vpack.c.b16 %v1158, %v1142
      %v1943 = vpack.c.b16 %v1159, %v1143
      %v1944 = vpack.c.b16 %v1160, %v1144
      %v1945 = vpack.c.b16 %v1161, %v1145
      %v1946 = vpack.c.b16 %v1162, %v1146
      %v1947 = vpack.c.b16 %v1163, %v1147
      %v1948 = vpack.c.b16 %v1164, %v1148
      %v1949 = vpack.c.b16 %v1165, %v1149
      %v1950 = vpack.c.b16 %v1166, %v1150
      %v1951 = vpack.c.b16 %v1183, %v1167
      %v1952 = vpack.c.b16 %v1184, %v1168
      %v1953 = vpack.c.b16 %v1185, %v1169
      %v1954 = vpack.c.b16 %v1186, %v1170
      %v1955 = vpack.c.b16 %v1187, %v1171
      %v1956 = vpack.c.b16 %v1188, %v1172
      %v1957 = vpack.c.b16 %v1189, %v1173
      %v1958 = vpack.c.b16 %v1190, %v1174
      %v1959 = vpack.c.b16 %v1191, %v1175
      %v1960 = vpack.c.b16 %v1192, %v1176
      %v1961 = vpack.c.b16 %v1193, %v1177
      %v1962 = vpack.c.b16 %v1194, %v1178
      %v1963 = vpack.c.b16 %v1195, %v1179
      %v1964 = vpack.c.b16 %v1196, %v1180
      %v1965 = vpack.c.b16 %v1197, %v1181
      %v1966 = vpack.c.b16 %v1198, %v1182
      %v1967 = vpack.c.b16 %v1215, %v1199
      %v1968 = vpack.c.b16 %v1216, %v1200
      %v1969 = vpack.c.b16 %v1217, %v1201
      %v1970 = vpack.c.b16 %v1218, %v1202
      %v1971 = vpack.c.b16 %v1219, %v1203
      %v1972 = vpack.c.b16 %v1220, %v1204
      %v1973 = vpack.c.b16 %v1221, %v1205
      %v1974 = vpack.c.b16 %v1222, %v1206
      %v1975 = vpack.c.b16 %v1223, %v1207
      %v1976 = vpack.c.b16 %v1224, %v1208
      %v1977 = vpack.c.b16 %v1225, %v1209
      %v1978 = vpack.c.b16 %v1226, %v1210
      %v1979 = vpack.c.b16 %v1227, %v1211
      %v1980 = vpack.c.b16 %v1228, %v1212
      %v1981 = vpack.c.b16 %v1229, %v1213
      %v1982 = vpack.c.b16 %v1230, %v1214
      %v1983 = vpack.c.b16 %v1247, %v1231
      %v1984 = vpack.c.b16 %v1248, %v1232
      %v1985 = vpack.c.b16 %v1249, %v1233
      %v1986 = vpack.c.b16 %v1250, %v1234
      %v1987 = vpack.c.b16 %v1251, %v1235
      %v1988 = vpack.c.b16 %v1252, %v1236
      %v1989 = vpack.c.b16 %v1253, %v1237
      %v1990 = vpack.c.b16 %v1254, %v1238
      %v1991 = vpack.c.b16 %v1255, %v1239
      %v1992 = vpack.c.b16 %v1256, %v1240
      %v1993 = vpack.c.b16 %v1257, %v1241
      %v1994 = vpack.c.b16 %v1258, %v1242
      %v1995 = vpack.c.b16 %v1259, %v1243
      %v1996 = vpack.c.b16 %v1260, %v1244
      %v1997 = vpack.c.b16 %v1261, %v1245
      %v1998 = vpack.c.b16 %v1262, %v1246
      %v1999 = vpack.c.b16 %v1279, %v1263
      %v2000 = vpack.c.b16 %v1280, %v1264
      %v2001 = vpack.c.b16 %v1281, %v1265
      %v2002 = vpack.c.b16 %v1282, %v1266
      %v2003 = vpack.c.b16 %v1283, %v1267
      %v2004 = vpack.c.b16 %v1284, %v1268
      %v2005 = vpack.c.b16 %v1285, %v1269
      %v2006 = vpack.c.b16 %v1286, %v1270
      %v2007 = vpack.c.b16 %v1287, %v1271
      %v2008 = vpack.c.b16 %v1288, %v1272
      %v2009 = vpack.c.b16 %v1289, %v1273
      %v2010 = vpack.c.b16 %v1290, %v1274
      %v2011 = vpack.c.b16 %v1291, %v1275
      %v2012 = vpack.c.b16 %v1292, %v1276
      %v2013 = vpack.c.b16 %v1293, %v1277
      %v2014 = vpack.c.b16 %v1294, %v1278
      %v2015 = vpack.c.b16 %v1311, %v1295
      %v2016 = vpack.c.b16 %v1312, %v1296
      %v2017 = vpack.c.b16 %v1313, %v1297
      %v2018 = vpack.c.b16 %v1314, %v1298
      %v2019 = vpack.c.b16 %v1315, %v1299
      %v2020 = vpack.c.b16 %v1316, %v1300
      %v2021 = vpack.c.b16 %v1317, %v1301
      %v2022 = vpack.c.b16 %v1318, %v1302
      %v2023 = vpack.c.b16 %v1319, %v1303
      %v2024 = vpack.c.b16 %v1320, %v1304
      %v2025 = vpack.c.b16 %v1321, %v1305
      %v2026 = vpack.c.b16 %v1322, %v1306
      %v2027 = vpack.c.b16 %v1323, %v1307
      %v2028 = vpack.c.b16 %v1324, %v1308
      %v2029 = vpack.c.b16 %v1325, %v1309
      %v2030 = vpack.c.b16 %v1326, %v1310
      %v2031 = vpack.c.b16 %v1343, %v1327
      %v2032 = vpack.c.b16 %v1344, %v1328
      %v2033 = vpack.c.b16 %v1345, %v1329
      %v2034 = vpack.c.b16 %v1346, %v1330
      %v2035 = vpack.c.b16 %v1347, %v1331
      %v2036 = vpack.c.b16 %v1348, %v1332
      %v2037 = vpack.c.b16 %v1349, %v1333
      %v2038 = vpack.c.b16 %v1350, %v1334
      %v2039 = vpack.c.b16 %v1351, %v1335
      %v2040 = vpack.c.b16 %v1352, %v1336
      %v2041 = vpack.c.b16 %v1353, %v1337
      %v2042 = vpack.c.b16 %v1354, %v1338
      %v2043 = vpack.c.b16 %v1355, %v1339
      %v2044 = vpack.c.b16 %v1356, %v1340
      %v2045 = vpack.c.b16 %v1357, %v1341
      %v2046 = vpack.c.b16 %v1358, %v1342
      %v2047 = vpack.c.b16 %v1375, %v1359
      %v2048 = vpack.c.b16 %v1376, %v1360
      %v2049 = vpack.c.b16 %v1377, %v1361
      %v2050 = vpack.c.b16 %v1378, %v1362
      %v2051 = vpack.c.b16 %v1379, %v1363
      %v2052 = vpack.c.b16 %v1380, %v1364
      %v2053 = vpack.c.b16 %v1381, %v1365
      %v2054 = vpack.c.b16 %v1382, %v1366
      %v2055 = vpack.c.b16 %v1383, %v1367
      %v2056 = vpack.c.b16 %v1384, %v1368
      %v2057 = vpack.c.b16 %v1385, %v1369
      %v2058 = vpack.c.b16 %v1386, %v1370
      %v2059 = vpack.c.b16 %v1387, %v1371
      %v2060 = vpack.c.b16 %v1388, %v1372
      %v2061 = vpack.c.b16 %v1389, %v1373
      %v2062 = vpack.c.b16 %v1390, %v1374
      %v2063 = vpack.c.b16 %v1407, %v1391
      %v2064 = vpack.c.b16 %v1408, %v1392
      %v2065 = vpack.c.b16 %v1409, %v1393
      %v2066 = vpack.c.b16 %v1410, %v1394
      %v2067 = vpack.c.b16 %v1411, %v1395
      %v2068 = vpack.c.b16 %v1412, %v1396
      %v2069 = vpack.c.b16 %v1413, %v1397
      %v2070 = vpack.c.b16 %v1414, %v1398
      %v2071 = vpack.c.b16 %v1415, %v1399
      %v2072 = vpack.c.b16 %v1416, %v1400
      %v2073 = vpack.c.b16 %v1417, %v1401
      %v2074 = vpack.c.b16 %v1418, %v1402
      %v2075 = vpack.c.b16 %v1419, %v1403
      %v2076 = vpack.c.b16 %v1420, %v1404
      %v2077 = vpack.c.b16 %v1421, %v1405
      %v2078 = vpack.c.b16 %v1422, %v1406
      %v2079 = vpack.c.b16 %v1439, %v1423
      %v2080 = vpack.c.b16 %v1440, %v1424
      %v2081 = vpack.c.b16 %v1441, %v1425
      %v2082 = vpack.c.b16 %v1442, %v1426
      %v2083 = vpack.c.b16 %v1443, %v1427
      %v2084 = vpack.c.b16 %v1444, %v1428
      %v2085 = vpack.c.b16 %v1445, %v1429
      %v2086 = vpack.c.b16 %v1446, %v1430
      %v2087 = vpack.c.b16 %v1447, %v1431
      %v2088 = vpack.c.b16 %v1448, %v1432
      %v2089 = vpack.c.b16 %v1449, %v1433
      %v2090 = vpack.c.b16 %v1450, %v1434
      %v2091 = vpack.c.b16 %v1451, %v1435
      %v2092 = vpack.c.b16 %v1452, %v1436
      %v2093 = vpack.c.b16 %v1453, %v1437
      %v2094 = vpack.c.b16 %v1454, %v1438
      %v2095 = vpack.c.b16 %v1471, %v1455
      %v2096 = vpack.c.b16 %v1472, %v1456
      %v2097 = vpack.c.b16 %v1473, %v1457
      %v2098 = vpack.c.b16 %v1474, %v1458
      %v2099 = vpack.c.b16 %v1475, %v1459
      %v2100 = vpack.c.b16 %v1476, %v1460
      %v2101 = vpack.c.b16 %v1477, %v1461
      %v2102 = vpack.c.b16 %v1478, %v1462
      %v2103 = vpack.c.b16 %v1479, %v1463
      %v2104 = vpack.c.b16 %v1480, %v1464
      %v2105 = vpack.c.b16 %v1481, %v1465
      %v2106 = vpack.c.b16 %v1482, %v1466
      %v2107 = vpack.c.b16 %v1483, %v1467
      %v2108 = vpack.c.b16 %v1484, %v1468
      %v2109 = vpack.c.b16 %v1485, %v1469
      %v2110 = vpack.c.b16 %v1486, %v1470
      %v2111 = vpack.c.b16 %v1503, %v1487
      %v2112 = vpack.c.b16 %v1504, %v1488
      %v2113 = vpack.c.b16 %v1505, %v1489
      %v2114 = vpack.c.b16 %v1506, %v1490
      %v2115 = vpack.c.b16 %v1507, %v1491
      %v2116 = vpack.c.b16 %v1508, %v1492
      %v2117 = vpack.c.b16 %v1509, %v1493
      %v2118 = vpack.c.b16 %v1510, %v1494
      %v2119 = vpack.c.b16 %v1511, %v1495
      %v2120 = vpack.c.b16 %v1512, %v1496
      %v2121 = vpack.c.b16 %v1513, %v1497
      %v2122 = vpack.c.b16 %v1514, %v1498
      %v2123 = vpack.c.b16 %v1515, %v1499
      %v2124 = vpack.c.b16 %v1516, %v1500
      %v2125 = vpack.c.b16 %v1517, %v1501
      %v2126 = vpack.c.b16 %v1518, %v1502
      %v2127 = vpack.c.b16 %v1535, %v1519
      %v2128 = vpack.c.b16 %v1536, %v1520
      %v2129 = vpack.c.b16 %v1537, %v1521
      %v2130 = vpack.c.b16 %v1538, %v1522
      %v2131 = vpack.c.b16 %v1539, %v1523
      %v2132 = vpack.c.b16 %v1540, %v1524
      %v2133 = vpack.c.b16 %v1541, %v1525
      %v2134 = vpack.c.b16 %v1542, %v1526
      %v2135 = vpack.c.b16 %v1543, %v1527
      %v2136 = vpack.c.b16 %v1544, %v1528
      %v2137 = vpack.c.b16 %v1545, %v1529
      %v2138 = vpack.c.b16 %v1546, %v1530
      %v2139 = vpack.c.b16 %v1547, %v1531
      %v2140 = vpack.c.b16 %v1548, %v1532
      %v2141 = vpack.c.b16 %v1549, %v1533
      %v2142 = vpack.c.b16 %v1550, %v1534
      %v2143 = vpack.c.b16 %v1567, %v1551
      %v2144 = vpack.c.b16 %v1568, %v1552
      %v2145 = vpack.c.b16 %v1569, %v1553
      %v2146 = vpack.c.b16 %v1570, %v1554
      %v2147 = vpack.c.b16 %v1571, %v1555
      %v2148 = vpack.c.b16 %v1572, %v1556
      %v2149 = vpack.c.b16 %v1573, %v1557
      %v2150 = vpack.c.b16 %v1574, %v1558
      %v2151 = vpack.c.b16 %v1575, %v1559
      %v2152 = vpack.c.b16 %v1576, %v1560
      %v2153 = vpack.c.b16 %v1577, %v1561
      %v2154 = vpack.c.b16 %v1578, %v1562
      %v2155 = vpack.c.b16 %v1579, %v1563
      %v2156 = vpack.c.b16 %v1580, %v1564
      %v2157 = vpack.c.b16 %v1581, %v1565
      %v2158 = vpack.c.b16 %v1582, %v1566
      %v2159 = vpack.c.b16 %v1599, %v1583
      %v2160 = vpack.c.b16 %v1600, %v1584
      %v2161 = vpack.c.b16 %v1601, %v1585
      %v2162 = vpack.c.b16 %v1602, %v1586
      %v2163 = vpack.c.b16 %v1603, %v1587
      %v2164 = vpack.c.b16 %v1604, %v1588
      %v2165 = vpack.c.b16 %v1605, %v1589
      %v2166 = vpack.c.b16 %v1606, %v1590
      %v2167 = vpack.c.b16 %v1607, %v1591
      %v2168 = vpack.c.b16 %v1608, %v1592
      %v2169 = vpack.c.b16 %v1609, %v1593
      %v2170 = vpack.c.b16 %v1610, %v1594
      %v2171 = vpack.c.b16 %v1611, %v1595
      %v2172 = vpack.c.b16 %v1612, %v1596
      %v2173 = vpack.c.b16 %v1613, %v1597
      %v2174 = vpack.c.b16 %v1614, %v1598
      %v2175 = vpack.c.b16 %v1631, %v1615
      %v2176 = vpack.c.b16 %v1632, %v1616
      %v2177 = vpack.c.b16 %v1633, %v1617
      %v2178 = vpack.c.b16 %v1634, %v1618
      %v2179 = vpack.c.b16 %v1635, %v1619
      %v2180 = vpack.c.b16 %v1636, %v1620
      %v2181 = vpack.c.b16 %v1637, %v1621
      %v2182 = vpack.c.b16 %v1638, %v1622
      %v2183 = vpack.c.b16 %v1639, %v1623
      %v2184 = vpack.c.b16 %v1640, %v1624
      %v2185 = vpack.c.b16 %v1641, %v1625
      %v2186 = vpack.c.b16 %v1642, %v1626
      %v2187 = vpack.c.b16 %v1643, %v1627
      %v2188 = vpack.c.b16 %v1644, %v1628
      %v2189 = vpack.c.b16 %v1645, %v1629
      %v2190 = vpack.c.b16 %v1646, %v1630
      %v2191 = vpack.c.b16 %v1663, %v1647
      %v2192 = vpack.c.b16 %v1664, %v1648
      %v2193 = vpack.c.b16 %v1665, %v1649
      %v2194 = vpack.c.b16 %v1666, %v1650
      %v2195 = vpack.c.b16 %v1667, %v1651
      %v2196 = vpack.c.b16 %v1668, %v1652
      %v2197 = vpack.c.b16 %v1669, %v1653
      %v2198 = vpack.c.b16 %v1670, %v1654
      %v2199 = vpack.c.b16 %v1671, %v1655
      %v2200 = vpack.c.b16 %v1672, %v1656
      %v2201 = vpack.c.b16 %v1673, %v1657
      %v2202 = vpack.c.b16 %v1674, %v1658
      %v2203 = vpack.c.b16 %v1675, %v1659
      %v2204 = vpack.c.b16 %v1676, %v1660
      %v2205 = vpack.c.b16 %v1677, %v1661
      %v2206 = vpack.c.b16 %v1678, %v1662
      %v2207 = vpack.c.b16 %v1695, %v1679
      %v2208 = vpack.c.b16 %v1696, %v1680
      %v2209 = vpack.c.b16 %v1697, %v1681
      %v2210 = vpack.c.b16 %v1698, %v1682
      %v2211 = vpack.c.b16 %v1699, %v1683
      %v2212 = vpack.c.b16 %v1700, %v1684
      %v2213 = vpack.c.b16 %v1701, %v1685
      %v2214 = vpack.c.b16 %v1702, %v1686
      %v2215 = vpack.c.b16 %v1703, %v1687
      %v2216 = vpack.c.b16 %v1704, %v1688
      %v2217 = vpack.c.b16 %v1705, %v1689
      %v2218 = vpack.c.b16 %v1706, %v1690
      %v2219 = vpack.c.b16 %v1707, %v1691
      %v2220 = vpack.c.b16 %v1708, %v1692
      %v2221 = vpack.c.b16 %v1709, %v1693
      %v2222 = vpack.c.b16 %v1710, %v1694
      %v2223 = vpack.c.b16 %v1727, %v1711
      %v2224 = vpack.c.b16 %v1728, %v1712
      %v2225 = vpack.c.b16 %v1729, %v1713
      %v2226 = vpack.c.b16 %v1730, %v1714
      %v2227 = vpack.c.b16 %v1731, %v1715
      %v2228 = vpack.c.b16 %v1732, %v1716
      %v2229 = vpack.c.b16 %v1733, %v1717
      %v2230 = vpack.c.b16 %v1734, %v1718
      %v2231 = vpack.c.b16 %v1735, %v1719
      %v2232 = vpack.c.b16 %v1736, %v1720
      %v2233 = vpack.c.b16 %v1737, %v1721
      %v2234 = vpack.c.b16 %v1738, %v1722
      %v2235 = vpack.c.b16 %v1739, %v1723
      %v2236 = vpack.c.b16 %v1740, %v1724
      %v2237 = vpack.c.b16 %v1741, %v1725
      %v2238 = vpack.c.b16 %v1742, %v1726
      %v2239 = vpack.c.b16 %v1759, %v1743
      %v2240 = vpack.c.b16 %v1760, %v1744
      %v2241 = vpack.c.b16 %v1761, %v1745
      %v2242 = vpack.c.b16 %v1762, %v1746
      %v2243 = vpack.c.b16 %v1763, %v1747
      %v2244 = vpack.c.b16 %v1764, %v1748
      %v2245 = vpack.c.b16 %v1765, %v1749
      %v2246 = vpack.c.b16 %v1766, %v1750
      %v2247 = vpack.c.b16 %v1767, %v1751
      %v2248 = vpack.c.b16 %v1768, %v1752
      %v2249 = vpack.c.b16 %v1769, %v1753
      %v2250 = vpack.c.b16 %v1770, %v1754
      %v2251 = vpack.c.b16 %v1771, %v1755
      %v2252 = vpack.c.b16 %v1772, %v1756
      %v2253 = vpack.c.b16 %v1773, %v1757
      %v2254 = vpack.c.b16 %v1774, %v1758
      %v2255 = vpack.c.b16 %v1791, %v1775
      %v2256 = vpack.c.b16 %v1792, %v1776
      %v2257 = vpack.c.b16 %v1793, %v1777
      %v2258 = vpack.c.b16 %v1794, %v1778
      %v2259 = vpack.c.b16 %v1795, %v1779
      %v2260 = vpack.c.b16 %v1796, %v1780
      %v2261 = vpack.c.b16 %v1797, %v1781
      %v2262 = vpack.c.b16 %v1798, %v1782
      %v2263 = vpack.c.b16 %v1799, %v1783
      %v2264 = vpack.c.b16 %v1800, %v1784
      %v2265 = vpack.c.b16 %v1801, %v1785
      %v2266 = vpack.c.b16 %v1802, %v1786
      %v2267 = vpack.c.b16 %v1803, %v1787
      %v2268 = vpack.c.b16 %v1804, %v1788
      %v2269 = vpack.c.b16 %v1805, %v1789
      %v2270 = vpack.c.b16 %v1806, %v1790
      %v2271 = vpack.c.b16 %v1823, %v1807
      %v2272 = vpack.c.b16 %v1824, %v1808
      %v2273 = vpack.c.b16 %v1825, %v1809
      %v2274 = vpack.c.b16 %v1826, %v1810
      %v2275 = vpack.c.b16 %v1827, %v1811
      %v2276 = vpack.c.b16 %v1828, %v1812
      %v2277 = vpack.c.b16 %v1829, %v1813
      %v2278 = vpack.c.b16 %v1830, %v1814
      %v2279 = vpack.c.b16 %v1831, %v1815
      %v2280 = vpack.c.b16 %v1832, %v1816
      %v2281 = vpack.c.b16 %v1833, %v1817
      %v2282 = vpack.c.b16 %v1834, %v1818
      %v2283 = vpack.c.b16 %v1835, %v1819
      %v2284 = vpack.c.b16 %v1836, %v1820
      %v2285 = vpack.c.b16 %v1837, %v1821
      %v2286 = vpack.c.b16 %v1838, %v1822
      %v2287 = vpack.c.b16 %v1855, %v1839
      %v2288 = vpack.c.b16 %v1856, %v1840
      %v2289 = vpack.c.b16 %v1857, %v1841
      %v2290 = vpack.c.b16 %v1858, %v1842
      %v2291 = vpack.c.b16 %v1859, %v1843
      %v2292 = vpack.c.b16 %v1860, %v1844
      %v2293 = vpack.c.b16 %v1861, %v1845
      %v2294 = vpack.c.b16 %v1862, %v1846
      %v2295 = vpack.c.b16 %v1863, %v1847
      %v2296 = vpack.c.b16 %v1864, %v1848
      %v2297 = vpack.c.b16 %v1865, %v1849
      %v2298 = vpack.c.b16 %v1866, %v1850
      %v2299 = vpack.c.b16 %v1867, %v1851
      %v2300 = vpack.c.b16 %v1868, %v1852
      %v2301 = vpack.c.b16 %v1869, %v1853
      %v2302 = vpack.c.b16 %v1870, %v1854
      %v2303 = vpack.c.b16 %v1887, %v1871
      %v2304 = vpack.c.b16 %v1888, %v1872
      %v2305 = vpack.c.b16 %v1889, %v1873
      %v2306 = vpack.c.b16 %v1890, %v1874
      %v2307 = vpack.c.b16 %v1891, %v1875
      %v2308 = vpack.c.b16 %v1892, %v1876
      %v2309 = vpack.c.b16 %v1893, %v1877
      %v2310 = vpack.c.b16 %v1894, %v1878
      %v2311 = vpack.c.b16 %v1895, %v1879
      %v2312 = vpack.c.b16 %v1896, %v1880
      %v2313 = vpack.c.b16 %v1897, %v1881
      %v2314 = vpack.c.b16 %v1898, %v1882
      %v2315 = vpack.c.b16 %v1899, %v1883
      %v2316 = vpack.c.b16 %v1900, %v1884
      %v2317 = vpack.c.b16 %v1901, %v1885
      %v2318 = vpack.c.b16 %v1902, %v1886
      %v2319 = vpack.c.b16 %v1919, %v1903
      %v2320 = vpack.c.b16 %v1920, %v1904
      %v2321 = vpack.c.b16 %v1921, %v1905
      %v2322 = vpack.c.b16 %v1922, %v1906
      %v2323 = vpack.c.b16 %v1923, %v1907
      %v2324 = vpack.c.b16 %v1924, %v1908
      %v2325 = vpack.c.b16 %v1925, %v1909
      %v2326 = vpack.c.b16 %v1926, %v1910
      %v2327 = vpack.c.b16 %v1927, %v1911
      %v2328 = vpack.c.b16 %v1928, %v1912
      %v2329 = vpack.c.b16 %v1929, %v1913
      %v2330 = vpack.c.b16 %v1930, %v1914
      %v2331 = vpack.c.b16 %v1931, %v1915
      %v2332 = vpack.c.b16 %v1932, %v1916
      %v2333 = vpack.c.b16 %v1933, %v1917
      %v2334 = vpack.c.b16 %v1934, %v1918
      %vm2735 = vcmask 130048
      %v2737 = vsel %vm2735, %v731, 0
      %2739 = vmatprep.subr.bf16.mxu0 %v1936
      %2740 = vmatpush1.bf16.msra.mxu0 %v1935
      %2741 = vmatprep.subr.bf16.mxu0 %v1952
      %2742 = vmatpush1.bf16.msra.mxu0 %v1951
      %2743 = vmatprep.subr.bf16.mxu0 %v1968
      %2744 = vmatpush1.bf16.msra.mxu0 %v1967
      %2745 = vmatprep.subr.bf16.mxu0 %v1984
      %2746 = vmatpush1.bf16.msra.mxu0 %v1983
      %2747 = vmatprep.subr.bf16.mxu0 %v2000
      %2748 = vmatpush1.bf16.msra.mxu0 %v1999
      %2749 = vmatprep.subr.bf16.mxu0 %v2016
      %2750 = vmatpush1.bf16.msra.mxu0 %v2015
      %2751 = vmatprep.subr.bf16.mxu0 %v2032
      %2752 = vmatpush1.bf16.msra.mxu0 %v2031
      %2753 = vmatprep.subr.bf16.mxu0 %v2048
      %2754 = vmatpush1.bf16.msra.mxu0 %v2047
      %2755 = vmatprep.subr.bf16.mxu0 %v2064
      %2756 = vmatpush1.bf16.msra.mxu0 %v2063
      %2757 = vmatprep.subr.bf16.mxu0 %v2080
      %2758 = vmatpush1.bf16.msra.mxu0 %v2079
      %2759 = vmatprep.subr.bf16.mxu0 %v2096
      %2760 = vmatpush1.bf16.msra.mxu0 %v2095
      %2761 = vmatprep.subr.bf16.mxu0 %v2112
      %2762 = vmatpush1.bf16.msra.mxu0 %v2111
      %2763 = vmatprep.subr.bf16.mxu0 %v2128
      %2764 = vmatpush1.bf16.msra.mxu0 %v2127
      %2765 = vmatprep.subr.bf16.mxu0 %v2144
      %2766 = vmatpush1.bf16.msra.mxu0 %v2143
      %2767 = vmatprep.subr.bf16.mxu0 %v2160
      %2768 = vmatpush1.bf16.msra.mxu0 %v2159
      %2769 = vmatprep.subr.bf16.mxu0 %v2176
      %2770 = vmatpush1.bf16.msra.mxu0 %v2175
      %2771 = vmatprep.mubr.bf16.mxu0 %v729
      %2772 = vmatmul.mubr.bf16.gmra.mrb[0].mxu0 %v728
      %v2773 = vpop.f32.mrb[0].mxu0
      %v2774 = vadd.f32 %v709, %v2773
      %v2775 = vpop.f32.mrb[0].mxu0
      %v2776 = vadd.f32 %v709, %v2775
      %v2777 = vpop.f32.mrb[0].mxu0
      %v2778 = vadd.f32 %v714, %v2777
      %v2779 = vpop.f32.mrb[0].mxu0
      %v2780 = vadd.f32 %v714, %v2779
      %2781 = vdwg.mxu0
      %2782 = vmatprep.subr.bf16.mxu0 %v2192
      %2783 = vmatpush1.bf16.msra.mxu0 %v2191
      %2784 = vmatprep.subr.bf16.mxu0 %v2208
      %2785 = vmatpush1.bf16.msra.mxu0 %v2207
      %2786 = vmatprep.subr.bf16.mxu0 %v2224
      %2787 = vmatpush1.bf16.msra.mxu0 %v2223
      %2788 = vmatprep.subr.bf16.mxu0 %v2240
      %2789 = vmatpush1.bf16.msra.mxu0 %v2239
      %2790 = vmatprep.subr.bf16.mxu0 %v2256
      %2791 = vmatpush1.bf16.msra.mxu0 %v2255
      %2792 = vmatprep.subr.bf16.mxu0 %v2272
      %2793 = vmatpush1.bf16.msra.mxu0 %v2271
      %2794 = vmatprep.subr.bf16.mxu0 %v2288
      %2795 = vmatpush1.bf16.msra.mxu0 %v2287
      %2796 = vmatprep.subr.bf16.mxu0 %v2304
      %2797 = vmatpush1.bf16.msra.mxu0 %v2303
      %2798 = vmatprep.subr.bf16.mxu0 %v2320
      %2799 = vmatpush1.bf16.msra.mxu0 %v2319
      %2800 = vmatprep.subr.bf16.mxu0 0
      %2801 = vmatpush1.bf16.msra.mxu0 0
      %2802 = vmatprep.subr.bf16.mxu0 0
      %2803 = vmatpush1.bf16.msra.mxu0 0
      %2804 = vmatprep.subr.bf16.mxu0 0
      %2805 = vmatpush1.bf16.msra.mxu0 0
      %2806 = vmatprep.subr.bf16.mxu0 0
      %2807 = vmatpush1.bf16.msra.mxu0 0
      %2808 = vmatprep.subr.bf16.mxu0 0
      %2809 = vmatpush1.bf16.msra.mxu0 0
      %2810 = vmatprep.subr.bf16.mxu0 0
      %2811 = vmatpush1.bf16.msra.mxu0 0
      %2812 = vmatprep.subr.bf16.mxu0 0
      %2813 = vmatpush1.bf16.msra.mxu0 0
      %2814 = vmatprep.mubr.bf16.mxu0 %v2737
      %2815 = vmatmul.mubr.bf16.gmra.mrb[0].mxu0 %v730
      %v2816 = vpop.f32.mrb[0].mxu0
      %v2817 = vadd.f32 %v2774, %v2816
      %v2818 = vpop.f32.mrb[0].mxu0
      %v2819 = vadd.f32 %v2776, %v2818
      %v2820 = vpop.f32.mrb[0].mxu0
      %v2821 = vadd.f32 %v2778, %v2820
      %v2822 = vpop.f32.mrb[0].mxu0
      %v2823 = vadd.f32 %v2780, %v2822
      %2824 = vdwg.mxu0
      %2825 = vmatprep.subr.bf16.mxu0 %v1938
      %2826 = vmatpush1.bf16.msra.mxu0 %v1937
      %2827 = vmatprep.subr.bf16.mxu0 %v1954
      %2828 = vmatpush1.bf16.msra.mxu0 %v1953
      %2829 = vmatprep.subr.bf16.mxu0 %v1970
      %2830 = vmatpush1.bf16.msra.mxu0 %v1969
      %2831 = vmatprep.subr.bf16.mxu0 %v1986
      %2832 = vmatpush1.bf16.msra.mxu0 %v1985
      %2833 = vmatprep.subr.bf16.mxu0 %v2002
      %2834 = vmatpush1.bf16.msra.mxu0 %v2001
      %2835 = vmatprep.subr.bf16.mxu0 %v2018
      %2836 = vmatpush1.bf16.msra.mxu0 %v2017
      %2837 = vmatprep.subr.bf16.mxu0 %v2034
      %2838 = vmatpush1.bf16.msra.mxu0 %v2033
      %2839 = vmatprep.subr.bf16.mxu0 %v2050
      %2840 = vmatpush1.bf16.msra.mxu0 %v2049
      %2841 = vmatprep.subr.bf16.mxu0 %v2066
      %2842 = vmatpush1.bf16.msra.mxu0 %v2065
      %2843 = vmatprep.subr.bf16.mxu0 %v2082
      %2844 = vmatpush1.bf16.msra.mxu0 %v2081
      %2845 = vmatprep.subr.bf16.mxu0 %v2098
      %2846 = vmatpush1.bf16.msra.mxu0 %v2097
      %2847 = vmatprep.subr.bf16.mxu0 %v2114
      %2848 = vmatpush1.bf16.msra.mxu0 %v2113
      %2849 = vmatprep.subr.bf16.mxu0 %v2130
      %2850 = vmatpush1.bf16.msra.mxu0 %v2129
      %2851 = vmatprep.subr.bf16.mxu0 %v2146
      %2852 = vmatpush1.bf16.msra.mxu0 %v2145
      %2853 = vmatprep.subr.bf16.mxu0 %v2162
      %2854 = vmatpush1.bf16.msra.mxu0 %v2161
      %2855 = vmatprep.subr.bf16.mxu0 %v2178
      %2856 = vmatpush1.bf16.msra.mxu0 %v2177
      %2857 = vmatprep.mubr.bf16.mxu0 %v729
      %2858 = vmatmul.mubr.bf16.gmra.mrb[0].mxu0 %v728
      %v2859 = vpop.f32.mrb[0].mxu0
      %v2860 = vadd.f32 %v709, %v2859
      %v2861 = vpop.f32.mrb[0].mxu0
      %v2862 = vadd.f32 %v709, %v2861
      %v2863 = vpop.f32.mrb[0].mxu0
      %v2864 = vadd.f32 %v714, %v2863
      %v2865 = vpop.f32.mrb[0].mxu0
      %v2866 = vadd.f32 %v714, %v2865
      %2867 = vdwg.mxu0
      %2868 = vmatprep.subr.bf16.mxu0 %v2194
      %2869 = vmatpush1.bf16.msra.mxu0 %v2193
      %2870 = vmatprep.subr.bf16.mxu0 %v2210
      %2871 = vmatpush1.bf16.msra.mxu0 %v2209
      %2872 = vmatprep.subr.bf16.mxu0 %v2226
      %2873 = vmatpush1.bf16.msra.mxu0 %v2225
      %2874 = vmatprep.subr.bf16.mxu0 %v2242
      %2875 = vmatpush1.bf16.msra.mxu0 %v2241
      %2876 = vmatprep.subr.bf16.mxu0 %v2258
      %2877 = vmatpush1.bf16.msra.mxu0 %v2257
      %2878 = vmatprep.subr.bf16.mxu0 %v2274
      %2879 = vmatpush1.bf16.msra.mxu0 %v2273
      %2880 = vmatprep.subr.bf16.mxu0 %v2290
      %2881 = vmatpush1.bf16.msra.mxu0 %v2289
      %2882 = vmatprep.subr.bf16.mxu0 %v2306
      %2883 = vmatpush1.bf16.msra.mxu0 %v2305
      %2884 = vmatprep.subr.bf16.mxu0 %v2322
      %2885 = vmatpush1.bf16.msra.mxu0 %v2321
      %2886 = vmatprep.subr.bf16.mxu0 0
      %2887 = vmatpush1.bf16.msra.mxu0 0
      %2888 = vmatprep.subr.bf16.mxu0 0
      %2889 = vmatpush1.bf16.msra.mxu0 0
      %2890 = vmatprep.subr.bf16.mxu0 0
      %2891 = vmatpush1.bf16.msra.mxu0 0
      %2892 = vmatprep.subr.bf16.mxu0 0
      %2893 = vmatpush1.bf16.msra.mxu0 0
      %2894 = vmatprep.subr.bf16.mxu0 0
      %2895 = vmatpush1.bf16.msra.mxu0 0
      %2896 = vmatprep.subr.bf16.mxu0 0
      %2897 = vmatpush1.bf16.msra.mxu0 0
      %2898 = vmatprep.subr.bf16.mxu0 0
      %2899 = vmatpush1.bf16.msra.mxu0 0
      %2900 = vmatprep.mubr.bf16.mxu0 %v2737
      %2901 = vmatmul.mubr.bf16.gmra.mrb[0].mxu0 %v730
      %v2902 = vpop.f32.mrb[0].mxu0
      %v2903 = vadd.f32 %v2860, %v2902
      %v2904 = vpop.f32.mrb[0].mxu0
      %v2905 = vadd.f32 %v2862, %v2904
      %v2906 = vpop.f32.mrb[0].mxu0
      %v2907 = vadd.f32 %v2864, %v2906
      %v2908 = vpop.f32.mrb[0].mxu0
      %v2909 = vadd.f32 %v2866, %v2908
      %2910 = vdwg.mxu0
      %2911 = vmatprep.subr.bf16.mxu0 %v1940
      %2912 = vmatpush1.bf16.msra.mxu0 %v1939
      %2913 = vmatprep.subr.bf16.mxu0 %v1956
      %2914 = vmatpush1.bf16.msra.mxu0 %v1955
      %2915 = vmatprep.subr.bf16.mxu0 %v1972
      %2916 = vmatpush1.bf16.msra.mxu0 %v1971
      %2917 = vmatprep.subr.bf16.mxu0 %v1988
      %2918 = vmatpush1.bf16.msra.mxu0 %v1987
      %2919 = vmatprep.subr.bf16.mxu0 %v2004
      %2920 = vmatpush1.bf16.msra.mxu0 %v2003
      %2921 = vmatprep.subr.bf16.mxu0 %v2020
      %2922 = vmatpush1.bf16.msra.mxu0 %v2019
      %2923 = vmatprep.subr.bf16.mxu0 %v2036
      %2924 = vmatpush1.bf16.msra.mxu0 %v2035
      %2925 = vmatprep.subr.bf16.mxu0 %v2052
      %2926 = vmatpush1.bf16.msra.mxu0 %v2051
      %2927 = vmatprep.subr.bf16.mxu0 %v2068
      %2928 = vmatpush1.bf16.msra.mxu0 %v2067
      %2929 = vmatprep.subr.bf16.mxu0 %v2084
      %2930 = vmatpush1.bf16.msra.mxu0 %v2083
      %2931 = vmatprep.subr.bf16.mxu0 %v2100
      %2932 = vmatpush1.bf16.msra.mxu0 %v2099
      %2933 = vmatprep.subr.bf16.mxu0 %v2116
      %2934 = vmatpush1.bf16.msra.mxu0 %v2115
      %2935 = vmatprep.subr.bf16.mxu0 %v2132
      %2936 = vmatpush1.bf16.msra.mxu0 %v2131
      %2937 = vmatprep.subr.bf16.mxu0 %v2148
      %2938 = vmatpush1.bf16.msra.mxu0 %v2147
      %2939 = vmatprep.subr.bf16.mxu0 %v2164
      %2940 = vmatpush1.bf16.msra.mxu0 %v2163
      %2941 = vmatprep.subr.bf16.mxu0 %v2180
      %2942 = vmatpush1.bf16.msra.mxu0 %v2179
      %2943 = vmatprep.mubr.bf16.mxu0 %v729
      %2944 = vmatmul.mubr.bf16.gmra.mrb[0].mxu0 %v728
      %v2945 = vpop.f32.mrb[0].mxu0
      %v2946 = vadd.f32 %v709, %v2945
      %v2947 = vpop.f32.mrb[0].mxu0
      %v2948 = vadd.f32 %v709, %v2947
      %v2949 = vpop.f32.mrb[0].mxu0
      %v2950 = vadd.f32 %v714, %v2949
      %v2951 = vpop.f32.mrb[0].mxu0
      %v2952 = vadd.f32 %v714, %v2951
      %2953 = vdwg.mxu0
      %2954 = vmatprep.subr.bf16.mxu0 %v2196
      %2955 = vmatpush1.bf16.msra.mxu0 %v2195
      %2956 = vmatprep.subr.bf16.mxu0 %v2212
      %2957 = vmatpush1.bf16.msra.mxu0 %v2211
      %2958 = vmatprep.subr.bf16.mxu0 %v2228
      %2959 = vmatpush1.bf16.msra.mxu0 %v2227
      %2960 = vmatprep.subr.bf16.mxu0 %v2244
      %2961 = vmatpush1.bf16.msra.mxu0 %v2243
      %2962 = vmatprep.subr.bf16.mxu0 %v2260
      %2963 = vmatpush1.bf16.msra.mxu0 %v2259
      %2964 = vmatprep.subr.bf16.mxu0 %v2276
      %2965 = vmatpush1.bf16.msra.mxu0 %v2275
      %2966 = vmatprep.subr.bf16.mxu0 %v2292
      %2967 = vmatpush1.bf16.msra.mxu0 %v2291
      %2968 = vmatprep.subr.bf16.mxu0 %v2308
      %2969 = vmatpush1.bf16.msra.mxu0 %v2307
      %2970 = vmatprep.subr.bf16.mxu0 %v2324
      %2971 = vmatpush1.bf16.msra.mxu0 %v2323
      %2972 = vmatprep.subr.bf16.mxu0 0
      %2973 = vmatpush1.bf16.msra.mxu0 0
      %2974 = vmatprep.subr.bf16.mxu0 0
      %2975 = vmatpush1.bf16.msra.mxu0 0
      %2976 = vmatprep.subr.bf16.mxu0 0
      %2977 = vmatpush1.bf16.msra.mxu0 0
      %2978 = vmatprep.subr.bf16.mxu0 0
      %2979 = vmatpush1.bf16.msra.mxu0 0
      %2980 = vmatprep.subr.bf16.mxu0 0
      %2981 = vmatpush1.bf16.msra.mxu0 0
      %2982 = vmatprep.subr.bf16.mxu0 0
      %2983 = vmatpush1.bf16.msra.mxu0 0
      %2984 = vmatprep.subr.bf16.mxu0 0
      %2985 = vmatpush1.bf16.msra.mxu0 0
      %2986 = vmatprep.mubr.bf16.mxu0 %v2737
      %2987 = vmatmul.mubr.bf16.gmra.mrb[0].mxu0 %v730
      %v2988 = vpop.f32.mrb[0].mxu0
      %v2989 = vadd.f32 %v2946, %v2988
      %v2990 = vpop.f32.mrb[0].mxu0
      %v2991 = vadd.f32 %v2948, %v2990
      %v2992 = vpop.f32.mrb[0].mxu0
      %v2993 = vadd.f32 %v2950, %v2992
      %v2994 = vpop.f32.mrb[0].mxu0
      %v2995 = vadd.f32 %v2952, %v2994
      %2996 = vdwg.mxu0
      %2997 = vmatprep.subr.bf16.mxu0 %v1942
      %2998 = vmatpush1.bf16.msra.mxu0 %v1941
      %2999 = vmatprep.subr.bf16.mxu0 %v1958
      %3000 = vmatpush1.bf16.msra.mxu0 %v1957
      %3001 = vmatprep.subr.bf16.mxu0 %v1974
      %3002 = vmatpush1.bf16.msra.mxu0 %v1973
      %3003 = vmatprep.subr.bf16.mxu0 %v1990
      %3004 = vmatpush1.bf16.msra.mxu0 %v1989
      %3005 = vmatprep.subr.bf16.mxu0 %v2006
      %3006 = vmatpush1.bf16.msra.mxu0 %v2005
      %3007 = vmatprep.subr.bf16.mxu0 %v2022
      %3008 = vmatpush1.bf16.msra.mxu0 %v2021
      %3009 = vmatprep.subr.bf16.mxu0 %v2038
      %3010 = vmatpush1.bf16.msra.mxu0 %v2037
      %3011 = vmatprep.subr.bf16.mxu0 %v2054
      %3012 = vmatpush1.bf16.msra.mxu0 %v2053
      %3013 = vmatprep.subr.bf16.mxu0 %v2070
      %3014 = vmatpush1.bf16.msra.mxu0 %v2069
      %3015 = vmatprep.subr.bf16.mxu0 %v2086
      %3016 = vmatpush1.bf16.msra.mxu0 %v2085
      %3017 = vmatprep.subr.bf16.mxu0 %v2102
      %3018 = vmatpush1.bf16.msra.mxu0 %v2101
      %3019 = vmatprep.subr.bf16.mxu0 %v2118
      %3020 = vmatpush1.bf16.msra.mxu0 %v2117
      %3021 = vmatprep.subr.bf16.mxu0 %v2134
      %3022 = vmatpush1.bf16.msra.mxu0 %v2133
      %3023 = vmatprep.subr.bf16.mxu0 %v2150
      %3024 = vmatpush1.bf16.msra.mxu0 %v2149
      %3025 = vmatprep.subr.bf16.mxu0 %v2166
      %3026 = vmatpush1.bf16.msra.mxu0 %v2165
      %3027 = vmatprep.subr.bf16.mxu0 %v2182
      %3028 = vmatpush1.bf16.msra.mxu0 %v2181
      %3029 = vmatprep.mubr.bf16.mxu0 %v729
      %3030 = vmatmul.mubr.bf16.gmra.mrb[0].mxu0 %v728
      %v3031 = vpop.f32.mrb[0].mxu0
      %v3032 = vadd.f32 %v709, %v3031
      %v3033 = vpop.f32.mrb[0].mxu0
      %v3034 = vadd.f32 %v709, %v3033
      %v3035 = vpop.f32.mrb[0].mxu0
      %v3036 = vadd.f32 %v714, %v3035
      %v3037 = vpop.f32.mrb[0].mxu0
      %v3038 = vadd.f32 %v714, %v3037
      %3039 = vdwg.mxu0
      %3040 = vmatprep.subr.bf16.mxu0 %v2198
      %3041 = vmatpush1.bf16.msra.mxu0 %v2197
      %3042 = vmatprep.subr.bf16.mxu0 %v2214
      %3043 = vmatpush1.bf16.msra.mxu0 %v2213
      %3044 = vmatprep.subr.bf16.mxu0 %v2230
      %3045 = vmatpush1.bf16.msra.mxu0 %v2229
      %3046 = vmatprep.subr.bf16.mxu0 %v2246
      %3047 = vmatpush1.bf16.msra.mxu0 %v2245
      %3048 = vmatprep.subr.bf16.mxu0 %v2262
      %3049 = vmatpush1.bf16.msra.mxu0 %v2261
      %3050 = vmatprep.subr.bf16.mxu0 %v2278
      %3051 = vmatpush1.bf16.msra.mxu0 %v2277
      %3052 = vmatprep.subr.bf16.mxu0 %v2294
      %3053 = vmatpush1.bf16.msra.mxu0 %v2293
      %3054 = vmatprep.subr.bf16.mxu0 %v2310
      %3055 = vmatpush1.bf16.msra.mxu0 %v2309
      %3056 = vmatprep.subr.bf16.mxu0 %v2326
      %3057 = vmatpush1.bf16.msra.mxu0 %v2325
      %3058 = vmatprep.subr.bf16.mxu0 0
      %3059 = vmatpush1.bf16.msra.mxu0 0
      %3060 = vmatprep.subr.bf16.mxu0 0
      %3061 = vmatpush1.bf16.msra.mxu0 0
      %3062 = vmatprep.subr.bf16.mxu0 0
      %3063 = vmatpush1.bf16.msra.mxu0 0
      %3064 = vmatprep.subr.bf16.mxu0 0
      %3065 = vmatpush1.bf16.msra.mxu0 0
      %3066 = vmatprep.subr.bf16.mxu0 0
      %3067 = vmatpush1.bf16.msra.mxu0 0
      %3068 = vmatprep.subr.bf16.mxu0 0
      %3069 = vmatpush1.bf16.msra.mxu0 0
      %3070 = vmatprep.subr.bf16.mxu0 0
      %3071 = vmatpush1.bf16.msra.mxu0 0
      %3072 = vmatprep.mubr.bf16.mxu0 %v2737
      %3073 = vmatmul.mubr.bf16.gmra.mrb[0].mxu0 %v730
      %v3074 = vpop.f32.mrb[0].mxu0
      %v3075 = vadd.f32 %v3032, %v3074
      %v3076 = vpop.f32.mrb[0].mxu0
      %v3077 = vadd.f32 %v3034, %v3076
      %v3078 = vpop.f32.mrb[0].mxu0
      %v3079 = vadd.f32 %v3036, %v3078
      %v3080 = vpop.f32.mrb[0].mxu0
      %v3081 = vadd.f32 %v3038, %v3080
      %3082 = vdwg.mxu0
      %3083 = vmatprep.subr.bf16.mxu0 %v1944
      %3084 = vmatpush1.bf16.msra.mxu0 %v1943
      %3085 = vmatprep.subr.bf16.mxu0 %v1960
      %3086 = vmatpush1.bf16.msra.mxu0 %v1959
      %3087 = vmatprep.subr.bf16.mxu0 %v1976
      %3088 = vmatpush1.bf16.msra.mxu0 %v1975
      %3089 = vmatprep.subr.bf16.mxu0 %v1992
      %3090 = vmatpush1.bf16.msra.mxu0 %v1991
      %3091 = vmatprep.subr.bf16.mxu0 %v2008
      %3092 = vmatpush1.bf16.msra.mxu0 %v2007
      %3093 = vmatprep.subr.bf16.mxu0 %v2024
      %3094 = vmatpush1.bf16.msra.mxu0 %v2023
      %3095 = vmatprep.subr.bf16.mxu0 %v2040
      %3096 = vmatpush1.bf16.msra.mxu0 %v2039
      %3097 = vmatprep.subr.bf16.mxu0 %v2056
      %3098 = vmatpush1.bf16.msra.mxu0 %v2055
      %3099 = vmatprep.subr.bf16.mxu0 %v2072
      %3100 = vmatpush1.bf16.msra.mxu0 %v2071
      %3101 = vmatprep.subr.bf16.mxu0 %v2088
      %3102 = vmatpush1.bf16.msra.mxu0 %v2087
      %3103 = vmatprep.subr.bf16.mxu0 %v2104
      %3104 = vmatpush1.bf16.msra.mxu0 %v2103
      %3105 = vmatprep.subr.bf16.mxu0 %v2120
      %3106 = vmatpush1.bf16.msra.mxu0 %v2119
      %3107 = vmatprep.subr.bf16.mxu0 %v2136
      %3108 = vmatpush1.bf16.msra.mxu0 %v2135
      %3109 = vmatprep.subr.bf16.mxu0 %v2152
      %3110 = vmatpush1.bf16.msra.mxu0 %v2151
      %3111 = vmatprep.subr.bf16.mxu0 %v2168
      %3112 = vmatpush1.bf16.msra.mxu0 %v2167
      %3113 = vmatprep.subr.bf16.mxu0 %v2184
      %3114 = vmatpush1.bf16.msra.mxu0 %v2183
      %3115 = vmatprep.mubr.bf16.mxu0 %v729
      %3116 = vmatmul.mubr.bf16.gmra.mrb[0].mxu0 %v728
      %v3117 = vpop.f32.mrb[0].mxu0
      %v3118 = vadd.f32 %v709, %v3117
      %v3119 = vpop.f32.mrb[0].mxu0
      %v3120 = vadd.f32 %v709, %v3119
      %v3121 = vpop.f32.mrb[0].mxu0
      %v3122 = vadd.f32 %v714, %v3121
      %v3123 = vpop.f32.mrb[0].mxu0
      %v3124 = vadd.f32 %v714, %v3123
      %3125 = vdwg.mxu0
      %3126 = vmatprep.subr.bf16.mxu0 %v2200
      %3127 = vmatpush1.bf16.msra.mxu0 %v2199
      %3128 = vmatprep.subr.bf16.mxu0 %v2216
      %3129 = vmatpush1.bf16.msra.mxu0 %v2215
      %3130 = vmatprep.subr.bf16.mxu0 %v2232
      %3131 = vmatpush1.bf16.msra.mxu0 %v2231
      %3132 = vmatprep.subr.bf16.mxu0 %v2248
      %3133 = vmatpush1.bf16.msra.mxu0 %v2247
      %3134 = vmatprep.subr.bf16.mxu0 %v2264
      %3135 = vmatpush1.bf16.msra.mxu0 %v2263
      %3136 = vmatprep.subr.bf16.mxu0 %v2280
      %3137 = vmatpush1.bf16.msra.mxu0 %v2279
      %3138 = vmatprep.subr.bf16.mxu0 %v2296
      %3139 = vmatpush1.bf16.msra.mxu0 %v2295
      %3140 = vmatprep.subr.bf16.mxu0 %v2312
      %3141 = vmatpush1.bf16.msra.mxu0 %v2311
      %3142 = vmatprep.subr.bf16.mxu0 %v2328
      %3143 = vmatpush1.bf16.msra.mxu0 %v2327
      %3144 = vmatprep.subr.bf16.mxu0 0
      %3145 = vmatpush1.bf16.msra.mxu0 0
      %3146 = vmatprep.subr.bf16.mxu0 0
      %3147 = vmatpush1.bf16.msra.mxu0 0
      %3148 = vmatprep.subr.bf16.mxu0 0
      %3149 = vmatpush1.bf16.msra.mxu0 0
      %3150 = vmatprep.subr.bf16.mxu0 0
      %3151 = vmatpush1.bf16.msra.mxu0 0
      %3152 = vmatprep.subr.bf16.mxu0 0
      %3153 = vmatpush1.bf16.msra.mxu0 0
      %3154 = vmatprep.subr.bf16.mxu0 0
      %3155 = vmatpush1.bf16.msra.mxu0 0
      %3156 = vmatprep.subr.bf16.mxu0 0
      %3157 = vmatpush1.bf16.msra.mxu0 0
      %3158 = vmatprep.mubr.bf16.mxu0 %v2737
      %3159 = vmatmul.mubr.bf16.gmra.mrb[0].mxu0 %v730
      %v3160 = vpop.f32.mrb[0].mxu0
      %v3161 = vadd.f32 %v3118, %v3160
      %v3162 = vpop.f32.mrb[0].mxu0
      %v3163 = vadd.f32 %v3120, %v3162
      %v3164 = vpop.f32.mrb[0].mxu0
      %v3165 = vadd.f32 %v3122, %v3164
      %v3166 = vpop.f32.mrb[0].mxu0
      %v3167 = vadd.f32 %v3124, %v3166
      %3168 = vdwg.mxu0
      %3169 = vmatprep.subr.bf16.mxu0 %v1946
      %3170 = vmatpush1.bf16.msra.mxu0 %v1945
      %3171 = vmatprep.subr.bf16.mxu0 %v1962
      %3172 = vmatpush1.bf16.msra.mxu0 %v1961
      %3173 = vmatprep.subr.bf16.mxu0 %v1978
      %3174 = vmatpush1.bf16.msra.mxu0 %v1977
      %3175 = vmatprep.subr.bf16.mxu0 %v1994
      %3176 = vmatpush1.bf16.msra.mxu0 %v1993
      %3177 = vmatprep.subr.bf16.mxu0 %v2010
      %3178 = vmatpush1.bf16.msra.mxu0 %v2009
      %3179 = vmatprep.subr.bf16.mxu0 %v2026
      %3180 = vmatpush1.bf16.msra.mxu0 %v2025
      %3181 = vmatprep.subr.bf16.mxu0 %v2042
      %3182 = vmatpush1.bf16.msra.mxu0 %v2041
      %3183 = vmatprep.subr.bf16.mxu0 %v2058
      %3184 = vmatpush1.bf16.msra.mxu0 %v2057
      %3185 = vmatprep.subr.bf16.mxu0 %v2074
      %3186 = vmatpush1.bf16.msra.mxu0 %v2073
      %3187 = vmatprep.subr.bf16.mxu0 %v2090
      %3188 = vmatpush1.bf16.msra.mxu0 %v2089
      %3189 = vmatprep.subr.bf16.mxu0 %v2106
      %3190 = vmatpush1.bf16.msra.mxu0 %v2105
      %3191 = vmatprep.subr.bf16.mxu0 %v2122
      %3192 = vmatpush1.bf16.msra.mxu0 %v2121
      %3193 = vmatprep.subr.bf16.mxu0 %v2138
      %3194 = vmatpush1.bf16.msra.mxu0 %v2137
      %3195 = vmatprep.subr.bf16.mxu0 %v2154
      %3196 = vmatpush1.bf16.msra.mxu0 %v2153
      %3197 = vmatprep.subr.bf16.mxu0 %v2170
      %3198 = vmatpush1.bf16.msra.mxu0 %v2169
      %3199 = vmatprep.subr.bf16.mxu0 %v2186
      %3200 = vmatpush1.bf16.msra.mxu0 %v2185
      %3201 = vmatprep.mubr.bf16.mxu0 %v729
      %3202 = vmatmul.mubr.bf16.gmra.mrb[0].mxu0 %v728
      %v3203 = vpop.f32.mrb[0].mxu0
      %v3204 = vadd.f32 %v709, %v3203
      %v3205 = vpop.f32.mrb[0].mxu0
      %v3206 = vadd.f32 %v709, %v3205
      %v3207 = vpop.f32.mrb[0].mxu0
      %v3208 = vadd.f32 %v714, %v3207
      %v3209 = vpop.f32.mrb[0].mxu0
      %v3210 = vadd.f32 %v714, %v3209
      %3211 = vdwg.mxu0
      %3212 = vmatprep.subr.bf16.mxu0 %v2202
      %3213 = vmatpush1.bf16.msra.mxu0 %v2201
      %3214 = vmatprep.subr.bf16.mxu0 %v2218
      %3215 = vmatpush1.bf16.msra.mxu0 %v2217
      %3216 = vmatprep.subr.bf16.mxu0 %v2234
      %3217 = vmatpush1.bf16.msra.mxu0 %v2233
      %3218 = vmatprep.subr.bf16.mxu0 %v2250
      %3219 = vmatpush1.bf16.msra.mxu0 %v2249
      %3220 = vmatprep.subr.bf16.mxu0 %v2266
      %3221 = vmatpush1.bf16.msra.mxu0 %v2265
      %3222 = vmatprep.subr.bf16.mxu0 %v2282
      %3223 = vmatpush1.bf16.msra.mxu0 %v2281
      %3224 = vmatprep.subr.bf16.mxu0 %v2298
      %3225 = vmatpush1.bf16.msra.mxu0 %v2297
      %3226 = vmatprep.subr.bf16.mxu0 %v2314
      %3227 = vmatpush1.bf16.msra.mxu0 %v2313
      %3228 = vmatprep.subr.bf16.mxu0 %v2330
      %3229 = vmatpush1.bf16.msra.mxu0 %v2329
      %3230 = vmatprep.subr.bf16.mxu0 0
      %3231 = vmatpush1.bf16.msra.mxu0 0
      %3232 = vmatprep.subr.bf16.mxu0 0
      %3233 = vmatpush1.bf16.msra.mxu0 0
      %3234 = vmatprep.subr.bf16.mxu0 0
      %3235 = vmatpush1.bf16.msra.mxu0 0
      %3236 = vmatprep.subr.bf16.mxu0 0
      %3237 = vmatpush1.bf16.msra.mxu0 0
      %3238 = vmatprep.subr.bf16.mxu0 0
      %3239 = vmatpush1.bf16.msra.mxu0 0
      %3240 = vmatprep.subr.bf16.mxu0 0
      %3241 = vmatpush1.bf16.msra.mxu0 0
      %3242 = vmatprep.subr.bf16.mxu0 0
      %3243 = vmatpush1.bf16.msra.mxu0 0
      %3244 = vmatprep.mubr.bf16.mxu0 %v2737
      %3245 = vmatmul.mubr.bf16.gmra.mrb[0].mxu0 %v730
      %v3246 = vpop.f32.mrb[0].mxu0
      %v3247 = vadd.f32 %v3204, %v3246
      %v3248 = vpop.f32.mrb[0].mxu0
      %v3249 = vadd.f32 %v3206, %v3248
      %v3250 = vpop.f32.mrb[0].mxu0
      %v3251 = vadd.f32 %v3208, %v3250
      %v3252 = vpop.f32.mrb[0].mxu0
      %v3253 = vadd.f32 %v3210, %v3252
      %3254 = vdwg.mxu0
      %3255 = vmatprep.subr.bf16.mxu0 %v1948
      %3256 = vmatpush1.bf16.msra.mxu0 %v1947
      %3257 = vmatprep.subr.bf16.mxu0 %v1964
      %3258 = vmatpush1.bf16.msra.mxu0 %v1963
      %3259 = vmatprep.subr.bf16.mxu0 %v1980
      %3260 = vmatpush1.bf16.msra.mxu0 %v1979
      %3261 = vmatprep.subr.bf16.mxu0 %v1996
      %3262 = vmatpush1.bf16.msra.mxu0 %v1995
      %3263 = vmatprep.subr.bf16.mxu0 %v2012
      %3264 = vmatpush1.bf16.msra.mxu0 %v2011
      %3265 = vmatprep.subr.bf16.mxu0 %v2028
      %3266 = vmatpush1.bf16.msra.mxu0 %v2027
      %3267 = vmatprep.subr.bf16.mxu0 %v2044
      %3268 = vmatpush1.bf16.msra.mxu0 %v2043
      %3269 = vmatprep.subr.bf16.mxu0 %v2060
      %3270 = vmatpush1.bf16.msra.mxu0 %v2059
      %3271 = vmatprep.subr.bf16.mxu0 %v2076
      %3272 = vmatpush1.bf16.msra.mxu0 %v2075
      %3273 = vmatprep.subr.bf16.mxu0 %v2092
      %3274 = vmatpush1.bf16.msra.mxu0 %v2091
      %3275 = vmatprep.subr.bf16.mxu0 %v2108
      %3276 = vmatpush1.bf16.msra.mxu0 %v2107
      %3277 = vmatprep.subr.bf16.mxu0 %v2124
      %3278 = vmatpush1.bf16.msra.mxu0 %v2123
      %3279 = vmatprep.subr.bf16.mxu0 %v2140
      %3280 = vmatpush1.bf16.msra.mxu0 %v2139
      %3281 = vmatprep.subr.bf16.mxu0 %v2156
      %3282 = vmatpush1.bf16.msra.mxu0 %v2155
      %3283 = vmatprep.subr.bf16.mxu0 %v2172
      %3284 = vmatpush1.bf16.msra.mxu0 %v2171
      %3285 = vmatprep.subr.bf16.mxu0 %v2188
      %3286 = vmatpush1.bf16.msra.mxu0 %v2187
      %3287 = vmatprep.mubr.bf16.mxu0 %v729
      %3288 = vmatmul.mubr.bf16.gmra.mrb[0].mxu0 %v728
      %v3289 = vpop.f32.mrb[0].mxu0
      %v3290 = vadd.f32 %v709, %v3289
      %v3291 = vpop.f32.mrb[0].mxu0
      %v3292 = vadd.f32 %v709, %v3291
      %v3293 = vpop.f32.mrb[0].mxu0
      %v3294 = vadd.f32 %v714, %v3293
      %v3295 = vpop.f32.mrb[0].mxu0
      %v3296 = vadd.f32 %v714, %v3295
      %3297 = vdwg.mxu0
      %3298 = vmatprep.subr.bf16.mxu0 %v2204
      %3299 = vmatpush1.bf16.msra.mxu0 %v2203
      %3300 = vmatprep.subr.bf16.mxu0 %v2220
      %3301 = vmatpush1.bf16.msra.mxu0 %v2219
      %3302 = vmatprep.subr.bf16.mxu0 %v2236
      %3303 = vmatpush1.bf16.msra.mxu0 %v2235
      %3304 = vmatprep.subr.bf16.mxu0 %v2252
      %3305 = vmatpush1.bf16.msra.mxu0 %v2251
      %3306 = vmatprep.subr.bf16.mxu0 %v2268
      %3307 = vmatpush1.bf16.msra.mxu0 %v2267
      %3308 = vmatprep.subr.bf16.mxu0 %v2284
      %3309 = vmatpush1.bf16.msra.mxu0 %v2283
      %3310 = vmatprep.subr.bf16.mxu0 %v2300
      %3311 = vmatpush1.bf16.msra.mxu0 %v2299
      %3312 = vmatprep.subr.bf16.mxu0 %v2316
      %3313 = vmatpush1.bf16.msra.mxu0 %v2315
      %3314 = vmatprep.subr.bf16.mxu0 %v2332
      %3315 = vmatpush1.bf16.msra.mxu0 %v2331
      %3316 = vmatprep.subr.bf16.mxu0 0
      %3317 = vmatpush1.bf16.msra.mxu0 0
      %3318 = vmatprep.subr.bf16.mxu0 0
      %3319 = vmatpush1.bf16.msra.mxu0 0
      %3320 = vmatprep.subr.bf16.mxu0 0
      %3321 = vmatpush1.bf16.msra.mxu0 0
      %3322 = vmatprep.subr.bf16.mxu0 0
      %3323 = vmatpush1.bf16.msra.mxu0 0
      %3324 = vmatprep.subr.bf16.mxu0 0
      %3325 = vmatpush1.bf16.msra.mxu0 0
      %3326 = vmatprep.subr.bf16.mxu0 0
      %3327 = vmatpush1.bf16.msra.mxu0 0
      %3328 = vmatprep.subr.bf16.mxu0 0
      %3329 = vmatpush1.bf16.msra.mxu0 0
      %3330 = vmatprep.mubr.bf16.mxu0 %v2737
      %3331 = vmatmul.mubr.bf16.gmra.mrb[0].mxu0 %v730
      %v3332 = vpop.f32.mrb[0].mxu0
      %v3333 = vadd.f32 %v3290, %v3332
      %v3334 = vpop.f32.mrb[0].mxu0
      %v3335 = vadd.f32 %v3292, %v3334
      %v3336 = vpop.f32.mrb[0].mxu0
      %v3337 = vadd.f32 %v3294, %v3336
      %v3338 = vpop.f32.mrb[0].mxu0
      %v3339 = vadd.f32 %v3296, %v3338
      %3340 = vdwg.mxu0
      %3341 = vmatprep.subr.bf16.mxu0 %v1950
      %3342 = vmatpush1.bf16.msra.mxu0 %v1949
      %3343 = vmatprep.subr.bf16.mxu0 %v1966
      %3344 = vmatpush1.bf16.msra.mxu0 %v1965
      %3345 = vmatprep.subr.bf16.mxu0 %v1982
      %3346 = vmatpush1.bf16.msra.mxu0 %v1981
      %3347 = vmatprep.subr.bf16.mxu0 %v1998
      %3348 = vmatpush1.bf16.msra.mxu0 %v1997
      %3349 = vmatprep.subr.bf16.mxu0 %v2014
      %3350 = vmatpush1.bf16.msra.mxu0 %v2013
      %3351 = vmatprep.subr.bf16.mxu0 %v2030
      %3352 = vmatpush1.bf16.msra.mxu0 %v2029
      %3353 = vmatprep.subr.bf16.mxu0 %v2046
      %3354 = vmatpush1.bf16.msra.mxu0 %v2045
      %3355 = vmatprep.subr.bf16.mxu0 %v2062
      %3356 = vmatpush1.bf16.msra.mxu0 %v2061
      %3357 = vmatprep.subr.bf16.mxu0 %v2078
      %3358 = vmatpush1.bf16.msra.mxu0 %v2077
      %3359 = vmatprep.subr.bf16.mxu0 %v2094
      %3360 = vmatpush1.bf16.msra.mxu0 %v2093
      %3361 = vmatprep.subr.bf16.mxu0 %v2110
      %3362 = vmatpush1.bf16.msra.mxu0 %v2109
      %3363 = vmatprep.subr.bf16.mxu0 %v2126
      %3364 = vmatpush1.bf16.msra.mxu0 %v2125
      %3365 = vmatprep.subr.bf16.mxu0 %v2142
      %3366 = vmatpush1.bf16.msra.mxu0 %v2141
      %3367 = vmatprep.subr.bf16.mxu0 %v2158
      %3368 = vmatpush1.bf16.msra.mxu0 %v2157
      %3369 = vmatprep.subr.bf16.mxu0 %v2174
      %3370 = vmatpush1.bf16.msra.mxu0 %v2173
      %3371 = vmatprep.subr.bf16.mxu0 %v2190
      %3372 = vmatpush1.bf16.msra.mxu0 %v2189
      %3373 = vmatprep.mubr.bf16.mxu0 %v729
      %3374 = vmatmul.mubr.bf16.gmra.mrb[0].mxu0 %v728
      %v3375 = vpop.f32.mrb[0].mxu0
      %v3376 = vadd.f32 %v709, %v3375
      %v3377 = vpop.f32.mrb[0].mxu0
      %v3378 = vadd.f32 %v709, %v3377
      %v3379 = vpop.f32.mrb[0].mxu0
      %v3380 = vadd.f32 %v714, %v3379
      %v3381 = vpop.f32.mrb[0].mxu0
      %v3382 = vadd.f32 %v714, %v3381
      %3383 = vdwg.mxu0
      %3384 = vmatprep.subr.bf16.mxu0 %v2206
      %3385 = vmatpush1.bf16.msra.mxu0 %v2205
      %3386 = vmatprep.subr.bf16.mxu0 %v2222
      %3387 = vmatpush1.bf16.msra.mxu0 %v2221
      %3388 = vmatprep.subr.bf16.mxu0 %v2238
      %3389 = vmatpush1.bf16.msra.mxu0 %v2237
      %3390 = vmatprep.subr.bf16.mxu0 %v2254
      %3391 = vmatpush1.bf16.msra.mxu0 %v2253
      %3392 = vmatprep.subr.bf16.mxu0 %v2270
      %3393 = vmatpush1.bf16.msra.mxu0 %v2269
      %3394 = vmatprep.subr.bf16.mxu0 %v2286
      %3395 = vmatpush1.bf16.msra.mxu0 %v2285
      %3396 = vmatprep.subr.bf16.mxu0 %v2302
      %3397 = vmatpush1.bf16.msra.mxu0 %v2301
      %3398 = vmatprep.subr.bf16.mxu0 %v2318
      %3399 = vmatpush1.bf16.msra.mxu0 %v2317
      %3400 = vmatprep.subr.bf16.mxu0 %v2334
      %3401 = vmatpush1.bf16.msra.mxu0 %v2333
      %3402 = vmatprep.subr.bf16.mxu0 0
      %3403 = vmatpush1.bf16.msra.mxu0 0
      %3404 = vmatprep.subr.bf16.mxu0 0
      %3405 = vmatpush1.bf16.msra.mxu0 0
      %3406 = vmatprep.subr.bf16.mxu0 0
      %3407 = vmatpush1.bf16.msra.mxu0 0
      %3408 = vmatprep.subr.bf16.mxu0 0
      %3409 = vmatpush1.bf16.msra.mxu0 0
      %3410 = vmatprep.subr.bf16.mxu0 0
      %3411 = vmatpush1.bf16.msra.mxu0 0
      %3412 = vmatprep.subr.bf16.mxu0 0
      %3413 = vmatpush1.bf16.msra.mxu0 0
      %3414 = vmatprep.subr.bf16.mxu0 0
      %3415 = vmatpush1.bf16.msra.mxu0 0
      %3416 = vmatprep.mubr.bf16.mxu0 %v2737
      %3417 = vmatmul.mubr.bf16.gmra.mrb[0].mxu0 %v730
      %v3418 = vpop.f32.mrb[0].mxu0
      %v3419 = vadd.f32 %v3376, %v3418
      %v3420 = vpop.f32.mrb[0].mxu0
      %v3421 = vadd.f32 %v3378, %v3420
      %v3422 = vpop.f32.mrb[0].mxu0
      %v3423 = vadd.f32 %v3380, %v3422
      %v3424 = vpop.f32.mrb[0].mxu0
      %v3425 = vadd.f32 %v3382, %v3424
      %3426 = vdwg.mxu0
      %v3427 = vadd.f32 %v2817, %v2819
      %v3428 = vadd.f32 %v3427, %v2903
      %v3429 = vadd.f32 %v3428, %v2905
      %v3430 = vadd.f32 %v3429, %v2989
      %v3431 = vadd.f32 %v3430, %v2991
      %v3432 = vadd.f32 %v3431, %v3075
      %v3433 = vadd.f32 %v3432, %v3077
      %v3434 = vadd.f32 %v3433, %v3161
      %v3435 = vadd.f32 %v3434, %v3163
      %v3436 = vadd.f32 %v3435, %v3247
      %v3437 = vadd.f32 %v3436, %v3249
      %v3438 = vadd.f32 %v3437, %v3333
      %v3439 = vadd.f32 %v3438, %v3335
      %v3440 = vadd.f32 %v3439, %v3419
      %v3441 = vadd.f32 %v3440, %v3421
      %3442 = vadd.xlane.f32.xlu0 %v3441
      %v3443 = vpop.xlane.xlu0 %3442
      %v3444 = vadd.f32 %v2821, %v2823
      %v3445 = vadd.f32 %v3444, %v2907
      %v3446 = vadd.f32 %v3445, %v2909
      %v3447 = vadd.f32 %v3446, %v2993
      %v3448 = vadd.f32 %v3447, %v2995
      %v3449 = vadd.f32 %v3448, %v3079
      %v3450 = vadd.f32 %v3449, %v3081
      %v3451 = vadd.f32 %v3450, %v3165
      %v3452 = vadd.f32 %v3451, %v3167
      %v3453 = vadd.f32 %v3452, %v3251
      %v3454 = vadd.f32 %v3453, %v3253
      %v3455 = vadd.f32 %v3454, %v3337
      %v3456 = vadd.f32 %v3455, %v3339
      %v3457 = vadd.f32 %v3456, %v3423
      %v3458 = vadd.f32 %v3457, %v3425
      %3459 = vadd.xlane.f32.xlu0 %v3458
      %v3460 = vpop.xlane.xlu0 %3459
      %v3461 = vmul.f32 %v3443, 0.00048828125
      %v3462 = vmul.f32 %v3460, 0.00048828125
      %v3463 = vsub.f32 %v2817, %v3461
      %v3464 = vsub.f32 %v2819, %v3461
      %v3465 = vsub.f32 %v2903, %v3461
      %v3466 = vsub.f32 %v2905, %v3461
      %v3467 = vsub.f32 %v2989, %v3461
      %v3468 = vsub.f32 %v2991, %v3461
      %v3469 = vsub.f32 %v3075, %v3461
      %v3470 = vsub.f32 %v3077, %v3461
      %v3471 = vsub.f32 %v3161, %v3461
      %v3472 = vsub.f32 %v3163, %v3461
      %v3473 = vsub.f32 %v3247, %v3461
      %v3474 = vsub.f32 %v3249, %v3461
      %v3475 = vsub.f32 %v3333, %v3461
      %v3476 = vsub.f32 %v3335, %v3461
      %v3477 = vsub.f32 %v3419, %v3461
      %v3478 = vsub.f32 %v3421, %v3461
      %v3479 = vsub.f32 %v2821, %v3462
      %v3480 = vsub.f32 %v2823, %v3462
      %v3481 = vsub.f32 %v2907, %v3462
      %v3482 = vsub.f32 %v2909, %v3462
      %v3483 = vsub.f32 %v2993, %v3462
      %v3484 = vsub.f32 %v2995, %v3462
      %v3485 = vsub.f32 %v3079, %v3462
      %v3486 = vsub.f32 %v3081, %v3462
      %v3487 = vsub.f32 %v3165, %v3462
      %v3488 = vsub.f32 %v3167, %v3462
      %v3489 = vsub.f32 %v3251, %v3462
      %v3490 = vsub.f32 %v3253, %v3462
      %v3491 = vsub.f32 %v3337, %v3462
      %v3492 = vsub.f32 %v3339, %v3462
      %v3493 = vsub.f32 %v3423, %v3462
      %v3494 = vsub.f32 %v3425, %v3462
      %v3495 = vmul.f32 %v3463, %v3463
      %v3496 = vmul.f32 %v3464, %v3464
      %v3497 = vmul.f32 %v3465, %v3465
      %v3498 = vmul.f32 %v3466, %v3466
      %v3499 = vmul.f32 %v3467, %v3467
      %v3500 = vmul.f32 %v3468, %v3468
      %v3501 = vmul.f32 %v3469, %v3469
      %v3502 = vmul.f32 %v3470, %v3470
      %v3503 = vmul.f32 %v3471, %v3471
      %v3504 = vmul.f32 %v3472, %v3472
      %v3505 = vmul.f32 %v3473, %v3473
      %v3506 = vmul.f32 %v3474, %v3474
      %v3507 = vmul.f32 %v3475, %v3475
      %v3508 = vmul.f32 %v3476, %v3476
      %v3509 = vmul.f32 %v3477, %v3477
      %v3510 = vmul.f32 %v3478, %v3478
      %v3511 = vmul.f32 %v3479, %v3479
      %v3512 = vmul.f32 %v3480, %v3480
      %v3513 = vmul.f32 %v3481, %v3481
      %v3514 = vmul.f32 %v3482, %v3482
      %v3515 = vmul.f32 %v3483, %v3483
      %v3516 = vmul.f32 %v3484, %v3484
      %v3517 = vmul.f32 %v3485, %v3485
      %v3518 = vmul.f32 %v3486, %v3486
      %v3519 = vmul.f32 %v3487, %v3487
      %v3520 = vmul.f32 %v3488, %v3488
      %v3521 = vmul.f32 %v3489, %v3489
      %v3522 = vmul.f32 %v3490, %v3490
      %v3523 = vmul.f32 %v3491, %v3491
      %v3524 = vmul.f32 %v3492, %v3492
      %v3525 = vmul.f32 %v3493, %v3493
      %v3526 = vmul.f32 %v3494, %v3494
      %v3527 = vadd.f32 %v3495, %v3496
      %v3528 = vadd.f32 %v3527, %v3497
      %v3529 = vadd.f32 %v3528, %v3498
      %v3530 = vadd.f32 %v3529, %v3499
      %v3531 = vadd.f32 %v3530, %v3500
      %v3532 = vadd.f32 %v3531, %v3501
      %v3533 = vadd.f32 %v3532, %v3502
      %v3534 = vadd.f32 %v3533, %v3503
      %v3535 = vadd.f32 %v3534, %v3504
      %v3536 = vadd.f32 %v3535, %v3505
      %v3537 = vadd.f32 %v3536, %v3506
      %v3538 = vadd.f32 %v3537, %v3507
      %v3539 = vadd.f32 %v3538, %v3508
      %v3540 = vadd.f32 %v3539, %v3509
      %v3541 = vadd.f32 %v3540, %v3510
      %3542 = vadd.xlane.f32.xlu0 %v3541
      %v3543 = vpop.xlane.xlu0 %3542
      %v3544 = vadd.f32 %v3511, %v3512
      %v3545 = vadd.f32 %v3544, %v3513
      %v3546 = vadd.f32 %v3545, %v3514
      %v3547 = vadd.f32 %v3546, %v3515
      %v3548 = vadd.f32 %v3547, %v3516
      %v3549 = vadd.f32 %v3548, %v3517
      %v3550 = vadd.f32 %v3549, %v3518
      %v3551 = vadd.f32 %v3550, %v3519
      %v3552 = vadd.f32 %v3551, %v3520
      %v3553 = vadd.f32 %v3552, %v3521
      %v3554 = vadd.f32 %v3553, %v3522
      %v3555 = vadd.f32 %v3554, %v3523
      %v3556 = vadd.f32 %v3555, %v3524
      %v3557 = vadd.f32 %v3556, %v3525
      %v3558 = vadd.f32 %v3557, %v3526
      %3559 = vadd.xlane.f32.xlu0 %v3558
      %v3560 = vpop.xlane.xlu0 %3559
      %v3561 = vmul.f32 %v3543, 0.00048828125
      %v3562 = vmul.f32 %v3560, 0.00048828125
      %v3563 = vld [vmem:[%s284] sm:$0xff]
      %v3564 = vld [vmem:[%s284 + $0x8] sm:$0xff]
      %v3565 = vadd.f32 %v3561, 1e-05
      %v3566 = vadd.f32 %v3562, 1e-05
      %v3567 = vrsqrt.pop %v3565
      %v3568 = vrsqrt.pop %v3566
      %v3569 = vmul.f32 %v3563, %v3567
      %v3570 = vmul.f32 %v3564, %v3568
      %v3571 = vld [vmem:[%s290] sm:$0xff]
      %v3572 = vld [vmem:[%s290 + $0x8] sm:$0xff]
      %v3573 = vmul.f32 %v3461, %v3569
      %v3574 = vmul.f32 %v3462, %v3570
      %v3575 = vsub.f32 %v3571, %v3573
      %v3576 = vsub.f32 %v3572, %v3574
      %3578 = vset.pattern.permute.xlu0 0
      %3579 = vperm.xlu0 %3578, %v3569
      %v3580 = vpop.permute.xlu0 %3579
      %3583 = vset.pattern.permute.xlu0 0
      %3584 = vperm.xlu0 %3583, %v3570
      %v3585 = vpop.permute.xlu0 %3584
      %v3587 = vmul.f32 %v2817, %v3580
      %v3588 = vmul.f32 %v2819, %v3580
      %v3589 = vmul.f32 %v2903, %v3580
      %v3590 = vmul.f32 %v2905, %v3580
      %v3591 = vmul.f32 %v2989, %v3580
      %v3592 = vmul.f32 %v2991, %v3580
      %v3593 = vmul.f32 %v3075, %v3580
      %v3594 = vmul.f32 %v3077, %v3580
      %v3595 = vmul.f32 %v3161, %v3580
      %v3596 = vmul.f32 %v3163, %v3580
      %v3597 = vmul.f32 %v3247, %v3580
      %v3598 = vmul.f32 %v3249, %v3580
      %v3599 = vmul.f32 %v3333, %v3580
      %v3600 = vmul.f32 %v3335, %v3580
      %v3601 = vmul.f32 %v3419, %v3580
      %v3602 = vmul.f32 %v3421, %v3580
      %v3603 = vmul.f32 %v2821, %v3585
      %v3604 = vmul.f32 %v2823, %v3585
      %v3605 = vmul.f32 %v2907, %v3585
      %v3606 = vmul.f32 %v2909, %v3585
      %v3607 = vmul.f32 %v2993, %v3585
      %v3608 = vmul.f32 %v2995, %v3585
      %v3609 = vmul.f32 %v3079, %v3585
      %v3610 = vmul.f32 %v3081, %v3585
      %v3611 = vmul.f32 %v3165, %v3585
      %v3612 = vmul.f32 %v3167, %v3585
      %v3613 = vmul.f32 %v3251, %v3585
      %v3614 = vmul.f32 %v3253, %v3585
      %v3615 = vmul.f32 %v3337, %v3585
      %v3616 = vmul.f32 %v3339, %v3585
      %v3617 = vmul.f32 %v3423, %v3585
      %v3618 = vmul.f32 %v3425, %v3585
      %3620 = vset.pattern.permute.xlu0 0
      %3621 = vperm.xlu0 %3620, %v3575
      %v3622 = vpop.permute.xlu0 %3621
      %3625 = vset.pattern.permute.xlu0 0
      %3626 = vperm.xlu0 %3625, %v3576
      %v3627 = vpop.permute.xlu0 %3626
      %v3629 = vadd.f32 %v3587, %v3622
      %v3630 = vadd.f32 %v3588, %v3622
      %v3631 = vadd.f32 %v3589, %v3622
      %v3632 = vadd.f32 %v3590, %v3622
      %v3633 = vadd.f32 %v3591, %v3622
      %v3634 = vadd.f32 %v3592, %v3622
      %v3635 = vadd.f32 %v3593, %v3622
      %v3636 = vadd.f32 %v3594, %v3622
      %v3637 = vadd.f32 %v3595, %v3622
      %v3638 = vadd.f32 %v3596, %v3622
      %v3639 = vadd.f32 %v3597, %v3622
      %v3640 = vadd.f32 %v3598, %v3622
      %v3641 = vadd.f32 %v3599, %v3622
      %v3642 = vadd.f32 %v3600, %v3622
      %v3643 = vadd.f32 %v3601, %v3622
      %v3644 = vadd.f32 %v3602, %v3622
      %v3645 = vadd.f32 %v3603, %v3627
      %v3646 = vadd.f32 %v3604, %v3627
      %v3647 = vadd.f32 %v3605, %v3627
      %v3648 = vadd.f32 %v3606, %v3627
      %v3649 = vadd.f32 %v3607, %v3627
      %v3650 = vadd.f32 %v3608, %v3627
      %v3651 = vadd.f32 %v3609, %v3627
      %v3652 = vadd.f32 %v3610, %v3627
      %v3653 = vadd.f32 %v3611, %v3627
      %v3654 = vadd.f32 %v3612, %v3627
      %v3655 = vadd.f32 %v3613, %v3627
      %v3656 = vadd.f32 %v3614, %v3627
      %v3657 = vadd.f32 %v3615, %v3627
      %v3658 = vadd.f32 %v3616, %v3627
      %v3659 = vadd.f32 %v3617, %v3627
      %v3660 = vadd.f32 %v3618, %v3627
      %v3661 = vmax.f32 %v3629, 0.0
      %v3662 = vmax.f32 %v3630, 0.0
      %v3663 = vmax.f32 %v3631, 0.0
      %v3664 = vmax.f32 %v3632, 0.0
      %v3665 = vmax.f32 %v3633, 0.0
      %v3666 = vmax.f32 %v3634, 0.0
      %v3667 = vmax.f32 %v3635, 0.0
      %v3668 = vmax.f32 %v3636, 0.0
      %v3669 = vmax.f32 %v3637, 0.0
      %v3670 = vmax.f32 %v3638, 0.0
      %v3671 = vmax.f32 %v3639, 0.0
      %v3672 = vmax.f32 %v3640, 0.0
      %v3673 = vmax.f32 %v3641, 0.0
      %v3674 = vmax.f32 %v3642, 0.0
      %v3675 = vmax.f32 %v3643, 0.0
      %v3676 = vmax.f32 %v3644, 0.0
      %v3677 = vmax.f32 %v3645, 0.0
      %v3678 = vmax.f32 %v3646, 0.0
      %v3679 = vmax.f32 %v3647, 0.0
      %v3680 = vmax.f32 %v3648, 0.0
      %v3681 = vmax.f32 %v3649, 0.0
      %v3682 = vmax.f32 %v3650, 0.0
      %v3683 = vmax.f32 %v3651, 0.0
      %v3684 = vmax.f32 %v3652, 0.0
      %v3685 = vmax.f32 %v3653, 0.0
      %v3686 = vmax.f32 %v3654, 0.0
      %v3687 = vmax.f32 %v3655, 0.0
      %v3688 = vmax.f32 %v3656, 0.0
      %v3689 = vmax.f32 %v3657, 0.0
      %v3690 = vmax.f32 %v3658, 0.0
      %v3691 = vmax.f32 %v3659, 0.0
      %v3692 = vmax.f32 %v3660, 0.0
      %v3693 = vmax.f32 %v3661, %v3665
      %v3694 = vmax.f32 %v3662, %v3666
      %v3695 = vmax.f32 %v3663, %v3667
      %v3696 = vmax.f32 %v3664, %v3668
      %v3697 = vmax.f32 %v3677, %v3681
      %v3698 = vmax.f32 %v3678, %v3682
      %v3699 = vmax.f32 %v3679, %v3683
      %v3700 = vmax.f32 %v3680, %v3684
      %v3701 = vmax.f32 %v3693, %v3669
      %v3702 = vmax.f32 %v3694, %v3670
      %v3703 = vmax.f32 %v3695, %v3671
      %v3704 = vmax.f32 %v3696, %v3672
      %v3705 = vmax.f32 %v3697, %v3685
      %v3706 = vmax.f32 %v3698, %v3686
      %v3707 = vmax.f32 %v3699, %v3687
      %v3708 = vmax.f32 %v3700, %v3688
      %v3709 = vmax.f32 %v3701, %v3673
      %v3710 = vmax.f32 %v3702, %v3674
      %v3711 = vmax.f32 %v3703, %v3675
      %v3712 = vmax.f32 %v3704, %v3676
      %v3713 = vmax.f32 %v3705, %v3689
      %v3714 = vmax.f32 %v3706, %v3690
      %v3715 = vmax.f32 %v3707, %v3691
      %v3716 = vmax.f32 %v3708, %v3692
      %v3717 = vpack.c.bf16 %v3713, %v3709
      %v3718 = vpack.c.bf16 %v3714, %v3710
      %v3719 = vpack.c.bf16 %v3715, %v3711
      %v3720 = vpack.c.bf16 %v3716, %v3712
      %v3725 = vunpack.c.l.b16 %v3717
      %v3726 = vunpack.c.l.b16 %v3718
      %v3727 = vunpack.c.l.b16 %v3719
      %v3728 = vunpack.c.l.b16 %v3720
      %v3729 = vunpack.c.h.b16 %v3717
      %v3730 = vunpack.c.h.b16 %v3718
      %v3731 = vunpack.c.h.b16 %v3719
      %v3732 = vunpack.c.h.b16 %v3720
      %v3733 = vpack.c.b16 %v3726, %v3725
      %v3734 = vpack.c.b16 %v3728, %v3727
      %v3735 = vpack.c.b16 %v3730, %v3729
      %v3736 = vpack.c.b16 %v3732, %v3731
      %3741 = vst [vmem:[%s297] sm:$0xff] %v3733
      %3742 = vst [vmem:[%s297 + $0x8] sm:$0xff] %v3734
      %3743 = vst [vmem:[%s297 + $0x10] sm:$0xff] %v3735
      %3744 = vst [vmem:[%s297 + $0x18] sm:$0xff] %v3736
      %s3745 = smul.u32 2, %s16
      %p3746 = scmp.lt.s32.totalorder %s3745, 3
      %s3747 = scalar_select %p3746, %s3745, 3
      %s3748 = smul.addr %s3747, 4
      %s3749 = smul.addr %s3748, 4
      %s3750 = scalar_lea.vmem %s5, %s3749
      // Predicated region
      $region41: #{net_forward.5} parent=39 // pred_check
        %p3751 = pneg %p159
      $region42: #{net_forward.5} parent=39 // pred_check_branch
        %3753 = sbr.rel (%p3751) target = $region44
      $region43: #{net_forward.5} parent=39 // pred_region
        %s3754 = smul.u32 2, %s16
      $region44: #{net_forward.5} parent=39 // pred_fallthru
        _
    $region40: #{net_forward.5} parent=5 // pred_fallthru
      _
    %p3755 = scmp.le.s32.totalorder 2, %s11
    // Predicated region
    $region45: #{net_forward.5} parent=5 // pred_check
      %p3756 = pneg %p3755
    $region46: #{net_forward.5} parent=5 // pred_check_branch
      %3758 = sbr.rel (%p3756) target = $region48
    $region47: #{net_forward.5} parent=5 // pred_region
      %s3759 = ssub.s32 %s11, 2
      // Predicated region
      $region49: #{net_forward.5} parent=47 // pred_check
        %p3760 = pneg %p165
      $region50: #{net_forward.5} parent=47 // pred_check_branch
        %3762 = sbr.rel (%p3760) target = $region52
      $region51: #{net_forward.5} parent=47 // pred_region
        %s3763 = smul.u32 2, %s17
        %p3764 = scmp.lt.s32.totalorder %s3763, 3
        %s3765 = scalar_select %p3764, %s3763, 3
        %s3766 = smul.addr %s3765, 4
        %s3767 = smul.addr %s3766, 4
        %s3768 = scalar_lea.vmem %s5, %s3767
      $region52: #{net_forward.5} parent=47 // pred_fallthru
        _
    $region48: #{net_forward.5} parent=5 // pred_fallthru
      _
  $region6: #{net_forward.5} parent=0 // loop_footer
    %s15 = sadd.s32 1, %s11
  $region7: #{net_forward.5} parent=0 // loop_footer_branch
    %10 = sbr.rel target = $region3
  $region8: #{net_forward.5} parent=0 // loop_exit
    _

// kernel: net_forward.6
$region0: #{net_forward.6}
  #allocation0 [shape = 'u32[]', space=smem, size = 0x4, offset = 0x4, fixed_abs, tag = 'smem constant byte address 0x4 - core index']
  #allocation1 [shape = 'u32[144,128]{1,0:T(1,128)}', space=vmem, size = 0x12000, scoped, tag = 'internal scratch']
  %s0 = inlined_call_operand.vmem [shape: bf16[2,8192], index: 0, kind: input, shape index: {}]
  %s1 = inlined_call_operand.vmem [shape: bf16[8192,120], index: 1, kind: input, shape index: {}]
  %s2 = inlined_call_operand.vmem [shape: f32[1,120], index: 2, kind: input, shape index: {}]
  %s3 = inlined_call_operand.vmem [shape: f32[120,20], index: 3, kind: input, shape index: {}]
  %s4 = inlined_call_operand.vmem [shape: f32[1,20], index: 4, kind: input, shape index: {}]
  %s5 = inlined_call_operand.vmem [shape: f32[2,20], index: 5, kind: output, shape index: {}]
  %s6 = sld [smem:[#allocation0]]
  $region30: #{net_forward.6} parent=0
    _
  %s8 = ssub.s32 1, %s6
  %s9 = scalar_select 0, %s8, %s6
  // Predicated region
  $region2: #{net_forward.6} parent=0 // pred_check
    _
  $region3: #{net_forward.6} parent=0 // pred_check_branch
    %11 = sbr.rel (0) target = $region5
  $region4: #{net_forward.6} parent=0 // pred_region
    _
  $region5: #{net_forward.6} parent=0 // pred_fallthru
    _
  // Predicated region
  $region6: #{net_forward.6} parent=0 // pred_check
    _
  $region7: #{net_forward.6} parent=0 // pred_check_branch
    %13 = sbr.rel (0) target = $region9
  $region8: #{net_forward.6} parent=0 // pred_region
    _
  $region9: #{net_forward.6} parent=0 // pred_fallthru
    _
  // Predicated region
  $region10: #{net_forward.6} parent=0 // pred_check
    _
  $region11: #{net_forward.6} parent=0 // pred_check_branch
    %15 = sbr.rel (0) target = $region13
  $region12: #{net_forward.6} parent=0 // pred_region
    _
  $region13: #{net_forward.6} parent=0 // pred_fallthru
    _
  // Predicated region
  $region14: #{net_forward.6} parent=0 // pred_check
    _
  $region15: #{net_forward.6} parent=0 // pred_check_branch
    %17 = sbr.rel (0) target = $region17
  $region16: #{net_forward.6} parent=0 // pred_region
    _
  $region17: #{net_forward.6} parent=0 // pred_fallthru
    _
  // Predicated region
  $region18: #{net_forward.6} parent=0 // pred_check
    _
  $region19: #{net_forward.6} parent=0 // pred_check_branch
    %19 = sbr.rel (0) target = $region21
  $region20: #{net_forward.6} parent=0 // pred_region
    _
  $region21: #{net_forward.6} parent=0 // pred_fallthru
    _
  %v21 = vld [vmem:[%s0] sm:$0xff]
  %v22 = vld [vmem:[%s0 + $0x8] sm:$0xff]
  %v23 = vld [vmem:[%s0 + $0x10] sm:$0xff]
  %v24 = vld [vmem:[%s0 + $0x18] sm:$0xff]
  %v25 = vld [vmem:[%s0 + $0x20] sm:$0xff]
  %v26 = vld [vmem:[%s0 + $0x28] sm:$0xff]
  %v27 = vld [vmem:[%s0 + $0x30] sm:$0xff]
  %v28 = vld [vmem:[%s0 + $0x38] sm:$0xff]
  %v29 = vld [vmem:[%s1] sm:$0xf]
  %v30 = vld [vmem:[%s1 + $0x4] sm:$0xf]
  %v31 = vld [vmem:[%s1 + $0x8] sm:$0xf]
  %v32 = vld [vmem:[%s1 + $0xc] sm:$0xf]
  %v33 = vld [vmem:[%s1 + $0x10] sm:$0xf]
  %v34 = vld [vmem:[%s1 + $0x14] sm:$0xf]
  %v35 = vld [vmem:[%s1 + $0x18] sm:$0xf]
  %v36 = vld [vmem:[%s1 + $0x1c] sm:$0xf]
  %v37 = vld [vmem:[%s1 + $0x20] sm:$0xf]
  %v38 = vld [vmem:[%s1 + $0x24] sm:$0xf]
  %v39 = vld [vmem:[%s1 + $0x28] sm:$0xf]
  %v40 = vld [vmem:[%s1 + $0x2c] sm:$0xf]
  %v41 = vld [vmem:[%s1 + $0x30] sm:$0xf]
  %v42 = vld [vmem:[%s1 + $0x34] sm:$0xf]
  %v43 = vld [vmem:[%s1 + $0x38] sm:$0xf]
  %v44 = vld [vmem:[%s1 + $0x3c] sm:$0xf]
  %v45 = vld [vmem:[%s1 + $0x40] sm:$0xf]
  %v46 = vld [vmem:[%s1 + $0x44] sm:$0xf]
  %v47 = vld [vmem:[%s1 + $0x48] sm:$0xf]
  %v48 = vld [vmem:[%s1 + $0x4c] sm:$0xf]
  %v49 = vld [vmem:[%s1 + $0x50] sm:$0xf]
  %v50 = vld [vmem:[%s1 + $0x54] sm:$0xf]
  %v51 = vld [vmem:[%s1 + $0x58] sm:$0xf]
  %v52 = vld [vmem:[%s1 + $0x5c] sm:$0xf]
  %v53 = vld [vmem:[%s1 + $0x60] sm:$0xf]
  %v54 = vld [vmem:[%s1 + $0x64] sm:$0xf]
  %v55 = vld [vmem:[%s1 + $0x68] sm:$0xf]
  %v56 = vld [vmem:[%s1 + $0x6c] sm:$0xf]
  %v57 = vld [vmem:[%s1 + $0x70] sm:$0xf]
  %v58 = vld [vmem:[%s1 + $0x74] sm:$0xf]
  %v59 = vld [vmem:[%s1 + $0x78] sm:$0xf]
  %v60 = vld [vmem:[%s1 + $0x7c] sm:$0xf]
  %v61 = vld [vmem:[%s1 + $0x80] sm:$0xf]
  %v62 = vld [vmem:[%s1 + $0x84] sm:$0xf]
  %v63 = vld [vmem:[%s1 + $0x88] sm:$0xf]
  %v64 = vld [vmem:[%s1 + $0x8c] sm:$0xf]
  %v65 = vld [vmem:[%s1 + $0x90] sm:$0xf]
  %v66 = vld [vmem:[%s1 + $0x94] sm:$0xf]
  %v67 = vld [vmem:[%s1 + $0x98] sm:$0xf]
  %v68 = vld [vmem:[%s1 + $0x9c] sm:$0xf]
  %v69 = vld [vmem:[%s1 + $0xa0] sm:$0xf]
  %v70 = vld [vmem:[%s1 + $0xa4] sm:$0xf]
  %v71 = vld [vmem:[%s1 + $0xa8] sm:$0xf]
  %v72 = vld [vmem:[%s1 + $0xac] sm:$0xf]
  %v73 = vld [vmem:[%s1 + $0xb0] sm:$0xf]
  %v74 = vld [vmem:[%s1 + $0xb4] sm:$0xf]
  %v75 = vld [vmem:[%s1 + $0xb8] sm:$0xf]
  %v76 = vld [vmem:[%s1 + $0xbc] sm:$0xf]
  %v77 = vld [vmem:[%s1 + $0xc0] sm:$0xf]
  %v78 = vld [vmem:[%s1 + $0xc4] sm:$0xf]
  %v79 = vld [vmem:[%s1 + $0xc8] sm:$0xf]
  %v80 = vld [vmem:[%s1 + $0xcc] sm:$0xf]
  %v81 = vld [vmem:[%s1 + $0xd0] sm:$0xf]
  %v82 = vld [vmem:[%s1 + $0xd4] sm:$0xf]
  %v83 = vld [vmem:[%s1 + $0xd8] sm:$0xf]
  %v84 = vld [vmem:[%s1 + $0xdc] sm:$0xf]
  %v85 = vld [vmem:[%s1 + $0xe0] sm:$0xf]
  %v86 = vld [vmem:[%s1 + $0xe4] sm:$0xf]
  %v87 = vld [vmem:[%s1 + $0xe8] sm:$0xf]
  %v88 = vld [vmem:[%s1 + $0xec] sm:$0xf]
  %v89 = vld [vmem:[%s1 + $0xf0] sm:$0xf]
  %v90 = vld [vmem:[%s1 + $0xf4] sm:$0xf]
  %v91 = vld [vmem:[%s1 + $0xf8] sm:$0xf]
  %v92 = vld [vmem:[%s1 + $0xfc] sm:$0xf]
  %v93 = vld [vmem:[%s1 + $0x100] sm:$0xf]
  %v94 = vld [vmem:[%s1 + $0x104] sm:$0xf]
  %v95 = vld [vmem:[%s1 + $0x108] sm:$0xf]
  %v96 = vld [vmem:[%s1 + $0x10c] sm:$0xf]
  %v97 = vld [vmem:[%s1 + $0x110] sm:$0xf]
  %v98 = vld [vmem:[%s1 + $0x114] sm:$0xf]
  %v99 = vld [vmem:[%s1 + $0x118] sm:$0xf]
  %v100 = vld [vmem:[%s1 + $0x11c] sm:$0xf]
  %v101 = vld [vmem:[%s1 + $0x120] sm:$0xf]
  %v102 = vld [vmem:[%s1 + $0x124] sm:$0xf]
  %v103 = vld [vmem:[%s1 + $0x128] sm:$0xf]
  %v104 = vld [vmem:[%s1 + $0x12c] sm:$0xf]
  %v105 = vld [vmem:[%s1 + $0x130] sm:$0xf]
  %v106 = vld [vmem:[%s1 + $0x134] sm:$0xf]
  %v107 = vld [vmem:[%s1 + $0x138] sm:$0xf]
  %v108 = vld [vmem:[%s1 + $0x13c] sm:$0xf]
  %v109 = vld [vmem:[%s1 + $0x140] sm:$0xf]
  %v110 = vld [vmem:[%s1 + $0x144] sm:$0xf]
  %v111 = vld [vmem:[%s1 + $0x148] sm:$0xf]
  %v112 = vld [vmem:[%s1 + $0x14c] sm:$0xf]
  %v113 = vld [vmem:[%s1 + $0x150] sm:$0xf]
  %v114 = vld [vmem:[%s1 + $0x154] sm:$0xf]
  %v115 = vld [vmem:[%s1 + $0x158] sm:$0xf]
  %v116 = vld [vmem:[%s1 + $0x15c] sm:$0xf]
  %v117 = vld [vmem:[%s1 + $0x160] sm:$0xf]
  %v118 = vld [vmem:[%s1 + $0x164] sm:$0xf]
  %v119 = vld [vmem:[%s1 + $0x168] sm:$0xf]
  %v120 = vld [vmem:[%s1 + $0x16c] sm:$0xf]
  %v121 = vld [vmem:[%s1 + $0x170] sm:$0xf]
  %v122 = vld [vmem:[%s1 + $0x174] sm:$0xf]
  %v123 = vld [vmem:[%s1 + $0x178] sm:$0xf]
  %v124 = vld [vmem:[%s1 + $0x17c] sm:$0xf]
  %v125 = vld [vmem:[%s1 + $0x180] sm:$0xf]
  %v126 = vld [vmem:[%s1 + $0x184] sm:$0xf]
  %v127 = vld [vmem:[%s1 + $0x188] sm:$0xf]
  %v128 = vld [vmem:[%s1 + $0x18c] sm:$0xf]
  %v129 = vld [vmem:[%s1 + $0x190] sm:$0xf]
  %v130 = vld [vmem:[%s1 + $0x194] sm:$0xf]
  %v131 = vld [vmem:[%s1 + $0x198] sm:$0xf]
  %v132 = vld [vmem:[%s1 + $0x19c] sm:$0xf]
  %v133 = vld [vmem:[%s1 + $0x1a0] sm:$0xf]
  %v134 = vld [vmem:[%s1 + $0x1a4] sm:$0xf]
  %v135 = vld [vmem:[%s1 + $0x1a8] sm:$0xf]
  %v136 = vld [vmem:[%s1 + $0x1ac] sm:$0xf]
  %v137 = vld [vmem:[%s1 + $0x1b0] sm:$0xf]
  %v138 = vld [vmem:[%s1 + $0x1b4] sm:$0xf]
  %v139 = vld [vmem:[%s1 + $0x1b8] sm:$0xf]
  %v140 = vld [vmem:[%s1 + $0x1bc] sm:$0xf]
  %v141 = vld [vmem:[%s1 + $0x1c0] sm:$0xf]
  %v142 = vld [vmem:[%s1 + $0x1c4] sm:$0xf]
  %v143 = vld [vmem:[%s1 + $0x1c8] sm:$0xf]
  %v144 = vld [vmem:[%s1 + $0x1cc] sm:$0xf]
  %v145 = vld [vmem:[%s1 + $0x1d0] sm:$0xf]
  %v146 = vld [vmem:[%s1 + $0x1d4] sm:$0xf]
  %v147 = vld [vmem:[%s1 + $0x1d8] sm:$0xf]
  %v148 = vld [vmem:[%s1 + $0x1dc] sm:$0xf]
  %v149 = vld [vmem:[%s1 + $0x1e0] sm:$0xf]
  %v150 = vld [vmem:[%s1 + $0x1e4] sm:$0xf]
  %v151 = vld [vmem:[%s1 + $0x1e8] sm:$0xf]
  %v152 = vld [vmem:[%s1 + $0x1ec] sm:$0xf]
  %v153 = vld [vmem:[%s1 + $0x1f0] sm:$0xf]
  %v154 = vld [vmem:[%s1 + $0x1f4] sm:$0xf]
  %v155 = vld [vmem:[%s1 + $0x1f8] sm:$0xf]
  %v156 = vld [vmem:[%s1 + $0x1fc] sm:$0xf]
  %v157 = vld [vmem:[%s1 + $0x200] sm:$0xf]
  %v158 = vld [vmem:[%s1 + $0x204] sm:$0xf]
  %v159 = vld [vmem:[%s1 + $0x208] sm:$0xf]
  %v160 = vld [vmem:[%s1 + $0x20c] sm:$0xf]
  %v161 = vld [vmem:[%s1 + $0x210] sm:$0xf]
  %v162 = vld [vmem:[%s1 + $0x214] sm:$0xf]
  %v163 = vld [vmem:[%s1 + $0x218] sm:$0xf]
  %v164 = vld [vmem:[%s1 + $0x21c] sm:$0xf]
  %v165 = vld [vmem:[%s1 + $0x220] sm:$0xf]
  %v166 = vld [vmem:[%s1 + $0x224] sm:$0xf]
  %v167 = vld [vmem:[%s1 + $0x228] sm:$0xf]
  %v168 = vld [vmem:[%s1 + $0x22c] sm:$0xf]
  %v169 = vld [vmem:[%s1 + $0x230] sm:$0xf]
  %v170 = vld [vmem:[%s1 + $0x234] sm:$0xf]
  %v171 = vld [vmem:[%s1 + $0x238] sm:$0xf]
  %v172 = vld [vmem:[%s1 + $0x23c] sm:$0xf]
  %v173 = vld [vmem:[%s1 + $0x240] sm:$0xf]
  %v174 = vld [vmem:[%s1 + $0x244] sm:$0xf]
  %v175 = vld [vmem:[%s1 + $0x248] sm:$0xf]
  %v176 = vld [vmem:[%s1 + $0x24c] sm:$0xf]
  %v177 = vld [vmem:[%s1 + $0x250] sm:$0xf]
  %v178 = vld [vmem:[%s1 + $0x254] sm:$0xf]
  %v179 = vld [vmem:[%s1 + $0x258] sm:$0xf]
  %v180 = vld [vmem:[%s1 + $0x25c] sm:$0xf]
  %v181 = vld [vmem:[%s1 + $0x260] sm:$0xf]
  %v182 = vld [vmem:[%s1 + $0x264] sm:$0xf]
  %v183 = vld [vmem:[%s1 + $0x268] sm:$0xf]
  %v184 = vld [vmem:[%s1 + $0x26c] sm:$0xf]
  %v185 = vld [vmem:[%s1 + $0x270] sm:$0xf]
  %v186 = vld [vmem:[%s1 + $0x274] sm:$0xf]
  %v187 = vld [vmem:[%s1 + $0x278] sm:$0xf]
  %v188 = vld [vmem:[%s1 + $0x27c] sm:$0xf]
  %v189 = vld [vmem:[%s1 + $0x280] sm:$0xf]
  %v190 = vld [vmem:[%s1 + $0x284] sm:$0xf]
  %v191 = vld [vmem:[%s1 + $0x288] sm:$0xf]
  %v192 = vld [vmem:[%s1 + $0x28c] sm:$0xf]
  %v193 = vld [vmem:[%s1 + $0x290] sm:$0xf]
  %v194 = vld [vmem:[%s1 + $0x294] sm:$0xf]
  %v195 = vld [vmem:[%s1 + $0x298] sm:$0xf]
  %v196 = vld [vmem:[%s1 + $0x29c] sm:$0xf]
  %v197 = vld [vmem:[%s1 + $0x2a0] sm:$0xf]
  %v198 = vld [vmem:[%s1 + $0x2a4] sm:$0xf]
  %v199 = vld [vmem:[%s1 + $0x2a8] sm:$0xf]
  %v200 = vld [vmem:[%s1 + $0x2ac] sm:$0xf]
  %v201 = vld [vmem:[%s1 + $0x2b0] sm:$0xf]
  %v202 = vld [vmem:[%s1 + $0x2b4] sm:$0xf]
  %v203 = vld [vmem:[%s1 + $0x2b8] sm:$0xf]
  %v204 = vld [vmem:[%s1 + $0x2bc] sm:$0xf]
  %v205 = vld [vmem:[%s1 + $0x2c0] sm:$0xf]
  %v206 = vld [vmem:[%s1 + $0x2c4] sm:$0xf]
  %v207 = vld [vmem:[%s1 + $0x2c8] sm:$0xf]
  %v208 = vld [vmem:[%s1 + $0x2cc] sm:$0xf]
  %v209 = vld [vmem:[%s1 + $0x2d0] sm:$0xf]
  %v210 = vld [vmem:[%s1 + $0x2d4] sm:$0xf]
  %v211 = vld [vmem:[%s1 + $0x2d8] sm:$0xf]
  %v212 = vld [vmem:[%s1 + $0x2dc] sm:$0xf]
  %v213 = vld [vmem:[%s1 + $0x2e0] sm:$0xf]
  %v214 = vld [vmem:[%s1 + $0x2e4] sm:$0xf]
  %v215 = vld [vmem:[%s1 + $0x2e8] sm:$0xf]
  %v216 = vld [vmem:[%s1 + $0x2ec] sm:$0xf]
  %v217 = vld [vmem:[%s1 + $0x2f0] sm:$0xf]
  %v218 = vld [vmem:[%s1 + $0x2f4] sm:$0xf]
  %v219 = vld [vmem:[%s1 + $0x2f8] sm:$0xf]
  %v220 = vld [vmem:[%s1 + $0x2fc] sm:$0xf]
  %v221 = vld [vmem:[%s1 + $0x300] sm:$0xf]
  %v222 = vld [vmem:[%s1 + $0x304] sm:$0xf]
  %v223 = vld [vmem:[%s1 + $0x308] sm:$0xf]
  %v224 = vld [vmem:[%s1 + $0x30c] sm:$0xf]
  %v225 = vld [vmem:[%s1 + $0x310] sm:$0xf]
  %v226 = vld [vmem:[%s1 + $0x314] sm:$0xf]
  %v227 = vld [vmem:[%s1 + $0x318] sm:$0xf]
  %v228 = vld [vmem:[%s1 + $0x31c] sm:$0xf]
  %v229 = vld [vmem:[%s1 + $0x320] sm:$0xf]
  %v230 = vld [vmem:[%s1 + $0x324] sm:$0xf]
  %v231 = vld [vmem:[%s1 + $0x328] sm:$0xf]
  %v232 = vld [vmem:[%s1 + $0x32c] sm:$0xf]
  %v233 = vld [vmem:[%s1 + $0x330] sm:$0xf]
  %v234 = vld [vmem:[%s1 + $0x334] sm:$0xf]
  %v235 = vld [vmem:[%s1 + $0x338] sm:$0xf]
  %v236 = vld [vmem:[%s1 + $0x33c] sm:$0xf]
  %v237 = vld [vmem:[%s1 + $0x340] sm:$0xf]
  %v238 = vld [vmem:[%s1 + $0x344] sm:$0xf]
  %v239 = vld [vmem:[%s1 + $0x348] sm:$0xf]
  %v240 = vld [vmem:[%s1 + $0x34c] sm:$0xf]
  %v241 = vld [vmem:[%s1 + $0x350] sm:$0xf]
  %v242 = vld [vmem:[%s1 + $0x354] sm:$0xf]
  %v243 = vld [vmem:[%s1 + $0x358] sm:$0xf]
  %v244 = vld [vmem:[%s1 + $0x35c] sm:$0xf]
  %v245 = vld [vmem:[%s1 + $0x360] sm:$0xf]
  %v246 = vld [vmem:[%s1 + $0x364] sm:$0xf]
  %v247 = vld [vmem:[%s1 + $0x368] sm:$0xf]
  %v248 = vld [vmem:[%s1 + $0x36c] sm:$0xf]
  %v249 = vld [vmem:[%s1 + $0x370] sm:$0xf]
  %v250 = vld [vmem:[%s1 + $0x374] sm:$0xf]
  %v251 = vld [vmem:[%s1 + $0x378] sm:$0xf]
  %v252 = vld [vmem:[%s1 + $0x37c] sm:$0xf]
  %v253 = vld [vmem:[%s1 + $0x380] sm:$0xf]
  %v254 = vld [vmem:[%s1 + $0x384] sm:$0xf]
  %v255 = vld [vmem:[%s1 + $0x388] sm:$0xf]
  %v256 = vld [vmem:[%s1 + $0x38c] sm:$0xf]
  %v257 = vld [vmem:[%s1 + $0x390] sm:$0xf]
  %v258 = vld [vmem:[%s1 + $0x394] sm:$0xf]
  %v259 = vld [vmem:[%s1 + $0x398] sm:$0xf]
  %v260 = vld [vmem:[%s1 + $0x39c] sm:$0xf]
  %v261 = vld [vmem:[%s1 + $0x3a0] sm:$0xf]
  %v262 = vld [vmem:[%s1 + $0x3a4] sm:$0xf]
  %v263 = vld [vmem:[%s1 + $0x3a8] sm:$0xf]
  %v264 = vld [vmem:[%s1 + $0x3ac] sm:$0xf]
  %v265 = vld [vmem:[%s1 + $0x3b0] sm:$0xf]
  %v266 = vld [vmem:[%s1 + $0x3b4] sm:$0xf]
  %v267 = vld [vmem:[%s1 + $0x3b8] sm:$0xf]
  %v268 = vld [vmem:[%s1 + $0x3bc] sm:$0xf]
  %v269 = vld [vmem:[%s1 + $0x3c0] sm:$0xf]
  %v270 = vld [vmem:[%s1 + $0x3c4] sm:$0xf]
  %v271 = vld [vmem:[%s1 + $0x3c8] sm:$0xf]
  %v272 = vld [vmem:[%s1 + $0x3cc] sm:$0xf]
  %v273 = vld [vmem:[%s1 + $0x3d0] sm:$0xf]
  %v274 = vld [vmem:[%s1 + $0x3d4] sm:$0xf]
  %v275 = vld [vmem:[%s1 + $0x3d8] sm:$0xf]
  %v276 = vld [vmem:[%s1 + $0x3dc] sm:$0xf]
  %v277 = vld [vmem:[%s1 + $0x3e0] sm:$0xf]
  %v278 = vld [vmem:[%s1 + $0x3e4] sm:$0xf]
  %v279 = vld [vmem:[%s1 + $0x3e8] sm:$0xf]
  %v280 = vld [vmem:[%s1 + $0x3ec] sm:$0xf]
  %v281 = vld [vmem:[%s1 + $0x3f0] sm:$0xf]
  %v282 = vld [vmem:[%s1 + $0x3f4] sm:$0xf]
  %v283 = vld [vmem:[%s1 + $0x3f8] sm:$0xf]
  %v284 = vld [vmem:[%s1 + $0x3fc] sm:$0xf]
  %v285 = vld [vmem:[%s1 + $0x400] sm:$0xf]
  %v286 = vld [vmem:[%s1 + $0x404] sm:$0xf]
  %v287 = vld [vmem:[%s1 + $0x408] sm:$0xf]
  %v288 = vld [vmem:[%s1 + $0x40c] sm:$0xf]
  %v289 = vld [vmem:[%s1 + $0x410] sm:$0xf]
  %v290 = vld [vmem:[%s1 + $0x414] sm:$0xf]
  %v291 = vld [vmem:[%s1 + $0x418] sm:$0xf]
  %v292 = vld [vmem:[%s1 + $0x41c] sm:$0xf]
  %v293 = vld [vmem:[%s1 + $0x420] sm:$0xf]
  %v294 = vld [vmem:[%s1 + $0x424] sm:$0xf]
  %v295 = vld [vmem:[%s1 + $0x428] sm:$0xf]
  %v296 = vld [vmem:[%s1 + $0x42c] sm:$0xf]
  %v297 = vld [vmem:[%s1 + $0x430] sm:$0xf]
  %v298 = vld [vmem:[%s1 + $0x434] sm:$0xf]
  %v299 = vld [vmem:[%s1 + $0x438] sm:$0xf]
  %v300 = vld [vmem:[%s1 + $0x43c] sm:$0xf]
  %v301 = vld [vmem:[%s1 + $0x440] sm:$0xf]
  %v302 = vld [vmem:[%s1 + $0x444] sm:$0xf]
  %v303 = vld [vmem:[%s1 + $0x448] sm:$0xf]
  %v304 = vld [vmem:[%s1 + $0x44c] sm:$0xf]
  %v305 = vld [vmem:[%s1 + $0x450] sm:$0xf]
  %v306 = vld [vmem:[%s1 + $0x454] sm:$0xf]
  %v307 = vld [vmem:[%s1 + $0x458] sm:$0xf]
  %v308 = vld [vmem:[%s1 + $0x45c] sm:$0xf]
  %v309 = vld [vmem:[%s1 + $0x460] sm:$0xf]
  %v310 = vld [vmem:[%s1 + $0x464] sm:$0xf]
  %v311 = vld [vmem:[%s1 + $0x468] sm:$0xf]
  %v312 = vld [vmem:[%s1 + $0x46c] sm:$0xf]
  %v313 = vld [vmem:[%s1 + $0x470] sm:$0xf]
  %v314 = vld [vmem:[%s1 + $0x474] sm:$0xf]
  %v315 = vld [vmem:[%s1 + $0x478] sm:$0xf]
  %v316 = vld [vmem:[%s1 + $0x47c] sm:$0xf]
  %v317 = vld [vmem:[%s1 + $0x480] sm:$0xf]
  %v318 = vld [vmem:[%s1 + $0x484] sm:$0xf]
  %v319 = vld [vmem:[%s1 + $0x488] sm:$0xf]
  %v320 = vld [vmem:[%s1 + $0x48c] sm:$0xf]
  %v321 = vld [vmem:[%s1 + $0x490] sm:$0xf]
  %v322 = vld [vmem:[%s1 + $0x494] sm:$0xf]
  %v323 = vld [vmem:[%s1 + $0x498] sm:$0xf]
  %v324 = vld [vmem:[%s1 + $0x49c] sm:$0xf]
  %v325 = vld [vmem:[%s1 + $0x4a0] sm:$0xf]
  %v326 = vld [vmem:[%s1 + $0x4a4] sm:$0xf]
  %v327 = vld [vmem:[%s1 + $0x4a8] sm:$0xf]
  %v328 = vld [vmem:[%s1 + $0x4ac] sm:$0xf]
  %v329 = vld [vmem:[%s1 + $0x4b0] sm:$0xf]
  %v330 = vld [vmem:[%s1 + $0x4b4] sm:$0xf]
  %v331 = vld [vmem:[%s1 + $0x4b8] sm:$0xf]
  %v332 = vld [vmem:[%s1 + $0x4bc] sm:$0xf]
  %v333 = vld [vmem:[%s1 + $0x4c0] sm:$0xf]
  %v334 = vld [vmem:[%s1 + $0x4c4] sm:$0xf]
  %v335 = vld [vmem:[%s1 + $0x4c8] sm:$0xf]
  %v336 = vld [vmem:[%s1 + $0x4cc] sm:$0xf]
  %v337 = vld [vmem:[%s1 + $0x4d0] sm:$0xf]
  %v338 = vld [vmem:[%s1 + $0x4d4] sm:$0xf]
  %v339 = vld [vmem:[%s1 + $0x4d8] sm:$0xf]
  %v340 = vld [vmem:[%s1 + $0x4dc] sm:$0xf]
  %v341 = vld [vmem:[%s1 + $0x4e0] sm:$0xf]
  %v342 = vld [vmem:[%s1 + $0x4e4] sm:$0xf]
  %v343 = vld [vmem:[%s1 + $0x4e8] sm:$0xf]
  %v344 = vld [vmem:[%s1 + $0x4ec] sm:$0xf]
  %v345 = vld [vmem:[%s1 + $0x4f0] sm:$0xf]
  %v346 = vld [vmem:[%s1 + $0x4f4] sm:$0xf]
  %v347 = vld [vmem:[%s1 + $0x4f8] sm:$0xf]
  %v348 = vld [vmem:[%s1 + $0x4fc] sm:$0xf]
  %v349 = vld [vmem:[%s1 + $0x500] sm:$0xf]
  %v350 = vld [vmem:[%s1 + $0x504] sm:$0xf]
  %v351 = vld [vmem:[%s1 + $0x508] sm:$0xf]
  %v352 = vld [vmem:[%s1 + $0x50c] sm:$0xf]
  %v353 = vld [vmem:[%s1 + $0x510] sm:$0xf]
  %v354 = vld [vmem:[%s1 + $0x514] sm:$0xf]
  %v355 = vld [vmem:[%s1 + $0x518] sm:$0xf]
  %v356 = vld [vmem:[%s1 + $0x51c] sm:$0xf]
  %v357 = vld [vmem:[%s1 + $0x520] sm:$0xf]
  %v358 = vld [vmem:[%s1 + $0x524] sm:$0xf]
  %v359 = vld [vmem:[%s1 + $0x528] sm:$0xf]
  %v360 = vld [vmem:[%s1 + $0x52c] sm:$0xf]
  %v361 = vld [vmem:[%s1 + $0x530] sm:$0xf]
  %v362 = vld [vmem:[%s1 + $0x534] sm:$0xf]
  %v363 = vld [vmem:[%s1 + $0x538] sm:$0xf]
  %v364 = vld [vmem:[%s1 + $0x53c] sm:$0xf]
  %v365 = vld [vmem:[%s1 + $0x540] sm:$0xf]
  %v366 = vld [vmem:[%s1 + $0x544] sm:$0xf]
  %v367 = vld [vmem:[%s1 + $0x548] sm:$0xf]
  %v368 = vld [vmem:[%s1 + $0x54c] sm:$0xf]
  %v369 = vld [vmem:[%s1 + $0x550] sm:$0xf]
  %v370 = vld [vmem:[%s1 + $0x554] sm:$0xf]
  %v371 = vld [vmem:[%s1 + $0x558] sm:$0xf]
  %v372 = vld [vmem:[%s1 + $0x55c] sm:$0xf]
  %v373 = vld [vmem:[%s1 + $0x560] sm:$0xf]
  %v374 = vld [vmem:[%s1 + $0x564] sm:$0xf]
  %v375 = vld [vmem:[%s1 + $0x568] sm:$0xf]
  %v376 = vld [vmem:[%s1 + $0x56c] sm:$0xf]
  %v377 = vld [vmem:[%s1 + $0x570] sm:$0xf]
  %v378 = vld [vmem:[%s1 + $0x574] sm:$0xf]
  %v379 = vld [vmem:[%s1 + $0x578] sm:$0xf]
  %v380 = vld [vmem:[%s1 + $0x57c] sm:$0xf]
  %v381 = vld [vmem:[%s1 + $0x580] sm:$0xf]
  %v382 = vld [vmem:[%s1 + $0x584] sm:$0xf]
  %v383 = vld [vmem:[%s1 + $0x588] sm:$0xf]
  %v384 = vld [vmem:[%s1 + $0x58c] sm:$0xf]
  %v385 = vld [vmem:[%s1 + $0x590] sm:$0xf]
  %v386 = vld [vmem:[%s1 + $0x594] sm:$0xf]
  %v387 = vld [vmem:[%s1 + $0x598] sm:$0xf]
  %v388 = vld [vmem:[%s1 + $0x59c] sm:$0xf]
  %v389 = vld [vmem:[%s1 + $0x5a0] sm:$0xf]
  %v390 = vld [vmem:[%s1 + $0x5a4] sm:$0xf]
  %v391 = vld [vmem:[%s1 + $0x5a8] sm:$0xf]
  %v392 = vld [vmem:[%s1 + $0x5ac] sm:$0xf]
  %v393 = vld [vmem:[%s1 + $0x5b0] sm:$0xf]
  %v394 = vld [vmem:[%s1 + $0x5b4] sm:$0xf]
  %v395 = vld [vmem:[%s1 + $0x5b8] sm:$0xf]
  %v396 = vld [vmem:[%s1 + $0x5bc] sm:$0xf]
  %v397 = vld [vmem:[%s1 + $0x5c0] sm:$0xf]
  %v398 = vld [vmem:[%s1 + $0x5c4] sm:$0xf]
  %v399 = vld [vmem:[%s1 + $0x5c8] sm:$0xf]
  %v400 = vld [vmem:[%s1 + $0x5cc] sm:$0xf]
  %v401 = vld [vmem:[%s1 + $0x5d0] sm:$0xf]
  %v402 = vld [vmem:[%s1 + $0x5d4] sm:$0xf]
  %v403 = vld [vmem:[%s1 + $0x5d8] sm:$0xf]
  %v404 = vld [vmem:[%s1 + $0x5dc] sm:$0xf]
  %v405 = vld [vmem:[%s1 + $0x5e0] sm:$0xf]
  %v406 = vld [vmem:[%s1 + $0x5e4] sm:$0xf]
  %v407 = vld [vmem:[%s1 + $0x5e8] sm:$0xf]
  %v408 = vld [vmem:[%s1 + $0x5ec] sm:$0xf]
  %v409 = vld [vmem:[%s1 + $0x5f0] sm:$0xf]
  %v410 = vld [vmem:[%s1 + $0x5f4] sm:$0xf]
  %v411 = vld [vmem:[%s1 + $0x5f8] sm:$0xf]
  %v412 = vld [vmem:[%s1 + $0x5fc] sm:$0xf]
  %v413 = vld [vmem:[%s1 + $0x600] sm:$0xf]
  %v414 = vld [vmem:[%s1 + $0x604] sm:$0xf]
  %v415 = vld [vmem:[%s1 + $0x608] sm:$0xf]
  %v416 = vld [vmem:[%s1 + $0x60c] sm:$0xf]
  %v417 = vld [vmem:[%s1 + $0x610] sm:$0xf]
  %v418 = vld [vmem:[%s1 + $0x614] sm:$0xf]
  %v419 = vld [vmem:[%s1 + $0x618] sm:$0xf]
  %v420 = vld [vmem:[%s1 + $0x61c] sm:$0xf]
  %v421 = vld [vmem:[%s1 + $0x620] sm:$0xf]
  %v422 = vld [vmem:[%s1 + $0x624] sm:$0xf]
  %v423 = vld [vmem:[%s1 + $0x628] sm:$0xf]
  %v424 = vld [vmem:[%s1 + $0x62c] sm:$0xf]
  %v425 = vld [vmem:[%s1 + $0x630] sm:$0xf]
  %v426 = vld [vmem:[%s1 + $0x634] sm:$0xf]
  %v427 = vld [vmem:[%s1 + $0x638] sm:$0xf]
  %v428 = vld [vmem:[%s1 + $0x63c] sm:$0xf]
  %v429 = vld [vmem:[%s1 + $0x640] sm:$0xf]
  %v430 = vld [vmem:[%s1 + $0x644] sm:$0xf]
  %v431 = vld [vmem:[%s1 + $0x648] sm:$0xf]
  %v432 = vld [vmem:[%s1 + $0x64c] sm:$0xf]
  %v433 = vld [vmem:[%s1 + $0x650] sm:$0xf]
  %v434 = vld [vmem:[%s1 + $0x654] sm:$0xf]
  %v435 = vld [vmem:[%s1 + $0x658] sm:$0xf]
  %v436 = vld [vmem:[%s1 + $0x65c] sm:$0xf]
  %v437 = vld [vmem:[%s1 + $0x660] sm:$0xf]
  %v438 = vld [vmem:[%s1 + $0x664] sm:$0xf]
  %v439 = vld [vmem:[%s1 + $0x668] sm:$0xf]
  %v440 = vld [vmem:[%s1 + $0x66c] sm:$0xf]
  %v441 = vld [vmem:[%s1 + $0x670] sm:$0xf]
  %v442 = vld [vmem:[%s1 + $0x674] sm:$0xf]
  %v443 = vld [vmem:[%s1 + $0x678] sm:$0xf]
  %v444 = vld [vmem:[%s1 + $0x67c] sm:$0xf]
  %v445 = vld [vmem:[%s1 + $0x680] sm:$0xf]
  %v446 = vld [vmem:[%s1 + $0x684] sm:$0xf]
  %v447 = vld [vmem:[%s1 + $0x688] sm:$0xf]
  %v448 = vld [vmem:[%s1 + $0x68c] sm:$0xf]
  %v449 = vld [vmem:[%s1 + $0x690] sm:$0xf]
  %v450 = vld [vmem:[%s1 + $0x694] sm:$0xf]
  %v451 = vld [vmem:[%s1 + $0x698] sm:$0xf]
  %v452 = vld [vmem:[%s1 + $0x69c] sm:$0xf]
  %v453 = vld [vmem:[%s1 + $0x6a0] sm:$0xf]
  %v454 = vld [vmem:[%s1 + $0x6a4] sm:$0xf]
  %v455 = vld [vmem:[%s1 + $0x6a8] sm:$0xf]
  %v456 = vld [vmem:[%s1 + $0x6ac] sm:$0xf]
  %v457 = vld [vmem:[%s1 + $0x6b0] sm:$0xf]
  %v458 = vld [vmem:[%s1 + $0x6b4] sm:$0xf]
  %v459 = vld [vmem:[%s1 + $0x6b8] sm:$0xf]
  %v460 = vld [vmem:[%s1 + $0x6bc] sm:$0xf]
  %v461 = vld [vmem:[%s1 + $0x6c0] sm:$0xf]
  %v462 = vld [vmem:[%s1 + $0x6c4] sm:$0xf]
  %v463 = vld [vmem:[%s1 + $0x6c8] sm:$0xf]
  %v464 = vld [vmem:[%s1 + $0x6cc] sm:$0xf]
  %v465 = vld [vmem:[%s1 + $0x6d0] sm:$0xf]
  %v466 = vld [vmem:[%s1 + $0x6d4] sm:$0xf]
  %v467 = vld [vmem:[%s1 + $0x6d8] sm:$0xf]
  %v468 = vld [vmem:[%s1 + $0x6dc] sm:$0xf]
  %v469 = vld [vmem:[%s1 + $0x6e0] sm:$0xf]
  %v470 = vld [vmem:[%s1 + $0x6e4] sm:$0xf]
  %v471 = vld [vmem:[%s1 + $0x6e8] sm:$0xf]
  %v472 = vld [vmem:[%s1 + $0x6ec] sm:$0xf]
  %v473 = vld [vmem:[%s1 + $0x6f0] sm:$0xf]
  %v474 = vld [vmem:[%s1 + $0x6f4] sm:$0xf]
  %v475 = vld [vmem:[%s1 + $0x6f8] sm:$0xf]
  %v476 = vld [vmem:[%s1 + $0x6fc] sm:$0xf]
  %v477 = vld [vmem:[%s1 + $0x700] sm:$0xf]
  %v478 = vld [vmem:[%s1 + $0x704] sm:$0xf]
  %v479 = vld [vmem:[%s1 + $0x708] sm:$0xf]
  %v480 = vld [vmem:[%s1 + $0x70c] sm:$0xf]
  %v481 = vld [vmem:[%s1 + $0x710] sm:$0xf]
  %v482 = vld [vmem:[%s1 + $0x714] sm:$0xf]
  %v483 = vld [vmem:[%s1 + $0x718] sm:$0xf]
  %v484 = vld [vmem:[%s1 + $0x71c] sm:$0xf]
  %v485 = vld [vmem:[%s1 + $0x720] sm:$0xf]
  %v486 = vld [vmem:[%s1 + $0x724] sm:$0xf]
  %v487 = vld [vmem:[%s1 + $0x728] sm:$0xf]
  %v488 = vld [vmem:[%s1 + $0x72c] sm:$0xf]
  %v489 = vld [vmem:[%s1 + $0x730] sm:$0xf]
  %v490 = vld [vmem:[%s1 + $0x734] sm:$0xf]
  %v491 = vld [vmem:[%s1 + $0x738] sm:$0xf]
  %v492 = vld [vmem:[%s1 + $0x73c] sm:$0xf]
  %v493 = vld [vmem:[%s1 + $0x740] sm:$0xf]
  %v494 = vld [vmem:[%s1 + $0x744] sm:$0xf]
  %v495 = vld [vmem:[%s1 + $0x748] sm:$0xf]
  %v496 = vld [vmem:[%s1 + $0x74c] sm:$0xf]
  %v497 = vld [vmem:[%s1 + $0x750] sm:$0xf]
  %v498 = vld [vmem:[%s1 + $0x754] sm:$0xf]
  %v499 = vld [vmem:[%s1 + $0x758] sm:$0xf]
  %v500 = vld [vmem:[%s1 + $0x75c] sm:$0xf]
  %v501 = vld [vmem:[%s1 + $0x760] sm:$0xf]
  %v502 = vld [vmem:[%s1 + $0x764] sm:$0xf]
  %v503 = vld [vmem:[%s1 + $0x768] sm:$0xf]
  %v504 = vld [vmem:[%s1 + $0x76c] sm:$0xf]
  %v505 = vld [vmem:[%s1 + $0x770] sm:$0xf]
  %v506 = vld [vmem:[%s1 + $0x774] sm:$0xf]
  %v507 = vld [vmem:[%s1 + $0x778] sm:$0xf]
  %v508 = vld [vmem:[%s1 + $0x77c] sm:$0xf]
  %v509 = vld [vmem:[%s1 + $0x780] sm:$0xf]
  %v510 = vld [vmem:[%s1 + $0x784] sm:$0xf]
  %v511 = vld [vmem:[%s1 + $0x788] sm:$0xf]
  %v512 = vld [vmem:[%s1 + $0x78c] sm:$0xf]
  %v513 = vld [vmem:[%s1 + $0x790] sm:$0xf]
  %v514 = vld [vmem:[%s1 + $0x794] sm:$0xf]
  %v515 = vld [vmem:[%s1 + $0x798] sm:$0xf]
  %v516 = vld [vmem:[%s1 + $0x79c] sm:$0xf]
  %v517 = vld [vmem:[%s1 + $0x7a0] sm:$0xf]
  %v518 = vld [vmem:[%s1 + $0x7a4] sm:$0xf]
  %v519 = vld [vmem:[%s1 + $0x7a8] sm:$0xf]
  %v520 = vld [vmem:[%s1 + $0x7ac] sm:$0xf]
  %v521 = vld [vmem:[%s1 + $0x7b0] sm:$0xf]
  %v522 = vld [vmem:[%s1 + $0x7b4] sm:$0xf]
  %v523 = vld [vmem:[%s1 + $0x7b8] sm:$0xf]
  %v524 = vld [vmem:[%s1 + $0x7bc] sm:$0xf]
  %v525 = vld [vmem:[%s1 + $0x7c0] sm:$0xf]
  %v526 = vld [vmem:[%s1 + $0x7c4] sm:$0xf]
  %v527 = vld [vmem:[%s1 + $0x7c8] sm:$0xf]
  %v528 = vld [vmem:[%s1 + $0x7cc] sm:$0xf]
  %v529 = vld [vmem:[%s1 + $0x7d0] sm:$0xf]
  %v530 = vld [vmem:[%s1 + $0x7d4] sm:$0xf]
  %v531 = vld [vmem:[%s1 + $0x7d8] sm:$0xf]
  %v532 = vld [vmem:[%s1 + $0x7dc] sm:$0xf]
  %v533 = vld [vmem:[%s1 + $0x7e0] sm:$0xf]
  %v534 = vld [vmem:[%s1 + $0x7e4] sm:$0xf]
  %v535 = vld [vmem:[%s1 + $0x7e8] sm:$0xf]
  %v536 = vld [vmem:[%s1 + $0x7ec] sm:$0xf]
  %v537 = vld [vmem:[%s1 + $0x7f0] sm:$0xf]
  %v538 = vld [vmem:[%s1 + $0x7f4] sm:$0xf]
  %v539 = vld [vmem:[%s1 + $0x7f8] sm:$0xf]
  %v540 = vld [vmem:[%s1 + $0x7fc] sm:$0xf]
  %v541 = vld [vmem:[%s1 + $0x800] sm:$0xf]
  %v542 = vld [vmem:[%s1 + $0x804] sm:$0xf]
  %v543 = vld [vmem:[%s1 + $0x808] sm:$0xf]
  %v544 = vld [vmem:[%s1 + $0x80c] sm:$0xf]
  %v545 = vld [vmem:[%s1 + $0x810] sm:$0xf]
  %v546 = vld [vmem:[%s1 + $0x814] sm:$0xf]
  %v547 = vld [vmem:[%s1 + $0x818] sm:$0xf]
  %v548 = vld [vmem:[%s1 + $0x81c] sm:$0xf]
  %v549 = vld [vmem:[%s1 + $0x820] sm:$0xf]
  %v550 = vld [vmem:[%s1 + $0x824] sm:$0xf]
  %v551 = vld [vmem:[%s1 + $0x828] sm:$0xf]
  %v552 = vld [vmem:[%s1 + $0x82c] sm:$0xf]
  %v553 = vld [vmem:[%s1 + $0x830] sm:$0xf]
  %v554 = vld [vmem:[%s1 + $0x834] sm:$0xf]
  %v555 = vld [vmem:[%s1 + $0x838] sm:$0xf]
  %v556 = vld [vmem:[%s1 + $0x83c] sm:$0xf]
  %v557 = vld [vmem:[%s1 + $0x840] sm:$0xf]
  %v558 = vld [vmem:[%s1 + $0x844] sm:$0xf]
  %v559 = vld [vmem:[%s1 + $0x848] sm:$0xf]
  %v560 = vld [vmem:[%s1 + $0x84c] sm:$0xf]
  %v561 = vld [vmem:[%s1 + $0x850] sm:$0xf]
  %v562 = vld [vmem:[%s1 + $0x854] sm:$0xf]
  %v563 = vld [vmem:[%s1 + $0x858] sm:$0xf]
  %v564 = vld [vmem:[%s1 + $0x85c] sm:$0xf]
  %v565 = vld [vmem:[%s1 + $0x860] sm:$0xf]
  %v566 = vld [vmem:[%s1 + $0x864] sm:$0xf]
  %v567 = vld [vmem:[%s1 + $0x868] sm:$0xf]
  %v568 = vld [vmem:[%s1 + $0x86c] sm:$0xf]
  %v569 = vld [vmem:[%s1 + $0x870] sm:$0xf]
  %v570 = vld [vmem:[%s1 + $0x874] sm:$0xf]
  %v571 = vld [vmem:[%s1 + $0x878] sm:$0xf]
  %v572 = vld [vmem:[%s1 + $0x87c] sm:$0xf]
  %v573 = vld [vmem:[%s1 + $0x880] sm:$0xf]
  %v574 = vld [vmem:[%s1 + $0x884] sm:$0xf]
  %v575 = vld [vmem:[%s1 + $0x888] sm:$0xf]
  %v576 = vld [vmem:[%s1 + $0x88c] sm:$0xf]
  %v577 = vld [vmem:[%s1 + $0x890] sm:$0xf]
  %v578 = vld [vmem:[%s1 + $0x894] sm:$0xf]
  %v579 = vld [vmem:[%s1 + $0x898] sm:$0xf]
  %v580 = vld [vmem:[%s1 + $0x89c] sm:$0xf]
  %v581 = vld [vmem:[%s1 + $0x8a0] sm:$0xf]
  %v582 = vld [vmem:[%s1 + $0x8a4] sm:$0xf]
  %v583 = vld [vmem:[%s1 + $0x8a8] sm:$0xf]
  %v584 = vld [vmem:[%s1 + $0x8ac] sm:$0xf]
  %v585 = vld [vmem:[%s1 + $0x8b0] sm:$0xf]
  %v586 = vld [vmem:[%s1 + $0x8b4] sm:$0xf]
  %v587 = vld [vmem:[%s1 + $0x8b8] sm:$0xf]
  %v588 = vld [vmem:[%s1 + $0x8bc] sm:$0xf]
  %v589 = vld [vmem:[%s1 + $0x8c0] sm:$0xf]
  %v590 = vld [vmem:[%s1 + $0x8c4] sm:$0xf]
  %v591 = vld [vmem:[%s1 + $0x8c8] sm:$0xf]
  %v592 = vld [vmem:[%s1 + $0x8cc] sm:$0xf]
  %v593 = vld [vmem:[%s1 + $0x8d0] sm:$0xf]
  %v594 = vld [vmem:[%s1 + $0x8d4] sm:$0xf]
  %v595 = vld [vmem:[%s1 + $0x8d8] sm:$0xf]
  %v596 = vld [vmem:[%s1 + $0x8dc] sm:$0xf]
  %v597 = vld [vmem:[%s1 + $0x8e0] sm:$0xf]
  %v598 = vld [vmem:[%s1 + $0x8e4] sm:$0xf]
  %v599 = vld [vmem:[%s1 + $0x8e8] sm:$0xf]
  %v600 = vld [vmem:[%s1 + $0x8ec] sm:$0xf]
  %v601 = vld [vmem:[%s1 + $0x8f0] sm:$0xf]
  %v602 = vld [vmem:[%s1 + $0x8f4] sm:$0xf]
  %v603 = vld [vmem:[%s1 + $0x8f8] sm:$0xf]
  %v604 = vld [vmem:[%s1 + $0x8fc] sm:$0xf]
  %v605 = vld [vmem:[%s1 + $0x900] sm:$0xf]
  %v606 = vld [vmem:[%s1 + $0x904] sm:$0xf]
  %v607 = vld [vmem:[%s1 + $0x908] sm:$0xf]
  %v608 = vld [vmem:[%s1 + $0x90c] sm:$0xf]
  %v609 = vld [vmem:[%s1 + $0x910] sm:$0xf]
  %v610 = vld [vmem:[%s1 + $0x914] sm:$0xf]
  %v611 = vld [vmem:[%s1 + $0x918] sm:$0xf]
  %v612 = vld [vmem:[%s1 + $0x91c] sm:$0xf]
  %v613 = vld [vmem:[%s1 + $0x920] sm:$0xf]
  %v614 = vld [vmem:[%s1 + $0x924] sm:$0xf]
  %v615 = vld [vmem:[%s1 + $0x928] sm:$0xf]
  %v616 = vld [vmem:[%s1 + $0x92c] sm:$0xf]
  %v617 = vld [vmem:[%s1 + $0x930] sm:$0xf]
  %v618 = vld [vmem:[%s1 + $0x934] sm:$0xf]
  %v619 = vld [vmem:[%s1 + $0x938] sm:$0xf]
  %v620 = vld [vmem:[%s1 + $0x93c] sm:$0xf]
  %v621 = vld [vmem:[%s1 + $0x940] sm:$0xf]
  %v622 = vld [vmem:[%s1 + $0x944] sm:$0xf]
  %v623 = vld [vmem:[%s1 + $0x948] sm:$0xf]
  %v624 = vld [vmem:[%s1 + $0x94c] sm:$0xf]
  %v625 = vld [vmem:[%s1 + $0x950] sm:$0xf]
  %v626 = vld [vmem:[%s1 + $0x954] sm:$0xf]
  %v627 = vld [vmem:[%s1 + $0x958] sm:$0xf]
  %v628 = vld [vmem:[%s1 + $0x95c] sm:$0xf]
  %v629 = vld [vmem:[%s1 + $0x960] sm:$0xf]
  %v630 = vld [vmem:[%s1 + $0x964] sm:$0xf]
  %v631 = vld [vmem:[%s1 + $0x968] sm:$0xf]
  %v632 = vld [vmem:[%s1 + $0x96c] sm:$0xf]
  %v633 = vld [vmem:[%s1 + $0x970] sm:$0xf]
  %v634 = vld [vmem:[%s1 + $0x974] sm:$0xf]
  %v635 = vld [vmem:[%s1 + $0x978] sm:$0xf]
  %v636 = vld [vmem:[%s1 + $0x97c] sm:$0xf]
  %v637 = vld [vmem:[%s1 + $0x980] sm:$0xf]
  %v638 = vld [vmem:[%s1 + $0x984] sm:$0xf]
  %v639 = vld [vmem:[%s1 + $0x988] sm:$0xf]
  %v640 = vld [vmem:[%s1 + $0x98c] sm:$0xf]
  %v641 = vld [vmem:[%s1 + $0x990] sm:$0xf]
  %v642 = vld [vmem:[%s1 + $0x994] sm:$0xf]
  %v643 = vld [vmem:[%s1 + $0x998] sm:$0xf]
  %v644 = vld [vmem:[%s1 + $0x99c] sm:$0xf]
  %v645 = vld [vmem:[%s1 + $0x9a0] sm:$0xf]
  %v646 = vld [vmem:[%s1 + $0x9a4] sm:$0xf]
  %v647 = vld [vmem:[%s1 + $0x9a8] sm:$0xf]
  %v648 = vld [vmem:[%s1 + $0x9ac] sm:$0xf]
  %v649 = vld [vmem:[%s1 + $0x9b0] sm:$0xf]
  %v650 = vld [vmem:[%s1 + $0x9b4] sm:$0xf]
  %v651 = vld [vmem:[%s1 + $0x9b8] sm:$0xf]
  %v652 = vld [vmem:[%s1 + $0x9bc] sm:$0xf]
  %v653 = vld [vmem:[%s1 + $0x9c0] sm:$0xf]
  %v654 = vld [vmem:[%s1 + $0x9c4] sm:$0xf]
  %v655 = vld [vmem:[%s1 + $0x9c8] sm:$0xf]
  %v656 = vld [vmem:[%s1 + $0x9cc] sm:$0xf]
  %v657 = vld [vmem:[%s1 + $0x9d0] sm:$0xf]
  %v658 = vld [vmem:[%s1 + $0x9d4] sm:$0xf]
  %v659 = vld [vmem:[%s1 + $0x9d8] sm:$0xf]
  %v660 = vld [vmem:[%s1 + $0x9dc] sm:$0xf]
  %v661 = vld [vmem:[%s1 + $0x9e0] sm:$0xf]
  %v662 = vld [vmem:[%s1 + $0x9e4] sm:$0xf]
  %v663 = vld [vmem:[%s1 + $0x9e8] sm:$0xf]
  %v664 = vld [vmem:[%s1 + $0x9ec] sm:$0xf]
  %v665 = vld [vmem:[%s1 + $0x9f0] sm:$0xf]
  %v666 = vld [vmem:[%s1 + $0x9f4] sm:$0xf]
  %v667 = vld [vmem:[%s1 + $0x9f8] sm:$0xf]
  %v668 = vld [vmem:[%s1 + $0x9fc] sm:$0xf]
  %v669 = vld [vmem:[%s1 + $0xa00] sm:$0xf]
  %v670 = vld [vmem:[%s1 + $0xa04] sm:$0xf]
  %v671 = vld [vmem:[%s1 + $0xa08] sm:$0xf]
  %v672 = vld [vmem:[%s1 + $0xa0c] sm:$0xf]
  %v673 = vld [vmem:[%s1 + $0xa10] sm:$0xf]
  %v674 = vld [vmem:[%s1 + $0xa14] sm:$0xf]
  %v675 = vld [vmem:[%s1 + $0xa18] sm:$0xf]
  %v676 = vld [vmem:[%s1 + $0xa1c] sm:$0xf]
  %v677 = vld [vmem:[%s1 + $0xa20] sm:$0xf]
  %v678 = vld [vmem:[%s1 + $0xa24] sm:$0xf]
  %v679 = vld [vmem:[%s1 + $0xa28] sm:$0xf]
  %v680 = vld [vmem:[%s1 + $0xa2c] sm:$0xf]
  %v681 = vld [vmem:[%s1 + $0xa30] sm:$0xf]
  %v682 = vld [vmem:[%s1 + $0xa34] sm:$0xf]
  %v683 = vld [vmem:[%s1 + $0xa38] sm:$0xf]
  %v684 = vld [vmem:[%s1 + $0xa3c] sm:$0xf]
  %v685 = vld [vmem:[%s1 + $0xa40] sm:$0xf]
  %v686 = vld [vmem:[%s1 + $0xa44] sm:$0xf]
  %v687 = vld [vmem:[%s1 + $0xa48] sm:$0xf]
  %v688 = vld [vmem:[%s1 + $0xa4c] sm:$0xf]
  %v689 = vld [vmem:[%s1 + $0xa50] sm:$0xf]
  %v690 = vld [vmem:[%s1 + $0xa54] sm:$0xf]
  %v691 = vld [vmem:[%s1 + $0xa58] sm:$0xf]
  %v692 = vld [vmem:[%s1 + $0xa5c] sm:$0xf]
  %v693 = vld [vmem:[%s1 + $0xa60] sm:$0xf]
  %v694 = vld [vmem:[%s1 + $0xa64] sm:$0xf]
  %v695 = vld [vmem:[%s1 + $0xa68] sm:$0xf]
  %v696 = vld [vmem:[%s1 + $0xa6c] sm:$0xf]
  %v697 = vld [vmem:[%s1 + $0xa70] sm:$0xf]
  %v698 = vld [vmem:[%s1 + $0xa74] sm:$0xf]
  %v699 = vld [vmem:[%s1 + $0xa78] sm:$0xf]
  %v700 = vld [vmem:[%s1 + $0xa7c] sm:$0xf]
  %v701 = vld [vmem:[%s1 + $0xa80] sm:$0xf]
  %v702 = vld [vmem:[%s1 + $0xa84] sm:$0xf]
  %v703 = vld [vmem:[%s1 + $0xa88] sm:$0xf]
  %v704 = vld [vmem:[%s1 + $0xa8c] sm:$0xf]
  %v705 = vld [vmem:[%s1 + $0xa90] sm:$0xf]
  %v706 = vld [vmem:[%s1 + $0xa94] sm:$0xf]
  %v707 = vld [vmem:[%s1 + $0xa98] sm:$0xf]
  %v708 = vld [vmem:[%s1 + $0xa9c] sm:$0xf]
  %v709 = vld [vmem:[%s1 + $0xaa0] sm:$0xf]
  %v710 = vld [vmem:[%s1 + $0xaa4] sm:$0xf]
  %v711 = vld [vmem:[%s1 + $0xaa8] sm:$0xf]
  %v712 = vld [vmem:[%s1 + $0xaac] sm:$0xf]
  %v713 = vld [vmem:[%s1 + $0xab0] sm:$0xf]
  %v714 = vld [vmem:[%s1 + $0xab4] sm:$0xf]
  %v715 = vld [vmem:[%s1 + $0xab8] sm:$0xf]
  %v716 = vld [vmem:[%s1 + $0xabc] sm:$0xf]
  %v717 = vld [vmem:[%s1 + $0xac0] sm:$0xf]
  %v718 = vld [vmem:[%s1 + $0xac4] sm:$0xf]
  %v719 = vld [vmem:[%s1 + $0xac8] sm:$0xf]
  %v720 = vld [vmem:[%s1 + $0xacc] sm:$0xf]
  %v721 = vld [vmem:[%s1 + $0xad0] sm:$0xf]
  %v722 = vld [vmem:[%s1 + $0xad4] sm:$0xf]
  %v723 = vld [vmem:[%s1 + $0xad8] sm:$0xf]
  %v724 = vld [vmem:[%s1 + $0xadc] sm:$0xf]
  %v725 = vld [vmem:[%s1 + $0xae0] sm:$0xf]
  %v726 = vld [vmem:[%s1 + $0xae4] sm:$0xf]
  %v727 = vld [vmem:[%s1 + $0xae8] sm:$0xf]
  %v728 = vld [vmem:[%s1 + $0xaec] sm:$0xf]
  %v729 = vld [vmem:[%s1 + $0xaf0] sm:$0xf]
  %v730 = vld [vmem:[%s1 + $0xaf4] sm:$0xf]
  %v731 = vld [vmem:[%s1 + $0xaf8] sm:$0xf]
  %v732 = vld [vmem:[%s1 + $0xafc] sm:$0xf]
  %v733 = vld [vmem:[%s1 + $0xb00] sm:$0xf]
  %v734 = vld [vmem:[%s1 + $0xb04] sm:$0xf]
  %v735 = vld [vmem:[%s1 + $0xb08] sm:$0xf]
  %v736 = vld [vmem:[%s1 + $0xb0c] sm:$0xf]
  %v737 = vld [vmem:[%s1 + $0xb10] sm:$0xf]
  %v738 = vld [vmem:[%s1 + $0xb14] sm:$0xf]
  %v739 = vld [vmem:[%s1 + $0xb18] sm:$0xf]
  %v740 = vld [vmem:[%s1 + $0xb1c] sm:$0xf]
  %v741 = vld [vmem:[%s1 + $0xb20] sm:$0xf]
  %v742 = vld [vmem:[%s1 + $0xb24] sm:$0xf]
  %v743 = vld [vmem:[%s1 + $0xb28] sm:$0xf]
  %v744 = vld [vmem:[%s1 + $0xb2c] sm:$0xf]
  %v745 = vld [vmem:[%s1 + $0xb30] sm:$0xf]
  %v746 = vld [vmem:[%s1 + $0xb34] sm:$0xf]
  %v747 = vld [vmem:[%s1 + $0xb38] sm:$0xf]
  %v748 = vld [vmem:[%s1 + $0xb3c] sm:$0xf]
  %v749 = vld [vmem:[%s1 + $0xb40] sm:$0xf]
  %v750 = vld [vmem:[%s1 + $0xb44] sm:$0xf]
  %v751 = vld [vmem:[%s1 + $0xb48] sm:$0xf]
  %v752 = vld [vmem:[%s1 + $0xb4c] sm:$0xf]
  %v753 = vld [vmem:[%s1 + $0xb50] sm:$0xf]
  %v754 = vld [vmem:[%s1 + $0xb54] sm:$0xf]
  %v755 = vld [vmem:[%s1 + $0xb58] sm:$0xf]
  %v756 = vld [vmem:[%s1 + $0xb5c] sm:$0xf]
  %v757 = vld [vmem:[%s1 + $0xb60] sm:$0xf]
  %v758 = vld [vmem:[%s1 + $0xb64] sm:$0xf]
  %v759 = vld [vmem:[%s1 + $0xb68] sm:$0xf]
  %v760 = vld [vmem:[%s1 + $0xb6c] sm:$0xf]
  %v761 = vld [vmem:[%s1 + $0xb70] sm:$0xf]
  %v762 = vld [vmem:[%s1 + $0xb74] sm:$0xf]
  %v763 = vld [vmem:[%s1 + $0xb78] sm:$0xf]
  %v764 = vld [vmem:[%s1 + $0xb7c] sm:$0xf]
  %v765 = vld [vmem:[%s1 + $0xb80] sm:$0xf]
  %v766 = vld [vmem:[%s1 + $0xb84] sm:$0xf]
  %v767 = vld [vmem:[%s1 + $0xb88] sm:$0xf]
  %v768 = vld [vmem:[%s1 + $0xb8c] sm:$0xf]
  %v769 = vld [vmem:[%s1 + $0xb90] sm:$0xf]
  %v770 = vld [vmem:[%s1 + $0xb94] sm:$0xf]
  %v771 = vld [vmem:[%s1 + $0xb98] sm:$0xf]
  %v772 = vld [vmem:[%s1 + $0xb9c] sm:$0xf]
  %v773 = vld [vmem:[%s1 + $0xba0] sm:$0xf]
  %v774 = vld [vmem:[%s1 + $0xba4] sm:$0xf]
  %v775 = vld [vmem:[%s1 + $0xba8] sm:$0xf]
  %v776 = vld [vmem:[%s1 + $0xbac] sm:$0xf]
  %v777 = vld [vmem:[%s1 + $0xbb0] sm:$0xf]
  %v778 = vld [vmem:[%s1 + $0xbb4] sm:$0xf]
  %v779 = vld [vmem:[%s1 + $0xbb8] sm:$0xf]
  %v780 = vld [vmem:[%s1 + $0xbbc] sm:$0xf]
  %v781 = vld [vmem:[%s1 + $0xbc0] sm:$0xf]
  %v782 = vld [vmem:[%s1 + $0xbc4] sm:$0xf]
  %v783 = vld [vmem:[%s1 + $0xbc8] sm:$0xf]
  %v784 = vld [vmem:[%s1 + $0xbcc] sm:$0xf]
  %v785 = vld [vmem:[%s1 + $0xbd0] sm:$0xf]
  %v786 = vld [vmem:[%s1 + $0xbd4] sm:$0xf]
  %v787 = vld [vmem:[%s1 + $0xbd8] sm:$0xf]
  %v788 = vld [vmem:[%s1 + $0xbdc] sm:$0xf]
  %v789 = vld [vmem:[%s1 + $0xbe0] sm:$0xf]
  %v790 = vld [vmem:[%s1 + $0xbe4] sm:$0xf]
  %v791 = vld [vmem:[%s1 + $0xbe8] sm:$0xf]
  %v792 = vld [vmem:[%s1 + $0xbec] sm:$0xf]
  %v793 = vld [vmem:[%s1 + $0xbf0] sm:$0xf]
  %v794 = vld [vmem:[%s1 + $0xbf4] sm:$0xf]
  %v795 = vld [vmem:[%s1 + $0xbf8] sm:$0xf]
  %v796 = vld [vmem:[%s1 + $0xbfc] sm:$0xf]
  %v797 = vld [vmem:[%s1 + $0xc00] sm:$0xf]
  %v798 = vld [vmem:[%s1 + $0xc04] sm:$0xf]
  %v799 = vld [vmem:[%s1 + $0xc08] sm:$0xf]
  %v800 = vld [vmem:[%s1 + $0xc0c] sm:$0xf]
  %v801 = vld [vmem:[%s1 + $0xc10] sm:$0xf]
  %v802 = vld [vmem:[%s1 + $0xc14] sm:$0xf]
  %v803 = vld [vmem:[%s1 + $0xc18] sm:$0xf]
  %v804 = vld [vmem:[%s1 + $0xc1c] sm:$0xf]
  %v805 = vld [vmem:[%s1 + $0xc20] sm:$0xf]
  %v806 = vld [vmem:[%s1 + $0xc24] sm:$0xf]
  %v807 = vld [vmem:[%s1 + $0xc28] sm:$0xf]
  %v808 = vld [vmem:[%s1 + $0xc2c] sm:$0xf]
  %v809 = vld [vmem:[%s1 + $0xc30] sm:$0xf]
  %v810 = vld [vmem:[%s1 + $0xc34] sm:$0xf]
  %v811 = vld [vmem:[%s1 + $0xc38] sm:$0xf]
  %v812 = vld [vmem:[%s1 + $0xc3c] sm:$0xf]
  %v813 = vld [vmem:[%s1 + $0xc40] sm:$0xf]
  %v814 = vld [vmem:[%s1 + $0xc44] sm:$0xf]
  %v815 = vld [vmem:[%s1 + $0xc48] sm:$0xf]
  %v816 = vld [vmem:[%s1 + $0xc4c] sm:$0xf]
  %v817 = vld [vmem:[%s1 + $0xc50] sm:$0xf]
  %v818 = vld [vmem:[%s1 + $0xc54] sm:$0xf]
  %v819 = vld [vmem:[%s1 + $0xc58] sm:$0xf]
  %v820 = vld [vmem:[%s1 + $0xc5c] sm:$0xf]
  %v821 = vld [vmem:[%s1 + $0xc60] sm:$0xf]
  %v822 = vld [vmem:[%s1 + $0xc64] sm:$0xf]
  %v823 = vld [vmem:[%s1 + $0xc68] sm:$0xf]
  %v824 = vld [vmem:[%s1 + $0xc6c] sm:$0xf]
  %v825 = vld [vmem:[%s1 + $0xc70] sm:$0xf]
  %v826 = vld [vmem:[%s1 + $0xc74] sm:$0xf]
  %v827 = vld [vmem:[%s1 + $0xc78] sm:$0xf]
  %v828 = vld [vmem:[%s1 + $0xc7c] sm:$0xf]
  %v829 = vld [vmem:[%s1 + $0xc80] sm:$0xf]
  %v830 = vld [vmem:[%s1 + $0xc84] sm:$0xf]
  %v831 = vld [vmem:[%s1 + $0xc88] sm:$0xf]
  %v832 = vld [vmem:[%s1 + $0xc8c] sm:$0xf]
  %v833 = vld [vmem:[%s1 + $0xc90] sm:$0xf]
  %v834 = vld [vmem:[%s1 + $0xc94] sm:$0xf]
  %v835 = vld [vmem:[%s1 + $0xc98] sm:$0xf]
  %v836 = vld [vmem:[%s1 + $0xc9c] sm:$0xf]
  %v837 = vld [vmem:[%s1 + $0xca0] sm:$0xf]
  %v838 = vld [vmem:[%s1 + $0xca4] sm:$0xf]
  %v839 = vld [vmem:[%s1 + $0xca8] sm:$0xf]
  %v840 = vld [vmem:[%s1 + $0xcac] sm:$0xf]
  %v841 = vld [vmem:[%s1 + $0xcb0] sm:$0xf]
  %v842 = vld [vmem:[%s1 + $0xcb4] sm:$0xf]
  %v843 = vld [vmem:[%s1 + $0xcb8] sm:$0xf]
  %v844 = vld [vmem:[%s1 + $0xcbc] sm:$0xf]
  %v845 = vld [vmem:[%s1 + $0xcc0] sm:$0xf]
  %v846 = vld [vmem:[%s1 + $0xcc4] sm:$0xf]
  %v847 = vld [vmem:[%s1 + $0xcc8] sm:$0xf]
  %v848 = vld [vmem:[%s1 + $0xccc] sm:$0xf]
  %v849 = vld [vmem:[%s1 + $0xcd0] sm:$0xf]
  %v850 = vld [vmem:[%s1 + $0xcd4] sm:$0xf]
  %v851 = vld [vmem:[%s1 + $0xcd8] sm:$0xf]
  %v852 = vld [vmem:[%s1 + $0xcdc] sm:$0xf]
  %v853 = vld [vmem:[%s1 + $0xce0] sm:$0xf]
  %v854 = vld [vmem:[%s1 + $0xce4] sm:$0xf]
  %v855 = vld [vmem:[%s1 + $0xce8] sm:$0xf]
  %v856 = vld [vmem:[%s1 + $0xcec] sm:$0xf]
  %v857 = vld [vmem:[%s1 + $0xcf0] sm:$0xf]
  %v858 = vld [vmem:[%s1 + $0xcf4] sm:$0xf]
  %v859 = vld [vmem:[%s1 + $0xcf8] sm:$0xf]
  %v860 = vld [vmem:[%s1 + $0xcfc] sm:$0xf]
  %v861 = vld [vmem:[%s1 + $0xd00] sm:$0xf]
  %v862 = vld [vmem:[%s1 + $0xd04] sm:$0xf]
  %v863 = vld [vmem:[%s1 + $0xd08] sm:$0xf]
  %v864 = vld [vmem:[%s1 + $0xd0c] sm:$0xf]
  %v865 = vld [vmem:[%s1 + $0xd10] sm:$0xf]
  %v866 = vld [vmem:[%s1 + $0xd14] sm:$0xf]
  %v867 = vld [vmem:[%s1 + $0xd18] sm:$0xf]
  %v868 = vld [vmem:[%s1 + $0xd1c] sm:$0xf]
  %v869 = vld [vmem:[%s1 + $0xd20] sm:$0xf]
  %v870 = vld [vmem:[%s1 + $0xd24] sm:$0xf]
  %v871 = vld [vmem:[%s1 + $0xd28] sm:$0xf]
  %v872 = vld [vmem:[%s1 + $0xd2c] sm:$0xf]
  %v873 = vld [vmem:[%s1 + $0xd30] sm:$0xf]
  %v874 = vld [vmem:[%s1 + $0xd34] sm:$0xf]
  %v875 = vld [vmem:[%s1 + $0xd38] sm:$0xf]
  %v876 = vld [vmem:[%s1 + $0xd3c] sm:$0xf]
  %v877 = vld [vmem:[%s1 + $0xd40] sm:$0xf]
  %v878 = vld [vmem:[%s1 + $0xd44] sm:$0xf]
  %v879 = vld [vmem:[%s1 + $0xd48] sm:$0xf]
  %v880 = vld [vmem:[%s1 + $0xd4c] sm:$0xf]
  %v881 = vld [vmem:[%s1 + $0xd50] sm:$0xf]
  %v882 = vld [vmem:[%s1 + $0xd54] sm:$0xf]
  %v883 = vld [vmem:[%s1 + $0xd58] sm:$0xf]
  %v884 = vld [vmem:[%s1 + $0xd5c] sm:$0xf]
  %v885 = vld [vmem:[%s1 + $0xd60] sm:$0xf]
  %v886 = vld [vmem:[%s1 + $0xd64] sm:$0xf]
  %v887 = vld [vmem:[%s1 + $0xd68] sm:$0xf]
  %v888 = vld [vmem:[%s1 + $0xd6c] sm:$0xf]
  %v889 = vld [vmem:[%s1 + $0xd70] sm:$0xf]
  %v890 = vld [vmem:[%s1 + $0xd74] sm:$0xf]
  %v891 = vld [vmem:[%s1 + $0xd78] sm:$0xf]
  %v892 = vld [vmem:[%s1 + $0xd7c] sm:$0xf]
  %v893 = vld [vmem:[%s1 + $0xd80] sm:$0xf]
  %v894 = vld [vmem:[%s1 + $0xd84] sm:$0xf]
  %v895 = vld [vmem:[%s1 + $0xd88] sm:$0xf]
  %v896 = vld [vmem:[%s1 + $0xd8c] sm:$0xf]
  %v897 = vld [vmem:[%s1 + $0xd90] sm:$0xf]
  %v898 = vld [vmem:[%s1 + $0xd94] sm:$0xf]
  %v899 = vld [vmem:[%s1 + $0xd98] sm:$0xf]
  %v900 = vld [vmem:[%s1 + $0xd9c] sm:$0xf]
  %v901 = vld [vmem:[%s1 + $0xda0] sm:$0xf]
  %v902 = vld [vmem:[%s1 + $0xda4] sm:$0xf]
  %v903 = vld [vmem:[%s1 + $0xda8] sm:$0xf]
  %v904 = vld [vmem:[%s1 + $0xdac] sm:$0xf]
  %v905 = vld [vmem:[%s1 + $0xdb0] sm:$0xf]
  %v906 = vld [vmem:[%s1 + $0xdb4] sm:$0xf]
  %v907 = vld [vmem:[%s1 + $0xdb8] sm:$0xf]
  %v908 = vld [vmem:[%s1 + $0xdbc] sm:$0xf]
  %v909 = vld [vmem:[%s1 + $0xdc0] sm:$0xf]
  %v910 = vld [vmem:[%s1 + $0xdc4] sm:$0xf]
  %v911 = vld [vmem:[%s1 + $0xdc8] sm:$0xf]
  %v912 = vld [vmem:[%s1 + $0xdcc] sm:$0xf]
  %v913 = vld [vmem:[%s1 + $0xdd0] sm:$0xf]
  %v914 = vld [vmem:[%s1 + $0xdd4] sm:$0xf]
  %v915 = vld [vmem:[%s1 + $0xdd8] sm:$0xf]
  %v916 = vld [vmem:[%s1 + $0xddc] sm:$0xf]
  %v917 = vld [vmem:[%s1 + $0xde0] sm:$0xf]
  %v918 = vld [vmem:[%s1 + $0xde4] sm:$0xf]
  %v919 = vld [vmem:[%s1 + $0xde8] sm:$0xf]
  %v920 = vld [vmem:[%s1 + $0xdec] sm:$0xf]
  %v921 = vld [vmem:[%s1 + $0xdf0] sm:$0xf]
  %v922 = vld [vmem:[%s1 + $0xdf4] sm:$0xf]
  %v923 = vld [vmem:[%s1 + $0xdf8] sm:$0xf]
  %v924 = vld [vmem:[%s1 + $0xdfc] sm:$0xf]
  %v925 = vld [vmem:[%s1 + $0xe00] sm:$0xf]
  %v926 = vld [vmem:[%s1 + $0xe04] sm:$0xf]
  %v927 = vld [vmem:[%s1 + $0xe08] sm:$0xf]
  %v928 = vld [vmem:[%s1 + $0xe0c] sm:$0xf]
  %v929 = vld [vmem:[%s1 + $0xe10] sm:$0xf]
  %v930 = vld [vmem:[%s1 + $0xe14] sm:$0xf]
  %v931 = vld [vmem:[%s1 + $0xe18] sm:$0xf]
  %v932 = vld [vmem:[%s1 + $0xe1c] sm:$0xf]
  %v933 = vld [vmem:[%s1 + $0xe20] sm:$0xf]
  %v934 = vld [vmem:[%s1 + $0xe24] sm:$0xf]
  %v935 = vld [vmem:[%s1 + $0xe28] sm:$0xf]
  %v936 = vld [vmem:[%s1 + $0xe2c] sm:$0xf]
  %v937 = vld [vmem:[%s1 + $0xe30] sm:$0xf]
  %v938 = vld [vmem:[%s1 + $0xe34] sm:$0xf]
  %v939 = vld [vmem:[%s1 + $0xe38] sm:$0xf]
  %v940 = vld [vmem:[%s1 + $0xe3c] sm:$0xf]
  %v941 = vld [vmem:[%s1 + $0xe40] sm:$0xf]
  %v942 = vld [vmem:[%s1 + $0xe44] sm:$0xf]
  %v943 = vld [vmem:[%s1 + $0xe48] sm:$0xf]
  %v944 = vld [vmem:[%s1 + $0xe4c] sm:$0xf]
  %v945 = vld [vmem:[%s1 + $0xe50] sm:$0xf]
  %v946 = vld [vmem:[%s1 + $0xe54] sm:$0xf]
  %v947 = vld [vmem:[%s1 + $0xe58] sm:$0xf]
  %v948 = vld [vmem:[%s1 + $0xe5c] sm:$0xf]
  %v949 = vld [vmem:[%s1 + $0xe60] sm:$0xf]
  %v950 = vld [vmem:[%s1 + $0xe64] sm:$0xf]
  %v951 = vld [vmem:[%s1 + $0xe68] sm:$0xf]
  %v952 = vld [vmem:[%s1 + $0xe6c] sm:$0xf]
  %v953 = vld [vmem:[%s1 + $0xe70] sm:$0xf]
  %v954 = vld [vmem:[%s1 + $0xe74] sm:$0xf]
  %v955 = vld [vmem:[%s1 + $0xe78] sm:$0xf]
  %v956 = vld [vmem:[%s1 + $0xe7c] sm:$0xf]
  %v957 = vld [vmem:[%s1 + $0xe80] sm:$0xf]
  %v958 = vld [vmem:[%s1 + $0xe84] sm:$0xf]
  %v959 = vld [vmem:[%s1 + $0xe88] sm:$0xf]
  %v960 = vld [vmem:[%s1 + $0xe8c] sm:$0xf]
  %v961 = vld [vmem:[%s1 + $0xe90] sm:$0xf]
  %v962 = vld [vmem:[%s1 + $0xe94] sm:$0xf]
  %v963 = vld [vmem:[%s1 + $0xe98] sm:$0xf]
  %v964 = vld [vmem:[%s1 + $0xe9c] sm:$0xf]
  %v965 = vld [vmem:[%s1 + $0xea0] sm:$0xf]
  %v966 = vld [vmem:[%s1 + $0xea4] sm:$0xf]
  %v967 = vld [vmem:[%s1 + $0xea8] sm:$0xf]
  %v968 = vld [vmem:[%s1 + $0xeac] sm:$0xf]
  %v969 = vld [vmem:[%s1 + $0xeb0] sm:$0xf]
  %v970 = vld [vmem:[%s1 + $0xeb4] sm:$0xf]
  %v971 = vld [vmem:[%s1 + $0xeb8] sm:$0xf]
  %v972 = vld [vmem:[%s1 + $0xebc] sm:$0xf]
  %v973 = vld [vmem:[%s1 + $0xec0] sm:$0xf]
  %v974 = vld [vmem:[%s1 + $0xec4] sm:$0xf]
  %v975 = vld [vmem:[%s1 + $0xec8] sm:$0xf]
  %v976 = vld [vmem:[%s1 + $0xecc] sm:$0xf]
  %v977 = vld [vmem:[%s1 + $0xed0] sm:$0xf]
  %v978 = vld [vmem:[%s1 + $0xed4] sm:$0xf]
  %v979 = vld [vmem:[%s1 + $0xed8] sm:$0xf]
  %v980 = vld [vmem:[%s1 + $0xedc] sm:$0xf]
  %v981 = vld [vmem:[%s1 + $0xee0] sm:$0xf]
  %v982 = vld [vmem:[%s1 + $0xee4] sm:$0xf]
  %v983 = vld [vmem:[%s1 + $0xee8] sm:$0xf]
  %v984 = vld [vmem:[%s1 + $0xeec] sm:$0xf]
  %v985 = vld [vmem:[%s1 + $0xef0] sm:$0xf]
  %v986 = vld [vmem:[%s1 + $0xef4] sm:$0xf]
  %v987 = vld [vmem:[%s1 + $0xef8] sm:$0xf]
  %v988 = vld [vmem:[%s1 + $0xefc] sm:$0xf]
  %v989 = vld [vmem:[%s1 + $0xf00] sm:$0xf]
  %v990 = vld [vmem:[%s1 + $0xf04] sm:$0xf]
  %v991 = vld [vmem:[%s1 + $0xf08] sm:$0xf]
  %v992 = vld [vmem:[%s1 + $0xf0c] sm:$0xf]
  %v993 = vld [vmem:[%s1 + $0xf10] sm:$0xf]
  %v994 = vld [vmem:[%s1 + $0xf14] sm:$0xf]
  %v995 = vld [vmem:[%s1 + $0xf18] sm:$0xf]
  %v996 = vld [vmem:[%s1 + $0xf1c] sm:$0xf]
  %v997 = vld [vmem:[%s1 + $0xf20] sm:$0xf]
  %v998 = vld [vmem:[%s1 + $0xf24] sm:$0xf]
  %v999 = vld [vmem:[%s1 + $0xf28] sm:$0xf]
  %v1000 = vld [vmem:[%s1 + $0xf2c] sm:$0xf]
  %v1001 = vld [vmem:[%s1 + $0xf30] sm:$0xf]
  %v1002 = vld [vmem:[%s1 + $0xf34] sm:$0xf]
  %v1003 = vld [vmem:[%s1 + $0xf38] sm:$0xf]
  %v1004 = vld [vmem:[%s1 + $0xf3c] sm:$0xf]
  %v1005 = vld [vmem:[%s1 + $0xf40] sm:$0xf]
  %v1006 = vld [vmem:[%s1 + $0xf44] sm:$0xf]
  %v1007 = vld [vmem:[%s1 + $0xf48] sm:$0xf]
  %v1008 = vld [vmem:[%s1 + $0xf4c] sm:$0xf]
  %v1009 = vld [vmem:[%s1 + $0xf50] sm:$0xf]
  %v1010 = vld [vmem:[%s1 + $0xf54] sm:$0xf]
  %v1011 = vld [vmem:[%s1 + $0xf58] sm:$0xf]
  %v1012 = vld [vmem:[%s1 + $0xf5c] sm:$0xf]
  %v1013 = vld [vmem:[%s1 + $0xf60] sm:$0xf]
  %v1014 = vld [vmem:[%s1 + $0xf64] sm:$0xf]
  %v1015 = vld [vmem:[%s1 + $0xf68] sm:$0xf]
  %v1016 = vld [vmem:[%s1 + $0xf6c] sm:$0xf]
  %v1017 = vld [vmem:[%s1 + $0xf70] sm:$0xf]
  %v1018 = vld [vmem:[%s1 + $0xf74] sm:$0xf]
  %v1019 = vld [vmem:[%s1 + $0xf78] sm:$0xf]
  %v1020 = vld [vmem:[%s1 + $0xf7c] sm:$0xf]
  %v1021 = vld [vmem:[%s1 + $0xf80] sm:$0xf]
  %v1022 = vld [vmem:[%s1 + $0xf84] sm:$0xf]
  %v1023 = vld [vmem:[%s1 + $0xf88] sm:$0xf]
  %v1024 = vld [vmem:[%s1 + $0xf8c] sm:$0xf]
  %v1025 = vld [vmem:[%s1 + $0xf90] sm:$0xf]
  %v1026 = vld [vmem:[%s1 + $0xf94] sm:$0xf]
  %v1027 = vld [vmem:[%s1 + $0xf98] sm:$0xf]
  %v1028 = vld [vmem:[%s1 + $0xf9c] sm:$0xf]
  %v1029 = vld [vmem:[%s1 + $0xfa0] sm:$0xf]
  %v1030 = vld [vmem:[%s1 + $0xfa4] sm:$0xf]
  %v1031 = vld [vmem:[%s1 + $0xfa8] sm:$0xf]
  %v1032 = vld [vmem:[%s1 + $0xfac] sm:$0xf]
  %v1033 = vld [vmem:[%s1 + $0xfb0] sm:$0xf]
  %v1034 = vld [vmem:[%s1 + $0xfb4] sm:$0xf]
  %v1035 = vld [vmem:[%s1 + $0xfb8] sm:$0xf]
  %v1036 = vld [vmem:[%s1 + $0xfbc] sm:$0xf]
  %v1037 = vld [vmem:[%s1 + $0xfc0] sm:$0xf]
  %v1038 = vld [vmem:[%s1 + $0xfc4] sm:$0xf]
  %v1039 = vld [vmem:[%s1 + $0xfc8] sm:$0xf]
  %v1040 = vld [vmem:[%s1 + $0xfcc] sm:$0xf]
  %v1041 = vld [vmem:[%s1 + $0xfd0] sm:$0xf]
  %v1042 = vld [vmem:[%s1 + $0xfd4] sm:$0xf]
  %v1043 = vld [vmem:[%s1 + $0xfd8] sm:$0xf]
  %v1044 = vld [vmem:[%s1 + $0xfdc] sm:$0xf]
  %v1045 = vld [vmem:[%s1 + $0xfe0] sm:$0xf]
  %v1046 = vld [vmem:[%s1 + $0xfe4] sm:$0xf]
  %v1047 = vld [vmem:[%s1 + $0xfe8] sm:$0xf]
  %v1048 = vld [vmem:[%s1 + $0xfec] sm:$0xf]
  %v1049 = vld [vmem:[%s1 + $0xff0] sm:$0xf]
  %v1050 = vld [vmem:[%s1 + $0xff4] sm:$0xf]
  %v1051 = vld [vmem:[%s1 + $0xff8] sm:$0xf]
  %v1052 = vld [vmem:[%s1 + $0xffc] sm:$0xf]
  %v1053 = vld [vmem:[%s2] sm:$0x1]
  %v1055 = vlaneseq
  %v1056 = vshrl.u32 %v1055, 7
  %v1057 = vsub.s32 0, %v1056
  %v1058 = vrot.slane %v1053, %v1057
  %v1068 = vcombine.high %v21, %v21
  %v1070 = vunpack.c.l.s4 1966171168
  %v1071 = vunpack.c.0.s8 %v1070
  %v1072 = vlaneseq
  %v1073 = vshrl.u32 %v1072, 7
  %v1074 = vsub.s32 %v1071, %v1073
  %v1075 = vrot.slane %v21, %v1074
  %v1077 = vunpack.c.l.s4 1966171168
  %v1078 = vunpack.c.0.s8 %v1077
  %v1079 = vlaneseq
  %v1080 = vshrl.u32 %v1079, 7
  %v1081 = vsub.s32 %v1078, %v1080
  %v1082 = vrot.slane %v1068, %v1081
  %v1083 = vcombine.high %v1075, %v1075
  %v1084 = vcombine.high %v1082, %v1082
  %v1086 = vunpack.c.l.s4 1966171168
  %v1087 = vunpack.c.0.s8 %v1086
  %v1088 = vlaneseq
  %v1089 = vshrl.u32 %v1088, 7
  %v1090 = vsub.s32 %v1087, %v1089
  %v1091 = vrot.slane %v1075, %v1090
  %v1093 = vunpack.c.l.s4 1966171168
  %v1094 = vunpack.c.0.s8 %v1093
  %v1095 = vlaneseq
  %v1096 = vshrl.u32 %v1095, 7
  %v1097 = vsub.s32 %v1094, %v1096
  %v1098 = vrot.slane %v1082, %v1097
  %v1100 = vunpack.c.l.s4 1966171168
  %v1101 = vunpack.c.0.s8 %v1100
  %v1102 = vlaneseq
  %v1103 = vshrl.u32 %v1102, 7
  %v1104 = vsub.s32 %v1101, %v1103
  %v1105 = vrot.slane %v1083, %v1104
  %v1107 = vunpack.c.l.s4 1966171168
  %v1108 = vunpack.c.0.s8 %v1107
  %v1109 = vlaneseq
  %v1110 = vshrl.u32 %v1109, 7
  %v1111 = vsub.s32 %v1108, %v1110
  %v1112 = vrot.slane %v1084, %v1111
  %v1113 = vcombine.high %v1091, %v1091
  %v1114 = vcombine.high %v1098, %v1098
  %v1115 = vcombine.high %v1105, %v1105
  %v1116 = vcombine.high %v1112, %v1112
  %v1117 = vcombine.high %v22, %v22
  %v1119 = vunpack.c.l.s4 1966171168
  %v1120 = vunpack.c.0.s8 %v1119
  %v1121 = vlaneseq
  %v1122 = vshrl.u32 %v1121, 7
  %v1123 = vsub.s32 %v1120, %v1122
  %v1124 = vrot.slane %v22, %v1123
  %v1126 = vunpack.c.l.s4 1966171168
  %v1127 = vunpack.c.0.s8 %v1126
  %v1128 = vlaneseq
  %v1129 = vshrl.u32 %v1128, 7
  %v1130 = vsub.s32 %v1127, %v1129
  %v1131 = vrot.slane %v1117, %v1130
  %v1132 = vcombine.high %v1124, %v1124
  %v1133 = vcombine.high %v1131, %v1131
  %v1135 = vunpack.c.l.s4 1966171168
  %v1136 = vunpack.c.0.s8 %v1135
  %v1137 = vlaneseq
  %v1138 = vshrl.u32 %v1137, 7
  %v1139 = vsub.s32 %v1136, %v1138
  %v1140 = vrot.slane %v1124, %v1139
  %v1142 = vunpack.c.l.s4 1966171168
  %v1143 = vunpack.c.0.s8 %v1142
  %v1144 = vlaneseq
  %v1145 = vshrl.u32 %v1144, 7
  %v1146 = vsub.s32 %v1143, %v1145
  %v1147 = vrot.slane %v1131, %v1146
  %v1149 = vunpack.c.l.s4 1966171168
  %v1150 = vunpack.c.0.s8 %v1149
  %v1151 = vlaneseq
  %v1152 = vshrl.u32 %v1151, 7
  %v1153 = vsub.s32 %v1150, %v1152
  %v1154 = vrot.slane %v1132, %v1153
  %v1156 = vunpack.c.l.s4 1966171168
  %v1157 = vunpack.c.0.s8 %v1156
  %v1158 = vlaneseq
  %v1159 = vshrl.u32 %v1158, 7
  %v1160 = vsub.s32 %v1157, %v1159
  %v1161 = vrot.slane %v1133, %v1160
  %v1162 = vcombine.high %v1140, %v1140
  %v1163 = vcombine.high %v1147, %v1147
  %v1164 = vcombine.high %v1154, %v1154
  %v1165 = vcombine.high %v1161, %v1161
  %v1166 = vcombine.high %v23, %v23
  %v1168 = vunpack.c.l.s4 1966171168
  %v1169 = vunpack.c.0.s8 %v1168
  %v1170 = vlaneseq
  %v1171 = vshrl.u32 %v1170, 7
  %v1172 = vsub.s32 %v1169, %v1171
  %v1173 = vrot.slane %v23, %v1172
  %v1175 = vunpack.c.l.s4 1966171168
  %v1176 = vunpack.c.0.s8 %v1175
  %v1177 = vlaneseq
  %v1178 = vshrl.u32 %v1177, 7
  %v1179 = vsub.s32 %v1176, %v1178
  %v1180 = vrot.slane %v1166, %v1179
  %v1181 = vcombine.high %v1173, %v1173
  %v1182 = vcombine.high %v1180, %v1180
  %v1184 = vunpack.c.l.s4 1966171168
  %v1185 = vunpack.c.0.s8 %v1184
  %v1186 = vlaneseq
  %v1187 = vshrl.u32 %v1186, 7
  %v1188 = vsub.s32 %v1185, %v1187
  %v1189 = vrot.slane %v1173, %v1188
  %v1191 = vunpack.c.l.s4 1966171168
  %v1192 = vunpack.c.0.s8 %v1191
  %v1193 = vlaneseq
  %v1194 = vshrl.u32 %v1193, 7
  %v1195 = vsub.s32 %v1192, %v1194
  %v1196 = vrot.slane %v1180, %v1195
  %v1198 = vunpack.c.l.s4 1966171168
  %v1199 = vunpack.c.0.s8 %v1198
  %v1200 = vlaneseq
  %v1201 = vshrl.u32 %v1200, 7
  %v1202 = vsub.s32 %v1199, %v1201
  %v1203 = vrot.slane %v1181, %v1202
  %v1205 = vunpack.c.l.s4 1966171168
  %v1206 = vunpack.c.0.s8 %v1205
  %v1207 = vlaneseq
  %v1208 = vshrl.u32 %v1207, 7
  %v1209 = vsub.s32 %v1206, %v1208
  %v1210 = vrot.slane %v1182, %v1209
  %v1211 = vcombine.high %v1189, %v1189
  %v1212 = vcombine.high %v1196, %v1196
  %v1213 = vcombine.high %v1203, %v1203
  %v1214 = vcombine.high %v1210, %v1210
  %v1215 = vcombine.high %v24, %v24
  %v1217 = vunpack.c.l.s4 1966171168
  %v1218 = vunpack.c.0.s8 %v1217
  %v1219 = vlaneseq
  %v1220 = vshrl.u32 %v1219, 7
  %v1221 = vsub.s32 %v1218, %v1220
  %v1222 = vrot.slane %v24, %v1221
  %v1224 = vunpack.c.l.s4 1966171168
  %v1225 = vunpack.c.0.s8 %v1224
  %v1226 = vlaneseq
  %v1227 = vshrl.u32 %v1226, 7
  %v1228 = vsub.s32 %v1225, %v1227
  %v1229 = vrot.slane %v1215, %v1228
  %v1230 = vcombine.high %v1222, %v1222
  %v1231 = vcombine.high %v1229, %v1229
  %v1233 = vunpack.c.l.s4 1966171168
  %v1234 = vunpack.c.0.s8 %v1233
  %v1235 = vlaneseq
  %v1236 = vshrl.u32 %v1235, 7
  %v1237 = vsub.s32 %v1234, %v1236
  %v1238 = vrot.slane %v1222, %v1237
  %v1240 = vunpack.c.l.s4 1966171168
  %v1241 = vunpack.c.0.s8 %v1240
  %v1242 = vlaneseq
  %v1243 = vshrl.u32 %v1242, 7
  %v1244 = vsub.s32 %v1241, %v1243
  %v1245 = vrot.slane %v1229, %v1244
  %v1247 = vunpack.c.l.s4 1966171168
  %v1248 = vunpack.c.0.s8 %v1247
  %v1249 = vlaneseq
  %v1250 = vshrl.u32 %v1249, 7
  %v1251 = vsub.s32 %v1248, %v1250
  %v1252 = vrot.slane %v1230, %v1251
  %v1254 = vunpack.c.l.s4 1966171168
  %v1255 = vunpack.c.0.s8 %v1254
  %v1256 = vlaneseq
  %v1257 = vshrl.u32 %v1256, 7
  %v1258 = vsub.s32 %v1255, %v1257
  %v1259 = vrot.slane %v1231, %v1258
  %v1260 = vcombine.high %v1238, %v1238
  %v1261 = vcombine.high %v1245, %v1245
  %v1262 = vcombine.high %v1252, %v1252
  %v1263 = vcombine.high %v1259, %v1259
  %v1264 = vcombine.high %v25, %v25
  %v1266 = vunpack.c.l.s4 1966171168
  %v1267 = vunpack.c.0.s8 %v1266
  %v1268 = vlaneseq
  %v1269 = vshrl.u32 %v1268, 7
  %v1270 = vsub.s32 %v1267, %v1269
  %v1271 = vrot.slane %v25, %v1270
  %v1273 = vunpack.c.l.s4 1966171168
  %v1274 = vunpack.c.0.s8 %v1273
  %v1275 = vlaneseq
  %v1276 = vshrl.u32 %v1275, 7
  %v1277 = vsub.s32 %v1274, %v1276
  %v1278 = vrot.slane %v1264, %v1277
  %v1279 = vcombine.high %v1271, %v1271
  %v1280 = vcombine.high %v1278, %v1278
  %v1282 = vunpack.c.l.s4 1966171168
  %v1283 = vunpack.c.0.s8 %v1282
  %v1284 = vlaneseq
  %v1285 = vshrl.u32 %v1284, 7
  %v1286 = vsub.s32 %v1283, %v1285
  %v1287 = vrot.slane %v1271, %v1286
  %v1289 = vunpack.c.l.s4 1966171168
  %v1290 = vunpack.c.0.s8 %v1289
  %v1291 = vlaneseq
  %v1292 = vshrl.u32 %v1291, 7
  %v1293 = vsub.s32 %v1290, %v1292
  %v1294 = vrot.slane %v1278, %v1293
  %v1296 = vunpack.c.l.s4 1966171168
  %v1297 = vunpack.c.0.s8 %v1296
  %v1298 = vlaneseq
  %v1299 = vshrl.u32 %v1298, 7
  %v1300 = vsub.s32 %v1297, %v1299
  %v1301 = vrot.slane %v1279, %v1300
  %v1303 = vunpack.c.l.s4 1966171168
  %v1304 = vunpack.c.0.s8 %v1303
  %v1305 = vlaneseq
  %v1306 = vshrl.u32 %v1305, 7
  %v1307 = vsub.s32 %v1304, %v1306
  %v1308 = vrot.slane %v1280, %v1307
  %v1309 = vcombine.high %v1287, %v1287
  %v1310 = vcombine.high %v1294, %v1294
  %v1311 = vcombine.high %v1301, %v1301
  %v1312 = vcombine.high %v1308, %v1308
  %v1313 = vcombine.high %v26, %v26
  %v1315 = vunpack.c.l.s4 1966171168
  %v1316 = vunpack.c.0.s8 %v1315
  %v1317 = vlaneseq
  %v1318 = vshrl.u32 %v1317, 7
  %v1319 = vsub.s32 %v1316, %v1318
  %v1320 = vrot.slane %v26, %v1319
  %v1322 = vunpack.c.l.s4 1966171168
  %v1323 = vunpack.c.0.s8 %v1322
  %v1324 = vlaneseq
  %v1325 = vshrl.u32 %v1324, 7
  %v1326 = vsub.s32 %v1323, %v1325
  %v1327 = vrot.slane %v1313, %v1326
  %v1328 = vcombine.high %v1320, %v1320
  %v1329 = vcombine.high %v1327, %v1327
  %v1331 = vunpack.c.l.s4 1966171168
  %v1332 = vunpack.c.0.s8 %v1331
  %v1333 = vlaneseq
  %v1334 = vshrl.u32 %v1333, 7
  %v1335 = vsub.s32 %v1332, %v1334
  %v1336 = vrot.slane %v1320, %v1335
  %v1338 = vunpack.c.l.s4 1966171168
  %v1339 = vunpack.c.0.s8 %v1338
  %v1340 = vlaneseq
  %v1341 = vshrl.u32 %v1340, 7
  %v1342 = vsub.s32 %v1339, %v1341
  %v1343 = vrot.slane %v1327, %v1342
  %v1345 = vunpack.c.l.s4 1966171168
  %v1346 = vunpack.c.0.s8 %v1345
  %v1347 = vlaneseq
  %v1348 = vshrl.u32 %v1347, 7
  %v1349 = vsub.s32 %v1346, %v1348
  %v1350 = vrot.slane %v1328, %v1349
  %v1352 = vunpack.c.l.s4 1966171168
  %v1353 = vunpack.c.0.s8 %v1352
  %v1354 = vlaneseq
  %v1355 = vshrl.u32 %v1354, 7
  %v1356 = vsub.s32 %v1353, %v1355
  %v1357 = vrot.slane %v1329, %v1356
  %v1358 = vcombine.high %v1336, %v1336
  %v1359 = vcombine.high %v1343, %v1343
  %v1360 = vcombine.high %v1350, %v1350
  %v1361 = vcombine.high %v1357, %v1357
  %v1362 = vcombine.high %v27, %v27
  %v1364 = vunpack.c.l.s4 1966171168
  %v1365 = vunpack.c.0.s8 %v1364
  %v1366 = vlaneseq
  %v1367 = vshrl.u32 %v1366, 7
  %v1368 = vsub.s32 %v1365, %v1367
  %v1369 = vrot.slane %v27, %v1368
  %v1371 = vunpack.c.l.s4 1966171168
  %v1372 = vunpack.c.0.s8 %v1371
  %v1373 = vlaneseq
  %v1374 = vshrl.u32 %v1373, 7
  %v1375 = vsub.s32 %v1372, %v1374
  %v1376 = vrot.slane %v1362, %v1375
  %v1377 = vcombine.high %v1369, %v1369
  %v1378 = vcombine.high %v1376, %v1376
  %v1380 = vunpack.c.l.s4 1966171168
  %v1381 = vunpack.c.0.s8 %v1380
  %v1382 = vlaneseq
  %v1383 = vshrl.u32 %v1382, 7
  %v1384 = vsub.s32 %v1381, %v1383
  %v1385 = vrot.slane %v1369, %v1384
  %v1387 = vunpack.c.l.s4 1966171168
  %v1388 = vunpack.c.0.s8 %v1387
  %v1389 = vlaneseq
  %v1390 = vshrl.u32 %v1389, 7
  %v1391 = vsub.s32 %v1388, %v1390
  %v1392 = vrot.slane %v1376, %v1391
  %v1394 = vunpack.c.l.s4 1966171168
  %v1395 = vunpack.c.0.s8 %v1394
  %v1396 = vlaneseq
  %v1397 = vshrl.u32 %v1396, 7
  %v1398 = vsub.s32 %v1395, %v1397
  %v1399 = vrot.slane %v1377, %v1398
  %v1401 = vunpack.c.l.s4 1966171168
  %v1402 = vunpack.c.0.s8 %v1401
  %v1403 = vlaneseq
  %v1404 = vshrl.u32 %v1403, 7
  %v1405 = vsub.s32 %v1402, %v1404
  %v1406 = vrot.slane %v1378, %v1405
  %v1407 = vcombine.high %v1385, %v1385
  %v1408 = vcombine.high %v1392, %v1392
  %v1409 = vcombine.high %v1399, %v1399
  %v1410 = vcombine.high %v1406, %v1406
  %v1411 = vcombine.high %v28, %v28
  %v1413 = vunpack.c.l.s4 1966171168
  %v1414 = vunpack.c.0.s8 %v1413
  %v1415 = vlaneseq
  %v1416 = vshrl.u32 %v1415, 7
  %v1417 = vsub.s32 %v1414, %v1416
  %v1418 = vrot.slane %v28, %v1417
  %v1420 = vunpack.c.l.s4 1966171168
  %v1421 = vunpack.c.0.s8 %v1420
  %v1422 = vlaneseq
  %v1423 = vshrl.u32 %v1422, 7
  %v1424 = vsub.s32 %v1421, %v1423
  %v1425 = vrot.slane %v1411, %v1424
  %v1426 = vcombine.high %v1418, %v1418
  %v1427 = vcombine.high %v1425, %v1425
  %v1429 = vunpack.c.l.s4 1966171168
  %v1430 = vunpack.c.0.s8 %v1429
  %v1431 = vlaneseq
  %v1432 = vshrl.u32 %v1431, 7
  %v1433 = vsub.s32 %v1430, %v1432
  %v1434 = vrot.slane %v1418, %v1433
  %v1436 = vunpack.c.l.s4 1966171168
  %v1437 = vunpack.c.0.s8 %v1436
  %v1438 = vlaneseq
  %v1439 = vshrl.u32 %v1438, 7
  %v1440 = vsub.s32 %v1437, %v1439
  %v1441 = vrot.slane %v1425, %v1440
  %v1443 = vunpack.c.l.s4 1966171168
  %v1444 = vunpack.c.0.s8 %v1443
  %v1445 = vlaneseq
  %v1446 = vshrl.u32 %v1445, 7
  %v1447 = vsub.s32 %v1444, %v1446
  %v1448 = vrot.slane %v1426, %v1447
  %v1450 = vunpack.c.l.s4 1966171168
  %v1451 = vunpack.c.0.s8 %v1450
  %v1452 = vlaneseq
  %v1453 = vshrl.u32 %v1452, 7
  %v1454 = vsub.s32 %v1451, %v1453
  %v1455 = vrot.slane %v1427, %v1454
  %v1456 = vcombine.high %v1434, %v1434
  %v1457 = vcombine.high %v1441, %v1441
  %v1458 = vcombine.high %v1448, %v1448
  %v1459 = vcombine.high %v1455, %v1455
  %v2548 = vunpack.c.l.b16 %v29
  %v2549 = vunpack.c.l.b16 %v30
  %v2550 = vunpack.c.l.b16 %v31
  %v2551 = vunpack.c.l.b16 %v32
  %v2552 = vunpack.c.l.b16 %v33
  %v2553 = vunpack.c.l.b16 %v34
  %v2554 = vunpack.c.l.b16 %v35
  %v2555 = vunpack.c.l.b16 %v36
  %v2556 = vunpack.c.l.b16 %v37
  %v2557 = vunpack.c.l.b16 %v38
  %v2558 = vunpack.c.l.b16 %v39
  %v2559 = vunpack.c.l.b16 %v40
  %v2560 = vunpack.c.l.b16 %v41
  %v2561 = vunpack.c.l.b16 %v42
  %v2562 = vunpack.c.l.b16 %v43
  %v2563 = vunpack.c.l.b16 %v44
  %v2564 = vunpack.c.l.b16 %v45
  %v2565 = vunpack.c.l.b16 %v46
  %v2566 = vunpack.c.l.b16 %v47
  %v2567 = vunpack.c.l.b16 %v48
  %v2568 = vunpack.c.l.b16 %v49
  %v2569 = vunpack.c.l.b16 %v50
  %v2570 = vunpack.c.l.b16 %v51
  %v2571 = vunpack.c.l.b16 %v52
  %v2572 = vunpack.c.l.b16 %v53
  %v2573 = vunpack.c.l.b16 %v54
  %v2574 = vunpack.c.l.b16 %v55
  %v2575 = vunpack.c.l.b16 %v56
  %v2576 = vunpack.c.l.b16 %v57
  %v2577 = vunpack.c.l.b16 %v58
  %v2578 = vunpack.c.l.b16 %v59
  %v2579 = vunpack.c.l.b16 %v60
  %v2580 = vunpack.c.l.b16 %v61
  %v2581 = vunpack.c.l.b16 %v62
  %v2582 = vunpack.c.l.b16 %v63
  %v2583 = vunpack.c.l.b16 %v64
  %v2584 = vunpack.c.l.b16 %v65
  %v2585 = vunpack.c.l.b16 %v66
  %v2586 = vunpack.c.l.b16 %v67
  %v2587 = vunpack.c.l.b16 %v68
  %v2588 = vunpack.c.l.b16 %v69
  %v2589 = vunpack.c.l.b16 %v70
  %v2590 = vunpack.c.l.b16 %v71
  %v2591 = vunpack.c.l.b16 %v72
  %v2592 = vunpack.c.l.b16 %v73
  %v2593 = vunpack.c.l.b16 %v74
  %v2594 = vunpack.c.l.b16 %v75
  %v2595 = vunpack.c.l.b16 %v76
  %v2596 = vunpack.c.l.b16 %v77
  %v2597 = vunpack.c.l.b16 %v78
  %v2598 = vunpack.c.l.b16 %v79
  %v2599 = vunpack.c.l.b16 %v80
  %v2600 = vunpack.c.l.b16 %v81
  %v2601 = vunpack.c.l.b16 %v82
  %v2602 = vunpack.c.l.b16 %v83
  %v2603 = vunpack.c.l.b16 %v84
  %v2604 = vunpack.c.l.b16 %v85
  %v2605 = vunpack.c.l.b16 %v86
  %v2606 = vunpack.c.l.b16 %v87
  %v2607 = vunpack.c.l.b16 %v88
  %v2608 = vunpack.c.l.b16 %v89
  %v2609 = vunpack.c.l.b16 %v90
  %v2610 = vunpack.c.l.b16 %v91
  %v2611 = vunpack.c.l.b16 %v92
  %v2612 = vunpack.c.l.b16 %v93
  %v2613 = vunpack.c.l.b16 %v94
  %v2614 = vunpack.c.l.b16 %v95
  %v2615 = vunpack.c.l.b16 %v96
  %v2616 = vunpack.c.l.b16 %v97
  %v2617 = vunpack.c.l.b16 %v98
  %v2618 = vunpack.c.l.b16 %v99
  %v2619 = vunpack.c.l.b16 %v100
  %v2620 = vunpack.c.l.b16 %v101
  %v2621 = vunpack.c.l.b16 %v102
  %v2622 = vunpack.c.l.b16 %v103
  %v2623 = vunpack.c.l.b16 %v104
  %v2624 = vunpack.c.l.b16 %v105
  %v2625 = vunpack.c.l.b16 %v106
  %v2626 = vunpack.c.l.b16 %v107
  %v2627 = vunpack.c.l.b16 %v108
  %v2628 = vunpack.c.l.b16 %v109
  %v2629 = vunpack.c.l.b16 %v110
  %v2630 = vunpack.c.l.b16 %v111
  %v2631 = vunpack.c.l.b16 %v112
  %v2632 = vunpack.c.l.b16 %v113
  %v2633 = vunpack.c.l.b16 %v114
  %v2634 = vunpack.c.l.b16 %v115
  %v2635 = vunpack.c.l.b16 %v116
  %v2636 = vunpack.c.l.b16 %v117
  %v2637 = vunpack.c.l.b16 %v118
  %v2638 = vunpack.c.l.b16 %v119
  %v2639 = vunpack.c.l.b16 %v120
  %v2640 = vunpack.c.l.b16 %v121
  %v2641 = vunpack.c.l.b16 %v122
  %v2642 = vunpack.c.l.b16 %v123
  %v2643 = vunpack.c.l.b16 %v124
  %v2644 = vunpack.c.l.b16 %v125
  %v2645 = vunpack.c.l.b16 %v126
  %v2646 = vunpack.c.l.b16 %v127
  %v2647 = vunpack.c.l.b16 %v128
  %v2648 = vunpack.c.l.b16 %v129
  %v2649 = vunpack.c.l.b16 %v130
  %v2650 = vunpack.c.l.b16 %v131
  %v2651 = vunpack.c.l.b16 %v132
  %v2652 = vunpack.c.l.b16 %v133
  %v2653 = vunpack.c.l.b16 %v134
  %v2654 = vunpack.c.l.b16 %v135
  %v2655 = vunpack.c.l.b16 %v136
  %v2656 = vunpack.c.l.b16 %v137
  %v2657 = vunpack.c.l.b16 %v138
  %v2658 = vunpack.c.l.b16 %v139
  %v2659 = vunpack.c.l.b16 %v140
  %v2660 = vunpack.c.l.b16 %v141
  %v2661 = vunpack.c.l.b16 %v142
  %v2662 = vunpack.c.l.b16 %v143
  %v2663 = vunpack.c.l.b16 %v144
  %v2664 = vunpack.c.l.b16 %v145
  %v2665 = vunpack.c.l.b16 %v146
  %v2666 = vunpack.c.l.b16 %v147
  %v2667 = vunpack.c.l.b16 %v148
  %v2668 = vunpack.c.l.b16 %v149
  %v2669 = vunpack.c.l.b16 %v150
  %v2670 = vunpack.c.l.b16 %v151
  %v2671 = vunpack.c.l.b16 %v152
  %v2672 = vunpack.c.l.b16 %v153
  %v2673 = vunpack.c.l.b16 %v154
  %v2674 = vunpack.c.l.b16 %v155
  %v2675 = vunpack.c.l.b16 %v156
  %v2676 = vunpack.c.l.b16 %v157
  %v2677 = vunpack.c.l.b16 %v158
  %v2678 = vunpack.c.l.b16 %v159
  %v2679 = vunpack.c.l.b16 %v160
  %v2680 = vunpack.c.l.b16 %v161
  %v2681 = vunpack.c.l.b16 %v162
  %v2682 = vunpack.c.l.b16 %v163
  %v2683 = vunpack.c.l.b16 %v164
  %v2684 = vunpack.c.l.b16 %v165
  %v2685 = vunpack.c.l.b16 %v166
  %v2686 = vunpack.c.l.b16 %v167
  %v2687 = vunpack.c.l.b16 %v168
  %v2688 = vunpack.c.l.b16 %v169
  %v2689 = vunpack.c.l.b16 %v170
  %v2690 = vunpack.c.l.b16 %v171
  %v2691 = vunpack.c.l.b16 %v172
  %v2692 = vunpack.c.l.b16 %v173
  %v2693 = vunpack.c.l.b16 %v174
  %v2694 = vunpack.c.l.b16 %v175
  %v2695 = vunpack.c.l.b16 %v176
  %v2696 = vunpack.c.l.b16 %v177
  %v2697 = vunpack.c.l.b16 %v178
  %v2698 = vunpack.c.l.b16 %v179
  %v2699 = vunpack.c.l.b16 %v180
  %v2700 = vunpack.c.l.b16 %v181
  %v2701 = vunpack.c.l.b16 %v182
  %v2702 = vunpack.c.l.b16 %v183
  %v2703 = vunpack.c.l.b16 %v184
  %v2704 = vunpack.c.l.b16 %v185
  %v2705 = vunpack.c.l.b16 %v186
  %v2706 = vunpack.c.l.b16 %v187
  %v2707 = vunpack.c.l.b16 %v188
  %v2708 = vunpack.c.l.b16 %v189
  %v2709 = vunpack.c.l.b16 %v190
  %v2710 = vunpack.c.l.b16 %v191
  %v2711 = vunpack.c.l.b16 %v192
  %v2712 = vunpack.c.l.b16 %v193
  %v2713 = vunpack.c.l.b16 %v194
  %v2714 = vunpack.c.l.b16 %v195
  %v2715 = vunpack.c.l.b16 %v196
  %v2716 = vunpack.c.l.b16 %v197
  %v2717 = vunpack.c.l.b16 %v198
  %v2718 = vunpack.c.l.b16 %v199
  %v2719 = vunpack.c.l.b16 %v200
  %v2720 = vunpack.c.l.b16 %v201
  %v2721 = vunpack.c.l.b16 %v202
  %v2722 = vunpack.c.l.b16 %v203
  %v2723 = vunpack.c.l.b16 %v204
  %v2724 = vunpack.c.l.b16 %v205
  %v2725 = vunpack.c.l.b16 %v206
  %v2726 = vunpack.c.l.b16 %v207
  %v2727 = vunpack.c.l.b16 %v208
  %v2728 = vunpack.c.l.b16 %v209
  %v2729 = vunpack.c.l.b16 %v210
  %v2730 = vunpack.c.l.b16 %v211
  %v2731 = vunpack.c.l.b16 %v212
  %v2732 = vunpack.c.l.b16 %v213
  %v2733 = vunpack.c.l.b16 %v214
  %v2734 = vunpack.c.l.b16 %v215
  %v2735 = vunpack.c.l.b16 %v216
  %v2736 = vunpack.c.l.b16 %v217
  %v2737 = vunpack.c.l.b16 %v218
  %v2738 = vunpack.c.l.b16 %v219
  %v2739 = vunpack.c.l.b16 %v220
  %v2740 = vunpack.c.l.b16 %v221
  %v2741 = vunpack.c.l.b16 %v222
  %v2742 = vunpack.c.l.b16 %v223
  %v2743 = vunpack.c.l.b16 %v224
  %v2744 = vunpack.c.l.b16 %v225
  %v2745 = vunpack.c.l.b16 %v226
  %v2746 = vunpack.c.l.b16 %v227
  %v2747 = vunpack.c.l.b16 %v228
  %v2748 = vunpack.c.l.b16 %v229
  %v2749 = vunpack.c.l.b16 %v230
  %v2750 = vunpack.c.l.b16 %v231
  %v2751 = vunpack.c.l.b16 %v232
  %v2752 = vunpack.c.l.b16 %v233
  %v2753 = vunpack.c.l.b16 %v234
  %v2754 = vunpack.c.l.b16 %v235
  %v2755 = vunpack.c.l.b16 %v236
  %v2756 = vunpack.c.l.b16 %v237
  %v2757 = vunpack.c.l.b16 %v238
  %v2758 = vunpack.c.l.b16 %v239
  %v2759 = vunpack.c.l.b16 %v240
  %v2760 = vunpack.c.l.b16 %v241
  %v2761 = vunpack.c.l.b16 %v242
  %v2762 = vunpack.c.l.b16 %v243
  %v2763 = vunpack.c.l.b16 %v244
  %v2764 = vunpack.c.l.b16 %v245
  %v2765 = vunpack.c.l.b16 %v246
  %v2766 = vunpack.c.l.b16 %v247
  %v2767 = vunpack.c.l.b16 %v248
  %v2768 = vunpack.c.l.b16 %v249
  %v2769 = vunpack.c.l.b16 %v250
  %v2770 = vunpack.c.l.b16 %v251
  %v2771 = vunpack.c.l.b16 %v252
  %v2772 = vunpack.c.l.b16 %v253
  %v2773 = vunpack.c.l.b16 %v254
  %v2774 = vunpack.c.l.b16 %v255
  %v2775 = vunpack.c.l.b16 %v256
  %v2776 = vunpack.c.l.b16 %v257
  %v2777 = vunpack.c.l.b16 %v258
  %v2778 = vunpack.c.l.b16 %v259
  %v2779 = vunpack.c.l.b16 %v260
  %v2780 = vunpack.c.l.b16 %v261
  %v2781 = vunpack.c.l.b16 %v262
  %v2782 = vunpack.c.l.b16 %v263
  %v2783 = vunpack.c.l.b16 %v264
  %v2784 = vunpack.c.l.b16 %v265
  %v2785 = vunpack.c.l.b16 %v266
  %v2786 = vunpack.c.l.b16 %v267
  %v2787 = vunpack.c.l.b16 %v268
  %v2788 = vunpack.c.l.b16 %v269
  %v2789 = vunpack.c.l.b16 %v270
  %v2790 = vunpack.c.l.b16 %v271
  %v2791 = vunpack.c.l.b16 %v272
  %v2792 = vunpack.c.l.b16 %v273
  %v2793 = vunpack.c.l.b16 %v274
  %v2794 = vunpack.c.l.b16 %v275
  %v2795 = vunpack.c.l.b16 %v276
  %v2796 = vunpack.c.l.b16 %v277
  %v2797 = vunpack.c.l.b16 %v278
  %v2798 = vunpack.c.l.b16 %v279
  %v2799 = vunpack.c.l.b16 %v280
  %v2800 = vunpack.c.l.b16 %v281
  %v2801 = vunpack.c.l.b16 %v282
  %v2802 = vunpack.c.l.b16 %v283
  %v2803 = vunpack.c.l.b16 %v284
  %v2804 = vunpack.c.l.b16 %v285
  %v2805 = vunpack.c.l.b16 %v286
  %v2806 = vunpack.c.l.b16 %v287
  %v2807 = vunpack.c.l.b16 %v288
  %v2808 = vunpack.c.l.b16 %v289
  %v2809 = vunpack.c.l.b16 %v290
  %v2810 = vunpack.c.l.b16 %v291
  %v2811 = vunpack.c.l.b16 %v292
  %v2812 = vunpack.c.l.b16 %v293
  %v2813 = vunpack.c.l.b16 %v294
  %v2814 = vunpack.c.l.b16 %v295
  %v2815 = vunpack.c.l.b16 %v296
  %v2816 = vunpack.c.l.b16 %v297
  %v2817 = vunpack.c.l.b16 %v298
  %v2818 = vunpack.c.l.b16 %v299
  %v2819 = vunpack.c.l.b16 %v300
  %v2820 = vunpack.c.l.b16 %v301
  %v2821 = vunpack.c.l.b16 %v302
  %v2822 = vunpack.c.l.b16 %v303
  %v2823 = vunpack.c.l.b16 %v304
  %v2824 = vunpack.c.l.b16 %v305
  %v2825 = vunpack.c.l.b16 %v306
  %v2826 = vunpack.c.l.b16 %v307
  %v2827 = vunpack.c.l.b16 %v308
  %v2828 = vunpack.c.l.b16 %v309
  %v2829 = vunpack.c.l.b16 %v310
  %v2830 = vunpack.c.l.b16 %v311
  %v2831 = vunpack.c.l.b16 %v312
  %v2832 = vunpack.c.l.b16 %v313
  %v2833 = vunpack.c.l.b16 %v314
  %v2834 = vunpack.c.l.b16 %v315
  %v2835 = vunpack.c.l.b16 %v316
  %v2836 = vunpack.c.l.b16 %v317
  %v2837 = vunpack.c.l.b16 %v318
  %v2838 = vunpack.c.l.b16 %v319
  %v2839 = vunpack.c.l.b16 %v320
  %v2840 = vunpack.c.l.b16 %v321
  %v2841 = vunpack.c.l.b16 %v322
  %v2842 = vunpack.c.l.b16 %v323
  %v2843 = vunpack.c.l.b16 %v324
  %v2844 = vunpack.c.l.b16 %v325
  %v2845 = vunpack.c.l.b16 %v326
  %v2846 = vunpack.c.l.b16 %v327
  %v2847 = vunpack.c.l.b16 %v328
  %v2848 = vunpack.c.l.b16 %v329
  %v2849 = vunpack.c.l.b16 %v330
  %v2850 = vunpack.c.l.b16 %v331
  %v2851 = vunpack.c.l.b16 %v332
  %v2852 = vunpack.c.l.b16 %v333
  %v2853 = vunpack.c.l.b16 %v334
  %v2854 = vunpack.c.l.b16 %v335
  %v2855 = vunpack.c.l.b16 %v336
  %v2856 = vunpack.c.l.b16 %v337
  %v2857 = vunpack.c.l.b16 %v338
  %v2858 = vunpack.c.l.b16 %v339
  %v2859 = vunpack.c.l.b16 %v340
  %v2860 = vunpack.c.l.b16 %v341
  %v2861 = vunpack.c.l.b16 %v342
  %v2862 = vunpack.c.l.b16 %v343
  %v2863 = vunpack.c.l.b16 %v344
  %v2864 = vunpack.c.l.b16 %v345
  %v2865 = vunpack.c.l.b16 %v346
  %v2866 = vunpack.c.l.b16 %v347
  %v2867 = vunpack.c.l.b16 %v348
  %v2868 = vunpack.c.l.b16 %v349
  %v2869 = vunpack.c.l.b16 %v350
  %v2870 = vunpack.c.l.b16 %v351
  %v2871 = vunpack.c.l.b16 %v352
  %v2872 = vunpack.c.l.b16 %v353
  %v2873 = vunpack.c.l.b16 %v354
  %v2874 = vunpack.c.l.b16 %v355
  %v2875 = vunpack.c.l.b16 %v356
  %v2876 = vunpack.c.l.b16 %v357
  %v2877 = vunpack.c.l.b16 %v358
  %v2878 = vunpack.c.l.b16 %v359
  %v2879 = vunpack.c.l.b16 %v360
  %v2880 = vunpack.c.l.b16 %v361
  %v2881 = vunpack.c.l.b16 %v362
  %v2882 = vunpack.c.l.b16 %v363
  %v2883 = vunpack.c.l.b16 %v364
  %v2884 = vunpack.c.l.b16 %v365
  %v2885 = vunpack.c.l.b16 %v366
  %v2886 = vunpack.c.l.b16 %v367
  %v2887 = vunpack.c.l.b16 %v368
  %v2888 = vunpack.c.l.b16 %v369
  %v2889 = vunpack.c.l.b16 %v370
  %v2890 = vunpack.c.l.b16 %v371
  %v2891 = vunpack.c.l.b16 %v372
  %v2892 = vunpack.c.l.b16 %v373
  %v2893 = vunpack.c.l.b16 %v374
  %v2894 = vunpack.c.l.b16 %v375
  %v2895 = vunpack.c.l.b16 %v376
  %v2896 = vunpack.c.l.b16 %v377
  %v2897 = vunpack.c.l.b16 %v378
  %v2898 = vunpack.c.l.b16 %v379
  %v2899 = vunpack.c.l.b16 %v380
  %v2900 = vunpack.c.l.b16 %v381
  %v2901 = vunpack.c.l.b16 %v382
  %v2902 = vunpack.c.l.b16 %v383
  %v2903 = vunpack.c.l.b16 %v384
  %v2904 = vunpack.c.l.b16 %v385
  %v2905 = vunpack.c.l.b16 %v386
  %v2906 = vunpack.c.l.b16 %v387
  %v2907 = vunpack.c.l.b16 %v388
  %v2908 = vunpack.c.l.b16 %v389
  %v2909 = vunpack.c.l.b16 %v390
  %v2910 = vunpack.c.l.b16 %v391
  %v2911 = vunpack.c.l.b16 %v392
  %v2912 = vunpack.c.l.b16 %v393
  %v2913 = vunpack.c.l.b16 %v394
  %v2914 = vunpack.c.l.b16 %v395
  %v2915 = vunpack.c.l.b16 %v396
  %v2916 = vunpack.c.l.b16 %v397
  %v2917 = vunpack.c.l.b16 %v398
  %v2918 = vunpack.c.l.b16 %v399
  %v2919 = vunpack.c.l.b16 %v400
  %v2920 = vunpack.c.l.b16 %v401
  %v2921 = vunpack.c.l.b16 %v402
  %v2922 = vunpack.c.l.b16 %v403
  %v2923 = vunpack.c.l.b16 %v404
  %v2924 = vunpack.c.l.b16 %v405
  %v2925 = vunpack.c.l.b16 %v406
  %v2926 = vunpack.c.l.b16 %v407
  %v2927 = vunpack.c.l.b16 %v408
  %v2928 = vunpack.c.l.b16 %v409
  %v2929 = vunpack.c.l.b16 %v410
  %v2930 = vunpack.c.l.b16 %v411
  %v2931 = vunpack.c.l.b16 %v412
  %v2932 = vunpack.c.l.b16 %v413
  %v2933 = vunpack.c.l.b16 %v414
  %v2934 = vunpack.c.l.b16 %v415
  %v2935 = vunpack.c.l.b16 %v416
  %v2936 = vunpack.c.l.b16 %v417
  %v2937 = vunpack.c.l.b16 %v418
  %v2938 = vunpack.c.l.b16 %v419
  %v2939 = vunpack.c.l.b16 %v420
  %v2940 = vunpack.c.l.b16 %v421
  %v2941 = vunpack.c.l.b16 %v422
  %v2942 = vunpack.c.l.b16 %v423
  %v2943 = vunpack.c.l.b16 %v424
  %v2944 = vunpack.c.l.b16 %v425
  %v2945 = vunpack.c.l.b16 %v426
  %v2946 = vunpack.c.l.b16 %v427
  %v2947 = vunpack.c.l.b16 %v428
  %v2948 = vunpack.c.l.b16 %v429
  %v2949 = vunpack.c.l.b16 %v430
  %v2950 = vunpack.c.l.b16 %v431
  %v2951 = vunpack.c.l.b16 %v432
  %v2952 = vunpack.c.l.b16 %v433
  %v2953 = vunpack.c.l.b16 %v434
  %v2954 = vunpack.c.l.b16 %v435
  %v2955 = vunpack.c.l.b16 %v436
  %v2956 = vunpack.c.l.b16 %v437
  %v2957 = vunpack.c.l.b16 %v438
  %v2958 = vunpack.c.l.b16 %v439
  %v2959 = vunpack.c.l.b16 %v440
  %v2960 = vunpack.c.l.b16 %v441
  %v2961 = vunpack.c.l.b16 %v442
  %v2962 = vunpack.c.l.b16 %v443
  %v2963 = vunpack.c.l.b16 %v444
  %v2964 = vunpack.c.l.b16 %v445
  %v2965 = vunpack.c.l.b16 %v446
  %v2966 = vunpack.c.l.b16 %v447
  %v2967 = vunpack.c.l.b16 %v448
  %v2968 = vunpack.c.l.b16 %v449
  %v2969 = vunpack.c.l.b16 %v450
  %v2970 = vunpack.c.l.b16 %v451
  %v2971 = vunpack.c.l.b16 %v452
  %v2972 = vunpack.c.l.b16 %v453
  %v2973 = vunpack.c.l.b16 %v454
  %v2974 = vunpack.c.l.b16 %v455
  %v2975 = vunpack.c.l.b16 %v456
  %v2976 = vunpack.c.l.b16 %v457
  %v2977 = vunpack.c.l.b16 %v458
  %v2978 = vunpack.c.l.b16 %v459
  %v2979 = vunpack.c.l.b16 %v460
  %v2980 = vunpack.c.l.b16 %v461
  %v2981 = vunpack.c.l.b16 %v462
  %v2982 = vunpack.c.l.b16 %v463
  %v2983 = vunpack.c.l.b16 %v464
  %v2984 = vunpack.c.l.b16 %v465
  %v2985 = vunpack.c.l.b16 %v466
  %v2986 = vunpack.c.l.b16 %v467
  %v2987 = vunpack.c.l.b16 %v468
  %v2988 = vunpack.c.l.b16 %v469
  %v2989 = vunpack.c.l.b16 %v470
  %v2990 = vunpack.c.l.b16 %v471
  %v2991 = vunpack.c.l.b16 %v472
  %v2992 = vunpack.c.l.b16 %v473
  %v2993 = vunpack.c.l.b16 %v474
  %v2994 = vunpack.c.l.b16 %v475
  %v2995 = vunpack.c.l.b16 %v476
  %v2996 = vunpack.c.l.b16 %v477
  %v2997 = vunpack.c.l.b16 %v478
  %v2998 = vunpack.c.l.b16 %v479
  %v2999 = vunpack.c.l.b16 %v480
  %v3000 = vunpack.c.l.b16 %v481
  %v3001 = vunpack.c.l.b16 %v482
  %v3002 = vunpack.c.l.b16 %v483
  %v3003 = vunpack.c.l.b16 %v484
  %v3004 = vunpack.c.l.b16 %v485
  %v3005 = vunpack.c.l.b16 %v486
  %v3006 = vunpack.c.l.b16 %v487
  %v3007 = vunpack.c.l.b16 %v488
  %v3008 = vunpack.c.l.b16 %v489
  %v3009 = vunpack.c.l.b16 %v490
  %v3010 = vunpack.c.l.b16 %v491
  %v3011 = vunpack.c.l.b16 %v492
  %v3012 = vunpack.c.l.b16 %v493
  %v3013 = vunpack.c.l.b16 %v494
  %v3014 = vunpack.c.l.b16 %v495
  %v3015 = vunpack.c.l.b16 %v496
  %v3016 = vunpack.c.l.b16 %v497
  %v3017 = vunpack.c.l.b16 %v498
  %v3018 = vunpack.c.l.b16 %v499
  %v3019 = vunpack.c.l.b16 %v500
  %v3020 = vunpack.c.l.b16 %v501
  %v3021 = vunpack.c.l.b16 %v502
  %v3022 = vunpack.c.l.b16 %v503
  %v3023 = vunpack.c.l.b16 %v504
  %v3024 = vunpack.c.l.b16 %v505
  %v3025 = vunpack.c.l.b16 %v506
  %v3026 = vunpack.c.l.b16 %v507
  %v3027 = vunpack.c.l.b16 %v508
  %v3028 = vunpack.c.l.b16 %v509
  %v3029 = vunpack.c.l.b16 %v510
  %v3030 = vunpack.c.l.b16 %v511
  %v3031 = vunpack.c.l.b16 %v512
  %v3032 = vunpack.c.l.b16 %v513
  %v3033 = vunpack.c.l.b16 %v514
  %v3034 = vunpack.c.l.b16 %v515
  %v3035 = vunpack.c.l.b16 %v516
  %v3036 = vunpack.c.l.b16 %v517
  %v3037 = vunpack.c.l.b16 %v518
  %v3038 = vunpack.c.l.b16 %v519
  %v3039 = vunpack.c.l.b16 %v520
  %v3040 = vunpack.c.l.b16 %v521
  %v3041 = vunpack.c.l.b16 %v522
  %v3042 = vunpack.c.l.b16 %v523
  %v3043 = vunpack.c.l.b16 %v524
  %v3044 = vunpack.c.l.b16 %v525
  %v3045 = vunpack.c.l.b16 %v526
  %v3046 = vunpack.c.l.b16 %v527
  %v3047 = vunpack.c.l.b16 %v528
  %v3048 = vunpack.c.l.b16 %v529
  %v3049 = vunpack.c.l.b16 %v530
  %v3050 = vunpack.c.l.b16 %v531
  %v3051 = vunpack.c.l.b16 %v532
  %v3052 = vunpack.c.l.b16 %v533
  %v3053 = vunpack.c.l.b16 %v534
  %v3054 = vunpack.c.l.b16 %v535
  %v3055 = vunpack.c.l.b16 %v536
  %v3056 = vunpack.c.l.b16 %v537
  %v3057 = vunpack.c.l.b16 %v538
  %v3058 = vunpack.c.l.b16 %v539
  %v3059 = vunpack.c.l.b16 %v540
  %v3060 = vunpack.c.l.b16 %v541
  %v3061 = vunpack.c.l.b16 %v542
  %v3062 = vunpack.c.l.b16 %v543
  %v3063 = vunpack.c.l.b16 %v544
  %v3064 = vunpack.c.l.b16 %v545
  %v3065 = vunpack.c.l.b16 %v546
  %v3066 = vunpack.c.l.b16 %v547
  %v3067 = vunpack.c.l.b16 %v548
  %v3068 = vunpack.c.l.b16 %v549
  %v3069 = vunpack.c.l.b16 %v550
  %v3070 = vunpack.c.l.b16 %v551
  %v3071 = vunpack.c.l.b16 %v552
  %v3072 = vunpack.c.l.b16 %v553
  %v3073 = vunpack.c.l.b16 %v554
  %v3074 = vunpack.c.l.b16 %v555
  %v3075 = vunpack.c.l.b16 %v556
  %v3076 = vunpack.c.l.b16 %v557
  %v3077 = vunpack.c.l.b16 %v558
  %v3078 = vunpack.c.l.b16 %v559
  %v3079 = vunpack.c.l.b16 %v560
  %v3080 = vunpack.c.l.b16 %v561
  %v3081 = vunpack.c.l.b16 %v562
  %v3082 = vunpack.c.l.b16 %v563
  %v3083 = vunpack.c.l.b16 %v564
  %v3084 = vunpack.c.l.b16 %v565
  %v3085 = vunpack.c.l.b16 %v566
  %v3086 = vunpack.c.l.b16 %v567
  %v3087 = vunpack.c.l.b16 %v568
  %v3088 = vunpack.c.l.b16 %v569
  %v3089 = vunpack.c.l.b16 %v570
  %v3090 = vunpack.c.l.b16 %v571
  %v3091 = vunpack.c.l.b16 %v572
  %v3092 = vunpack.c.l.b16 %v573
  %v3093 = vunpack.c.l.b16 %v574
  %v3094 = vunpack.c.l.b16 %v575
  %v3095 = vunpack.c.l.b16 %v576
  %v3096 = vunpack.c.l.b16 %v577
  %v3097 = vunpack.c.l.b16 %v578
  %v3098 = vunpack.c.l.b16 %v579
  %v3099 = vunpack.c.l.b16 %v580
  %v3100 = vunpack.c.l.b16 %v581
  %v3101 = vunpack.c.l.b16 %v582
  %v3102 = vunpack.c.l.b16 %v583
  %v3103 = vunpack.c.l.b16 %v584
  %v3104 = vunpack.c.l.b16 %v585
  %v3105 = vunpack.c.l.b16 %v586
  %v3106 = vunpack.c.l.b16 %v587
  %v3107 = vunpack.c.l.b16 %v588
  %v3108 = vunpack.c.l.b16 %v589
  %v3109 = vunpack.c.l.b16 %v590
  %v3110 = vunpack.c.l.b16 %v591
  %v3111 = vunpack.c.l.b16 %v592
  %v3112 = vunpack.c.l.b16 %v593
  %v3113 = vunpack.c.l.b16 %v594
  %v3114 = vunpack.c.l.b16 %v595
  %v3115 = vunpack.c.l.b16 %v596
  %v3116 = vunpack.c.l.b16 %v597
  %v3117 = vunpack.c.l.b16 %v598
  %v3118 = vunpack.c.l.b16 %v599
  %v3119 = vunpack.c.l.b16 %v600
  %v3120 = vunpack.c.l.b16 %v601
  %v3121 = vunpack.c.l.b16 %v602
  %v3122 = vunpack.c.l.b16 %v603
  %v3123 = vunpack.c.l.b16 %v604
  %v3124 = vunpack.c.l.b16 %v605
  %v3125 = vunpack.c.l.b16 %v606
  %v3126 = vunpack.c.l.b16 %v607
  %v3127 = vunpack.c.l.b16 %v608
  %v3128 = vunpack.c.l.b16 %v609
  %v3129 = vunpack.c.l.b16 %v610
  %v3130 = vunpack.c.l.b16 %v611
  %v3131 = vunpack.c.l.b16 %v612
  %v3132 = vunpack.c.l.b16 %v613
  %v3133 = vunpack.c.l.b16 %v614
  %v3134 = vunpack.c.l.b16 %v615
  %v3135 = vunpack.c.l.b16 %v616
  %v3136 = vunpack.c.l.b16 %v617
  %v3137 = vunpack.c.l.b16 %v618
  %v3138 = vunpack.c.l.b16 %v619
  %v3139 = vunpack.c.l.b16 %v620
  %v3140 = vunpack.c.l.b16 %v621
  %v3141 = vunpack.c.l.b16 %v622
  %v3142 = vunpack.c.l.b16 %v623
  %v3143 = vunpack.c.l.b16 %v624
  %v3144 = vunpack.c.l.b16 %v625
  %v3145 = vunpack.c.l.b16 %v626
  %v3146 = vunpack.c.l.b16 %v627
  %v3147 = vunpack.c.l.b16 %v628
  %v3148 = vunpack.c.l.b16 %v629
  %v3149 = vunpack.c.l.b16 %v630
  %v3150 = vunpack.c.l.b16 %v631
  %v3151 = vunpack.c.l.b16 %v632
  %v3152 = vunpack.c.l.b16 %v633
  %v3153 = vunpack.c.l.b16 %v634
  %v3154 = vunpack.c.l.b16 %v635
  %v3155 = vunpack.c.l.b16 %v636
  %v3156 = vunpack.c.l.b16 %v637
  %v3157 = vunpack.c.l.b16 %v638
  %v3158 = vunpack.c.l.b16 %v639
  %v3159 = vunpack.c.l.b16 %v640
  %v3160 = vunpack.c.l.b16 %v641
  %v3161 = vunpack.c.l.b16 %v642
  %v3162 = vunpack.c.l.b16 %v643
  %v3163 = vunpack.c.l.b16 %v644
  %v3164 = vunpack.c.l.b16 %v645
  %v3165 = vunpack.c.l.b16 %v646
  %v3166 = vunpack.c.l.b16 %v647
  %v3167 = vunpack.c.l.b16 %v648
  %v3168 = vunpack.c.l.b16 %v649
  %v3169 = vunpack.c.l.b16 %v650
  %v3170 = vunpack.c.l.b16 %v651
  %v3171 = vunpack.c.l.b16 %v652
  %v3172 = vunpack.c.l.b16 %v653
  %v3173 = vunpack.c.l.b16 %v654
  %v3174 = vunpack.c.l.b16 %v655
  %v3175 = vunpack.c.l.b16 %v656
  %v3176 = vunpack.c.l.b16 %v657
  %v3177 = vunpack.c.l.b16 %v658
  %v3178 = vunpack.c.l.b16 %v659
  %v3179 = vunpack.c.l.b16 %v660
  %v3180 = vunpack.c.l.b16 %v661
  %v3181 = vunpack.c.l.b16 %v662
  %v3182 = vunpack.c.l.b16 %v663
  %v3183 = vunpack.c.l.b16 %v664
  %v3184 = vunpack.c.l.b16 %v665
  %v3185 = vunpack.c.l.b16 %v666
  %v3186 = vunpack.c.l.b16 %v667
  %v3187 = vunpack.c.l.b16 %v668
  %v3188 = vunpack.c.l.b16 %v669
  %v3189 = vunpack.c.l.b16 %v670
  %v3190 = vunpack.c.l.b16 %v671
  %v3191 = vunpack.c.l.b16 %v672
  %v3192 = vunpack.c.l.b16 %v673
  %v3193 = vunpack.c.l.b16 %v674
  %v3194 = vunpack.c.l.b16 %v675
  %v3195 = vunpack.c.l.b16 %v676
  %v3196 = vunpack.c.l.b16 %v677
  %v3197 = vunpack.c.l.b16 %v678
  %v3198 = vunpack.c.l.b16 %v679
  %v3199 = vunpack.c.l.b16 %v680
  %v3200 = vunpack.c.l.b16 %v681
  %v3201 = vunpack.c.l.b16 %v682
  %v3202 = vunpack.c.l.b16 %v683
  %v3203 = vunpack.c.l.b16 %v684
  %v3204 = vunpack.c.l.b16 %v685
  %v3205 = vunpack.c.l.b16 %v686
  %v3206 = vunpack.c.l.b16 %v687
  %v3207 = vunpack.c.l.b16 %v688
  %v3208 = vunpack.c.l.b16 %v689
  %v3209 = vunpack.c.l.b16 %v690
  %v3210 = vunpack.c.l.b16 %v691
  %v3211 = vunpack.c.l.b16 %v692
  %v3212 = vunpack.c.l.b16 %v693
  %v3213 = vunpack.c.l.b16 %v694
  %v3214 = vunpack.c.l.b16 %v695
  %v3215 = vunpack.c.l.b16 %v696
  %v3216 = vunpack.c.l.b16 %v697
  %v3217 = vunpack.c.l.b16 %v698
  %v3218 = vunpack.c.l.b16 %v699
  %v3219 = vunpack.c.l.b16 %v700
  %v3220 = vunpack.c.l.b16 %v701
  %v3221 = vunpack.c.l.b16 %v702
  %v3222 = vunpack.c.l.b16 %v703
  %v3223 = vunpack.c.l.b16 %v704
  %v3224 = vunpack.c.l.b16 %v705
  %v3225 = vunpack.c.l.b16 %v706
  %v3226 = vunpack.c.l.b16 %v707
  %v3227 = vunpack.c.l.b16 %v708
  %v3228 = vunpack.c.l.b16 %v709
  %v3229 = vunpack.c.l.b16 %v710
  %v3230 = vunpack.c.l.b16 %v711
  %v3231 = vunpack.c.l.b16 %v712
  %v3232 = vunpack.c.l.b16 %v713
  %v3233 = vunpack.c.l.b16 %v714
  %v3234 = vunpack.c.l.b16 %v715
  %v3235 = vunpack.c.l.b16 %v716
  %v3236 = vunpack.c.l.b16 %v717
  %v3237 = vunpack.c.l.b16 %v718
  %v3238 = vunpack.c.l.b16 %v719
  %v3239 = vunpack.c.l.b16 %v720
  %v3240 = vunpack.c.l.b16 %v721
  %v3241 = vunpack.c.l.b16 %v722
  %v3242 = vunpack.c.l.b16 %v723
  %v3243 = vunpack.c.l.b16 %v724
  %v3244 = vunpack.c.l.b16 %v725
  %v3245 = vunpack.c.l.b16 %v726
  %v3246 = vunpack.c.l.b16 %v727
  %v3247 = vunpack.c.l.b16 %v728
  %v3248 = vunpack.c.l.b16 %v729
  %v3249 = vunpack.c.l.b16 %v730
  %v3250 = vunpack.c.l.b16 %v731
  %v3251 = vunpack.c.l.b16 %v732
  %v3252 = vunpack.c.l.b16 %v733
  %v3253 = vunpack.c.l.b16 %v734
  %v3254 = vunpack.c.l.b16 %v735
  %v3255 = vunpack.c.l.b16 %v736
  %v3256 = vunpack.c.l.b16 %v737
  %v3257 = vunpack.c.l.b16 %v738
  %v3258 = vunpack.c.l.b16 %v739
  %v3259 = vunpack.c.l.b16 %v740
  %v3260 = vunpack.c.l.b16 %v741
  %v3261 = vunpack.c.l.b16 %v742
  %v3262 = vunpack.c.l.b16 %v743
  %v3263 = vunpack.c.l.b16 %v744
  %v3264 = vunpack.c.l.b16 %v745
  %v3265 = vunpack.c.l.b16 %v746
  %v3266 = vunpack.c.l.b16 %v747
  %v3267 = vunpack.c.l.b16 %v748
  %v3268 = vunpack.c.l.b16 %v749
  %v3269 = vunpack.c.l.b16 %v750
  %v3270 = vunpack.c.l.b16 %v751
  %v3271 = vunpack.c.l.b16 %v752
  %v3272 = vunpack.c.l.b16 %v753
  %v3273 = vunpack.c.l.b16 %v754
  %v3274 = vunpack.c.l.b16 %v755
  %v3275 = vunpack.c.l.b16 %v756
  %v3276 = vunpack.c.l.b16 %v757
  %v3277 = vunpack.c.l.b16 %v758
  %v3278 = vunpack.c.l.b16 %v759
  %v3279 = vunpack.c.l.b16 %v760
  %v3280 = vunpack.c.l.b16 %v761
  %v3281 = vunpack.c.l.b16 %v762
  %v3282 = vunpack.c.l.b16 %v763
  %v3283 = vunpack.c.l.b16 %v764
  %v3284 = vunpack.c.l.b16 %v765
  %v3285 = vunpack.c.l.b16 %v766
  %v3286 = vunpack.c.l.b16 %v767
  %v3287 = vunpack.c.l.b16 %v768
  %v3288 = vunpack.c.l.b16 %v769
  %v3289 = vunpack.c.l.b16 %v770
  %v3290 = vunpack.c.l.b16 %v771
  %v3291 = vunpack.c.l.b16 %v772
  %v3292 = vunpack.c.l.b16 %v773
  %v3293 = vunpack.c.l.b16 %v774
  %v3294 = vunpack.c.l.b16 %v775
  %v3295 = vunpack.c.l.b16 %v776
  %v3296 = vunpack.c.l.b16 %v777
  %v3297 = vunpack.c.l.b16 %v778
  %v3298 = vunpack.c.l.b16 %v779
  %v3299 = vunpack.c.l.b16 %v780
  %v3300 = vunpack.c.l.b16 %v781
  %v3301 = vunpack.c.l.b16 %v782
  %v3302 = vunpack.c.l.b16 %v783
  %v3303 = vunpack.c.l.b16 %v784
  %v3304 = vunpack.c.l.b16 %v785
  %v3305 = vunpack.c.l.b16 %v786
  %v3306 = vunpack.c.l.b16 %v787
  %v3307 = vunpack.c.l.b16 %v788
  %v3308 = vunpack.c.l.b16 %v789
  %v3309 = vunpack.c.l.b16 %v790
  %v3310 = vunpack.c.l.b16 %v791
  %v3311 = vunpack.c.l.b16 %v792
  %v3312 = vunpack.c.l.b16 %v793
  %v3313 = vunpack.c.l.b16 %v794
  %v3314 = vunpack.c.l.b16 %v795
  %v3315 = vunpack.c.l.b16 %v796
  %v3316 = vunpack.c.l.b16 %v797
  %v3317 = vunpack.c.l.b16 %v798
  %v3318 = vunpack.c.l.b16 %v799
  %v3319 = vunpack.c.l.b16 %v800
  %v3320 = vunpack.c.l.b16 %v801
  %v3321 = vunpack.c.l.b16 %v802
  %v3322 = vunpack.c.l.b16 %v803
  %v3323 = vunpack.c.l.b16 %v804
  %v3324 = vunpack.c.l.b16 %v805
  %v3325 = vunpack.c.l.b16 %v806
  %v3326 = vunpack.c.l.b16 %v807
  %v3327 = vunpack.c.l.b16 %v808
  %v3328 = vunpack.c.l.b16 %v809
  %v3329 = vunpack.c.l.b16 %v810
  %v3330 = vunpack.c.l.b16 %v811
  %v3331 = vunpack.c.l.b16 %v812
  %v3332 = vunpack.c.l.b16 %v813
  %v3333 = vunpack.c.l.b16 %v814
  %v3334 = vunpack.c.l.b16 %v815
  %v3335 = vunpack.c.l.b16 %v816
  %v3336 = vunpack.c.l.b16 %v817
  %v3337 = vunpack.c.l.b16 %v818
  %v3338 = vunpack.c.l.b16 %v819
  %v3339 = vunpack.c.l.b16 %v820
  %v3340 = vunpack.c.l.b16 %v821
  %v3341 = vunpack.c.l.b16 %v822
  %v3342 = vunpack.c.l.b16 %v823
  %v3343 = vunpack.c.l.b16 %v824
  %v3344 = vunpack.c.l.b16 %v825
  %v3345 = vunpack.c.l.b16 %v826
  %v3346 = vunpack.c.l.b16 %v827
  %v3347 = vunpack.c.l.b16 %v828
  %v3348 = vunpack.c.l.b16 %v829
  %v3349 = vunpack.c.l.b16 %v830
  %v3350 = vunpack.c.l.b16 %v831
  %v3351 = vunpack.c.l.b16 %v832
  %v3352 = vunpack.c.l.b16 %v833
  %v3353 = vunpack.c.l.b16 %v834
  %v3354 = vunpack.c.l.b16 %v835
  %v3355 = vunpack.c.l.b16 %v836
  %v3356 = vunpack.c.l.b16 %v837
  %v3357 = vunpack.c.l.b16 %v838
  %v3358 = vunpack.c.l.b16 %v839
  %v3359 = vunpack.c.l.b16 %v840
  %v3360 = vunpack.c.l.b16 %v841
  %v3361 = vunpack.c.l.b16 %v842
  %v3362 = vunpack.c.l.b16 %v843
  %v3363 = vunpack.c.l.b16 %v844
  %v3364 = vunpack.c.l.b16 %v845
  %v3365 = vunpack.c.l.b16 %v846
  %v3366 = vunpack.c.l.b16 %v847
  %v3367 = vunpack.c.l.b16 %v848
  %v3368 = vunpack.c.l.b16 %v849
  %v3369 = vunpack.c.l.b16 %v850
  %v3370 = vunpack.c.l.b16 %v851
  %v3371 = vunpack.c.l.b16 %v852
  %v3372 = vunpack.c.l.b16 %v853
  %v3373 = vunpack.c.l.b16 %v854
  %v3374 = vunpack.c.l.b16 %v855
  %v3375 = vunpack.c.l.b16 %v856
  %v3376 = vunpack.c.l.b16 %v857
  %v3377 = vunpack.c.l.b16 %v858
  %v3378 = vunpack.c.l.b16 %v859
  %v3379 = vunpack.c.l.b16 %v860
  %v3380 = vunpack.c.l.b16 %v861
  %v3381 = vunpack.c.l.b16 %v862
  %v3382 = vunpack.c.l.b16 %v863
  %v3383 = vunpack.c.l.b16 %v864
  %v3384 = vunpack.c.l.b16 %v865
  %v3385 = vunpack.c.l.b16 %v866
  %v3386 = vunpack.c.l.b16 %v867
  %v3387 = vunpack.c.l.b16 %v868
  %v3388 = vunpack.c.l.b16 %v869
  %v3389 = vunpack.c.l.b16 %v870
  %v3390 = vunpack.c.l.b16 %v871
  %v3391 = vunpack.c.l.b16 %v872
  %v3392 = vunpack.c.l.b16 %v873
  %v3393 = vunpack.c.l.b16 %v874
  %v3394 = vunpack.c.l.b16 %v875
  %v3395 = vunpack.c.l.b16 %v876
  %v3396 = vunpack.c.l.b16 %v877
  %v3397 = vunpack.c.l.b16 %v878
  %v3398 = vunpack.c.l.b16 %v879
  %v3399 = vunpack.c.l.b16 %v880
  %v3400 = vunpack.c.l.b16 %v881
  %v3401 = vunpack.c.l.b16 %v882
  %v3402 = vunpack.c.l.b16 %v883
  %v3403 = vunpack.c.l.b16 %v884
  %v3404 = vunpack.c.l.b16 %v885
  %v3405 = vunpack.c.l.b16 %v886
  %v3406 = vunpack.c.l.b16 %v887
  %v3407 = vunpack.c.l.b16 %v888
  %v3408 = vunpack.c.l.b16 %v889
  %v3409 = vunpack.c.l.b16 %v890
  %v3410 = vunpack.c.l.b16 %v891
  %v3411 = vunpack.c.l.b16 %v892
  %v3412 = vunpack.c.l.b16 %v893
  %v3413 = vunpack.c.l.b16 %v894
  %v3414 = vunpack.c.l.b16 %v895
  %v3415 = vunpack.c.l.b16 %v896
  %v3416 = vunpack.c.l.b16 %v897
  %v3417 = vunpack.c.l.b16 %v898
  %v3418 = vunpack.c.l.b16 %v899
  %v3419 = vunpack.c.l.b16 %v900
  %v3420 = vunpack.c.l.b16 %v901
  %v3421 = vunpack.c.l.b16 %v902
  %v3422 = vunpack.c.l.b16 %v903
  %v3423 = vunpack.c.l.b16 %v904
  %v3424 = vunpack.c.l.b16 %v905
  %v3425 = vunpack.c.l.b16 %v906
  %v3426 = vunpack.c.l.b16 %v907
  %v3427 = vunpack.c.l.b16 %v908
  %v3428 = vunpack.c.l.b16 %v909
  %v3429 = vunpack.c.l.b16 %v910
  %v3430 = vunpack.c.l.b16 %v911
  %v3431 = vunpack.c.l.b16 %v912
  %v3432 = vunpack.c.l.b16 %v913
  %v3433 = vunpack.c.l.b16 %v914
  %v3434 = vunpack.c.l.b16 %v915
  %v3435 = vunpack.c.l.b16 %v916
  %v3436 = vunpack.c.l.b16 %v917
  %v3437 = vunpack.c.l.b16 %v918
  %v3438 = vunpack.c.l.b16 %v919
  %v3439 = vunpack.c.l.b16 %v920
  %v3440 = vunpack.c.l.b16 %v921
  %v3441 = vunpack.c.l.b16 %v922
  %v3442 = vunpack.c.l.b16 %v923
  %v3443 = vunpack.c.l.b16 %v924
  %v3444 = vunpack.c.l.b16 %v925
  %v3445 = vunpack.c.l.b16 %v926
  %v3446 = vunpack.c.l.b16 %v927
  %v3447 = vunpack.c.l.b16 %v928
  %v3448 = vunpack.c.l.b16 %v929
  %v3449 = vunpack.c.l.b16 %v930
  %v3450 = vunpack.c.l.b16 %v931
  %v3451 = vunpack.c.l.b16 %v932
  %v3452 = vunpack.c.l.b16 %v933
  %v3453 = vunpack.c.l.b16 %v934
  %v3454 = vunpack.c.l.b16 %v935
  %v3455 = vunpack.c.l.b16 %v936
  %v3456 = vunpack.c.l.b16 %v937
  %v3457 = vunpack.c.l.b16 %v938
  %v3458 = vunpack.c.l.b16 %v939
  %v3459 = vunpack.c.l.b16 %v940
  %v3460 = vunpack.c.l.b16 %v941
  %v3461 = vunpack.c.l.b16 %v942
  %v3462 = vunpack.c.l.b16 %v943
  %v3463 = vunpack.c.l.b16 %v944
  %v3464 = vunpack.c.l.b16 %v945
  %v3465 = vunpack.c.l.b16 %v946
  %v3466 = vunpack.c.l.b16 %v947
  %v3467 = vunpack.c.l.b16 %v948
  %v3468 = vunpack.c.l.b16 %v949
  %v3469 = vunpack.c.l.b16 %v950
  %v3470 = vunpack.c.l.b16 %v951
  %v3471 = vunpack.c.l.b16 %v952
  %v3472 = vunpack.c.l.b16 %v953
  %v3473 = vunpack.c.l.b16 %v954
  %v3474 = vunpack.c.l.b16 %v955
  %v3475 = vunpack.c.l.b16 %v956
  %v3476 = vunpack.c.l.b16 %v957
  %v3477 = vunpack.c.l.b16 %v958
  %v3478 = vunpack.c.l.b16 %v959
  %v3479 = vunpack.c.l.b16 %v960
  %v3480 = vunpack.c.l.b16 %v961
  %v3481 = vunpack.c.l.b16 %v962
  %v3482 = vunpack.c.l.b16 %v963
  %v3483 = vunpack.c.l.b16 %v964
  %v3484 = vunpack.c.l.b16 %v965
  %v3485 = vunpack.c.l.b16 %v966
  %v3486 = vunpack.c.l.b16 %v967
  %v3487 = vunpack.c.l.b16 %v968
  %v3488 = vunpack.c.l.b16 %v969
  %v3489 = vunpack.c.l.b16 %v970
  %v3490 = vunpack.c.l.b16 %v971
  %v3491 = vunpack.c.l.b16 %v972
  %v3492 = vunpack.c.l.b16 %v973
  %v3493 = vunpack.c.l.b16 %v974
  %v3494 = vunpack.c.l.b16 %v975
  %v3495 = vunpack.c.l.b16 %v976
  %v3496 = vunpack.c.l.b16 %v977
  %v3497 = vunpack.c.l.b16 %v978
  %v3498 = vunpack.c.l.b16 %v979
  %v3499 = vunpack.c.l.b16 %v980
  %v3500 = vunpack.c.l.b16 %v981
  %v3501 = vunpack.c.l.b16 %v982
  %v3502 = vunpack.c.l.b16 %v983
  %v3503 = vunpack.c.l.b16 %v984
  %v3504 = vunpack.c.l.b16 %v985
  %v3505 = vunpack.c.l.b16 %v986
  %v3506 = vunpack.c.l.b16 %v987
  %v3507 = vunpack.c.l.b16 %v988
  %v3508 = vunpack.c.l.b16 %v989
  %v3509 = vunpack.c.l.b16 %v990
  %v3510 = vunpack.c.l.b16 %v991
  %v3511 = vunpack.c.l.b16 %v992
  %v3512 = vunpack.c.l.b16 %v993
  %v3513 = vunpack.c.l.b16 %v994
  %v3514 = vunpack.c.l.b16 %v995
  %v3515 = vunpack.c.l.b16 %v996
  %v3516 = vunpack.c.l.b16 %v997
  %v3517 = vunpack.c.l.b16 %v998
  %v3518 = vunpack.c.l.b16 %v999
  %v3519 = vunpack.c.l.b16 %v1000
  %v3520 = vunpack.c.l.b16 %v1001
  %v3521 = vunpack.c.l.b16 %v1002
  %v3522 = vunpack.c.l.b16 %v1003
  %v3523 = vunpack.c.l.b16 %v1004
  %v3524 = vunpack.c.l.b16 %v1005
  %v3525 = vunpack.c.l.b16 %v1006
  %v3526 = vunpack.c.l.b16 %v1007
  %v3527 = vunpack.c.l.b16 %v1008
  %v3528 = vunpack.c.l.b16 %v1009
  %v3529 = vunpack.c.l.b16 %v1010
  %v3530 = vunpack.c.l.b16 %v1011
  %v3531 = vunpack.c.l.b16 %v1012
  %v3532 = vunpack.c.l.b16 %v1013
  %v3533 = vunpack.c.l.b16 %v1014
  %v3534 = vunpack.c.l.b16 %v1015
  %v3535 = vunpack.c.l.b16 %v1016
  %v3536 = vunpack.c.l.b16 %v1017
  %v3537 = vunpack.c.l.b16 %v1018
  %v3538 = vunpack.c.l.b16 %v1019
  %v3539 = vunpack.c.l.b16 %v1020
  %v3540 = vunpack.c.l.b16 %v1021
  %v3541 = vunpack.c.l.b16 %v1022
  %v3542 = vunpack.c.l.b16 %v1023
  %v3543 = vunpack.c.l.b16 %v1024
  %v3544 = vunpack.c.l.b16 %v1025
  %v3545 = vunpack.c.l.b16 %v1026
  %v3546 = vunpack.c.l.b16 %v1027
  %v3547 = vunpack.c.l.b16 %v1028
  %v3548 = vunpack.c.l.b16 %v1029
  %v3549 = vunpack.c.l.b16 %v1030
  %v3550 = vunpack.c.l.b16 %v1031
  %v3551 = vunpack.c.l.b16 %v1032
  %v3552 = vunpack.c.l.b16 %v1033
  %v3553 = vunpack.c.l.b16 %v1034
  %v3554 = vunpack.c.l.b16 %v1035
  %v3555 = vunpack.c.l.b16 %v1036
  %v3556 = vunpack.c.l.b16 %v1037
  %v3557 = vunpack.c.l.b16 %v1038
  %v3558 = vunpack.c.l.b16 %v1039
  %v3559 = vunpack.c.l.b16 %v1040
  %v3560 = vunpack.c.l.b16 %v1041
  %v3561 = vunpack.c.l.b16 %v1042
  %v3562 = vunpack.c.l.b16 %v1043
  %v3563 = vunpack.c.l.b16 %v1044
  %v3564 = vunpack.c.l.b16 %v1045
  %v3565 = vunpack.c.l.b16 %v1046
  %v3566 = vunpack.c.l.b16 %v1047
  %v3567 = vunpack.c.l.b16 %v1048
  %v3568 = vunpack.c.l.b16 %v1049
  %v3569 = vunpack.c.l.b16 %v1050
  %v3570 = vunpack.c.l.b16 %v1051
  %v3571 = vunpack.c.l.b16 %v1052
  %v3572 = vpack.c.b16 %v2549, %v2548
  %v3573 = vpack.c.b16 %v2551, %v2550
  %v3574 = vpack.c.b16 %v2553, %v2552
  %v3575 = vpack.c.b16 %v2555, %v2554
  %v3576 = vpack.c.b16 %v2557, %v2556
  %v3577 = vpack.c.b16 %v2559, %v2558
  %v3578 = vpack.c.b16 %v2561, %v2560
  %v3579 = vpack.c.b16 %v2563, %v2562
  %v3580 = vpack.c.b16 %v2565, %v2564
  %v3581 = vpack.c.b16 %v2567, %v2566
  %v3582 = vpack.c.b16 %v2569, %v2568
  %v3583 = vpack.c.b16 %v2571, %v2570
  %v3584 = vpack.c.b16 %v2573, %v2572
  %v3585 = vpack.c.b16 %v2575, %v2574
  %v3586 = vpack.c.b16 %v2577, %v2576
  %v3587 = vpack.c.b16 %v2579, %v2578
  %v3588 = vpack.c.b16 %v2581, %v2580
  %v3589 = vpack.c.b16 %v2583, %v2582
  %v3590 = vpack.c.b16 %v2585, %v2584
  %v3591 = vpack.c.b16 %v2587, %v2586
  %v3592 = vpack.c.b16 %v2589, %v2588
  %v3593 = vpack.c.b16 %v2591, %v2590
  %v3594 = vpack.c.b16 %v2593, %v2592
  %v3595 = vpack.c.b16 %v2595, %v2594
  %v3596 = vpack.c.b16 %v2597, %v2596
  %v3597 = vpack.c.b16 %v2599, %v2598
  %v3598 = vpack.c.b16 %v2601, %v2600
  %v3599 = vpack.c.b16 %v2603, %v2602
  %v3600 = vpack.c.b16 %v2605, %v2604
  %v3601 = vpack.c.b16 %v2607, %v2606
  %v3602 = vpack.c.b16 %v2609, %v2608
  %v3603 = vpack.c.b16 %v2611, %v2610
  %v3604 = vpack.c.b16 %v2613, %v2612
  %v3605 = vpack.c.b16 %v2615, %v2614
  %v3606 = vpack.c.b16 %v2617, %v2616
  %v3607 = vpack.c.b16 %v2619, %v2618
  %v3608 = vpack.c.b16 %v2621, %v2620
  %v3609 = vpack.c.b16 %v2623, %v2622
  %v3610 = vpack.c.b16 %v2625, %v2624
  %v3611 = vpack.c.b16 %v2627, %v2626
  %v3612 = vpack.c.b16 %v2629, %v2628
  %v3613 = vpack.c.b16 %v2631, %v2630
  %v3614 = vpack.c.b16 %v2633, %v2632
  %v3615 = vpack.c.b16 %v2635, %v2634
  %v3616 = vpack.c.b16 %v2637, %v2636
  %v3617 = vpack.c.b16 %v2639, %v2638
  %v3618 = vpack.c.b16 %v2641, %v2640
  %v3619 = vpack.c.b16 %v2643, %v2642
  %v3620 = vpack.c.b16 %v2645, %v2644
  %v3621 = vpack.c.b16 %v2647, %v2646
  %v3622 = vpack.c.b16 %v2649, %v2648
  %v3623 = vpack.c.b16 %v2651, %v2650
  %v3624 = vpack.c.b16 %v2653, %v2652
  %v3625 = vpack.c.b16 %v2655, %v2654
  %v3626 = vpack.c.b16 %v2657, %v2656
  %v3627 = vpack.c.b16 %v2659, %v2658
  %v3628 = vpack.c.b16 %v2661, %v2660
  %v3629 = vpack.c.b16 %v2663, %v2662
  %v3630 = vpack.c.b16 %v2665, %v2664
  %v3631 = vpack.c.b16 %v2667, %v2666
  %v3632 = vpack.c.b16 %v2669, %v2668
  %v3633 = vpack.c.b16 %v2671, %v2670
  %v3634 = vpack.c.b16 %v2673, %v2672
  %v3635 = vpack.c.b16 %v2675, %v2674
  %v3636 = vpack.c.b16 %v2677, %v2676
  %v3637 = vpack.c.b16 %v2679, %v2678
  %v3638 = vpack.c.b16 %v2681, %v2680
  %v3639 = vpack.c.b16 %v2683, %v2682
  %v3640 = vpack.c.b16 %v2685, %v2684
  %v3641 = vpack.c.b16 %v2687, %v2686
  %v3642 = vpack.c.b16 %v2689, %v2688
  %v3643 = vpack.c.b16 %v2691, %v2690
  %v3644 = vpack.c.b16 %v2693, %v2692
  %v3645 = vpack.c.b16 %v2695, %v2694
  %v3646 = vpack.c.b16 %v2697, %v2696
  %v3647 = vpack.c.b16 %v2699, %v2698
  %v3648 = vpack.c.b16 %v2701, %v2700
  %v3649 = vpack.c.b16 %v2703, %v2702
  %v3650 = vpack.c.b16 %v2705, %v2704
  %v3651 = vpack.c.b16 %v2707, %v2706
  %v3652 = vpack.c.b16 %v2709, %v2708
  %v3653 = vpack.c.b16 %v2711, %v2710
  %v3654 = vpack.c.b16 %v2713, %v2712
  %v3655 = vpack.c.b16 %v2715, %v2714
  %v3656 = vpack.c.b16 %v2717, %v2716
  %v3657 = vpack.c.b16 %v2719, %v2718
  %v3658 = vpack.c.b16 %v2721, %v2720
  %v3659 = vpack.c.b16 %v2723, %v2722
  %v3660 = vpack.c.b16 %v2725, %v2724
  %v3661 = vpack.c.b16 %v2727, %v2726
  %v3662 = vpack.c.b16 %v2729, %v2728
  %v3663 = vpack.c.b16 %v2731, %v2730
  %v3664 = vpack.c.b16 %v2733, %v2732
  %v3665 = vpack.c.b16 %v2735, %v2734
  %v3666 = vpack.c.b16 %v2737, %v2736
  %v3667 = vpack.c.b16 %v2739, %v2738
  %v3668 = vpack.c.b16 %v2741, %v2740
  %v3669 = vpack.c.b16 %v2743, %v2742
  %v3670 = vpack.c.b16 %v2745, %v2744
  %v3671 = vpack.c.b16 %v2747, %v2746
  %v3672 = vpack.c.b16 %v2749, %v2748
  %v3673 = vpack.c.b16 %v2751, %v2750
  %v3674 = vpack.c.b16 %v2753, %v2752
  %v3675 = vpack.c.b16 %v2755, %v2754
  %v3676 = vpack.c.b16 %v2757, %v2756
  %v3677 = vpack.c.b16 %v2759, %v2758
  %v3678 = vpack.c.b16 %v2761, %v2760
  %v3679 = vpack.c.b16 %v2763, %v2762
  %v3680 = vpack.c.b16 %v2765, %v2764
  %v3681 = vpack.c.b16 %v2767, %v2766
  %v3682 = vpack.c.b16 %v2769, %v2768
  %v3683 = vpack.c.b16 %v2771, %v2770
  %v3684 = vpack.c.b16 %v2773, %v2772
  %v3685 = vpack.c.b16 %v2775, %v2774
  %v3686 = vpack.c.b16 %v2777, %v2776
  %v3687 = vpack.c.b16 %v2779, %v2778
  %v3688 = vpack.c.b16 %v2781, %v2780
  %v3689 = vpack.c.b16 %v2783, %v2782
  %v3690 = vpack.c.b16 %v2785, %v2784
  %v3691 = vpack.c.b16 %v2787, %v2786
  %v3692 = vpack.c.b16 %v2789, %v2788
  %v3693 = vpack.c.b16 %v2791, %v2790
  %v3694 = vpack.c.b16 %v2793, %v2792
  %v3695 = vpack.c.b16 %v2795, %v2794
  %v3696 = vpack.c.b16 %v2797, %v2796
  %v3697 = vpack.c.b16 %v2799, %v2798
  %v3698 = vpack.c.b16 %v2801, %v2800
  %v3699 = vpack.c.b16 %v2803, %v2802
  %v3700 = vpack.c.b16 %v2805, %v2804
  %v3701 = vpack.c.b16 %v2807, %v2806
  %v3702 = vpack.c.b16 %v2809, %v2808
  %v3703 = vpack.c.b16 %v2811, %v2810
  %v3704 = vpack.c.b16 %v2813, %v2812
  %v3705 = vpack.c.b16 %v2815, %v2814
  %v3706 = vpack.c.b16 %v2817, %v2816
  %v3707 = vpack.c.b16 %v2819, %v2818
  %v3708 = vpack.c.b16 %v2821, %v2820
  %v3709 = vpack.c.b16 %v2823, %v2822
  %v3710 = vpack.c.b16 %v2825, %v2824
  %v3711 = vpack.c.b16 %v2827, %v2826
  %v3712 = vpack.c.b16 %v2829, %v2828
  %v3713 = vpack.c.b16 %v2831, %v2830
  %v3714 = vpack.c.b16 %v2833, %v2832
  %v3715 = vpack.c.b16 %v2835, %v2834
  %v3716 = vpack.c.b16 %v2837, %v2836
  %v3717 = vpack.c.b16 %v2839, %v2838
  %v3718 = vpack.c.b16 %v2841, %v2840
  %v3719 = vpack.c.b16 %v2843, %v2842
  %v3720 = vpack.c.b16 %v2845, %v2844
  %v3721 = vpack.c.b16 %v2847, %v2846
  %v3722 = vpack.c.b16 %v2849, %v2848
  %v3723 = vpack.c.b16 %v2851, %v2850
  %v3724 = vpack.c.b16 %v2853, %v2852
  %v3725 = vpack.c.b16 %v2855, %v2854
  %v3726 = vpack.c.b16 %v2857, %v2856
  %v3727 = vpack.c.b16 %v2859, %v2858
  %v3728 = vpack.c.b16 %v2861, %v2860
  %v3729 = vpack.c.b16 %v2863, %v2862
  %v3730 = vpack.c.b16 %v2865, %v2864
  %v3731 = vpack.c.b16 %v2867, %v2866
  %v3732 = vpack.c.b16 %v2869, %v2868
  %v3733 = vpack.c.b16 %v2871, %v2870
  %v3734 = vpack.c.b16 %v2873, %v2872
  %v3735 = vpack.c.b16 %v2875, %v2874
  %v3736 = vpack.c.b16 %v2877, %v2876
  %v3737 = vpack.c.b16 %v2879, %v2878
  %v3738 = vpack.c.b16 %v2881, %v2880
  %v3739 = vpack.c.b16 %v2883, %v2882
  %v3740 = vpack.c.b16 %v2885, %v2884
  %v3741 = vpack.c.b16 %v2887, %v2886
  %v3742 = vpack.c.b16 %v2889, %v2888
  %v3743 = vpack.c.b16 %v2891, %v2890
  %v3744 = vpack.c.b16 %v2893, %v2892
  %v3745 = vpack.c.b16 %v2895, %v2894
  %v3746 = vpack.c.b16 %v2897, %v2896
  %v3747 = vpack.c.b16 %v2899, %v2898
  %v3748 = vpack.c.b16 %v2901, %v2900
  %v3749 = vpack.c.b16 %v2903, %v2902
  %v3750 = vpack.c.b16 %v2905, %v2904
  %v3751 = vpack.c.b16 %v2907, %v2906
  %v3752 = vpack.c.b16 %v2909, %v2908
  %v3753 = vpack.c.b16 %v2911, %v2910
  %v3754 = vpack.c.b16 %v2913, %v2912
  %v3755 = vpack.c.b16 %v2915, %v2914
  %v3756 = vpack.c.b16 %v2917, %v2916
  %v3757 = vpack.c.b16 %v2919, %v2918
  %v3758 = vpack.c.b16 %v2921, %v2920
  %v3759 = vpack.c.b16 %v2923, %v2922
  %v3760 = vpack.c.b16 %v2925, %v2924
  %v3761 = vpack.c.b16 %v2927, %v2926
  %v3762 = vpack.c.b16 %v2929, %v2928
  %v3763 = vpack.c.b16 %v2931, %v2930
  %v3764 = vpack.c.b16 %v2933, %v2932
  %v3765 = vpack.c.b16 %v2935, %v2934
  %v3766 = vpack.c.b16 %v2937, %v2936
  %v3767 = vpack.c.b16 %v2939, %v2938
  %v3768 = vpack.c.b16 %v2941, %v2940
  %v3769 = vpack.c.b16 %v2943, %v2942
  %v3770 = vpack.c.b16 %v2945, %v2944
  %v3771 = vpack.c.b16 %v2947, %v2946
  %v3772 = vpack.c.b16 %v2949, %v2948
  %v3773 = vpack.c.b16 %v2951, %v2950
  %v3774 = vpack.c.b16 %v2953, %v2952
  %v3775 = vpack.c.b16 %v2955, %v2954
  %v3776 = vpack.c.b16 %v2957, %v2956
  %v3777 = vpack.c.b16 %v2959, %v2958
  %v3778 = vpack.c.b16 %v2961, %v2960
  %v3779 = vpack.c.b16 %v2963, %v2962
  %v3780 = vpack.c.b16 %v2965, %v2964
  %v3781 = vpack.c.b16 %v2967, %v2966
  %v3782 = vpack.c.b16 %v2969, %v2968
  %v3783 = vpack.c.b16 %v2971, %v2970
  %v3784 = vpack.c.b16 %v2973, %v2972
  %v3785 = vpack.c.b16 %v2975, %v2974
  %v3786 = vpack.c.b16 %v2977, %v2976
  %v3787 = vpack.c.b16 %v2979, %v2978
  %v3788 = vpack.c.b16 %v2981, %v2980
  %v3789 = vpack.c.b16 %v2983, %v2982
  %v3790 = vpack.c.b16 %v2985, %v2984
  %v3791 = vpack.c.b16 %v2987, %v2986
  %v3792 = vpack.c.b16 %v2989, %v2988
  %v3793 = vpack.c.b16 %v2991, %v2990
  %v3794 = vpack.c.b16 %v2993, %v2992
  %v3795 = vpack.c.b16 %v2995, %v2994
  %v3796 = vpack.c.b16 %v2997, %v2996
  %v3797 = vpack.c.b16 %v2999, %v2998
  %v3798 = vpack.c.b16 %v3001, %v3000
  %v3799 = vpack.c.b16 %v3003, %v3002
  %v3800 = vpack.c.b16 %v3005, %v3004
  %v3801 = vpack.c.b16 %v3007, %v3006
  %v3802 = vpack.c.b16 %v3009, %v3008
  %v3803 = vpack.c.b16 %v3011, %v3010
  %v3804 = vpack.c.b16 %v3013, %v3012
  %v3805 = vpack.c.b16 %v3015, %v3014
  %v3806 = vpack.c.b16 %v3017, %v3016
  %v3807 = vpack.c.b16 %v3019, %v3018
  %v3808 = vpack.c.b16 %v3021, %v3020
  %v3809 = vpack.c.b16 %v3023, %v3022
  %v3810 = vpack.c.b16 %v3025, %v3024
  %v3811 = vpack.c.b16 %v3027, %v3026
  %v3812 = vpack.c.b16 %v3029, %v3028
  %v3813 = vpack.c.b16 %v3031, %v3030
  %v3814 = vpack.c.b16 %v3033, %v3032
  %v3815 = vpack.c.b16 %v3035, %v3034
  %v3816 = vpack.c.b16 %v3037, %v3036
  %v3817 = vpack.c.b16 %v3039, %v3038
  %v3818 = vpack.c.b16 %v3041, %v3040
  %v3819 = vpack.c.b16 %v3043, %v3042
  %v3820 = vpack.c.b16 %v3045, %v3044
  %v3821 = vpack.c.b16 %v3047, %v3046
  %v3822 = vpack.c.b16 %v3049, %v3048
  %v3823 = vpack.c.b16 %v3051, %v3050
  %v3824 = vpack.c.b16 %v3053, %v3052
  %v3825 = vpack.c.b16 %v3055, %v3054
  %v3826 = vpack.c.b16 %v3057, %v3056
  %v3827 = vpack.c.b16 %v3059, %v3058
  %v3828 = vpack.c.b16 %v3061, %v3060
  %v3829 = vpack.c.b16 %v3063, %v3062
  %v3830 = vpack.c.b16 %v3065, %v3064
  %v3831 = vpack.c.b16 %v3067, %v3066
  %v3832 = vpack.c.b16 %v3069, %v3068
  %v3833 = vpack.c.b16 %v3071, %v3070
  %v3834 = vpack.c.b16 %v3073, %v3072
  %v3835 = vpack.c.b16 %v3075, %v3074
  %v3836 = vpack.c.b16 %v3077, %v3076
  %v3837 = vpack.c.b16 %v3079, %v3078
  %v3838 = vpack.c.b16 %v3081, %v3080
  %v3839 = vpack.c.b16 %v3083, %v3082
  %v3840 = vpack.c.b16 %v3085, %v3084
  %v3841 = vpack.c.b16 %v3087, %v3086
  %v3842 = vpack.c.b16 %v3089, %v3088
  %v3843 = vpack.c.b16 %v3091, %v3090
  %v3844 = vpack.c.b16 %v3093, %v3092
  %v3845 = vpack.c.b16 %v3095, %v3094
  %v3846 = vpack.c.b16 %v3097, %v3096
  %v3847 = vpack.c.b16 %v3099, %v3098
  %v3848 = vpack.c.b16 %v3101, %v3100
  %v3849 = vpack.c.b16 %v3103, %v3102
  %v3850 = vpack.c.b16 %v3105, %v3104
  %v3851 = vpack.c.b16 %v3107, %v3106
  %v3852 = vpack.c.b16 %v3109, %v3108
  %v3853 = vpack.c.b16 %v3111, %v3110
  %v3854 = vpack.c.b16 %v3113, %v3112
  %v3855 = vpack.c.b16 %v3115, %v3114
  %v3856 = vpack.c.b16 %v3117, %v3116
  %v3857 = vpack.c.b16 %v3119, %v3118
  %v3858 = vpack.c.b16 %v3121, %v3120
  %v3859 = vpack.c.b16 %v3123, %v3122
  %v3860 = vpack.c.b16 %v3125, %v3124
  %v3861 = vpack.c.b16 %v3127, %v3126
  %v3862 = vpack.c.b16 %v3129, %v3128
  %v3863 = vpack.c.b16 %v3131, %v3130
  %v3864 = vpack.c.b16 %v3133, %v3132
  %v3865 = vpack.c.b16 %v3135, %v3134
  %v3866 = vpack.c.b16 %v3137, %v3136
  %v3867 = vpack.c.b16 %v3139, %v3138
  %v3868 = vpack.c.b16 %v3141, %v3140
  %v3869 = vpack.c.b16 %v3143, %v3142
  %v3870 = vpack.c.b16 %v3145, %v3144
  %v3871 = vpack.c.b16 %v3147, %v3146
  %v3872 = vpack.c.b16 %v3149, %v3148
  %v3873 = vpack.c.b16 %v3151, %v3150
  %v3874 = vpack.c.b16 %v3153, %v3152
  %v3875 = vpack.c.b16 %v3155, %v3154
  %v3876 = vpack.c.b16 %v3157, %v3156
  %v3877 = vpack.c.b16 %v3159, %v3158
  %v3878 = vpack.c.b16 %v3161, %v3160
  %v3879 = vpack.c.b16 %v3163, %v3162
  %v3880 = vpack.c.b16 %v3165, %v3164
  %v3881 = vpack.c.b16 %v3167, %v3166
  %v3882 = vpack.c.b16 %v3169, %v3168
  %v3883 = vpack.c.b16 %v3171, %v3170
  %v3884 = vpack.c.b16 %v3173, %v3172
  %v3885 = vpack.c.b16 %v3175, %v3174
  %v3886 = vpack.c.b16 %v3177, %v3176
  %v3887 = vpack.c.b16 %v3179, %v3178
  %v3888 = vpack.c.b16 %v3181, %v3180
  %v3889 = vpack.c.b16 %v3183, %v3182
  %v3890 = vpack.c.b16 %v3185, %v3184
  %v3891 = vpack.c.b16 %v3187, %v3186
  %v3892 = vpack.c.b16 %v3189, %v3188
  %v3893 = vpack.c.b16 %v3191, %v3190
  %v3894 = vpack.c.b16 %v3193, %v3192
  %v3895 = vpack.c.b16 %v3195, %v3194
  %v3896 = vpack.c.b16 %v3197, %v3196
  %v3897 = vpack.c.b16 %v3199, %v3198
  %v3898 = vpack.c.b16 %v3201, %v3200
  %v3899 = vpack.c.b16 %v3203, %v3202
  %v3900 = vpack.c.b16 %v3205, %v3204
  %v3901 = vpack.c.b16 %v3207, %v3206
  %v3902 = vpack.c.b16 %v3209, %v3208
  %v3903 = vpack.c.b16 %v3211, %v3210
  %v3904 = vpack.c.b16 %v3213, %v3212
  %v3905 = vpack.c.b16 %v3215, %v3214
  %v3906 = vpack.c.b16 %v3217, %v3216
  %v3907 = vpack.c.b16 %v3219, %v3218
  %v3908 = vpack.c.b16 %v3221, %v3220
  %v3909 = vpack.c.b16 %v3223, %v3222
  %v3910 = vpack.c.b16 %v3225, %v3224
  %v3911 = vpack.c.b16 %v3227, %v3226
  %v3912 = vpack.c.b16 %v3229, %v3228
  %v3913 = vpack.c.b16 %v3231, %v3230
  %v3914 = vpack.c.b16 %v3233, %v3232
  %v3915 = vpack.c.b16 %v3235, %v3234
  %v3916 = vpack.c.b16 %v3237, %v3236
  %v3917 = vpack.c.b16 %v3239, %v3238
  %v3918 = vpack.c.b16 %v3241, %v3240
  %v3919 = vpack.c.b16 %v3243, %v3242
  %v3920 = vpack.c.b16 %v3245, %v3244
  %v3921 = vpack.c.b16 %v3247, %v3246
  %v3922 = vpack.c.b16 %v3249, %v3248
  %v3923 = vpack.c.b16 %v3251, %v3250
  %v3924 = vpack.c.b16 %v3253, %v3252
  %v3925 = vpack.c.b16 %v3255, %v3254
  %v3926 = vpack.c.b16 %v3257, %v3256
  %v3927 = vpack.c.b16 %v3259, %v3258
  %v3928 = vpack.c.b16 %v3261, %v3260
  %v3929 = vpack.c.b16 %v3263, %v3262
  %v3930 = vpack.c.b16 %v3265, %v3264
  %v3931 = vpack.c.b16 %v3267, %v3266
  %v3932 = vpack.c.b16 %v3269, %v3268
  %v3933 = vpack.c.b16 %v3271, %v3270
  %v3934 = vpack.c.b16 %v3273, %v3272
  %v3935 = vpack.c.b16 %v3275, %v3274
  %v3936 = vpack.c.b16 %v3277, %v3276
  %v3937 = vpack.c.b16 %v3279, %v3278
  %v3938 = vpack.c.b16 %v3281, %v3280
  %v3939 = vpack.c.b16 %v3283, %v3282
  %v3940 = vpack.c.b16 %v3285, %v3284
  %v3941 = vpack.c.b16 %v3287, %v3286
  %v3942 = vpack.c.b16 %v3289, %v3288
  %v3943 = vpack.c.b16 %v3291, %v3290
  %v3944 = vpack.c.b16 %v3293, %v3292
  %v3945 = vpack.c.b16 %v3295, %v3294
  %v3946 = vpack.c.b16 %v3297, %v3296
  %v3947 = vpack.c.b16 %v3299, %v3298
  %v3948 = vpack.c.b16 %v3301, %v3300
  %v3949 = vpack.c.b16 %v3303, %v3302
  %v3950 = vpack.c.b16 %v3305, %v3304
  %v3951 = vpack.c.b16 %v3307, %v3306
  %v3952 = vpack.c.b16 %v3309, %v3308
  %v3953 = vpack.c.b16 %v3311, %v3310
  %v3954 = vpack.c.b16 %v3313, %v3312
  %v3955 = vpack.c.b16 %v3315, %v3314
  %v3956 = vpack.c.b16 %v3317, %v3316
  %v3957 = vpack.c.b16 %v3319, %v3318
  %v3958 = vpack.c.b16 %v3321, %v3320
  %v3959 = vpack.c.b16 %v3323, %v3322
  %v3960 = vpack.c.b16 %v3325, %v3324
  %v3961 = vpack.c.b16 %v3327, %v3326
  %v3962 = vpack.c.b16 %v3329, %v3328
  %v3963 = vpack.c.b16 %v3331, %v3330
  %v3964 = vpack.c.b16 %v3333, %v3332
  %v3965 = vpack.c.b16 %v3335, %v3334
  %v3966 = vpack.c.b16 %v3337, %v3336
  %v3967 = vpack.c.b16 %v3339, %v3338
  %v3968 = vpack.c.b16 %v3341, %v3340
  %v3969 = vpack.c.b16 %v3343, %v3342
  %v3970 = vpack.c.b16 %v3345, %v3344
  %v3971 = vpack.c.b16 %v3347, %v3346
  %v3972 = vpack.c.b16 %v3349, %v3348
  %v3973 = vpack.c.b16 %v3351, %v3350
  %v3974 = vpack.c.b16 %v3353, %v3352
  %v3975 = vpack.c.b16 %v3355, %v3354
  %v3976 = vpack.c.b16 %v3357, %v3356
  %v3977 = vpack.c.b16 %v3359, %v3358
  %v3978 = vpack.c.b16 %v3361, %v3360
  %v3979 = vpack.c.b16 %v3363, %v3362
  %v3980 = vpack.c.b16 %v3365, %v3364
  %v3981 = vpack.c.b16 %v3367, %v3366
  %v3982 = vpack.c.b16 %v3369, %v3368
  %v3983 = vpack.c.b16 %v3371, %v3370
  %v3984 = vpack.c.b16 %v3373, %v3372
  %v3985 = vpack.c.b16 %v3375, %v3374
  %v3986 = vpack.c.b16 %v3377, %v3376
  %v3987 = vpack.c.b16 %v3379, %v3378
  %v3988 = vpack.c.b16 %v3381, %v3380
  %v3989 = vpack.c.b16 %v3383, %v3382
  %v3990 = vpack.c.b16 %v3385, %v3384
  %v3991 = vpack.c.b16 %v3387, %v3386
  %v3992 = vpack.c.b16 %v3389, %v3388
  %v3993 = vpack.c.b16 %v3391, %v3390
  %v3994 = vpack.c.b16 %v3393, %v3392
  %v3995 = vpack.c.b16 %v3395, %v3394
  %v3996 = vpack.c.b16 %v3397, %v3396
  %v3997 = vpack.c.b16 %v3399, %v3398
  %v3998 = vpack.c.b16 %v3401, %v3400
  %v3999 = vpack.c.b16 %v3403, %v3402
  %v4000 = vpack.c.b16 %v3405, %v3404
  %v4001 = vpack.c.b16 %v3407, %v3406
  %v4002 = vpack.c.b16 %v3409, %v3408
  %v4003 = vpack.c.b16 %v3411, %v3410
  %v4004 = vpack.c.b16 %v3413, %v3412
  %v4005 = vpack.c.b16 %v3415, %v3414
  %v4006 = vpack.c.b16 %v3417, %v3416
  %v4007 = vpack.c.b16 %v3419, %v3418
  %v4008 = vpack.c.b16 %v3421, %v3420
  %v4009 = vpack.c.b16 %v3423, %v3422
  %v4010 = vpack.c.b16 %v3425, %v3424
  %v4011 = vpack.c.b16 %v3427, %v3426
  %v4012 = vpack.c.b16 %v3429, %v3428
  %v4013 = vpack.c.b16 %v3431, %v3430
  %v4014 = vpack.c.b16 %v3433, %v3432
  %v4015 = vpack.c.b16 %v3435, %v3434
  %v4016 = vpack.c.b16 %v3437, %v3436
  %v4017 = vpack.c.b16 %v3439, %v3438
  %v4018 = vpack.c.b16 %v3441, %v3440
  %v4019 = vpack.c.b16 %v3443, %v3442
  %v4020 = vpack.c.b16 %v3445, %v3444
  %v4021 = vpack.c.b16 %v3447, %v3446
  %v4022 = vpack.c.b16 %v3449, %v3448
  %v4023 = vpack.c.b16 %v3451, %v3450
  %v4024 = vpack.c.b16 %v3453, %v3452
  %v4025 = vpack.c.b16 %v3455, %v3454
  %v4026 = vpack.c.b16 %v3457, %v3456
  %v4027 = vpack.c.b16 %v3459, %v3458
  %v4028 = vpack.c.b16 %v3461, %v3460
  %v4029 = vpack.c.b16 %v3463, %v3462
  %v4030 = vpack.c.b16 %v3465, %v3464
  %v4031 = vpack.c.b16 %v3467, %v3466
  %v4032 = vpack.c.b16 %v3469, %v3468
  %v4033 = vpack.c.b16 %v3471, %v3470
  %v4034 = vpack.c.b16 %v3473, %v3472
  %v4035 = vpack.c.b16 %v3475, %v3474
  %v4036 = vpack.c.b16 %v3477, %v3476
  %v4037 = vpack.c.b16 %v3479, %v3478
  %v4038 = vpack.c.b16 %v3481, %v3480
  %v4039 = vpack.c.b16 %v3483, %v3482
  %v4040 = vpack.c.b16 %v3485, %v3484
  %v4041 = vpack.c.b16 %v3487, %v3486
  %v4042 = vpack.c.b16 %v3489, %v3488
  %v4043 = vpack.c.b16 %v3491, %v3490
  %v4044 = vpack.c.b16 %v3493, %v3492
  %v4045 = vpack.c.b16 %v3495, %v3494
  %v4046 = vpack.c.b16 %v3497, %v3496
  %v4047 = vpack.c.b16 %v3499, %v3498
  %v4048 = vpack.c.b16 %v3501, %v3500
  %v4049 = vpack.c.b16 %v3503, %v3502
  %v4050 = vpack.c.b16 %v3505, %v3504
  %v4051 = vpack.c.b16 %v3507, %v3506
  %v4052 = vpack.c.b16 %v3509, %v3508
  %v4053 = vpack.c.b16 %v3511, %v3510
  %v4054 = vpack.c.b16 %v3513, %v3512
  %v4055 = vpack.c.b16 %v3515, %v3514
  %v4056 = vpack.c.b16 %v3517, %v3516
  %v4057 = vpack.c.b16 %v3519, %v3518
  %v4058 = vpack.c.b16 %v3521, %v3520
  %v4059 = vpack.c.b16 %v3523, %v3522
  %v4060 = vpack.c.b16 %v3525, %v3524
  %v4061 = vpack.c.b16 %v3527, %v3526
  %v4062 = vpack.c.b16 %v3529, %v3528
  %v4063 = vpack.c.b16 %v3531, %v3530
  %v4064 = vpack.c.b16 %v3533, %v3532
  %v4065 = vpack.c.b16 %v3535, %v3534
  %v4066 = vpack.c.b16 %v3537, %v3536
  %v4067 = vpack.c.b16 %v3539, %v3538
  %v4068 = vpack.c.b16 %v3541, %v3540
  %v4069 = vpack.c.b16 %v3543, %v3542
  %v4070 = vpack.c.b16 %v3545, %v3544
  %v4071 = vpack.c.b16 %v3547, %v3546
  %v4072 = vpack.c.b16 %v3549, %v3548
  %v4073 = vpack.c.b16 %v3551, %v3550
  %v4074 = vpack.c.b16 %v3553, %v3552
  %v4075 = vpack.c.b16 %v3555, %v3554
  %v4076 = vpack.c.b16 %v3557, %v3556
  %v4077 = vpack.c.b16 %v3559, %v3558
  %v4078 = vpack.c.b16 %v3561, %v3560
  %v4079 = vpack.c.b16 %v3563, %v3562
  %v4080 = vpack.c.b16 %v3565, %v3564
  %v4081 = vpack.c.b16 %v3567, %v3566
  %v4082 = vpack.c.b16 %v3569, %v3568
  %v4083 = vpack.c.b16 %v3571, %v3570
  %4596 = vmatprep.subr.bf16.mxu0 0
  %4597 = vmatpush1.bf16.msra.mxu0 %v3572
  %4598 = vmatprep.subr.bf16.mxu0 0
  %4599 = vmatpush1.bf16.msra.mxu0 %v3573
  %4600 = vmatprep.subr.bf16.mxu0 0
  %4601 = vmatpush1.bf16.msra.mxu0 %v3574
  %4602 = vmatprep.subr.bf16.mxu0 0
  %4603 = vmatpush1.bf16.msra.mxu0 %v3575
  %4604 = vmatprep.subr.bf16.mxu0 0
  %4605 = vmatpush1.bf16.msra.mxu0 %v3576
  %4606 = vmatprep.subr.bf16.mxu0 0
  %4607 = vmatpush1.bf16.msra.mxu0 %v3577
  %4608 = vmatprep.subr.bf16.mxu0 0
  %4609 = vmatpush1.bf16.msra.mxu0 %v3578
  %4610 = vmatprep.subr.bf16.mxu0 0
  %4611 = vmatpush1.bf16.msra.mxu0 %v3579
  %4612 = vmatprep.subr.bf16.mxu0 0
  %4613 = vmatpush1.bf16.msra.mxu0 %v3580
  %4614 = vmatprep.subr.bf16.mxu0 0
  %4615 = vmatpush1.bf16.msra.mxu0 %v3581
  %4616 = vmatprep.subr.bf16.mxu0 0
  %4617 = vmatpush1.bf16.msra.mxu0 %v3582
  %4618 = vmatprep.subr.bf16.mxu0 0
  %4619 = vmatpush1.bf16.msra.mxu0 %v3583
  %4620 = vmatprep.subr.bf16.mxu0 0
  %4621 = vmatpush1.bf16.msra.mxu0 %v3584
  %4622 = vmatprep.subr.bf16.mxu0 0
  %4623 = vmatpush1.bf16.msra.mxu0 %v3585
  %4624 = vmatprep.subr.bf16.mxu0 0
  %4625 = vmatpush1.bf16.msra.mxu0 %v3586
  %4626 = vmatprep.subr.bf16.mxu0 0
  %4627 = vmatpush1.bf16.msra.mxu0 %v3587
  %4628 = vmatprep.mubr.bf16.mxu0 %v1105
  %4629 = vmatmul.mubr.bf16.gmra.mrb[0].mxu0 %v1091
  %v4630 = vpop.f32.mrb[0].mxu0
  %v4631 = vadd.f32 %v1058, %v4630
  %v4632 = vpop.f32.mrb[0].mxu0
  %v4633 = vpop.f32.mrb[0].mxu0
  %v4634 = vpop.f32.mrb[0].mxu0
  %4635 = vdwg.mxu0
  %4636 = vmatprep.subr.bf16.mxu0 0
  %4637 = vmatpush1.bf16.msra.mxu0 %v3588
  %4638 = vmatprep.subr.bf16.mxu0 0
  %4639 = vmatpush1.bf16.msra.mxu0 %v3589
  %4640 = vmatprep.subr.bf16.mxu0 0
  %4641 = vmatpush1.bf16.msra.mxu0 %v3590
  %4642 = vmatprep.subr.bf16.mxu0 0
  %4643 = vmatpush1.bf16.msra.mxu0 %v3591
  %4644 = vmatprep.subr.bf16.mxu0 0
  %4645 = vmatpush1.bf16.msra.mxu0 %v3592
  %4646 = vmatprep.subr.bf16.mxu0 0
  %4647 = vmatpush1.bf16.msra.mxu0 %v3593
  %4648 = vmatprep.subr.bf16.mxu0 0
  %4649 = vmatpush1.bf16.msra.mxu0 %v3594
  %4650 = vmatprep.subr.bf16.mxu0 0
  %4651 = vmatpush1.bf16.msra.mxu0 %v3595
  %4652 = vmatprep.subr.bf16.mxu0 0
  %4653 = vmatpush1.bf16.msra.mxu0 %v3596
  %4654 = vmatprep.subr.bf16.mxu0 0
  %4655 = vmatpush1.bf16.msra.mxu0 %v3597
  %4656 = vmatprep.subr.bf16.mxu0 0
  %4657 = vmatpush1.bf16.msra.mxu0 %v3598
  %4658 = vmatprep.subr.bf16.mxu0 0
  %4659 = vmatpush1.bf16.msra.mxu0 %v3599
  %4660 = vmatprep.subr.bf16.mxu0 0
  %4661 = vmatpush1.bf16.msra.mxu0 %v3600
  %4662 = vmatprep.subr.bf16.mxu0 0
  %4663 = vmatpush1.bf16.msra.mxu0 %v3601
  %4664 = vmatprep.subr.bf16.mxu0 0
  %4665 = vmatpush1.bf16.msra.mxu0 %v3602
  %4666 = vmatprep.subr.bf16.mxu0 0
  %4667 = vmatpush1.bf16.msra.mxu0 %v3603
  %4668 = vmatprep.mubr.bf16.mxu0 %v1115
  %4669 = vmatmul.mubr.bf16.gmra.mrb[0].mxu0 %v1113
  %v4670 = vpop.f32.mrb[0].mxu0
  %v4671 = vadd.f32 %v4631, %v4670
  %v4672 = vpop.f32.mrb[0].mxu0
  %v4673 = vpop.f32.mrb[0].mxu0
  %v4674 = vpop.f32.mrb[0].mxu0
  %4675 = vdwg.mxu0
  %4676 = vmatprep.subr.bf16.mxu0 0
  %4677 = vmatpush1.bf16.msra.mxu0 %v3604
  %4678 = vmatprep.subr.bf16.mxu0 0
  %4679 = vmatpush1.bf16.msra.mxu0 %v3605
  %4680 = vmatprep.subr.bf16.mxu0 0
  %4681 = vmatpush1.bf16.msra.mxu0 %v3606
  %4682 = vmatprep.subr.bf16.mxu0 0
  %4683 = vmatpush1.bf16.msra.mxu0 %v3607
  %4684 = vmatprep.subr.bf16.mxu0 0
  %4685 = vmatpush1.bf16.msra.mxu0 %v3608
  %4686 = vmatprep.subr.bf16.mxu0 0
  %4687 = vmatpush1.bf16.msra.mxu0 %v3609
  %4688 = vmatprep.subr.bf16.mxu0 0
  %4689 = vmatpush1.bf16.msra.mxu0 %v3610
  %4690 = vmatprep.subr.bf16.mxu0 0
  %4691 = vmatpush1.bf16.msra.mxu0 %v3611
  %4692 = vmatprep.subr.bf16.mxu0 0
  %4693 = vmatpush1.bf16.msra.mxu0 %v3612
  %4694 = vmatprep.subr.bf16.mxu0 0
  %4695 = vmatpush1.bf16.msra.mxu0 %v3613
  %4696 = vmatprep.subr.bf16.mxu0 0
  %4697 = vmatpush1.bf16.msra.mxu0 %v3614
  %4698 = vmatprep.subr.bf16.mxu0 0
  %4699 = vmatpush1.bf16.msra.mxu0 %v3615
  %4700 = vmatprep.subr.bf16.mxu0 0
  %4701 = vmatpush1.bf16.msra.mxu0 %v3616
  %4702 = vmatprep.subr.bf16.mxu0 0
  %4703 = vmatpush1.bf16.msra.mxu0 %v3617
  %4704 = vmatprep.subr.bf16.mxu0 0
  %4705 = vmatpush1.bf16.msra.mxu0 %v3618
  %4706 = vmatprep.subr.bf16.mxu0 0
  %4707 = vmatpush1.bf16.msra.mxu0 %v3619
  %4708 = vmatprep.mubr.bf16.mxu0 %v1112
  %4709 = vmatmul.mubr.bf16.gmra.mrb[0].mxu0 %v1098
  %v4710 = vpop.f32.mrb[0].mxu0
  %v4711 = vadd.f32 %v4671, %v4710
  %v4712 = vpop.f32.mrb[0].mxu0
  %v4713 = vpop.f32.mrb[0].mxu0
  %v4714 = vpop.f32.mrb[0].mxu0
  %4715 = vdwg.mxu0
  %4716 = vmatprep.subr.bf16.mxu0 0
  %4717 = vmatpush1.bf16.msra.mxu0 %v3620
  %4718 = vmatprep.subr.bf16.mxu0 0
  %4719 = vmatpush1.bf16.msra.mxu0 %v3621
  %4720 = vmatprep.subr.bf16.mxu0 0
  %4721 = vmatpush1.bf16.msra.mxu0 %v3622
  %4722 = vmatprep.subr.bf16.mxu0 0
  %4723 = vmatpush1.bf16.msra.mxu0 %v3623
  %4724 = vmatprep.subr.bf16.mxu0 0
  %4725 = vmatpush1.bf16.msra.mxu0 %v3624
  %4726 = vmatprep.subr.bf16.mxu0 0
  %4727 = vmatpush1.bf16.msra.mxu0 %v3625
  %4728 = vmatprep.subr.bf16.mxu0 0
  %4729 = vmatpush1.bf16.msra.mxu0 %v3626
  %4730 = vmatprep.subr.bf16.mxu0 0
  %4731 = vmatpush1.bf16.msra.mxu0 %v3627
  %4732 = vmatprep.subr.bf16.mxu0 0
  %4733 = vmatpush1.bf16.msra.mxu0 %v3628
  %4734 = vmatprep.subr.bf16.mxu0 0
  %4735 = vmatpush1.bf16.msra.mxu0 %v3629
  %4736 = vmatprep.subr.bf16.mxu0 0
  %4737 = vmatpush1.bf16.msra.mxu0 %v3630
  %4738 = vmatprep.subr.bf16.mxu0 0
  %4739 = vmatpush1.bf16.msra.mxu0 %v3631
  %4740 = vmatprep.subr.bf16.mxu0 0
  %4741 = vmatpush1.bf16.msra.mxu0 %v3632
  %4742 = vmatprep.subr.bf16.mxu0 0
  %4743 = vmatpush1.bf16.msra.mxu0 %v3633
  %4744 = vmatprep.subr.bf16.mxu0 0
  %4745 = vmatpush1.bf16.msra.mxu0 %v3634
  %4746 = vmatprep.subr.bf16.mxu0 0
  %4747 = vmatpush1.bf16.msra.mxu0 %v3635
  %4748 = vmatprep.mubr.bf16.mxu0 %v1116
  %4749 = vmatmul.mubr.bf16.gmra.mrb[0].mxu0 %v1114
  %v4750 = vpop.f32.mrb[0].mxu0
  %v4751 = vadd.f32 %v4711, %v4750
  %v4752 = vpop.f32.mrb[0].mxu0
  %v4753 = vpop.f32.mrb[0].mxu0
  %v4754 = vpop.f32.mrb[0].mxu0
  %4755 = vdwg.mxu0
  %4756 = vmatprep.subr.bf16.mxu0 0
  %4757 = vmatpush1.bf16.msra.mxu0 %v3636
  %4758 = vmatprep.subr.bf16.mxu0 0
  %4759 = vmatpush1.bf16.msra.mxu0 %v3637
  %4760 = vmatprep.subr.bf16.mxu0 0
  %4761 = vmatpush1.bf16.msra.mxu0 %v3638
  %4762 = vmatprep.subr.bf16.mxu0 0
  %4763 = vmatpush1.bf16.msra.mxu0 %v3639
  %4764 = vmatprep.subr.bf16.mxu0 0
  %4765 = vmatpush1.bf16.msra.mxu0 %v3640
  %4766 = vmatprep.subr.bf16.mxu0 0
  %4767 = vmatpush1.bf16.msra.mxu0 %v3641
  %4768 = vmatprep.subr.bf16.mxu0 0
  %4769 = vmatpush1.bf16.msra.mxu0 %v3642
  %4770 = vmatprep.subr.bf16.mxu0 0
  %4771 = vmatpush1.bf16.msra.mxu0 %v3643
  %4772 = vmatprep.subr.bf16.mxu0 0
  %4773 = vmatpush1.bf16.msra.mxu0 %v3644
  %4774 = vmatprep.subr.bf16.mxu0 0
  %4775 = vmatpush1.bf16.msra.mxu0 %v3645
  %4776 = vmatprep.subr.bf16.mxu0 0
  %4777 = vmatpush1.bf16.msra.mxu0 %v3646
  %4778 = vmatprep.subr.bf16.mxu0 0
  %4779 = vmatpush1.bf16.msra.mxu0 %v3647
  %4780 = vmatprep.subr.bf16.mxu0 0
  %4781 = vmatpush1.bf16.msra.mxu0 %v3648
  %4782 = vmatprep.subr.bf16.mxu0 0
  %4783 = vmatpush1.bf16.msra.mxu0 %v3649
  %4784 = vmatprep.subr.bf16.mxu0 0
  %4785 = vmatpush1.bf16.msra.mxu0 %v3650
  %4786 = vmatprep.subr.bf16.mxu0 0
  %4787 = vmatpush1.bf16.msra.mxu0 %v3651
  %4788 = vmatprep.mubr.bf16.mxu0 %v1154
  %4789 = vmatmul.mubr.bf16.gmra.mrb[0].mxu0 %v1140
  %v4790 = vpop.f32.mrb[0].mxu0
  %v4791 = vadd.f32 %v4751, %v4790
  %v4792 = vpop.f32.mrb[0].mxu0
  %v4793 = vpop.f32.mrb[0].mxu0
  %v4794 = vpop.f32.mrb[0].mxu0
  %4795 = vdwg.mxu0
  %4796 = vmatprep.subr.bf16.mxu0 0
  %4797 = vmatpush1.bf16.msra.mxu0 %v3652
  %4798 = vmatprep.subr.bf16.mxu0 0
  %4799 = vmatpush1.bf16.msra.mxu0 %v3653
  %4800 = vmatprep.subr.bf16.mxu0 0
  %4801 = vmatpush1.bf16.msra.mxu0 %v3654
  %4802 = vmatprep.subr.bf16.mxu0 0
  %4803 = vmatpush1.bf16.msra.mxu0 %v3655
  %4804 = vmatprep.subr.bf16.mxu0 0
  %4805 = vmatpush1.bf16.msra.mxu0 %v3656
  %4806 = vmatprep.subr.bf16.mxu0 0
  %4807 = vmatpush1.bf16.msra.mxu0 %v3657
  %4808 = vmatprep.subr.bf16.mxu0 0
  %4809 = vmatpush1.bf16.msra.mxu0 %v3658
  %4810 = vmatprep.subr.bf16.mxu0 0
  %4811 = vmatpush1.bf16.msra.mxu0 %v3659
  %4812 = vmatprep.subr.bf16.mxu0 0
  %4813 = vmatpush1.bf16.msra.mxu0 %v3660
  %4814 = vmatprep.subr.bf16.mxu0 0
  %4815 = vmatpush1.bf16.msra.mxu0 %v3661
  %4816 = vmatprep.subr.bf16.mxu0 0
  %4817 = vmatpush1.bf16.msra.mxu0 %v3662
  %4818 = vmatprep.subr.bf16.mxu0 0
  %4819 = vmatpush1.bf16.msra.mxu0 %v3663
  %4820 = vmatprep.subr.bf16.mxu0 0
  %4821 = vmatpush1.bf16.msra.mxu0 %v3664
  %4822 = vmatprep.subr.bf16.mxu0 0
  %4823 = vmatpush1.bf16.msra.mxu0 %v3665
  %4824 = vmatprep.subr.bf16.mxu0 0
  %4825 = vmatpush1.bf16.msra.mxu0 %v3666
  %4826 = vmatprep.subr.bf16.mxu0 0
  %4827 = vmatpush1.bf16.msra.mxu0 %v3667
  %4828 = vmatprep.mubr.bf16.mxu0 %v1164
  %4829 = vmatmul.mubr.bf16.gmra.mrb[0].mxu0 %v1162
  %v4830 = vpop.f32.mrb[0].mxu0
  %v4831 = vadd.f32 %v4791, %v4830
  %v4832 = vpop.f32.mrb[0].mxu0
  %v4833 = vpop.f32.mrb[0].mxu0
  %v4834 = vpop.f32.mrb[0].mxu0
  %4835 = vdwg.mxu0
  %4836 = vmatprep.subr.bf16.mxu0 0
  %4837 = vmatpush1.bf16.msra.mxu0 %v3668
  %4838 = vmatprep.subr.bf16.mxu0 0
  %4839 = vmatpush1.bf16.msra.mxu0 %v3669
  %4840 = vmatprep.subr.bf16.mxu0 0
  %4841 = vmatpush1.bf16.msra.mxu0 %v3670
  %4842 = vmatprep.subr.bf16.mxu0 0
  %4843 = vmatpush1.bf16.msra.mxu0 %v3671
  %4844 = vmatprep.subr.bf16.mxu0 0
  %4845 = vmatpush1.bf16.msra.mxu0 %v3672
  %4846 = vmatprep.subr.bf16.mxu0 0
  %4847 = vmatpush1.bf16.msra.mxu0 %v3673
  %4848 = vmatprep.subr.bf16.mxu0 0
  %4849 = vmatpush1.bf16.msra.mxu0 %v3674
  %4850 = vmatprep.subr.bf16.mxu0 0
  %4851 = vmatpush1.bf16.msra.mxu0 %v3675
  %4852 = vmatprep.subr.bf16.mxu0 0
  %4853 = vmatpush1.bf16.msra.mxu0 %v3676
  %4854 = vmatprep.subr.bf16.mxu0 0
  %4855 = vmatpush1.bf16.msra.mxu0 %v3677
  %4856 = vmatprep.subr.bf16.mxu0 0
  %4857 = vmatpush1.bf16.msra.mxu0 %v3678
  %4858 = vmatprep.subr.bf16.mxu0 0
  %4859 = vmatpush1.bf16.msra.mxu0 %v3679
  %4860 = vmatprep.subr.bf16.mxu0 0
  %4861 = vmatpush1.bf16.msra.mxu0 %v3680
  %4862 = vmatprep.subr.bf16.mxu0 0
  %4863 = vmatpush1.bf16.msra.mxu0 %v3681
  %4864 = vmatprep.subr.bf16.mxu0 0
  %4865 = vmatpush1.bf16.msra.mxu0 %v3682
  %4866 = vmatprep.subr.bf16.mxu0 0
  %4867 = vmatpush1.bf16.msra.mxu0 %v3683
  %4868 = vmatprep.mubr.bf16.mxu0 %v1161
  %4869 = vmatmul.mubr.bf16.gmra.mrb[0].mxu0 %v1147
  %v4870 = vpop.f32.mrb[0].mxu0
  %v4871 = vadd.f32 %v4831, %v4870
  %v4872 = vpop.f32.mrb[0].mxu0
  %v4873 = vpop.f32.mrb[0].mxu0
  %v4874 = vpop.f32.mrb[0].mxu0
  %4875 = vdwg.mxu0
  %4876 = vmatprep.subr.bf16.mxu0 0
  %4877 = vmatpush1.bf16.msra.mxu0 %v3684
  %4878 = vmatprep.subr.bf16.mxu0 0
  %4879 = vmatpush1.bf16.msra.mxu0 %v3685
  %4880 = vmatprep.subr.bf16.mxu0 0
  %4881 = vmatpush1.bf16.msra.mxu0 %v3686
  %4882 = vmatprep.subr.bf16.mxu0 0
  %4883 = vmatpush1.bf16.msra.mxu0 %v3687
  %4884 = vmatprep.subr.bf16.mxu0 0
  %4885 = vmatpush1.bf16.msra.mxu0 %v3688
  %4886 = vmatprep.subr.bf16.mxu0 0
  %4887 = vmatpush1.bf16.msra.mxu0 %v3689
  %4888 = vmatprep.subr.bf16.mxu0 0
  %4889 = vmatpush1.bf16.msra.mxu0 %v3690
  %4890 = vmatprep.subr.bf16.mxu0 0
  %4891 = vmatpush1.bf16.msra.mxu0 %v3691
  %4892 = vmatprep.subr.bf16.mxu0 0
  %4893 = vmatpush1.bf16.msra.mxu0 %v3692
  %4894 = vmatprep.subr.bf16.mxu0 0
  %4895 = vmatpush1.bf16.msra.mxu0 %v3693
  %4896 = vmatprep.subr.bf16.mxu0 0
  %4897 = vmatpush1.bf16.msra.mxu0 %v3694
  %4898 = vmatprep.subr.bf16.mxu0 0
  %4899 = vmatpush1.bf16.msra.mxu0 %v3695
  %4900 = vmatprep.subr.bf16.mxu0 0
  %4901 = vmatpush1.bf16.msra.mxu0 %v3696
  %4902 = vmatprep.subr.bf16.mxu0 0
  %4903 = vmatpush1.bf16.msra.mxu0 %v3697
  %4904 = vmatprep.subr.bf16.mxu0 0
  %4905 = vmatpush1.bf16.msra.mxu0 %v3698
  %4906 = vmatprep.subr.bf16.mxu0 0
  %4907 = vmatpush1.bf16.msra.mxu0 %v3699
  %4908 = vmatprep.mubr.bf16.mxu0 %v1165
  %4909 = vmatmul.mubr.bf16.gmra.mrb[0].mxu0 %v1163
  %v4910 = vpop.f32.mrb[0].mxu0
  %v4911 = vadd.f32 %v4871, %v4910
  %v4912 = vpop.f32.mrb[0].mxu0
  %v4913 = vpop.f32.mrb[0].mxu0
  %v4914 = vpop.f32.mrb[0].mxu0
  %4915 = vdwg.mxu0
  %4916 = vmatprep.subr.bf16.mxu0 0
  %4917 = vmatpush1.bf16.msra.mxu0 %v3700
  %4918 = vmatprep.subr.bf16.mxu0 0
  %4919 = vmatpush1.bf16.msra.mxu0 %v3701
  %4920 = vmatprep.subr.bf16.mxu0 0
  %4921 = vmatpush1.bf16.msra.mxu0 %v3702
  %4922 = vmatprep.subr.bf16.mxu0 0
  %4923 = vmatpush1.bf16.msra.mxu0 %v3703
  %4924 = vmatprep.subr.bf16.mxu0 0
  %4925 = vmatpush1.bf16.msra.mxu0 %v3704
  %4926 = vmatprep.subr.bf16.mxu0 0
  %4927 = vmatpush1.bf16.msra.mxu0 %v3705
  %4928 = vmatprep.subr.bf16.mxu0 0
  %4929 = vmatpush1.bf16.msra.mxu0 %v3706
  %4930 = vmatprep.subr.bf16.mxu0 0
  %4931 = vmatpush1.bf16.msra.mxu0 %v3707
  %4932 = vmatprep.subr.bf16.mxu0 0
  %4933 = vmatpush1.bf16.msra.mxu0 %v3708
  %4934 = vmatprep.subr.bf16.mxu0 0
  %4935 = vmatpush1.bf16.msra.mxu0 %v3709
  %4936 = vmatprep.subr.bf16.mxu0 0
  %4937 = vmatpush1.bf16.msra.mxu0 %v3710
  %4938 = vmatprep.subr.bf16.mxu0 0
  %4939 = vmatpush1.bf16.msra.mxu0 %v3711
  %4940 = vmatprep.subr.bf16.mxu0 0
  %4941 = vmatpush1.bf16.msra.mxu0 %v3712
  %4942 = vmatprep.subr.bf16.mxu0 0
  %4943 = vmatpush1.bf16.msra.mxu0 %v3713
  %4944 = vmatprep.subr.bf16.mxu0 0
  %4945 = vmatpush1.bf16.msra.mxu0 %v3714
  %4946 = vmatprep.subr.bf16.mxu0 0
  %4947 = vmatpush1.bf16.msra.mxu0 %v3715
  %4948 = vmatprep.mubr.bf16.mxu0 %v1203
  %4949 = vmatmul.mubr.bf16.gmra.mrb[0].mxu0 %v1189
  %v4950 = vpop.f32.mrb[0].mxu0
  %v4951 = vadd.f32 %v4911, %v4950
  %v4952 = vpop.f32.mrb[0].mxu0
  %v4953 = vpop.f32.mrb[0].mxu0
  %v4954 = vpop.f32.mrb[0].mxu0
  %4955 = vdwg.mxu0
  %4956 = vmatprep.subr.bf16.mxu0 0
  %4957 = vmatpush1.bf16.msra.mxu0 %v3716
  %4958 = vmatprep.subr.bf16.mxu0 0
  %4959 = vmatpush1.bf16.msra.mxu0 %v3717
  %4960 = vmatprep.subr.bf16.mxu0 0
  %4961 = vmatpush1.bf16.msra.mxu0 %v3718
  %4962 = vmatprep.subr.bf16.mxu0 0
  %4963 = vmatpush1.bf16.msra.mxu0 %v3719
  %4964 = vmatprep.subr.bf16.mxu0 0
  %4965 = vmatpush1.bf16.msra.mxu0 %v3720
  %4966 = vmatprep.subr.bf16.mxu0 0
  %4967 = vmatpush1.bf16.msra.mxu0 %v3721
  %4968 = vmatprep.subr.bf16.mxu0 0
  %4969 = vmatpush1.bf16.msra.mxu0 %v3722
  %4970 = vmatprep.subr.bf16.mxu0 0
  %4971 = vmatpush1.bf16.msra.mxu0 %v3723
  %4972 = vmatprep.subr.bf16.mxu0 0
  %4973 = vmatpush1.bf16.msra.mxu0 %v3724
  %4974 = vmatprep.subr.bf16.mxu0 0
  %4975 = vmatpush1.bf16.msra.mxu0 %v3725
  %4976 = vmatprep.subr.bf16.mxu0 0
  %4977 = vmatpush1.bf16.msra.mxu0 %v3726
  %4978 = vmatprep.subr.bf16.mxu0 0
  %4979 = vmatpush1.bf16.msra.mxu0 %v3727
  %4980 = vmatprep.subr.bf16.mxu0 0
  %4981 = vmatpush1.bf16.msra.mxu0 %v3728
  %4982 = vmatprep.subr.bf16.mxu0 0
  %4983 = vmatpush1.bf16.msra.mxu0 %v3729
  %4984 = vmatprep.subr.bf16.mxu0 0
  %4985 = vmatpush1.bf16.msra.mxu0 %v3730
  %4986 = vmatprep.subr.bf16.mxu0 0
  %4987 = vmatpush1.bf16.msra.mxu0 %v3731
  %4988 = vmatprep.mubr.bf16.mxu0 %v1213
  %4989 = vmatmul.mubr.bf16.gmra.mrb[0].mxu0 %v1211
  %v4990 = vpop.f32.mrb[0].mxu0
  %v4991 = vadd.f32 %v4951, %v4990
  %v4992 = vpop.f32.mrb[0].mxu0
  %v4993 = vpop.f32.mrb[0].mxu0
  %v4994 = vpop.f32.mrb[0].mxu0
  %4995 = vdwg.mxu0
  %4996 = vmatprep.subr.bf16.mxu0 0
  %4997 = vmatpush1.bf16.msra.mxu0 %v3732
  %4998 = vmatprep.subr.bf16.mxu0 0
  %4999 = vmatpush1.bf16.msra.mxu0 %v3733
  %5000 = vmatprep.subr.bf16.mxu0 0
  %5001 = vmatpush1.bf16.msra.mxu0 %v3734
  %5002 = vmatprep.subr.bf16.mxu0 0
  %5003 = vmatpush1.bf16.msra.mxu0 %v3735
  %5004 = vmatprep.subr.bf16.mxu0 0
  %5005 = vmatpush1.bf16.msra.mxu0 %v3736
  %5006 = vmatprep.subr.bf16.mxu0 0
  %5007 = vmatpush1.bf16.msra.mxu0 %v3737
  %5008 = vmatprep.subr.bf16.mxu0 0
  %5009 = vmatpush1.bf16.msra.mxu0 %v3738
  %5010 = vmatprep.subr.bf16.mxu0 0
  %5011 = vmatpush1.bf16.msra.mxu0 %v3739
  %5012 = vmatprep.subr.bf16.mxu0 0
  %5013 = vmatpush1.bf16.msra.mxu0 %v3740
  %5014 = vmatprep.subr.bf16.mxu0 0
  %5015 = vmatpush1.bf16.msra.mxu0 %v3741
  %5016 = vmatprep.subr.bf16.mxu0 0
  %5017 = vmatpush1.bf16.msra.mxu0 %v3742
  %5018 = vmatprep.subr.bf16.mxu0 0
  %5019 = vmatpush1.bf16.msra.mxu0 %v3743
  %5020 = vmatprep.subr.bf16.mxu0 0
  %5021 = vmatpush1.bf16.msra.mxu0 %v3744
  %5022 = vmatprep.subr.bf16.mxu0 0
  %5023 = vmatpush1.bf16.msra.mxu0 %v3745
  %5024 = vmatprep.subr.bf16.mxu0 0
  %5025 = vmatpush1.bf16.msra.mxu0 %v3746
  %5026 = vmatprep.subr.bf16.mxu0 0
  %5027 = vmatpush1.bf16.msra.mxu0 %v3747
  %5028 = vmatprep.mubr.bf16.mxu0 %v1210
  %5029 = vmatmul.mubr.bf16.gmra.mrb[0].mxu0 %v1196
  %v5030 = vpop.f32.mrb[0].mxu0
  %v5031 = vadd.f32 %v4991, %v5030
  %v5032 = vpop.f32.mrb[0].mxu0
  %v5033 = vpop.f32.mrb[0].mxu0
  %v5034 = vpop.f32.mrb[0].mxu0
  %5035 = vdwg.mxu0
  %5036 = vmatprep.subr.bf16.mxu0 0
  %5037 = vmatpush1.bf16.msra.mxu0 %v3748
  %5038 = vmatprep.subr.bf16.mxu0 0
  %5039 = vmatpush1.bf16.msra.mxu0 %v3749
  %5040 = vmatprep.subr.bf16.mxu0 0
  %5041 = vmatpush1.bf16.msra.mxu0 %v3750
  %5042 = vmatprep.subr.bf16.mxu0 0
  %5043 = vmatpush1.bf16.msra.mxu0 %v3751
  %5044 = vmatprep.subr.bf16.mxu0 0
  %5045 = vmatpush1.bf16.msra.mxu0 %v3752
  %5046 = vmatprep.subr.bf16.mxu0 0
  %5047 = vmatpush1.bf16.msra.mxu0 %v3753
  %5048 = vmatprep.subr.bf16.mxu0 0
  %5049 = vmatpush1.bf16.msra.mxu0 %v3754
  %5050 = vmatprep.subr.bf16.mxu0 0
  %5051 = vmatpush1.bf16.msra.mxu0 %v3755
  %5052 = vmatprep.subr.bf16.mxu0 0
  %5053 = vmatpush1.bf16.msra.mxu0 %v3756
  %5054 = vmatprep.subr.bf16.mxu0 0
  %5055 = vmatpush1.bf16.msra.mxu0 %v3757
  %5056 = vmatprep.subr.bf16.mxu0 0
  %5057 = vmatpush1.bf16.msra.mxu0 %v3758
  %5058 = vmatprep.subr.bf16.mxu0 0
  %5059 = vmatpush1.bf16.msra.mxu0 %v3759
  %5060 = vmatprep.subr.bf16.mxu0 0
  %5061 = vmatpush1.bf16.msra.mxu0 %v3760
  %5062 = vmatprep.subr.bf16.mxu0 0
  %5063 = vmatpush1.bf16.msra.mxu0 %v3761
  %5064 = vmatprep.subr.bf16.mxu0 0
  %5065 = vmatpush1.bf16.msra.mxu0 %v3762
  %5066 = vmatprep.subr.bf16.mxu0 0
  %5067 = vmatpush1.bf16.msra.mxu0 %v3763
  %5068 = vmatprep.mubr.bf16.mxu0 %v1214
  %5069 = vmatmul.mubr.bf16.gmra.mrb[0].mxu0 %v1212
  %v5070 = vpop.f32.mrb[0].mxu0
  %v5071 = vadd.f32 %v5031, %v5070
  %v5072 = vpop.f32.mrb[0].mxu0
  %v5073 = vpop.f32.mrb[0].mxu0
  %v5074 = vpop.f32.mrb[0].mxu0
  %5075 = vdwg.mxu0
  %5076 = vmatprep.subr.bf16.mxu0 0
  %5077 = vmatpush1.bf16.msra.mxu0 %v3764
  %5078 = vmatprep.subr.bf16.mxu0 0
  %5079 = vmatpush1.bf16.msra.mxu0 %v3765
  %5080 = vmatprep.subr.bf16.mxu0 0
  %5081 = vmatpush1.bf16.msra.mxu0 %v3766
  %5082 = vmatprep.subr.bf16.mxu0 0
  %5083 = vmatpush1.bf16.msra.mxu0 %v3767
  %5084 = vmatprep.subr.bf16.mxu0 0
  %5085 = vmatpush1.bf16.msra.mxu0 %v3768
  %5086 = vmatprep.subr.bf16.mxu0 0
  %5087 = vmatpush1.bf16.msra.mxu0 %v3769
  %5088 = vmatprep.subr.bf16.mxu0 0
  %5089 = vmatpush1.bf16.msra.mxu0 %v3770
  %5090 = vmatprep.subr.bf16.mxu0 0
  %5091 = vmatpush1.bf16.msra.mxu0 %v3771
  %5092 = vmatprep.subr.bf16.mxu0 0
  %5093 = vmatpush1.bf16.msra.mxu0 %v3772
  %5094 = vmatprep.subr.bf16.mxu0 0
  %5095 = vmatpush1.bf16.msra.mxu0 %v3773
  %5096 = vmatprep.subr.bf16.mxu0 0
  %5097 = vmatpush1.bf16.msra.mxu0 %v3774
  %5098 = vmatprep.subr.bf16.mxu0 0
  %5099 = vmatpush1.bf16.msra.mxu0 %v3775
  %5100 = vmatprep.subr.bf16.mxu0 0
  %5101 = vmatpush1.bf16.msra.mxu0 %v3776
  %5102 = vmatprep.subr.bf16.mxu0 0
  %5103 = vmatpush1.bf16.msra.mxu0 %v3777
  %5104 = vmatprep.subr.bf16.mxu0 0
  %5105 = vmatpush1.bf16.msra.mxu0 %v3778
  %5106 = vmatprep.subr.bf16.mxu0 0
  %5107 = vmatpush1.bf16.msra.mxu0 %v3779
  %5108 = vmatprep.mubr.bf16.mxu0 %v1252
  %5109 = vmatmul.mubr.bf16.gmra.mrb[0].mxu0 %v1238
  %v5110 = vpop.f32.mrb[0].mxu0
  %v5111 = vadd.f32 %v5071, %v5110
  %v5112 = vpop.f32.mrb[0].mxu0
  %v5113 = vpop.f32.mrb[0].mxu0
  %v5114 = vpop.f32.mrb[0].mxu0
  %5115 = vdwg.mxu0
  %5116 = vmatprep.subr.bf16.mxu0 0
  %5117 = vmatpush1.bf16.msra.mxu0 %v3780
  %5118 = vmatprep.subr.bf16.mxu0 0
  %5119 = vmatpush1.bf16.msra.mxu0 %v3781
  %5120 = vmatprep.subr.bf16.mxu0 0
  %5121 = vmatpush1.bf16.msra.mxu0 %v3782
  %5122 = vmatprep.subr.bf16.mxu0 0
  %5123 = vmatpush1.bf16.msra.mxu0 %v3783
  %5124 = vmatprep.subr.bf16.mxu0 0
  %5125 = vmatpush1.bf16.msra.mxu0 %v3784
  %5126 = vmatprep.subr.bf16.mxu0 0
  %5127 = vmatpush1.bf16.msra.mxu0 %v3785
  %5128 = vmatprep.subr.bf16.mxu0 0
  %5129 = vmatpush1.bf16.msra.mxu0 %v3786
  %5130 = vmatprep.subr.bf16.mxu0 0
  %5131 = vmatpush1.bf16.msra.mxu0 %v3787
  %5132 = vmatprep.subr.bf16.mxu0 0
  %5133 = vmatpush1.bf16.msra.mxu0 %v3788
  %5134 = vmatprep.subr.bf16.mxu0 0
  %5135 = vmatpush1.bf16.msra.mxu0 %v3789
  %5136 = vmatprep.subr.bf16.mxu0 0
  %5137 = vmatpush1.bf16.msra.mxu0 %v3790
  %5138 = vmatprep.subr.bf16.mxu0 0
  %5139 = vmatpush1.bf16.msra.mxu0 %v3791
  %5140 = vmatprep.subr.bf16.mxu0 0
  %5141 = vmatpush1.bf16.msra.mxu0 %v3792
  %5142 = vmatprep.subr.bf16.mxu0 0
  %5143 = vmatpush1.bf16.msra.mxu0 %v3793
  %5144 = vmatprep.subr.bf16.mxu0 0
  %5145 = vmatpush1.bf16.msra.mxu0 %v3794
  %5146 = vmatprep.subr.bf16.mxu0 0
  %5147 = vmatpush1.bf16.msra.mxu0 %v3795
  %5148 = vmatprep.mubr.bf16.mxu0 %v1262
  %5149 = vmatmul.mubr.bf16.gmra.mrb[0].mxu0 %v1260
  %v5150 = vpop.f32.mrb[0].mxu0
  %v5151 = vadd.f32 %v5111, %v5150
  %v5152 = vpop.f32.mrb[0].mxu0
  %v5153 = vpop.f32.mrb[0].mxu0
  %v5154 = vpop.f32.mrb[0].mxu0
  %5155 = vdwg.mxu0
  %5156 = vmatprep.subr.bf16.mxu0 0
  %5157 = vmatpush1.bf16.msra.mxu0 %v3796
  %5158 = vmatprep.subr.bf16.mxu0 0
  %5159 = vmatpush1.bf16.msra.mxu0 %v3797
  %5160 = vmatprep.subr.bf16.mxu0 0
  %5161 = vmatpush1.bf16.msra.mxu0 %v3798
  %5162 = vmatprep.subr.bf16.mxu0 0
  %5163 = vmatpush1.bf16.msra.mxu0 %v3799
  %5164 = vmatprep.subr.bf16.mxu0 0
  %5165 = vmatpush1.bf16.msra.mxu0 %v3800
  %5166 = vmatprep.subr.bf16.mxu0 0
  %5167 = vmatpush1.bf16.msra.mxu0 %v3801
  %5168 = vmatprep.subr.bf16.mxu0 0
  %5169 = vmatpush1.bf16.msra.mxu0 %v3802
  %5170 = vmatprep.subr.bf16.mxu0 0
  %5171 = vmatpush1.bf16.msra.mxu0 %v3803
  %5172 = vmatprep.subr.bf16.mxu0 0
  %5173 = vmatpush1.bf16.msra.mxu0 %v3804
  %5174 = vmatprep.subr.bf16.mxu0 0
  %5175 = vmatpush1.bf16.msra.mxu0 %v3805
  %5176 = vmatprep.subr.bf16.mxu0 0
  %5177 = vmatpush1.bf16.msra.mxu0 %v3806
  %5178 = vmatprep.subr.bf16.mxu0 0
  %5179 = vmatpush1.bf16.msra.mxu0 %v3807
  %5180 = vmatprep.subr.bf16.mxu0 0
  %5181 = vmatpush1.bf16.msra.mxu0 %v3808
  %5182 = vmatprep.subr.bf16.mxu0 0
  %5183 = vmatpush1.bf16.msra.mxu0 %v3809
  %5184 = vmatprep.subr.bf16.mxu0 0
  %5185 = vmatpush1.bf16.msra.mxu0 %v3810
  %5186 = vmatprep.subr.bf16.mxu0 0
  %5187 = vmatpush1.bf16.msra.mxu0 %v3811
  %5188 = vmatprep.mubr.bf16.mxu0 %v1259
  %5189 = vmatmul.mubr.bf16.gmra.mrb[0].mxu0 %v1245
  %v5190 = vpop.f32.mrb[0].mxu0
  %v5191 = vadd.f32 %v5151, %v5190
  %v5192 = vpop.f32.mrb[0].mxu0
  %v5193 = vpop.f32.mrb[0].mxu0
  %v5194 = vpop.f32.mrb[0].mxu0
  %5195 = vdwg.mxu0
  %5196 = vmatprep.subr.bf16.mxu0 0
  %5197 = vmatpush1.bf16.msra.mxu0 %v3812
  %5198 = vmatprep.subr.bf16.mxu0 0
  %5199 = vmatpush1.bf16.msra.mxu0 %v3813
  %5200 = vmatprep.subr.bf16.mxu0 0
  %5201 = vmatpush1.bf16.msra.mxu0 %v3814
  %5202 = vmatprep.subr.bf16.mxu0 0
  %5203 = vmatpush1.bf16.msra.mxu0 %v3815
  %5204 = vmatprep.subr.bf16.mxu0 0
  %5205 = vmatpush1.bf16.msra.mxu0 %v3816
  %5206 = vmatprep.subr.bf16.mxu0 0
  %5207 = vmatpush1.bf16.msra.mxu0 %v3817
  %5208 = vmatprep.subr.bf16.mxu0 0
  %5209 = vmatpush1.bf16.msra.mxu0 %v3818
  %5210 = vmatprep.subr.bf16.mxu0 0
  %5211 = vmatpush1.bf16.msra.mxu0 %v3819
  %5212 = vmatprep.subr.bf16.mxu0 0
  %5213 = vmatpush1.bf16.msra.mxu0 %v3820
  %5214 = vmatprep.subr.bf16.mxu0 0
  %5215 = vmatpush1.bf16.msra.mxu0 %v3821
  %5216 = vmatprep.subr.bf16.mxu0 0
  %5217 = vmatpush1.bf16.msra.mxu0 %v3822
  %5218 = vmatprep.subr.bf16.mxu0 0
  %5219 = vmatpush1.bf16.msra.mxu0 %v3823
  %5220 = vmatprep.subr.bf16.mxu0 0
  %5221 = vmatpush1.bf16.msra.mxu0 %v3824
  %5222 = vmatprep.subr.bf16.mxu0 0
  %5223 = vmatpush1.bf16.msra.mxu0 %v3825
  %5224 = vmatprep.subr.bf16.mxu0 0
  %5225 = vmatpush1.bf16.msra.mxu0 %v3826
  %5226 = vmatprep.subr.bf16.mxu0 0
  %5227 = vmatpush1.bf16.msra.mxu0 %v3827
  %5228 = vmatprep.mubr.bf16.mxu0 %v1263
  %5229 = vmatmul.mubr.bf16.gmra.mrb[0].mxu0 %v1261
  %v5230 = vpop.f32.mrb[0].mxu0
  %v5231 = vadd.f32 %v5191, %v5230
  %v5232 = vpop.f32.mrb[0].mxu0
  %v5233 = vpop.f32.mrb[0].mxu0
  %v5234 = vpop.f32.mrb[0].mxu0
  %5235 = vdwg.mxu0
  %5236 = vmatprep.subr.bf16.mxu0 0
  %5237 = vmatpush1.bf16.msra.mxu0 %v3828
  %5238 = vmatprep.subr.bf16.mxu0 0
  %5239 = vmatpush1.bf16.msra.mxu0 %v3829
  %5240 = vmatprep.subr.bf16.mxu0 0
  %5241 = vmatpush1.bf16.msra.mxu0 %v3830
  %5242 = vmatprep.subr.bf16.mxu0 0
  %5243 = vmatpush1.bf16.msra.mxu0 %v3831
  %5244 = vmatprep.subr.bf16.mxu0 0
  %5245 = vmatpush1.bf16.msra.mxu0 %v3832
  %5246 = vmatprep.subr.bf16.mxu0 0
  %5247 = vmatpush1.bf16.msra.mxu0 %v3833
  %5248 = vmatprep.subr.bf16.mxu0 0
  %5249 = vmatpush1.bf16.msra.mxu0 %v3834
  %5250 = vmatprep.subr.bf16.mxu0 0
  %5251 = vmatpush1.bf16.msra.mxu0 %v3835
  %5252 = vmatprep.subr.bf16.mxu0 0
  %5253 = vmatpush1.bf16.msra.mxu0 %v3836
  %5254 = vmatprep.subr.bf16.mxu0 0
  %5255 = vmatpush1.bf16.msra.mxu0 %v3837
  %5256 = vmatprep.subr.bf16.mxu0 0
  %5257 = vmatpush1.bf16.msra.mxu0 %v3838
  %5258 = vmatprep.subr.bf16.mxu0 0
  %5259 = vmatpush1.bf16.msra.mxu0 %v3839
  %5260 = vmatprep.subr.bf16.mxu0 0
  %5261 = vmatpush1.bf16.msra.mxu0 %v3840
  %5262 = vmatprep.subr.bf16.mxu0 0
  %5263 = vmatpush1.bf16.msra.mxu0 %v3841
  %5264 = vmatprep.subr.bf16.mxu0 0
  %5265 = vmatpush1.bf16.msra.mxu0 %v3842
  %5266 = vmatprep.subr.bf16.mxu0 0
  %5267 = vmatpush1.bf16.msra.mxu0 %v3843
  %5268 = vmatprep.mubr.bf16.mxu0 %v1301
  %5269 = vmatmul.mubr.bf16.gmra.mrb[0].mxu0 %v1287
  %v5270 = vpop.f32.mrb[0].mxu0
  %v5271 = vadd.f32 %v5231, %v5270
  %v5272 = vpop.f32.mrb[0].mxu0
  %v5273 = vpop.f32.mrb[0].mxu0
  %v5274 = vpop.f32.mrb[0].mxu0
  %5275 = vdwg.mxu0
  %5276 = vmatprep.subr.bf16.mxu0 0
  %5277 = vmatpush1.bf16.msra.mxu0 %v3844
  %5278 = vmatprep.subr.bf16.mxu0 0
  %5279 = vmatpush1.bf16.msra.mxu0 %v3845
  %5280 = vmatprep.subr.bf16.mxu0 0
  %5281 = vmatpush1.bf16.msra.mxu0 %v3846
  %5282 = vmatprep.subr.bf16.mxu0 0
  %5283 = vmatpush1.bf16.msra.mxu0 %v3847
  %5284 = vmatprep.subr.bf16.mxu0 0
  %5285 = vmatpush1.bf16.msra.mxu0 %v3848
  %5286 = vmatprep.subr.bf16.mxu0 0
  %5287 = vmatpush1.bf16.msra.mxu0 %v3849
  %5288 = vmatprep.subr.bf16.mxu0 0
  %5289 = vmatpush1.bf16.msra.mxu0 %v3850
  %5290 = vmatprep.subr.bf16.mxu0 0
  %5291 = vmatpush1.bf16.msra.mxu0 %v3851
  %5292 = vmatprep.subr.bf16.mxu0 0
  %5293 = vmatpush1.bf16.msra.mxu0 %v3852
  %5294 = vmatprep.subr.bf16.mxu0 0
  %5295 = vmatpush1.bf16.msra.mxu0 %v3853
  %5296 = vmatprep.subr.bf16.mxu0 0
  %5297 = vmatpush1.bf16.msra.mxu0 %v3854
  %5298 = vmatprep.subr.bf16.mxu0 0
  %5299 = vmatpush1.bf16.msra.mxu0 %v3855
  %5300 = vmatprep.subr.bf16.mxu0 0
  %5301 = vmatpush1.bf16.msra.mxu0 %v3856
  %5302 = vmatprep.subr.bf16.mxu0 0
  %5303 = vmatpush1.bf16.msra.mxu0 %v3857
  %5304 = vmatprep.subr.bf16.mxu0 0
  %5305 = vmatpush1.bf16.msra.mxu0 %v3858
  %5306 = vmatprep.subr.bf16.mxu0 0
  %5307 = vmatpush1.bf16.msra.mxu0 %v3859
  %5308 = vmatprep.mubr.bf16.mxu0 %v1311
  %5309 = vmatmul.mubr.bf16.gmra.mrb[0].mxu0 %v1309
  %v5310 = vpop.f32.mrb[0].mxu0
  %v5311 = vadd.f32 %v5271, %v5310
  %v5312 = vpop.f32.mrb[0].mxu0
  %v5313 = vpop.f32.mrb[0].mxu0
  %v5314 = vpop.f32.mrb[0].mxu0
  %5315 = vdwg.mxu0
  %5316 = vmatprep.subr.bf16.mxu0 0
  %5317 = vmatpush1.bf16.msra.mxu0 %v3860
  %5318 = vmatprep.subr.bf16.mxu0 0
  %5319 = vmatpush1.bf16.msra.mxu0 %v3861
  %5320 = vmatprep.subr.bf16.mxu0 0
  %5321 = vmatpush1.bf16.msra.mxu0 %v3862
  %5322 = vmatprep.subr.bf16.mxu0 0
  %5323 = vmatpush1.bf16.msra.mxu0 %v3863
  %5324 = vmatprep.subr.bf16.mxu0 0
  %5325 = vmatpush1.bf16.msra.mxu0 %v3864
  %5326 = vmatprep.subr.bf16.mxu0 0
  %5327 = vmatpush1.bf16.msra.mxu0 %v3865
  %5328 = vmatprep.subr.bf16.mxu0 0
  %5329 = vmatpush1.bf16.msra.mxu0 %v3866
  %5330 = vmatprep.subr.bf16.mxu0 0
  %5331 = vmatpush1.bf16.msra.mxu0 %v3867
  %5332 = vmatprep.subr.bf16.mxu0 0
  %5333 = vmatpush1.bf16.msra.mxu0 %v3868
  %5334 = vmatprep.subr.bf16.mxu0 0
  %5335 = vmatpush1.bf16.msra.mxu0 %v3869
  %5336 = vmatprep.subr.bf16.mxu0 0
  %5337 = vmatpush1.bf16.msra.mxu0 %v3870
  %5338 = vmatprep.subr.bf16.mxu0 0
  %5339 = vmatpush1.bf16.msra.mxu0 %v3871
  %5340 = vmatprep.subr.bf16.mxu0 0
  %5341 = vmatpush1.bf16.msra.mxu0 %v3872
  %5342 = vmatprep.subr.bf16.mxu0 0
  %5343 = vmatpush1.bf16.msra.mxu0 %v3873
  %5344 = vmatprep.subr.bf16.mxu0 0
  %5345 = vmatpush1.bf16.msra.mxu0 %v3874
  %5346 = vmatprep.subr.bf16.mxu0 0
  %5347 = vmatpush1.bf16.msra.mxu0 %v3875
  %5348 = vmatprep.mubr.bf16.mxu0 %v1308
  %5349 = vmatmul.mubr.bf16.gmra.mrb[0].mxu0 %v1294
  %v5350 = vpop.f32.mrb[0].mxu0
  %v5351 = vadd.f32 %v5311, %v5350
  %v5352 = vpop.f32.mrb[0].mxu0
  %v5353 = vpop.f32.mrb[0].mxu0
  %v5354 = vpop.f32.mrb[0].mxu0
  %5355 = vdwg.mxu0
  %5356 = vmatprep.subr.bf16.mxu0 0
  %5357 = vmatpush1.bf16.msra.mxu0 %v3876
  %5358 = vmatprep.subr.bf16.mxu0 0
  %5359 = vmatpush1.bf16.msra.mxu0 %v3877
  %5360 = vmatprep.subr.bf16.mxu0 0
  %5361 = vmatpush1.bf16.msra.mxu0 %v3878
  %5362 = vmatprep.subr.bf16.mxu0 0
  %5363 = vmatpush1.bf16.msra.mxu0 %v3879
  %5364 = vmatprep.subr.bf16.mxu0 0
  %5365 = vmatpush1.bf16.msra.mxu0 %v3880
  %5366 = vmatprep.subr.bf16.mxu0 0
  %5367 = vmatpush1.bf16.msra.mxu0 %v3881
  %5368 = vmatprep.subr.bf16.mxu0 0
  %5369 = vmatpush1.bf16.msra.mxu0 %v3882
  %5370 = vmatprep.subr.bf16.mxu0 0
  %5371 = vmatpush1.bf16.msra.mxu0 %v3883
  %5372 = vmatprep.subr.bf16.mxu0 0
  %5373 = vmatpush1.bf16.msra.mxu0 %v3884
  %5374 = vmatprep.subr.bf16.mxu0 0
  %5375 = vmatpush1.bf16.msra.mxu0 %v3885
  %5376 = vmatprep.subr.bf16.mxu0 0
  %5377 = vmatpush1.bf16.msra.mxu0 %v3886
  %5378 = vmatprep.subr.bf16.mxu0 0
  %5379 = vmatpush1.bf16.msra.mxu0 %v3887
  %5380 = vmatprep.subr.bf16.mxu0 0
  %5381 = vmatpush1.bf16.msra.mxu0 %v3888
  %5382 = vmatprep.subr.bf16.mxu0 0
  %5383 = vmatpush1.bf16.msra.mxu0 %v3889
  %5384 = vmatprep.subr.bf16.mxu0 0
  %5385 = vmatpush1.bf16.msra.mxu0 %v3890
  %5386 = vmatprep.subr.bf16.mxu0 0
  %5387 = vmatpush1.bf16.msra.mxu0 %v3891
  %5388 = vmatprep.mubr.bf16.mxu0 %v1312
  %5389 = vmatmul.mubr.bf16.gmra.mrb[0].mxu0 %v1310
  %v5390 = vpop.f32.mrb[0].mxu0
  %v5391 = vadd.f32 %v5351, %v5390
  %v5392 = vpop.f32.mrb[0].mxu0
  %v5393 = vpop.f32.mrb[0].mxu0
  %v5394 = vpop.f32.mrb[0].mxu0
  %5395 = vdwg.mxu0
  %5396 = vmatprep.subr.bf16.mxu0 0
  %5397 = vmatpush1.bf16.msra.mxu0 %v3892
  %5398 = vmatprep.subr.bf16.mxu0 0
  %5399 = vmatpush1.bf16.msra.mxu0 %v3893
  %5400 = vmatprep.subr.bf16.mxu0 0
  %5401 = vmatpush1.bf16.msra.mxu0 %v3894
  %5402 = vmatprep.subr.bf16.mxu0 0
  %5403 = vmatpush1.bf16.msra.mxu0 %v3895
  %5404 = vmatprep.subr.bf16.mxu0 0
  %5405 = vmatpush1.bf16.msra.mxu0 %v3896
  %5406 = vmatprep.subr.bf16.mxu0 0
  %5407 = vmatpush1.bf16.msra.mxu0 %v3897
  %5408 = vmatprep.subr.bf16.mxu0 0
  %5409 = vmatpush1.bf16.msra.mxu0 %v3898
  %5410 = vmatprep.subr.bf16.mxu0 0
  %5411 = vmatpush1.bf16.msra.mxu0 %v3899
  %5412 = vmatprep.subr.bf16.mxu0 0
  %5413 = vmatpush1.bf16.msra.mxu0 %v3900
  %5414 = vmatprep.subr.bf16.mxu0 0
  %5415 = vmatpush1.bf16.msra.mxu0 %v3901
  %5416 = vmatprep.subr.bf16.mxu0 0
  %5417 = vmatpush1.bf16.msra.mxu0 %v3902
  %5418 = vmatprep.subr.bf16.mxu0 0
  %5419 = vmatpush1.bf16.msra.mxu0 %v3903
  %5420 = vmatprep.subr.bf16.mxu0 0
  %5421 = vmatpush1.bf16.msra.mxu0 %v3904
  %5422 = vmatprep.subr.bf16.mxu0 0
  %5423 = vmatpush1.bf16.msra.mxu0 %v3905
  %5424 = vmatprep.subr.bf16.mxu0 0
  %5425 = vmatpush1.bf16.msra.mxu0 %v3906
  %5426 = vmatprep.subr.bf16.mxu0 0
  %5427 = vmatpush1.bf16.msra.mxu0 %v3907
  %5428 = vmatprep.mubr.bf16.mxu0 %v1350
  %5429 = vmatmul.mubr.bf16.gmra.mrb[0].mxu0 %v1336
  %v5430 = vpop.f32.mrb[0].mxu0
  %v5431 = vadd.f32 %v5391, %v5430
  %v5432 = vpop.f32.mrb[0].mxu0
  %v5433 = vpop.f32.mrb[0].mxu0
  %v5434 = vpop.f32.mrb[0].mxu0
  %5435 = vdwg.mxu0
  %5436 = vmatprep.subr.bf16.mxu0 0
  %5437 = vmatpush1.bf16.msra.mxu0 %v3908
  %5438 = vmatprep.subr.bf16.mxu0 0
  %5439 = vmatpush1.bf16.msra.mxu0 %v3909
  %5440 = vmatprep.subr.bf16.mxu0 0
  %5441 = vmatpush1.bf16.msra.mxu0 %v3910
  %5442 = vmatprep.subr.bf16.mxu0 0
  %5443 = vmatpush1.bf16.msra.mxu0 %v3911
  %5444 = vmatprep.subr.bf16.mxu0 0
  %5445 = vmatpush1.bf16.msra.mxu0 %v3912
  %5446 = vmatprep.subr.bf16.mxu0 0
  %5447 = vmatpush1.bf16.msra.mxu0 %v3913
  %5448 = vmatprep.subr.bf16.mxu0 0
  %5449 = vmatpush1.bf16.msra.mxu0 %v3914
  %5450 = vmatprep.subr.bf16.mxu0 0
  %5451 = vmatpush1.bf16.msra.mxu0 %v3915
  %5452 = vmatprep.subr.bf16.mxu0 0
  %5453 = vmatpush1.bf16.msra.mxu0 %v3916
  %5454 = vmatprep.subr.bf16.mxu0 0
  %5455 = vmatpush1.bf16.msra.mxu0 %v3917
  %5456 = vmatprep.subr.bf16.mxu0 0
  %5457 = vmatpush1.bf16.msra.mxu0 %v3918
  %5458 = vmatprep.subr.bf16.mxu0 0
  %5459 = vmatpush1.bf16.msra.mxu0 %v3919
  %5460 = vmatprep.subr.bf16.mxu0 0
  %5461 = vmatpush1.bf16.msra.mxu0 %v3920
  %5462 = vmatprep.subr.bf16.mxu0 0
  %5463 = vmatpush1.bf16.msra.mxu0 %v3921
  %5464 = vmatprep.subr.bf16.mxu0 0
  %5465 = vmatpush1.bf16.msra.mxu0 %v3922
  %5466 = vmatprep.subr.bf16.mxu0 0
  %5467 = vmatpush1.bf16.msra.mxu0 %v3923
  %5468 = vmatprep.mubr.bf16.mxu0 %v1360
  %5469 = vmatmul.mubr.bf16.gmra.mrb[0].mxu0 %v1358
  %v5470 = vpop.f32.mrb[0].mxu0
  %v5471 = vadd.f32 %v5431, %v5470
  %v5472 = vpop.f32.mrb[0].mxu0
  %v5473 = vpop.f32.mrb[0].mxu0
  %v5474 = vpop.f32.mrb[0].mxu0
  %5475 = vdwg.mxu0
  %5476 = vmatprep.subr.bf16.mxu0 0
  %5477 = vmatpush1.bf16.msra.mxu0 %v3924
  %5478 = vmatprep.subr.bf16.mxu0 0
  %5479 = vmatpush1.bf16.msra.mxu0 %v3925
  %5480 = vmatprep.subr.bf16.mxu0 0
  %5481 = vmatpush1.bf16.msra.mxu0 %v3926
  %5482 = vmatprep.subr.bf16.mxu0 0
  %5483 = vmatpush1.bf16.msra.mxu0 %v3927
  %5484 = vmatprep.subr.bf16.mxu0 0
  %5485 = vmatpush1.bf16.msra.mxu0 %v3928
  %5486 = vmatprep.subr.bf16.mxu0 0
  %5487 = vmatpush1.bf16.msra.mxu0 %v3929
  %5488 = vmatprep.subr.bf16.mxu0 0
  %5489 = vmatpush1.bf16.msra.mxu0 %v3930
  %5490 = vmatprep.subr.bf16.mxu0 0
  %5491 = vmatpush1.bf16.msra.mxu0 %v3931
  %5492 = vmatprep.subr.bf16.mxu0 0
  %5493 = vmatpush1.bf16.msra.mxu0 %v3932
  %5494 = vmatprep.subr.bf16.mxu0 0
  %5495 = vmatpush1.bf16.msra.mxu0 %v3933
  %5496 = vmatprep.subr.bf16.mxu0 0
  %5497 = vmatpush1.bf16.msra.mxu0 %v3934
  %5498 = vmatprep.subr.bf16.mxu0 0
  %5499 = vmatpush1.bf16.msra.mxu0 %v3935
  %5500 = vmatprep.subr.bf16.mxu0 0
  %5501 = vmatpush1.bf16.msra.mxu0 %v3936
  %5502 = vmatprep.subr.bf16.mxu0 0
  %5503 = vmatpush1.bf16.msra.mxu0 %v3937
  %5504 = vmatprep.subr.bf16.mxu0 0
  %5505 = vmatpush1.bf16.msra.mxu0 %v3938
  %5506 = vmatprep.subr.bf16.mxu0 0
  %5507 = vmatpush1.bf16.msra.mxu0 %v3939
  %5508 = vmatprep.mubr.bf16.mxu0 %v1357
  %5509 = vmatmul.mubr.bf16.gmra.mrb[0].mxu0 %v1343
  %v5510 = vpop.f32.mrb[0].mxu0
  %v5511 = vadd.f32 %v5471, %v5510
  %v5512 = vpop.f32.mrb[0].mxu0
  %v5513 = vpop.f32.mrb[0].mxu0
  %v5514 = vpop.f32.mrb[0].mxu0
  %5515 = vdwg.mxu0
  %5516 = vmatprep.subr.bf16.mxu0 0
  %5517 = vmatpush1.bf16.msra.mxu0 %v3940
  %5518 = vmatprep.subr.bf16.mxu0 0
  %5519 = vmatpush1.bf16.msra.mxu0 %v3941
  %5520 = vmatprep.subr.bf16.mxu0 0
  %5521 = vmatpush1.bf16.msra.mxu0 %v3942
  %5522 = vmatprep.subr.bf16.mxu0 0
  %5523 = vmatpush1.bf16.msra.mxu0 %v3943
  %5524 = vmatprep.subr.bf16.mxu0 0
  %5525 = vmatpush1.bf16.msra.mxu0 %v3944
  %5526 = vmatprep.subr.bf16.mxu0 0
  %5527 = vmatpush1.bf16.msra.mxu0 %v3945
  %5528 = vmatprep.subr.bf16.mxu0 0
  %5529 = vmatpush1.bf16.msra.mxu0 %v3946
  %5530 = vmatprep.subr.bf16.mxu0 0
  %5531 = vmatpush1.bf16.msra.mxu0 %v3947
  %5532 = vmatprep.subr.bf16.mxu0 0
  %5533 = vmatpush1.bf16.msra.mxu0 %v3948
  %5534 = vmatprep.subr.bf16.mxu0 0
  %5535 = vmatpush1.bf16.msra.mxu0 %v3949
  %5536 = vmatprep.subr.bf16.mxu0 0
  %5537 = vmatpush1.bf16.msra.mxu0 %v3950
  %5538 = vmatprep.subr.bf16.mxu0 0
  %5539 = vmatpush1.bf16.msra.mxu0 %v3951
  %5540 = vmatprep.subr.bf16.mxu0 0
  %5541 = vmatpush1.bf16.msra.mxu0 %v3952
  %5542 = vmatprep.subr.bf16.mxu0 0
  %5543 = vmatpush1.bf16.msra.mxu0 %v3953
  %5544 = vmatprep.subr.bf16.mxu0 0
  %5545 = vmatpush1.bf16.msra.mxu0 %v3954
  %5546 = vmatprep.subr.bf16.mxu0 0
  %5547 = vmatpush1.bf16.msra.mxu0 %v3955
  %5548 = vmatprep.mubr.bf16.mxu0 %v1361
  %5549 = vmatmul.mubr.bf16.gmra.mrb[0].mxu0 %v1359
  %v5550 = vpop.f32.mrb[0].mxu0
  %v5551 = vadd.f32 %v5511, %v5550
  %v5552 = vpop.f32.mrb[0].mxu0
  %v5553 = vpop.f32.mrb[0].mxu0
  %v5554 = vpop.f32.mrb[0].mxu0
  %5555 = vdwg.mxu0
  %5556 = vmatprep.subr.bf16.mxu0 0
  %5557 = vmatpush1.bf16.msra.mxu0 %v3956
  %5558 = vmatprep.subr.bf16.mxu0 0
  %5559 = vmatpush1.bf16.msra.mxu0 %v3957
  %5560 = vmatprep.subr.bf16.mxu0 0
  %5561 = vmatpush1.bf16.msra.mxu0 %v3958
  %5562 = vmatprep.subr.bf16.mxu0 0
  %5563 = vmatpush1.bf16.msra.mxu0 %v3959
  %5564 = vmatprep.subr.bf16.mxu0 0
  %5565 = vmatpush1.bf16.msra.mxu0 %v3960
  %5566 = vmatprep.subr.bf16.mxu0 0
  %5567 = vmatpush1.bf16.msra.mxu0 %v3961
  %5568 = vmatprep.subr.bf16.mxu0 0
  %5569 = vmatpush1.bf16.msra.mxu0 %v3962
  %5570 = vmatprep.subr.bf16.mxu0 0
  %5571 = vmatpush1.bf16.msra.mxu0 %v3963
  %5572 = vmatprep.subr.bf16.mxu0 0
  %5573 = vmatpush1.bf16.msra.mxu0 %v3964
  %5574 = vmatprep.subr.bf16.mxu0 0
  %5575 = vmatpush1.bf16.msra.mxu0 %v3965
  %5576 = vmatprep.subr.bf16.mxu0 0
  %5577 = vmatpush1.bf16.msra.mxu0 %v3966
  %5578 = vmatprep.subr.bf16.mxu0 0
  %5579 = vmatpush1.bf16.msra.mxu0 %v3967
  %5580 = vmatprep.subr.bf16.mxu0 0
  %5581 = vmatpush1.bf16.msra.mxu0 %v3968
  %5582 = vmatprep.subr.bf16.mxu0 0
  %5583 = vmatpush1.bf16.msra.mxu0 %v3969
  %5584 = vmatprep.subr.bf16.mxu0 0
  %5585 = vmatpush1.bf16.msra.mxu0 %v3970
  %5586 = vmatprep.subr.bf16.mxu0 0
  %5587 = vmatpush1.bf16.msra.mxu0 %v3971
  %5588 = vmatprep.mubr.bf16.mxu0 %v1399
  %5589 = vmatmul.mubr.bf16.gmra.mrb[0].mxu0 %v1385
  %v5590 = vpop.f32.mrb[0].mxu0
  %v5591 = vadd.f32 %v5551, %v5590
  %v5592 = vpop.f32.mrb[0].mxu0
  %v5593 = vpop.f32.mrb[0].mxu0
  %v5594 = vpop.f32.mrb[0].mxu0
  %5595 = vdwg.mxu0
  %5596 = vmatprep.subr.bf16.mxu0 0
  %5597 = vmatpush1.bf16.msra.mxu0 %v3972
  %5598 = vmatprep.subr.bf16.mxu0 0
  %5599 = vmatpush1.bf16.msra.mxu0 %v3973
  %5600 = vmatprep.subr.bf16.mxu0 0
  %5601 = vmatpush1.bf16.msra.mxu0 %v3974
  %5602 = vmatprep.subr.bf16.mxu0 0
  %5603 = vmatpush1.bf16.msra.mxu0 %v3975
  %5604 = vmatprep.subr.bf16.mxu0 0
  %5605 = vmatpush1.bf16.msra.mxu0 %v3976
  %5606 = vmatprep.subr.bf16.mxu0 0
  %5607 = vmatpush1.bf16.msra.mxu0 %v3977
  %5608 = vmatprep.subr.bf16.mxu0 0
  %5609 = vmatpush1.bf16.msra.mxu0 %v3978
  %5610 = vmatprep.subr.bf16.mxu0 0
  %5611 = vmatpush1.bf16.msra.mxu0 %v3979
  %5612 = vmatprep.subr.bf16.mxu0 0
  %5613 = vmatpush1.bf16.msra.mxu0 %v3980
  %5614 = vmatprep.subr.bf16.mxu0 0
  %5615 = vmatpush1.bf16.msra.mxu0 %v3981
  %5616 = vmatprep.subr.bf16.mxu0 0
  %5617 = vmatpush1.bf16.msra.mxu0 %v3982
  %5618 = vmatprep.subr.bf16.mxu0 0
  %5619 = vmatpush1.bf16.msra.mxu0 %v3983
  %5620 = vmatprep.subr.bf16.mxu0 0
  %5621 = vmatpush1.bf16.msra.mxu0 %v3984
  %5622 = vmatprep.subr.bf16.mxu0 0
  %5623 = vmatpush1.bf16.msra.mxu0 %v3985
  %5624 = vmatprep.subr.bf16.mxu0 0
  %5625 = vmatpush1.bf16.msra.mxu0 %v3986
  %5626 = vmatprep.subr.bf16.mxu0 0
  %5627 = vmatpush1.bf16.msra.mxu0 %v3987
  %5628 = vmatprep.mubr.bf16.mxu0 %v1409
  %5629 = vmatmul.mubr.bf16.gmra.mrb[0].mxu0 %v1407
  %v5630 = vpop.f32.mrb[0].mxu0
  %v5631 = vadd.f32 %v5591, %v5630
  %v5632 = vpop.f32.mrb[0].mxu0
  %v5633 = vpop.f32.mrb[0].mxu0
  %v5634 = vpop.f32.mrb[0].mxu0
  %5635 = vdwg.mxu0
  %5636 = vmatprep.subr.bf16.mxu0 0
  %5637 = vmatpush1.bf16.msra.mxu0 %v3988
  %5638 = vmatprep.subr.bf16.mxu0 0
  %5639 = vmatpush1.bf16.msra.mxu0 %v3989
  %5640 = vmatprep.subr.bf16.mxu0 0
  %5641 = vmatpush1.bf16.msra.mxu0 %v3990
  %5642 = vmatprep.subr.bf16.mxu0 0
  %5643 = vmatpush1.bf16.msra.mxu0 %v3991
  %5644 = vmatprep.subr.bf16.mxu0 0
  %5645 = vmatpush1.bf16.msra.mxu0 %v3992
  %5646 = vmatprep.subr.bf16.mxu0 0
  %5647 = vmatpush1.bf16.msra.mxu0 %v3993
  %5648 = vmatprep.subr.bf16.mxu0 0
  %5649 = vmatpush1.bf16.msra.mxu0 %v3994
  %5650 = vmatprep.subr.bf16.mxu0 0
  %5651 = vmatpush1.bf16.msra.mxu0 %v3995
  %5652 = vmatprep.subr.bf16.mxu0 0
  %5653 = vmatpush1.bf16.msra.mxu0 %v3996
  %5654 = vmatprep.subr.bf16.mxu0 0
  %5655 = vmatpush1.bf16.msra.mxu0 %v3997
  %5656 = vmatprep.subr.bf16.mxu0 0
  %5657 = vmatpush1.bf16.msra.mxu0 %v3998
  %5658 = vmatprep.subr.bf16.mxu0 0
  %5659 = vmatpush1.bf16.msra.mxu0 %v3999
  %5660 = vmatprep.subr.bf16.mxu0 0
  %5661 = vmatpush1.bf16.msra.mxu0 %v4000
  %5662 = vmatprep.subr.bf16.mxu0 0
  %5663 = vmatpush1.bf16.msra.mxu0 %v4001
  %5664 = vmatprep.subr.bf16.mxu0 0
  %5665 = vmatpush1.bf16.msra.mxu0 %v4002
  %5666 = vmatprep.subr.bf16.mxu0 0
  %5667 = vmatpush1.bf16.msra.mxu0 %v4003
  %5668 = vmatprep.mubr.bf16.mxu0 %v1406
  %5669 = vmatmul.mubr.bf16.gmra.mrb[0].mxu0 %v1392
  %v5670 = vpop.f32.mrb[0].mxu0
  %v5671 = vadd.f32 %v5631, %v5670
  %v5672 = vpop.f32.mrb[0].mxu0
  %v5673 = vpop.f32.mrb[0].mxu0
  %v5674 = vpop.f32.mrb[0].mxu0
  %5675 = vdwg.mxu0
  %5676 = vmatprep.subr.bf16.mxu0 0
  %5677 = vmatpush1.bf16.msra.mxu0 %v4004
  %5678 = vmatprep.subr.bf16.mxu0 0
  %5679 = vmatpush1.bf16.msra.mxu0 %v4005
  %5680 = vmatprep.subr.bf16.mxu0 0
  %5681 = vmatpush1.bf16.msra.mxu0 %v4006
  %5682 = vmatprep.subr.bf16.mxu0 0
  %5683 = vmatpush1.bf16.msra.mxu0 %v4007
  %5684 = vmatprep.subr.bf16.mxu0 0
  %5685 = vmatpush1.bf16.msra.mxu0 %v4008
  %5686 = vmatprep.subr.bf16.mxu0 0
  %5687 = vmatpush1.bf16.msra.mxu0 %v4009
  %5688 = vmatprep.subr.bf16.mxu0 0
  %5689 = vmatpush1.bf16.msra.mxu0 %v4010
  %5690 = vmatprep.subr.bf16.mxu0 0
  %5691 = vmatpush1.bf16.msra.mxu0 %v4011
  %5692 = vmatprep.subr.bf16.mxu0 0
  %5693 = vmatpush1.bf16.msra.mxu0 %v4012
  %5694 = vmatprep.subr.bf16.mxu0 0
  %5695 = vmatpush1.bf16.msra.mxu0 %v4013
  %5696 = vmatprep.subr.bf16.mxu0 0
  %5697 = vmatpush1.bf16.msra.mxu0 %v4014
  %5698 = vmatprep.subr.bf16.mxu0 0
  %5699 = vmatpush1.bf16.msra.mxu0 %v4015
  %5700 = vmatprep.subr.bf16.mxu0 0
  %5701 = vmatpush1.bf16.msra.mxu0 %v4016
  %5702 = vmatprep.subr.bf16.mxu0 0
  %5703 = vmatpush1.bf16.msra.mxu0 %v4017
  %5704 = vmatprep.subr.bf16.mxu0 0
  %5705 = vmatpush1.bf16.msra.mxu0 %v4018
  %5706 = vmatprep.subr.bf16.mxu0 0
  %5707 = vmatpush1.bf16.msra.mxu0 %v4019
  %5708 = vmatprep.mubr.bf16.mxu0 %v1410
  %5709 = vmatmul.mubr.bf16.gmra.mrb[0].mxu0 %v1408
  %v5710 = vpop.f32.mrb[0].mxu0
  %v5711 = vadd.f32 %v5671, %v5710
  %v5712 = vpop.f32.mrb[0].mxu0
  %v5713 = vpop.f32.mrb[0].mxu0
  %v5714 = vpop.f32.mrb[0].mxu0
  %5715 = vdwg.mxu0
  %5716 = vmatprep.subr.bf16.mxu0 0
  %5717 = vmatpush1.bf16.msra.mxu0 %v4020
  %5718 = vmatprep.subr.bf16.mxu0 0
  %5719 = vmatpush1.bf16.msra.mxu0 %v4021
  %5720 = vmatprep.subr.bf16.mxu0 0
  %5721 = vmatpush1.bf16.msra.mxu0 %v4022
  %5722 = vmatprep.subr.bf16.mxu0 0
  %5723 = vmatpush1.bf16.msra.mxu0 %v4023
  %5724 = vmatprep.subr.bf16.mxu0 0
  %5725 = vmatpush1.bf16.msra.mxu0 %v4024
  %5726 = vmatprep.subr.bf16.mxu0 0
  %5727 = vmatpush1.bf16.msra.mxu0 %v4025
  %5728 = vmatprep.subr.bf16.mxu0 0
  %5729 = vmatpush1.bf16.msra.mxu0 %v4026
  %5730 = vmatprep.subr.bf16.mxu0 0
  %5731 = vmatpush1.bf16.msra.mxu0 %v4027
  %5732 = vmatprep.subr.bf16.mxu0 0
  %5733 = vmatpush1.bf16.msra.mxu0 %v4028
  %5734 = vmatprep.subr.bf16.mxu0 0
  %5735 = vmatpush1.bf16.msra.mxu0 %v4029
  %5736 = vmatprep.subr.bf16.mxu0 0
  %5737 = vmatpush1.bf16.msra.mxu0 %v4030
  %5738 = vmatprep.subr.bf16.mxu0 0
  %5739 = vmatpush1.bf16.msra.mxu0 %v4031
  %5740 = vmatprep.subr.bf16.mxu0 0
  %5741 = vmatpush1.bf16.msra.mxu0 %v4032
  %5742 = vmatprep.subr.bf16.mxu0 0
  %5743 = vmatpush1.bf16.msra.mxu0 %v4033
  %5744 = vmatprep.subr.bf16.mxu0 0
  %5745 = vmatpush1.bf16.msra.mxu0 %v4034
  %5746 = vmatprep.subr.bf16.mxu0 0
  %5747 = vmatpush1.bf16.msra.mxu0 %v4035
  %5748 = vmatprep.mubr.bf16.mxu0 %v1448
  %5749 = vmatmul.mubr.bf16.gmra.mrb[0].mxu0 %v1434
  %v5750 = vpop.f32.mrb[0].mxu0
  %v5751 = vadd.f32 %v5711, %v5750
  %v5752 = vpop.f32.mrb[0].mxu0
  %v5753 = vpop.f32.mrb[0].mxu0
  %v5754 = vpop.f32.mrb[0].mxu0
  %5755 = vdwg.mxu0
  %5756 = vmatprep.subr.bf16.mxu0 0
  %5757 = vmatpush1.bf16.msra.mxu0 %v4036
  %5758 = vmatprep.subr.bf16.mxu0 0
  %5759 = vmatpush1.bf16.msra.mxu0 %v4037
  %5760 = vmatprep.subr.bf16.mxu0 0
  %5761 = vmatpush1.bf16.msra.mxu0 %v4038
  %5762 = vmatprep.subr.bf16.mxu0 0
  %5763 = vmatpush1.bf16.msra.mxu0 %v4039
  %5764 = vmatprep.subr.bf16.mxu0 0
  %5765 = vmatpush1.bf16.msra.mxu0 %v4040
  %5766 = vmatprep.subr.bf16.mxu0 0
  %5767 = vmatpush1.bf16.msra.mxu0 %v4041
  %5768 = vmatprep.subr.bf16.mxu0 0
  %5769 = vmatpush1.bf16.msra.mxu0 %v4042
  %5770 = vmatprep.subr.bf16.mxu0 0
  %5771 = vmatpush1.bf16.msra.mxu0 %v4043
  %5772 = vmatprep.subr.bf16.mxu0 0
  %5773 = vmatpush1.bf16.msra.mxu0 %v4044
  %5774 = vmatprep.subr.bf16.mxu0 0
  %5775 = vmatpush1.bf16.msra.mxu0 %v4045
  %5776 = vmatprep.subr.bf16.mxu0 0
  %5777 = vmatpush1.bf16.msra.mxu0 %v4046
  %5778 = vmatprep.subr.bf16.mxu0 0
  %5779 = vmatpush1.bf16.msra.mxu0 %v4047
  %5780 = vmatprep.subr.bf16.mxu0 0
  %5781 = vmatpush1.bf16.msra.mxu0 %v4048
  %5782 = vmatprep.subr.bf16.mxu0 0
  %5783 = vmatpush1.bf16.msra.mxu0 %v4049
  %5784 = vmatprep.subr.bf16.mxu0 0
  %5785 = vmatpush1.bf16.msra.mxu0 %v4050
  %5786 = vmatprep.subr.bf16.mxu0 0
  %5787 = vmatpush1.bf16.msra.mxu0 %v4051
  %5788 = vmatprep.mubr.bf16.mxu0 %v1458
  %5789 = vmatmul.mubr.bf16.gmra.mrb[0].mxu0 %v1456
  %v5790 = vpop.f32.mrb[0].mxu0
  %v5791 = vadd.f32 %v5751, %v5790
  %v5792 = vpop.f32.mrb[0].mxu0
  %v5793 = vpop.f32.mrb[0].mxu0
  %v5794 = vpop.f32.mrb[0].mxu0
  %5795 = vdwg.mxu0
  %5796 = vmatprep.subr.bf16.mxu0 0
  %5797 = vmatpush1.bf16.msra.mxu0 %v4052
  %5798 = vmatprep.subr.bf16.mxu0 0
  %5799 = vmatpush1.bf16.msra.mxu0 %v4053
  %5800 = vmatprep.subr.bf16.mxu0 0
  %5801 = vmatpush1.bf16.msra.mxu0 %v4054
  %5802 = vmatprep.subr.bf16.mxu0 0
  %5803 = vmatpush1.bf16.msra.mxu0 %v4055
  %5804 = vmatprep.subr.bf16.mxu0 0
  %5805 = vmatpush1.bf16.msra.mxu0 %v4056
  %5806 = vmatprep.subr.bf16.mxu0 0
  %5807 = vmatpush1.bf16.msra.mxu0 %v4057
  %5808 = vmatprep.subr.bf16.mxu0 0
  %5809 = vmatpush1.bf16.msra.mxu0 %v4058
  %5810 = vmatprep.subr.bf16.mxu0 0
  %5811 = vmatpush1.bf16.msra.mxu0 %v4059
  %5812 = vmatprep.subr.bf16.mxu0 0
  %5813 = vmatpush1.bf16.msra.mxu0 %v4060
  %5814 = vmatprep.subr.bf16.mxu0 0
  %5815 = vmatpush1.bf16.msra.mxu0 %v4061
  %5816 = vmatprep.subr.bf16.mxu0 0
  %5817 = vmatpush1.bf16.msra.mxu0 %v4062
  %5818 = vmatprep.subr.bf16.mxu0 0
  %5819 = vmatpush1.bf16.msra.mxu0 %v4063
  %5820 = vmatprep.subr.bf16.mxu0 0
  %5821 = vmatpush1.bf16.msra.mxu0 %v4064
  %5822 = vmatprep.subr.bf16.mxu0 0
  %5823 = vmatpush1.bf16.msra.mxu0 %v4065
  %5824 = vmatprep.subr.bf16.mxu0 0
  %5825 = vmatpush1.bf16.msra.mxu0 %v4066
  %5826 = vmatprep.subr.bf16.mxu0 0
  %5827 = vmatpush1.bf16.msra.mxu0 %v4067
  %5828 = vmatprep.mubr.bf16.mxu0 %v1455
  %5829 = vmatmul.mubr.bf16.gmra.mrb[0].mxu0 %v1441
  %v5830 = vpop.f32.mrb[0].mxu0
  %v5831 = vadd.f32 %v5791, %v5830
  %v5832 = vpop.f32.mrb[0].mxu0
  %v5833 = vpop.f32.mrb[0].mxu0
  %v5834 = vpop.f32.mrb[0].mxu0
  %5835 = vdwg.mxu0
  %5836 = vmatprep.subr.bf16.mxu0 0
  %5837 = vmatpush1.bf16.msra.mxu0 %v4068
  %5838 = vmatprep.subr.bf16.mxu0 0
  %5839 = vmatpush1.bf16.msra.mxu0 %v4069
  %5840 = vmatprep.subr.bf16.mxu0 0
  %5841 = vmatpush1.bf16.msra.mxu0 %v4070
  %5842 = vmatprep.subr.bf16.mxu0 0
  %5843 = vmatpush1.bf16.msra.mxu0 %v4071
  %5844 = vmatprep.subr.bf16.mxu0 0
  %5845 = vmatpush1.bf16.msra.mxu0 %v4072
  %5846 = vmatprep.subr.bf16.mxu0 0
  %5847 = vmatpush1.bf16.msra.mxu0 %v4073
  %5848 = vmatprep.subr.bf16.mxu0 0
  %5849 = vmatpush1.bf16.msra.mxu0 %v4074
  %5850 = vmatprep.subr.bf16.mxu0 0
  %5851 = vmatpush1.bf16.msra.mxu0 %v4075
  %5852 = vmatprep.subr.bf16.mxu0 0
  %5853 = vmatpush1.bf16.msra.mxu0 %v4076
  %5854 = vmatprep.subr.bf16.mxu0 0
  %5855 = vmatpush1.bf16.msra.mxu0 %v4077
  %5856 = vmatprep.subr.bf16.mxu0 0
  %5857 = vmatpush1.bf16.msra.mxu0 %v4078
  %5858 = vmatprep.subr.bf16.mxu0 0
  %5859 = vmatpush1.bf16.msra.mxu0 %v4079
  %5860 = vmatprep.subr.bf16.mxu0 0
  %5861 = vmatpush1.bf16.msra.mxu0 %v4080
  %5862 = vmatprep.subr.bf16.mxu0 0
  %5863 = vmatpush1.bf16.msra.mxu0 %v4081
  %5864 = vmatprep.subr.bf16.mxu0 0
  %5865 = vmatpush1.bf16.msra.mxu0 %v4082
  %5866 = vmatprep.subr.bf16.mxu0 0
  %5867 = vmatpush1.bf16.msra.mxu0 %v4083
  %5868 = vmatprep.mubr.bf16.mxu0 %v1459
  %5869 = vmatmul.mubr.bf16.gmra.mrb[0].mxu0 %v1457
  %v5870 = vpop.f32.mrb[0].mxu0
  %v5871 = vadd.f32 %v5831, %v5870
  %v5872 = vpop.f32.mrb[0].mxu0
  %v5873 = vpop.f32.mrb[0].mxu0
  %v5874 = vpop.f32.mrb[0].mxu0
  %5875 = vdwg.mxu0
  %v5876 = vmax.f32 %v5871, 0.0
  %v5877 = vld [vmem:[%s3] sm:$0xff]
  %v5878 = vld [vmem:[%s3 + $0x8] sm:$0xff]
  %v5879 = vld [vmem:[%s3 + $0x10] sm:$0xff]
  %v5880 = vld [vmem:[%s3 + $0x18] sm:$0xff]
  %v5881 = vld [vmem:[%s3 + $0x20] sm:$0xff]
  %v5882 = vld [vmem:[%s3 + $0x28] sm:$0xff]
  %v5883 = vld [vmem:[%s3 + $0x30] sm:$0xff]
  %v5884 = vld [vmem:[%s3 + $0x38] sm:$0xff]
  %v5885 = vld [vmem:[%s3 + $0x40] sm:$0xff]
  %v5886 = vld [vmem:[%s3 + $0x48] sm:$0xff]
  %v5887 = vld [vmem:[%s3 + $0x50] sm:$0xff]
  %v5888 = vld [vmem:[%s3 + $0x58] sm:$0xff]
  %v5889 = vld [vmem:[%s3 + $0x60] sm:$0xff]
  %v5890 = vld [vmem:[%s3 + $0x68] sm:$0xff]
  %v5891 = vld [vmem:[%s3 + $0x70] sm:$0xff]
  %v5892 = vld [vmem:[%s4] sm:$0x1]
  %v5894 = vlaneseq
  %v5895 = vshrl.u32 %v5894, 7
  %v5896 = vsub.s32 0, %v5895
  %v5897 = vrot.slane %v5892, %v5896
  %vm5899 = vcmask 982016
  %v5901 = vsel %vm5899, %v5876, 0
  %5903 = vmatprep.subr.mxu0 0.0
  %5904 = vmatpush1.msra.mxu0 %v5877
  %5905 = vmatprep.subr.mxu0 0.0
  %5906 = vmatpush1.msra.mxu0 %v5878
  %5907 = vmatprep.subr.mxu0 0.0
  %5908 = vmatpush1.msra.mxu0 %v5879
  %5909 = vmatprep.subr.mxu0 0.0
  %5910 = vmatpush1.msra.mxu0 %v5880
  %5911 = vmatprep.subr.mxu0 0.0
  %5912 = vmatpush1.msra.mxu0 %v5881
  %5913 = vmatprep.subr.mxu0 0.0
  %5914 = vmatpush1.msra.mxu0 %v5882
  %5915 = vmatprep.subr.mxu0 0.0
  %5916 = vmatpush1.msra.mxu0 %v5883
  %5917 = vmatprep.subr.mxu0 0.0
  %5918 = vmatpush1.msra.mxu0 %v5884
  %5919 = vmatprep.subr.mxu0 0.0
  %5920 = vmatpush1.msra.mxu0 %v5885
  %5921 = vmatprep.subr.mxu0 0.0
  %5922 = vmatpush1.msra.mxu0 %v5886
  %5923 = vmatprep.subr.mxu0 0.0
  %5924 = vmatpush1.msra.mxu0 %v5887
  %5925 = vmatprep.subr.mxu0 0.0
  %5926 = vmatpush1.msra.mxu0 %v5888
  %5927 = vmatprep.subr.mxu0 0.0
  %5928 = vmatpush1.msra.mxu0 %v5889
  %5929 = vmatprep.subr.mxu0 0.0
  %5930 = vmatpush1.msra.mxu0 %v5890
  %5931 = vmatprep.subr.mxu0 0.0
  %5932 = vmatpush1.msra.mxu0 %v5891
  %5933 = vmatprep.subr.mxu0 0.0
  %5934 = vmatpush1.msra.mxu0 0.0
  %5935 = vmatprep.subr.mxu0 0.0
  %5936 = vmatpush1.msra.mxu0 0.0
  %5937 = vmatprep.subr.mxu0 0.0
  %5938 = vmatpush1.msra.mxu0 0.0
  %5939 = vmatprep.subr.mxu0 0.0
  %5940 = vmatpush1.msra.mxu0 0.0
  %5941 = vmatprep.subr.mxu0 0.0
  %5942 = vmatpush1.msra.mxu0 0.0
  %5943 = vmatprep.subr.mxu0 0.0
  %5944 = vmatpush1.msra.mxu0 0.0
  %5945 = vmatprep.subr.mxu0 0.0
  %5946 = vmatpush1.msra.mxu0 0.0
  %5947 = vmatprep.subr.mxu0 0.0
  %5948 = vmatpush1.msra.mxu0 0.0
  %5949 = vmatprep.subr.mxu0 0.0
  %5950 = vmatpush1.msra.mxu0 0.0
  %5951 = vmatprep.subr.mxu0 0.0
  %5952 = vmatpush1.msra.mxu0 0.0
  %5953 = vmatprep.subr.mxu0 0.0
  %5954 = vmatpush1.msra.mxu0 0.0
  %5955 = vmatprep.subr.mxu0 0.0
  %5956 = vmatpush1.msra.mxu0 0.0
  %5957 = vmatprep.subr.mxu0 0.0
  %5958 = vmatpush1.msra.mxu0 0.0
  %5959 = vmatprep.subr.mxu0 0.0
  %5960 = vmatpush1.msra.mxu0 0.0
  %5961 = vmatprep.subr.mxu0 0.0
  %5962 = vmatpush1.msra.mxu0 0.0
  %5963 = vmatprep.subr.mxu0 0.0
  %5964 = vmatpush1.msra.mxu0 0.0
  %5965 = vmatprep.subr.mxu0 0.0
  %5966 = vmatpush1.msra.mxu0 0.0
  %5967 = vmatprep.mubr.f32.mxu0 0.0
  %5968 = vmatmul.mubr.f32.gmra.mrb[0].mxu0 %v5901
  %v5969 = vpop.f32.mrb[0].mxu0
  %v5970 = vadd.f32 %v5897, %v5969
  %v5971 = vpop.f32.mrb[0].mxu0
  %5972 = vdwg.mxu0
  %v5973 = vmax.f32 %v5970, 0.0
  %vm5974 = vcmask 156672
  %5975 = vst.msk [vmem:[%s5] sm:$0x3] %vm5974, %v5973
  // Predicated region
  $region22: #{net_forward.6} parent=0 // pred_check
    _
  $region23: #{net_forward.6} parent=0 // pred_check_branch
    %5977 = sbr.rel (0) target = $region25
  $region24: #{net_forward.6} parent=0 // pred_region
    _
  $region25: #{net_forward.6} parent=0 // pred_fallthru
    _
  // Predicated region
  $region26: #{net_forward.6} parent=0 // pred_check
    _
  $region27: #{net_forward.6} parent=0 // pred_check_branch
    %5979 = sbr.rel (0) target = $region29
  $region28: #{net_forward.6} parent=0 // pred_region
    _
  $region29: #{net_forward.6} parent=0 // pred_fallthru
    _

// kernel: net_forward.7
$region0: #{net_forward.7}
  #allocation0 [shape = 'u32[]', space=smem, size = 0x4, offset = 0x4, fixed_abs, tag = 'smem constant byte address 0x4 - core index']
  #allocation1 [shape = 'u32[144,128]{1,0:T(1,128)}', space=vmem, size = 0x12000, scoped, tag = 'internal scratch']
  %s0 = inlined_call_operand.vmem [shape: f32[2,20], index: 0, kind: input, shape index: {}]
  %s1 = inlined_call_operand.vmem [shape: f32[20,11], index: 1, kind: input, shape index: {}]
  %s2 = inlined_call_operand.vmem [shape: f32[1,11], index: 2, kind: input, shape index: {}]
  %s3 = inlined_call_operand.hbm [shape: f32[2,11], index: 3, kind: output, shape index: {}]
  %s4 = sld [smem:[#allocation0]]
  $region22: #{net_forward.7} parent=0
    _
  %s6 = ssub.s32 1, %s4
  %s7 = scalar_select 0, %s6, %s4
  $region1: #{net_forward.7} parent=0
    #allocation2 [shape = 'u8[1024]{0}', space=vmem, size = 0x400, scoped, tag = 'output window, operand 0, single buffered']
    #allocation3 [shape = 's32[1]{0}', space=sflag, size = 0x4, scoped, tag = 'scoped memory for net_forward.7']
    %8 = vsyncpa [#allocation3], 0
    // Predicated region
    $region2: #{net_forward.7} parent=1 // pred_check
      _
    $region3: #{net_forward.7} parent=1 // pred_check_branch
      %10 = sbr.rel (0) target = $region5
    $region4: #{net_forward.7} parent=1 // pred_region
      _
    $region5: #{net_forward.7} parent=1 // pred_fallthru
      _
    // Predicated region
    $region6: #{net_forward.7} parent=1 // pred_check
      _
    $region7: #{net_forward.7} parent=1 // pred_check_branch
      %12 = sbr.rel (0) target = $region9
    $region8: #{net_forward.7} parent=1 // pred_region
      _
    $region9: #{net_forward.7} parent=1 // pred_fallthru
      _
    // Predicated region
    $region10: #{net_forward.7} parent=1 // pred_check
      _
    $region11: #{net_forward.7} parent=1 // pred_check_branch
      %14 = sbr.rel (0) target = $region13
    $region12: #{net_forward.7} parent=1 // pred_region
      _
    $region13: #{net_forward.7} parent=1 // pred_fallthru
      _
    %v15 = vld [vmem:[%s0] sm:$0x3]
    %v16 = vld [vmem:[%s1] sm:$0xff]
    %v17 = vld [vmem:[%s1 + $0x8] sm:$0xff]
    %v18 = vld [vmem:[%s1 + $0x10] sm:$0xf]
    %v19 = vld [vmem:[%s2] sm:$0x1]
    %v21 = vlaneseq
    %v22 = vshrl.u32 %v21, 7
    %v23 = vsub.s32 0, %v22
    %v24 = vrot.slane %v19, %v23
    %vm26 = vcmask 162816
    %v28 = vsel %vm26, %v15, 0
    %vm30 = vcmask 1043456
    %v32 = vsel %vm30, %v18, 0
    %34 = vmatprep.subr.mxu0 0.0
    %35 = vmatpush1.msra.mxu0 %v16
    %36 = vmatprep.subr.mxu0 0.0
    %37 = vmatpush1.msra.mxu0 %v17
    %38 = vmatprep.subr.mxu0 0.0
    %39 = vmatpush1.msra.mxu0 %v32
    %40 = vmatprep.subr.mxu0 0.0
    %41 = vmatpush1.msra.mxu0 0.0
    %42 = vmatprep.subr.mxu0 0.0
    %43 = vmatpush1.msra.mxu0 0.0
    %44 = vmatprep.subr.mxu0 0.0
    %45 = vmatpush1.msra.mxu0 0.0
    %46 = vmatprep.subr.mxu0 0.0
    %47 = vmatpush1.msra.mxu0 0.0
    %48 = vmatprep.subr.mxu0 0.0
    %49 = vmatpush1.msra.mxu0 0.0
    %50 = vmatprep.subr.mxu0 0.0
    %51 = vmatpush1.msra.mxu0 0.0
    %52 = vmatprep.subr.mxu0 0.0
    %53 = vmatpush1.msra.mxu0 0.0
    %54 = vmatprep.subr.mxu0 0.0
    %55 = vmatpush1.msra.mxu0 0.0
    %56 = vmatprep.subr.mxu0 0.0
    %57 = vmatpush1.msra.mxu0 0.0
    %58 = vmatprep.subr.mxu0 0.0
    %59 = vmatpush1.msra.mxu0 0.0
    %60 = vmatprep.subr.mxu0 0.0
    %61 = vmatpush1.msra.mxu0 0.0
    %62 = vmatprep.subr.mxu0 0.0
    %63 = vmatpush1.msra.mxu0 0.0
    %64 = vmatprep.subr.mxu0 0.0
    %65 = vmatpush1.msra.mxu0 0.0
    %66 = vmatprep.subr.mxu0 0.0
    %67 = vmatpush1.msra.mxu0 0.0
    %68 = vmatprep.subr.mxu0 0.0
    %69 = vmatpush1.msra.mxu0 0.0
    %70 = vmatprep.subr.mxu0 0.0
    %71 = vmatpush1.msra.mxu0 0.0
    %72 = vmatprep.subr.mxu0 0.0
    %73 = vmatpush1.msra.mxu0 0.0
    %74 = vmatprep.subr.mxu0 0.0
    %75 = vmatpush1.msra.mxu0 0.0
    %76 = vmatprep.subr.mxu0 0.0
    %77 = vmatpush1.msra.mxu0 0.0
    %78 = vmatprep.subr.mxu0 0.0
    %79 = vmatpush1.msra.mxu0 0.0
    %80 = vmatprep.subr.mxu0 0.0
    %81 = vmatpush1.msra.mxu0 0.0
    %82 = vmatprep.subr.mxu0 0.0
    %83 = vmatpush1.msra.mxu0 0.0
    %84 = vmatprep.subr.mxu0 0.0
    %85 = vmatpush1.msra.mxu0 0.0
    %86 = vmatprep.subr.mxu0 0.0
    %87 = vmatpush1.msra.mxu0 0.0
    %88 = vmatprep.subr.mxu0 0.0
    %89 = vmatpush1.msra.mxu0 0.0
    %90 = vmatprep.subr.mxu0 0.0
    %91 = vmatpush1.msra.mxu0 0.0
    %92 = vmatprep.subr.mxu0 0.0
    %93 = vmatpush1.msra.mxu0 0.0
    %94 = vmatprep.subr.mxu0 0.0
    %95 = vmatpush1.msra.mxu0 0.0
    %96 = vmatprep.subr.mxu0 0.0
    %97 = vmatpush1.msra.mxu0 0.0
    %98 = vmatprep.mubr.f32.mxu0 0.0
    %99 = vmatmul.mubr.f32.gmra.mrb[0].mxu0 %v28
    %v100 = vpop.f32.mrb[0].mxu0
    %v101 = vadd.f32 %v24, %v100
    %v102 = vpop.f32.mrb[0].mxu0
    %103 = vdwg.mxu0
    %vm104 = vcmask 82944
    %105 = vst.msk [vmem:[#allocation2] sm:$0x3] %vm104, %v101
    // Predicated region
    $region14: #{net_forward.7} parent=1 // pred_check
      _
    $region15: #{net_forward.7} parent=1 // pred_check_branch
      %107 = sbr.rel (0) target = $region17
    $region16: #{net_forward.7} parent=1 // pred_region
      %s109 = ssub.s32 32, 32
      %110 = vsyncadd [#allocation3], %s109
      %s112 = sshll.u32 [#allocation2], 4
      %s113 = int_to_ptr.vmem [resolvable:$true] %s112
      %115 = dma.vmem_to_hbm [thread:$0]  %s113, 32, %s3, [#allocation3]
    $region17: #{net_forward.7} parent=1 // pred_fallthru
      _
    // Predicated region
    $region18: #{net_forward.7} parent=1 // pred_check
      _
    $region19: #{net_forward.7} parent=1 // pred_check_branch
      %117 = sbr.rel (0) target = $region21
    $region20: #{net_forward.7} parent=1 // pred_region
      %118 = dma.done [#allocation3], 32
    $region21: #{net_forward.7} parent=1 // pred_fallthru
      _
    %119 = vsyncpa [#allocation3], 1

</llo_original>
